<compile_context>
chip_gen: v5e
topology: v5e:2x2
jax: 0.10.0
libtpu: 0.0.40
codegen_flags: <defaults>
</compile_context>

<pallas_src>
import jax
import jax.numpy as jnp
from jax.experimental import pallas as pl
from jax.experimental.pallas import tpu as pltpu

FEATURES_DIM_GENE = 512
FEATURES_DIM_BIONIC = 512
HID_DIM = 768
INV_SCALE = 1.0 / (float(HID_DIM) ** 0.5)  # n_heads = 1 -> head_dim = hid_dim = 768


def _attention_branch_kernel(
    qin_ref,    # (1, B, F)    f32   gene (branch 0) or bionic (branch 1)
    mol_ref,    # (B, S, H)    f32   shared MolGNet features
    mask_ref,   # (B, S)       f32   shared valid-atom mask
    wfc_ref,    # (1, F, H)    bf16  fc_layer_i weight
    wq_ref,     # (1, H, H)    bf16  attention_i fc_q weight
    wkv_ref,    # (1, H, 2H)   bf16  attention_i [fc_k | fc_v] fused weight
    wo_ref,     # (1, H, H)    bf16  attention_i fc_o weight
    bias_ref,   # (1, 5, H)    f32   rows: [b_fc, b_q, b_k, b_v, b_o]
    out_ref,    # (1, B, H)    f32   per-branch partial output
):
    B, S, H = mol_ref.shape
    mol2d = mol_ref[...].reshape(B * S, H)          # flatten tokens for K/V projection
    mask = mask_ref[...]                            # (B, S), nonzero == valid
    qin = qin_ref[0]                                # (B, F)
    biases = bias_ref[0]                            # (5, H)

    def matmul(x, w):
        # bf16 MXU matmul, f32 accumulation (weights already bf16 in HBM/VMEM).
        return jnp.dot(x.astype(jnp.bfloat16), w, preferred_element_type=jnp.float32)

    # fc_layer_i + ReLU -> query input
    h = jnp.maximum(matmul(qin, wfc_ref[0]) + biases[0:1, :], 0.0)        # (B, H)

    # projections; K and V come from one fused matmul over the flattened tokens
    q = matmul(h, wq_ref[0]) + biases[1:2, :]                             # (B, H)
    kv = matmul(mol2d, wkv_ref[0])                                        # (B*S, 2H)
    k = (kv[:, :H] + biases[2:3, :]).reshape(B, S, H)                     # (B, S, H)
    v = (kv[:, H:] + biases[3:4, :]).reshape(B, S, H)                     # (B, S, H)

    # single-head attention with a length-1 query (batched dots -> MXU, f32)
    energy = jnp.einsum("bqh,bsh->bqs", q[:, None, :], k,
                        preferred_element_type=jnp.float32)[:, 0, :] * INV_SCALE  # (B, S)
    energy = jnp.where(mask == 0.0, -1e10, energy)                        # masked_fill(mask==0, -1e10)
    energy = energy - jnp.max(energy, axis=-1, keepdims=True)
    p = jnp.exp(energy)
    inv_denom = pl.reciprocal(jnp.sum(p, axis=-1, keepdims=True), approx=True)
    attn = p * inv_denom                                                  # softmax over S
    # TODO(synk): attention dropout (p=0.3) is training-only; eval-mode identity here.
    ctx = jnp.einsum("bqs,bsh->bqh", attn[:, None, :], v,
                     preferred_element_type=jnp.float32)[:, 0, :]         # (B, H)

    out_ref[0] = matmul(ctx, wo_ref[0]) + biases[4:5, :]                  # fc_o -> (B, H)


def pack_params(params):
    """One-time packing: per-branch weight slabs in bf16, biases stacked in f32."""
    w_fc = jnp.stack([params["w0"], params["w1"]]).astype(jnp.bfloat16)      # (2, F, H)
    w_q = jnp.stack([params["wq0"], params["wq1"]]).astype(jnp.bfloat16)     # (2, H, H)
    w_kv = jnp.stack([
        jnp.concatenate([params["wk0"], params["wv0"]], axis=1),
        jnp.concatenate([params["wk1"], params["wv1"]], axis=1),
    ]).astype(jnp.bfloat16)                                                  # (2, H, 2H)
    w_o = jnp.stack([params["wo0"], params["wo1"]]).astype(jnp.bfloat16)     # (2, H, H)
    biases = jnp.stack([
        jnp.concatenate([params["b0"], params["bq0"], params["bk0"],
                         params["bv0"], params["bo0"]], axis=0),
        jnp.concatenate([params["b1"], params["bq1"], params["bk1"],
                         params["bv1"], params["bo1"]], axis=0),
    ]).astype(jnp.float32)                                                   # (2, 5, H)
    return {"w_fc": w_fc, "w_q": w_q, "w_kv": w_kv, "w_o": w_o, "biases": biases}


def attention_layer(molgnet, mask_f, gene, bionic, packed):
    B, S, H = molgnet.shape
    F = gene.shape[-1]
    qin = jnp.stack([gene, bionic], axis=0)                                  # (2, B, F)

    in_specs = [
        pl.BlockSpec((1, B, F), lambda i: (i, 0, 0)),        # qin (per-branch query input)
        pl.BlockSpec((B, S, H), lambda i: (0, 0, 0)),        # molgnet (shared)
        pl.BlockSpec((B, S), lambda i: (0, 0)),              # mask (shared)
        pl.BlockSpec((1, F, H), lambda i: (i, 0, 0)),        # w_fc
        pl.BlockSpec((1, H, H), lambda i: (i, 0, 0)),        # w_q
        pl.BlockSpec((1, H, 2 * H), lambda i: (i, 0, 0)),    # w_kv
        pl.BlockSpec((1, H, H), lambda i: (i, 0, 0)),        # w_o
        pl.BlockSpec((1, 5, H), lambda i: (i, 0, 0)),        # biases
    ]
    out_spec = pl.BlockSpec((1, B, H), lambda i: (i, 0, 0))

    parts = pl.pallas_call(
        _attention_branch_kernel,
        out_shape=jax.ShapeDtypeStruct((2, B, H), jnp.float32),
        grid=(2,),
        in_specs=in_specs,
        out_specs=out_spec,
        compiler_params=pltpu.CompilerParams(
            dimension_semantics=("parallel",),       # 2 branches -> 2 TCs on v7x
            vmem_limit_bytes=40 * 1024 * 1024,       # fits v7x 64 MiB; above v5e 16 MiB default
        ),
    )(qin, molgnet, mask_f, packed["w_fc"], packed["w_q"],
      packed["w_kv"], packed["w_o"], packed["biases"])

    return parts[0] + parts[1]                                              # x_att0 + x_att1


def make_params(key):
    """Deterministic synthetic weights. Linear weights stored as (in, out)."""
    names_shapes = {
        "w0": (FEATURES_DIM_GENE, HID_DIM), "b0": (1, HID_DIM),
        "w1": (FEATURES_DIM_BIONIC, HID_DIM), "b1": (1, HID_DIM),
    }
    for i in (0, 1):
        for p in ("q", "k", "v", "o"):
            names_shapes[f"w{p}{i}"] = (HID_DIM, HID_DIM)
            names_shapes[f"b{p}{i}"] = (1, HID_DIM)
    keys = jax.random.split(key, len(names_shapes))
    params = {}
    for (name, shape), k in zip(names_shapes.items(), keys):
        params[name] = jax.random.normal(k, shape, jnp.float32) * 0.02
    return params


def reference(molgnet, mask_f, gene, bionic, p):
    """Pure-JAX reference mirroring the PyTorch forward (eval mode).

    The deployed kernel consumes bf16-stored weights, so the reference uses the
    identically quantized weights (upcast to f32); remaining differences are
    in-kernel bf16 matmul-input rounding and the approx softmax reciprocal.
    """
    def qw(name):
        return p[name].astype(jnp.bfloat16).astype(jnp.float32)

    ge = jax.nn.relu(gene @ qw("w0") + p["b0"])
    bi = jax.nn.relu(bionic @ qw("w1") + p["b1"])

    def mha(q_in, wq, bq, wk, bk, wv, bv, wo, bo):
        q = q_in @ qw(wq) + p[bq]                             # (B, H)
        k = molgnet @ qw(wk) + p[bk]                          # (B, S, H)
        v = molgnet @ qw(wv) + p[bv]
        energy = jnp.einsum("bh,bsh->bs", q, k) * INV_SCALE
        energy = jnp.where(mask_f == 0.0, -1e10, energy)
        attn = jax.nn.softmax(energy, axis=-1)
        ctx = jnp.einsum("bs,bsh->bh", attn, v)
        return ctx @ qw(wo) + p[bo]

    out0 = mha(ge, "wq0", "bq0", "wk0", "bk0", "wv0", "bv0", "wo0", "bo0")
    out1 = mha(bi, "wq1", "bq1", "wk1", "bk1", "wv1", "bv1", "wo1", "bo1")
    return out0 + out1


if __name__ == "__main__":
    B, S = 2, 8
    key = jax.random.PRNGKey(0)
    k_mol, k_gene, k_bio, k_par = jax.random.split(key, 4)

    molgnet = jax.random.normal(k_mol, (B, S, HID_DIM), jnp.float32)
    gene = jax.random.normal(k_gene, (B, FEATURES_DIM_GENE), jnp.float32)
    bionic = jax.random.normal(k_bio, (B, FEATURES_DIM_BIONIC), jnp.float32)
    # valid-atom mask: molecule 0 has 8 atoms, molecule 1 has 5
    lengths = jnp.array([8, 5])
    mask_f = (jnp.arange(S)[None, :] < lengths[:, None]).astype(jnp.float32)

    params = make_params(k_par)
    packed = pack_params(params)

    out = attention_layer(molgnet, mask_f, gene, bionic, packed)
    out = jax.block_until_ready(out)

    ref = jax.block_until_ready(reference(molgnet, mask_f, gene, bionic, params))
    assert out.shape == (B, HID_DIM)
    assert jnp.allclose(out, ref, rtol=1e-2, atol=1e-2), "mismatch vs JAX reference"

    print("KERNEL_OK")
</pallas_src>

<mosaic_0001>
module attributes {stable_mosaic.version = 11 : i64} {
  func.func @_attention_branch_kernel(%arg0: i32, %arg1: memref<1x2x512xf32, #tpu.memory_space<vmem>>, %arg2: memref<2x8x768xf32, #tpu.memory_space<vmem>>, %arg3: memref<2x8xf32, #tpu.memory_space<vmem>>, %arg4: memref<1x512x768xbf16, #tpu.memory_space<vmem>>, %arg5: memref<1x768x768xbf16, #tpu.memory_space<vmem>>, %arg6: memref<1x768x1536xbf16, #tpu.memory_space<vmem>>, %arg7: memref<1x768x768xbf16, #tpu.memory_space<vmem>>, %arg8: memref<1x5x768xf32, #tpu.memory_space<vmem>>, %arg9: memref<1x2x768xf32, #tpu.memory_space<vmem>>) attributes {dimension_semantics = [#tpu.dimension_semantics<parallel>], iteration_bounds = array<i64: 2>, scalar_prefetch = 0 : i64, scratch_operands = 0 : i64, tpu.core_type = #tpu.core_type<tc>, window_params = [{transform_indices = @transform_0, window_bounds = array<i64: 1, 2, 512>}, {pipeline_mode = #tpu.pipeline_mode<synchronous>, transform_indices = @transform_1, window_bounds = array<i64: 2, 8, 768>}, {pipeline_mode = #tpu.pipeline_mode<synchronous>, transform_indices = @transform_2, window_bounds = array<i64: 2, 8>}, {transform_indices = @transform_3, window_bounds = array<i64: 1, 512, 768>}, {transform_indices = @transform_4, window_bounds = array<i64: 1, 768, 768>}, {transform_indices = @transform_5, window_bounds = array<i64: 1, 768, 1536>}, {transform_indices = @transform_6, window_bounds = array<i64: 1, 768, 768>}, {transform_indices = @transform_7, window_bounds = array<i64: 1, 5, 768>}, {transform_indices = @transform_8, window_bounds = array<i64: 1, 2, 768>}]} {
    %c0 = arith.constant 0 : index
    %c0_0 = arith.constant 0 : index
    %c0_1 = arith.constant 0 : index
    %0 = vector.load %arg2[%c0, %c0_0, %c0_1] : memref<2x8x768xf32, #tpu.memory_space<vmem>>, vector<2x8x768xf32>
    %1 = vector.shape_cast %0 : vector<2x8x768xf32> to vector<16x768xf32>
    %c0_2 = arith.constant 0 : index
    %c0_3 = arith.constant 0 : index
    %2 = vector.load %arg3[%c0_2, %c0_3] : memref<2x8xf32, #tpu.memory_space<vmem>>, vector<2x8xf32>
    %c0_4 = arith.constant 0 : index
    %c0_5 = arith.constant 0 : index
    %c0_6 = arith.constant 0 : index
    %3 = vector.load %arg1[%c0_4, %c0_5, %c0_6] : memref<1x2x512xf32, #tpu.memory_space<vmem>>, vector<1x2x512xf32>
    %4 = vector.shape_cast %3 : vector<1x2x512xf32> to vector<2x512xf32>
    %c0_7 = arith.constant 0 : index
    %c0_8 = arith.constant 0 : index
    %c0_9 = arith.constant 0 : index
    %5 = vector.load %arg8[%c0_7, %c0_8, %c0_9] : memref<1x5x768xf32, #tpu.memory_space<vmem>>, vector<1x5x768xf32>
    %6 = vector.shape_cast %5 : vector<1x5x768xf32> to vector<5x768xf32>
    %c0_10 = arith.constant 0 : index
    %c0_11 = arith.constant 0 : index
    %c0_12 = arith.constant 0 : index
    %7 = vector.load %arg4[%c0_10, %c0_11, %c0_12] : memref<1x512x768xbf16, #tpu.memory_space<vmem>>, vector<1x512x768xbf16>
    %8 = vector.shape_cast %7 : vector<1x512x768xbf16> to vector<512x768xbf16>
    %9 = arith.truncf %4 : vector<2x512xf32> to vector<2x512xbf16>
    %cst = arith.constant dense<0.000000e+00> : vector<2x768xf32>
    %10 = tpu.matmul %9, %8, %cst {dimension_numbers = #tpu.dot_dimension_numbers<[1], [0], [0], [1], [0, 0, 1, 1], [], []>} : vector<2x512xbf16>, vector<512x768xbf16>, vector<2x768xf32> -> vector<2x768xf32>
    %11 = vector.extract_strided_slice %6 {offsets = [0, 0], sizes = [1, 768], strides = [1, 1]} : vector<5x768xf32> to vector<1x768xf32>
    %12 = vector.broadcast %11 : vector<1x768xf32> to vector<2x768xf32>
    %13 = arith.addf %10, %12 : vector<2x768xf32>
    %cst_13 = arith.constant 0.000000e+00 : f32
    %14 = vector.broadcast %cst_13 : f32 to vector<2x768xf32>
    %15 = arith.maximumf %13, %14 : vector<2x768xf32>
    %c0_14 = arith.constant 0 : index
    %c0_15 = arith.constant 0 : index
    %c0_16 = arith.constant 0 : index
    %16 = vector.load %arg5[%c0_14, %c0_15, %c0_16] : memref<1x768x768xbf16, #tpu.memory_space<vmem>>, vector<1x768x768xbf16>
    %17 = vector.shape_cast %16 : vector<1x768x768xbf16> to vector<768x768xbf16>
    %18 = arith.truncf %15 : vector<2x768xf32> to vector<2x768xbf16>
    %cst_17 = arith.constant dense<0.000000e+00> : vector<2x768xf32>
    %19 = tpu.matmul %18, %17, %cst_17 {dimension_numbers = #tpu.dot_dimension_numbers<[1], [0], [0], [1], [0, 0, 1, 1], [], []>} : vector<2x768xbf16>, vector<768x768xbf16>, vector<2x768xf32> -> vector<2x768xf32>
    %20 = vector.extract_strided_slice %6 {offsets = [1, 0], sizes = [1, 768], strides = [1, 1]} : vector<5x768xf32> to vector<1x768xf32>
    %21 = vector.broadcast %20 : vector<1x768xf32> to vector<2x768xf32>
    %22 = arith.addf %19, %21 : vector<2x768xf32>
    %c0_18 = arith.constant 0 : index
    %c0_19 = arith.constant 0 : index
    %c0_20 = arith.constant 0 : index
    %23 = vector.load %arg6[%c0_18, %c0_19, %c0_20] : memref<1x768x1536xbf16, #tpu.memory_space<vmem>>, vector<1x768x1536xbf16>
    %24 = vector.shape_cast %23 : vector<1x768x1536xbf16> to vector<768x1536xbf16>
    %25 = arith.truncf %1 : vector<16x768xf32> to vector<16x768xbf16>
    %cst_21 = arith.constant dense<0.000000e+00> : vector<16x1536xf32>
    %26 = tpu.matmul %25, %24, %cst_21 {dimension_numbers = #tpu.dot_dimension_numbers<[1], [0], [0], [1], [0, 0, 1, 1], [], []>} : vector<16x768xbf16>, vector<768x1536xbf16>, vector<16x1536xf32> -> vector<16x1536xf32>
    %27 = vector.extract_strided_slice %26 {offsets = [0, 0], sizes = [16, 768], strides = [1, 1]} : vector<16x1536xf32> to vector<16x768xf32>
    %28 = vector.extract_strided_slice %6 {offsets = [2, 0], sizes = [1, 768], strides = [1, 1]} : vector<5x768xf32> to vector<1x768xf32>
    %29 = vector.broadcast %28 : vector<1x768xf32> to vector<16x768xf32>
    %30 = arith.addf %27, %29 : vector<16x768xf32>
    %31 = vector.shape_cast %30 : vector<16x768xf32> to vector<2x8x768xf32>
    %32 = vector.extract_strided_slice %26 {offsets = [0, 768], sizes = [16, 768], strides = [1, 1]} : vector<16x1536xf32> to vector<16x768xf32>
    %33 = vector.extract_strided_slice %6 {offsets = [3, 0], sizes = [1, 768], strides = [1, 1]} : vector<5x768xf32> to vector<1x768xf32>
    %34 = vector.broadcast %33 : vector<1x768xf32> to vector<16x768xf32>
    %35 = arith.addf %32, %34 : vector<16x768xf32>
    %36 = vector.shape_cast %35 : vector<16x768xf32> to vector<2x8x768xf32>
    %37 = vector.shape_cast %22 : vector<2x768xf32> to vector<2x1x768xf32>
    "tpu.trace_start"() <{level = 10 : i32, message = "bqh,bsh->bqs"}> : () -> ()
    %cst_22 = arith.constant dense<0.000000e+00> : vector<2x1x8xf32>
    %38 = tpu.matmul %37, %31, %cst_22 {dimension_numbers = #tpu.dot_dimension_numbers<[2], [2], [1], [1], [0, 0, 0, 1, 1, 1], [0], [0]>} : vector<2x1x768xf32>, vector<2x8x768xf32>, vector<2x1x8xf32> -> vector<2x1x8xf32>
    "tpu.trace_stop"() : () -> ()
    %39 = vector.shape_cast %38 : vector<2x1x8xf32> to vector<2x8xf32>
    %cst_23 = arith.constant 0.0360843912 : f32
    %40 = vector.broadcast %cst_23 : f32 to vector<2x8xf32>
    %41 = arith.mulf %39, %40 : vector<2x8xf32>
    %cst_24 = arith.constant 0.000000e+00 : f32
    %42 = vector.broadcast %cst_24 : f32 to vector<2x8xf32>
    %43 = arith.cmpf oeq, %2, %42 : vector<2x8xf32>
    %cst_25 = arith.constant -1.000000e+10 : f32
    %44 = vector.broadcast %cst_25 : f32 to vector<2x8xf32>
    %45 = arith.select %43, %44, %41 : vector<2x8xi1>, vector<2x8xf32>
    %cst_26 = arith.constant dense<0xFF800000> : vector<2xf32>
    %46 = vector.multi_reduction <maximumf>, %45, %cst_26 [1] : vector<2x8xf32> to vector<2xf32>
    %47 = vector.shape_cast %46 : vector<2xf32> to vector<2x1xf32>
    %48 = vector.broadcast %47 : vector<2x1xf32> to vector<2x8xf32>
    %49 = arith.subf %45, %48 : vector<2x8xf32>
    %50 = math.exp %49 : vector<2x8xf32>
    %cst_27 = arith.constant dense<0.000000e+00> : vector<2xf32>
    %51 = vector.multi_reduction <add>, %50, %cst_27 [1] : vector<2x8xf32> to vector<2xf32>
    %52 = vector.shape_cast %51 : vector<2xf32> to vector<2x1xf32>
    %53 = tpu.reciprocal %52 {approx = true} : vector<2x1xf32> -> vector<2x1xf32>
    %54 = vector.broadcast %53 : vector<2x1xf32> to vector<2x8xf32>
    %55 = arith.mulf %50, %54 : vector<2x8xf32>
    %56 = vector.shape_cast %55 : vector<2x8xf32> to vector<2x1x8xf32>
    "tpu.trace_start"() <{level = 10 : i32, message = "bqs,bsh->bqh"}> : () -> ()
    %cst_28 = arith.constant dense<0.000000e+00> : vector<2x1x768xf32>
    %57 = tpu.matmul %56, %36, %cst_28 {dimension_numbers = #tpu.dot_dimension_numbers<[2], [1], [1], [2], [0, 0, 0, 1, 1, 2], [0], [0]>} : vector<2x1x8xf32>, vector<2x8x768xf32>, vector<2x1x768xf32> -> vector<2x1x768xf32>
    "tpu.trace_stop"() : () -> ()
    %58 = vector.shape_cast %57 : vector<2x1x768xf32> to vector<2x768xf32>
    %c0_29 = arith.constant 0 : index
    %c0_30 = arith.constant 0 : index
    %c0_31 = arith.constant 0 : index
    %59 = vector.load %arg7[%c0_29, %c0_30, %c0_31] : memref<1x768x768xbf16, #tpu.memory_space<vmem>>, vector<1x768x768xbf16>
    %60 = vector.shape_cast %59 : vector<1x768x768xbf16> to vector<768x768xbf16>
    %61 = arith.truncf %58 : vector<2x768xf32> to vector<2x768xbf16>
    %cst_32 = arith.constant dense<0.000000e+00> : vector<2x768xf32>
    %62 = tpu.matmul %61, %60, %cst_32 {dimension_numbers = #tpu.dot_dimension_numbers<[1], [0], [0], [1], [0, 0, 1, 1], [], []>} : vector<2x768xbf16>, vector<768x768xbf16>, vector<2x768xf32> -> vector<2x768xf32>
    %63 = vector.extract_strided_slice %6 {offsets = [4, 0], sizes = [1, 768], strides = [1, 1]} : vector<5x768xf32> to vector<1x768xf32>
    %64 = vector.broadcast %63 : vector<1x768xf32> to vector<2x768xf32>
    %65 = arith.addf %62, %64 : vector<2x768xf32>
    %c0_33 = arith.constant 0 : index
    %c0_34 = arith.constant 0 : index
    %c0_35 = arith.constant 0 : index
    %66 = vector.load %arg9[%c0_33, %c0_34, %c0_35] : memref<1x2x768xf32, #tpu.memory_space<vmem>>, vector<1x2x768xf32>
    %67 = vector.shape_cast %66 : vector<1x2x768xf32> to vector<2x768xf32>
    %68 = vector.shape_cast %65 : vector<2x768xf32> to vector<1x2x768xf32>
    tpu.vector_store %arg9[%c0_33, %c0_34, %c0_35], %68 {strides = array<i32>} : memref<1x2x768xf32, #tpu.memory_space<vmem>>, vector<1x2x768xf32>,
    return
  }
  func.func @transform_0(%arg0: i32) -> (i32, i32, i32) {
    %c0_i32 = arith.constant 0 : i32
    %c0_i32_0 = arith.constant 0 : i32
    %c0_i32_1 = arith.constant 0 : i32
    return %arg0, %c0_i32, %c0_i32_0 : i32, i32, i32
  }
  func.func @transform_1(%arg0: i32) -> (i32, i32, i32) {
    %c0_i32 = arith.constant 0 : i32
    %c0_i32_0 = arith.constant 0 : i32
    %c0_i32_1 = arith.constant 0 : i32
    %c0_i32_2 = arith.constant 0 : i32
    return %c0_i32, %c0_i32_0, %c0_i32_1 : i32, i32, i32
  }
  func.func @transform_2(%arg0: i32) -> (i32, i32) {
    %c0_i32 = arith.constant 0 : i32
    %c0_i32_0 = arith.constant 0 : i32
    %c0_i32_1 = arith.constant 0 : i32
    return %c0_i32, %c0_i32_0 : i32, i32
  }
  func.func @transform_3(%arg0: i32) -> (i32, i32, i32) {
    %c0_i32 = arith.constant 0 : i32
    %c0_i32_0 = arith.constant 0 : i32
    %c0_i32_1 = arith.constant 0 : i32
    return %arg0, %c0_i32, %c0_i32_0 : i32, i32, i32
  }
  func.func @transform_4(%arg0: i32) -> (i32, i32, i32) {
    %c0_i32 = arith.constant 0 : i32
    %c0_i32_0 = arith.constant 0 : i32
    %c0_i32_1 = arith.constant 0 : i32
    return %arg0, %c0_i32, %c0_i32_0 : i32, i32, i32
  }
  func.func @transform_5(%arg0: i32) -> (i32, i32, i32) {
    %c0_i32 = arith.constant 0 : i32
    %c0_i32_0 = arith.constant 0 : i32
    %c0_i32_1 = arith.constant 0 : i32
    return %arg0, %c0_i32, %c0_i32_0 : i32, i32, i32
  }
  func.func @transform_6(%arg0: i32) -> (i32, i32, i32) {
    %c0_i32 = arith.constant 0 : i32
    %c0_i32_0 = arith.constant 0 : i32
    %c0_i32_1 = arith.constant 0 : i32
    return %arg0, %c0_i32, %c0_i32_0 : i32, i32, i32
  }
  func.func @transform_7(%arg0: i32) -> (i32, i32, i32) {
    %c0_i32 = arith.constant 0 : i32
    %c0_i32_0 = arith.constant 0 : i32
    %c0_i32_1 = arith.constant 0 : i32
    return %arg0, %c0_i32, %c0_i32_0 : i32, i32, i32
  }
  func.func @transform_8(%arg0: i32) -> (i32, i32, i32) {
    %c0_i32 = arith.constant 0 : i32
    %c0_i32_0 = arith.constant 0 : i32
    %c0_i32_1 = arith.constant 0 : i32
    return %arg0, %c0_i32, %c0_i32_0 : i32, i32, i32
  }
}

</mosaic_0001>

<llo_original>
// kernel: tpu_custom_call.1
$region0: #{tpu_custom_call.1}
  #allocation0 [shape = 'u32[]', space=smem, size = 0x4, offset = 0x4, fixed_abs, tag = 'smem constant byte address 0x4 - core index']
  #allocation1 [shape = 'u32[72,128]{1,0:T(1,128)}', space=vmem, size = 0x9000, scoped, tag = 'internal scratch']
  %s0 = inlined_call_operand.hbm [shape: f32[2,2,512], index: 0, kind: input, shape index: {}]
  %s1 = inlined_call_operand.hbm [shape: f32[2,8,768], index: 1, kind: input, shape index: {}]
  %s2 = inlined_call_operand.hbm [shape: f32[2,8], index: 2, kind: input, shape index: {}]
  %s3 = inlined_call_operand.hbm [shape: bf16[2,512,768], index: 3, kind: input, shape index: {}]
  %s4 = inlined_call_operand.hbm [shape: bf16[2,768,768], index: 4, kind: input, shape index: {}]
  %s5 = inlined_call_operand.hbm [shape: bf16[2,768,1536], index: 5, kind: input, shape index: {}]
  %s6 = inlined_call_operand.hbm [shape: bf16[2,768,768], index: 6, kind: input, shape index: {}]
  %s7 = inlined_call_operand.vmem [shape: f32[2,5,768], index: 7, kind: input, shape index: {}]
  %s8 = inlined_call_operand.hbm [shape: f32[2,2,768], index: 8, kind: output, shape index: {}]
  %s9 = sld [smem:[#allocation0]]
  $region93: #{tpu_custom_call.1} parent=0
    _
  %s11 = ssub.s32 1, %s9
  %s12 = scalar_select 0, %s11, %s9
  $region1: #{tpu_custom_call.1} parent=0
    #allocation2 [shape = 'u8[8192]{0}', space=vmem, size = 0x2000, scoped, tag = 'input window, operand 0']
    #allocation3 [shape = 's32[2]{0}', space=sflag, size = 0x8, scoped, tag = 'scoped memory for tpu_custom_call.1']
    #allocation4 [shape = 's32[2]{0}', space=sflag, size = 0x8, scoped, tag = 'scoped memory for tpu_custom_call.1']
    #allocation5 [shape = 'u8[49152]{0}', space=vmem, size = 0xc000, scoped, tag = 'input window, operand 1, single buffered']
    #allocation6 [shape = 's32[1]{0}', space=sflag, size = 0x4, scoped, tag = 'scoped memory for tpu_custom_call.1']
    #allocation7 [shape = 'u8[1024]{0}', space=vmem, size = 0x400, scoped, tag = 'input window, operand 2, single buffered']
    #allocation8 [shape = 'u8[1572864]{0}', space=vmem, size = 0x180000, scoped, tag = 'input window, operand 3']
    #allocation9 [shape = 's32[2]{0}', space=sflag, size = 0x8, scoped, tag = 'scoped memory for tpu_custom_call.1']
    #allocation10 [shape = 'u8[2359296]{0}', space=vmem, size = 0x240000, scoped, tag = 'input window, operand 4']
    #allocation11 [shape = 'u8[4718592]{0}', space=vmem, size = 0x480000, scoped, tag = 'input window, operand 5']
    #allocation12 [shape = 's32[2]{0}', space=sflag, size = 0x8, scoped, tag = 'scoped memory for tpu_custom_call.1']
    #allocation13 [shape = 'u8[2359296]{0}', space=vmem, size = 0x240000, scoped, tag = 'input window, operand 6']
    #allocation14 [shape = 'u8[12288]{0}', space=vmem, size = 0x3000, scoped, tag = 'output window, operand 0']
    %13 = vsyncpa [#allocation3], 0
    %s14 = scalar_lea.sflag [#allocation3], 1
    %15 = vsyncpa %s14, 0
    %16 = vsyncpa [#allocation6], 0
    %17 = vsyncpa [#allocation9], 0
    %s18 = scalar_lea.sflag [#allocation9], 1
    %19 = vsyncpa %s18, 0
    %20 = vsyncpa [#allocation12], 0
    %s21 = scalar_lea.sflag [#allocation12], 1
    %22 = vsyncpa %s21, 0
    %23 = vsyncpa [#allocation4], 0
    %s24 = scalar_lea.sflag [#allocation4], 1
    %25 = vsyncpa %s24, 0
    loop: start=0, step=1, limit=4
    $region2: #{tpu_custom_call.1} parent=1 // loop_pre_header
      _
    $region3: #{tpu_custom_call.1} parent=1 // loop_header
      %s27 = sphi 0, %s31
      %p28 = scmp.ge.s32.totalorder %s27, 4
      %s37 = sphi 0, %s39
      %s40 = sphi 0, %s37
      %s41 = sphi 0, %s40
      %s57 = sphi 0, %s41
      %s61 = sphi 0, %s61
      %s63 = sphi 0, %s61
      %s64 = sphi 0, %s63
      %s78 = sphi 0, %s64
      %s82 = sphi 0, %s82
      %s84 = sphi 0, %s82
      %s85 = sphi 0, %s84
      %s99 = sphi 0, %s85
      %s105 = sphi 0, %s107
      %s108 = sphi 0, %s105
      %s109 = sphi 0, %s108
      %s125 = sphi 0, %s109
      %s131 = sphi 0, %s133
      %s134 = sphi 0, %s131
      %s135 = sphi 0, %s134
      %s151 = sphi 0, %s135
      %s157 = sphi 0, %s159
      %s160 = sphi 0, %s157
      %s161 = sphi 0, %s160
      %s177 = sphi 0, %s161
      %s183 = sphi 0, %s185
      %s186 = sphi 0, %s183
      %s187 = sphi 0, %s186
      %s203 = sphi 0, %s187
      %s209 = sphi 0, %s211
      %s212 = sphi 0, %s209
      %s213 = sphi 0, %s212
      %s229 = sphi 0, %s213
      %s235 = sphi 0, %s237
      %s238 = sphi 0, %s235
      %s239 = sphi 0, %s238
      %s255 = sphi 0, %s239
    $region4: #{tpu_custom_call.1} parent=1 // loop_header_branch
      %30 = sbr.rel (%p28) target = $region8
    $region5: #{tpu_custom_call.1} parent=1 // loop_body
      %s32 = ssub.s32 %s27, 1
      %s33 = ssub.s32 %s27, 2
      %s34 = sadd.s32 %s27, 1
      %s35 = ssub.s32 %s27, %s34
      %p36 = scmp.eq.s32.totalorder %s35, 0
      %s38 = sadd.s32 %s37, 1
      %s39 = scalar_select %p36, %s37, %s38
      %p42 = pneg %p36
      %p43 = scmp.eq.s32.totalorder %s27, 1
      %p44 = por %p42, %p43
      %p45 = scmp.ne.s32.totalorder %s37, %s40
      %p46 = scmp.eq.s32.totalorder %s27, 0
      %p47 = por %p45, %p46
      %p48 = scmp.ne.s32.totalorder %s37, %s40
      %p49 = scmp.eq.s32.totalorder %s32, 1
      %p50 = por %p48, %p49
      %p51 = scmp.ne.s32.totalorder %s40, %s41
      %p52 = scmp.eq.s32.totalorder %s32, 0
      %p53 = por %p51, %p52
      %p54 = scmp.ne.s32.totalorder %s40, %s41
      %p55 = scmp.eq.s32.totalorder %s33, 1
      %p56 = por %p54, %p55
      %p58 = scmp.ne.s32.totalorder %s41, %s57
      %p59 = scmp.eq.s32.totalorder %s33, 0
      %p60 = por %p58, %p59
      %s62 = sadd.s32 %s61, 1
      %p65 = scmp.eq.s32.totalorder %s27, 1
      %p66 = scmp.ne.s32.totalorder %s61, %s63
      %p67 = scmp.eq.s32.totalorder %s27, 0
      %p68 = por %p66, %p67
      %p69 = scmp.ne.s32.totalorder %s61, %s63
      %p70 = scmp.eq.s32.totalorder %s32, 1
      %p71 = por %p69, %p70
      %p72 = scmp.ne.s32.totalorder %s63, %s64
      %p73 = scmp.eq.s32.totalorder %s32, 0
      %p74 = por %p72, %p73
      %p75 = scmp.ne.s32.totalorder %s63, %s64
      %p76 = scmp.eq.s32.totalorder %s33, 1
      %p77 = por %p75, %p76
      %p79 = scmp.ne.s32.totalorder %s64, %s78
      %p80 = scmp.eq.s32.totalorder %s33, 0
      %p81 = por %p79, %p80
      %s83 = sadd.s32 %s82, 1
      %p86 = scmp.eq.s32.totalorder %s27, 1
      %p87 = scmp.ne.s32.totalorder %s82, %s84
      %p88 = scmp.eq.s32.totalorder %s27, 0
      %p89 = por %p87, %p88
      %p90 = scmp.ne.s32.totalorder %s82, %s84
      %p91 = scmp.eq.s32.totalorder %s32, 1
      %p92 = por %p90, %p91
      %p93 = scmp.ne.s32.totalorder %s84, %s85
      %p94 = scmp.eq.s32.totalorder %s32, 0
      %p95 = por %p93, %p94
      %p96 = scmp.ne.s32.totalorder %s84, %s85
      %p97 = scmp.eq.s32.totalorder %s33, 1
      %p98 = por %p96, %p97
      %p100 = scmp.ne.s32.totalorder %s85, %s99
      %p101 = scmp.eq.s32.totalorder %s33, 0
      %p102 = por %p100, %p101
      %s103 = ssub.s32 %s27, %s34
      %p104 = scmp.eq.s32.totalorder %s103, 0
      %s106 = sadd.s32 %s105, 1
      %s107 = scalar_select %p104, %s105, %s106
      %p110 = pneg %p104
      %p111 = scmp.eq.s32.totalorder %s27, 1
      %p112 = por %p110, %p111
      %p113 = scmp.ne.s32.totalorder %s105, %s108
      %p114 = scmp.eq.s32.totalorder %s27, 0
      %p115 = por %p113, %p114
      %p116 = scmp.ne.s32.totalorder %s105, %s108
      %p117 = scmp.eq.s32.totalorder %s32, 1
      %p118 = por %p116, %p117
      %p119 = scmp.ne.s32.totalorder %s108, %s109
      %p120 = scmp.eq.s32.totalorder %s32, 0
      %p121 = por %p119, %p120
      %p122 = scmp.ne.s32.totalorder %s108, %s109
      %p123 = scmp.eq.s32.totalorder %s33, 1
      %p124 = por %p122, %p123
      %p126 = scmp.ne.s32.totalorder %s109, %s125
      %p127 = scmp.eq.s32.totalorder %s33, 0
      %p128 = por %p126, %p127
      %s129 = ssub.s32 %s27, %s34
      %p130 = scmp.eq.s32.totalorder %s129, 0
      %s132 = sadd.s32 %s131, 1
      %s133 = scalar_select %p130, %s131, %s132
      %p136 = pneg %p130
      %p137 = scmp.eq.s32.totalorder %s27, 1
      %p138 = por %p136, %p137
      %p139 = scmp.ne.s32.totalorder %s131, %s134
      %p140 = scmp.eq.s32.totalorder %s27, 0
      %p141 = por %p139, %p140
      %p142 = scmp.ne.s32.totalorder %s131, %s134
      %p143 = scmp.eq.s32.totalorder %s32, 1
      %p144 = por %p142, %p143
      %p145 = scmp.ne.s32.totalorder %s134, %s135
      %p146 = scmp.eq.s32.totalorder %s32, 0
      %p147 = por %p145, %p146
      %p148 = scmp.ne.s32.totalorder %s134, %s135
      %p149 = scmp.eq.s32.totalorder %s33, 1
      %p150 = por %p148, %p149
      %p152 = scmp.ne.s32.totalorder %s135, %s151
      %p153 = scmp.eq.s32.totalorder %s33, 0
      %p154 = por %p152, %p153
      %s155 = ssub.s32 %s27, %s34
      %p156 = scmp.eq.s32.totalorder %s155, 0
      %s158 = sadd.s32 %s157, 1
      %s159 = scalar_select %p156, %s157, %s158
      %p162 = pneg %p156
      %p163 = scmp.eq.s32.totalorder %s27, 1
      %p164 = por %p162, %p163
      %p165 = scmp.ne.s32.totalorder %s157, %s160
      %p166 = scmp.eq.s32.totalorder %s27, 0
      %p167 = por %p165, %p166
      %p168 = scmp.ne.s32.totalorder %s157, %s160
      %p169 = scmp.eq.s32.totalorder %s32, 1
      %p170 = por %p168, %p169
      %p171 = scmp.ne.s32.totalorder %s160, %s161
      %p172 = scmp.eq.s32.totalorder %s32, 0
      %p173 = por %p171, %p172
      %p174 = scmp.ne.s32.totalorder %s160, %s161
      %p175 = scmp.eq.s32.totalorder %s33, 1
      %p176 = por %p174, %p175
      %p178 = scmp.ne.s32.totalorder %s161, %s177
      %p179 = scmp.eq.s32.totalorder %s33, 0
      %p180 = por %p178, %p179
      %s181 = ssub.s32 %s27, %s34
      %p182 = scmp.eq.s32.totalorder %s181, 0
      %s184 = sadd.s32 %s183, 1
      %s185 = scalar_select %p182, %s183, %s184
      %p188 = pneg %p182
      %p189 = scmp.eq.s32.totalorder %s27, 1
      %p190 = por %p188, %p189
      %p191 = scmp.ne.s32.totalorder %s183, %s186
      %p192 = scmp.eq.s32.totalorder %s27, 0
      %p193 = por %p191, %p192
      %p194 = scmp.ne.s32.totalorder %s183, %s186
      %p195 = scmp.eq.s32.totalorder %s32, 1
      %p196 = por %p194, %p195
      %p197 = scmp.ne.s32.totalorder %s186, %s187
      %p198 = scmp.eq.s32.totalorder %s32, 0
      %p199 = por %p197, %p198
      %p200 = scmp.ne.s32.totalorder %s186, %s187
      %p201 = scmp.eq.s32.totalorder %s33, 1
      %p202 = por %p200, %p201
      %p204 = scmp.ne.s32.totalorder %s187, %s203
      %p205 = scmp.eq.s32.totalorder %s33, 0
      %p206 = por %p204, %p205
      %s207 = ssub.s32 %s27, %s34
      %p208 = scmp.eq.s32.totalorder %s207, 0
      %s210 = sadd.s32 %s209, 1
      %s211 = scalar_select %p208, %s209, %s210
      %p214 = pneg %p208
      %p215 = scmp.eq.s32.totalorder %s27, 1
      %p216 = por %p214, %p215
      %p217 = scmp.ne.s32.totalorder %s209, %s212
      %p218 = scmp.eq.s32.totalorder %s27, 0
      %p219 = por %p217, %p218
      %p220 = scmp.ne.s32.totalorder %s209, %s212
      %p221 = scmp.eq.s32.totalorder %s32, 1
      %p222 = por %p220, %p221
      %p223 = scmp.ne.s32.totalorder %s212, %s213
      %p224 = scmp.eq.s32.totalorder %s32, 0
      %p225 = por %p223, %p224
      %p226 = scmp.ne.s32.totalorder %s212, %s213
      %p227 = scmp.eq.s32.totalorder %s33, 1
      %p228 = por %p226, %p227
      %p230 = scmp.ne.s32.totalorder %s213, %s229
      %p231 = scmp.eq.s32.totalorder %s33, 0
      %p232 = por %p230, %p231
      %s233 = ssub.s32 %s27, %s34
      %p234 = scmp.eq.s32.totalorder %s233, 0
      %s236 = sadd.s32 %s235, 1
      %s237 = scalar_select %p234, %s235, %s236
      %p240 = pneg %p234
      %p241 = scmp.eq.s32.totalorder %s27, 1
      %p242 = por %p240, %p241
      %p243 = scmp.ne.s32.totalorder %s235, %s238
      %p244 = scmp.eq.s32.totalorder %s27, 0
      %p245 = por %p243, %p244
      %p246 = scmp.ne.s32.totalorder %s235, %s238
      %p247 = scmp.eq.s32.totalorder %s32, 1
      %p248 = por %p246, %p247
      %p249 = scmp.ne.s32.totalorder %s238, %s239
      %p250 = scmp.eq.s32.totalorder %s32, 0
      %p251 = por %p249, %p250
      %p252 = scmp.ne.s32.totalorder %s238, %s239
      %p253 = scmp.eq.s32.totalorder %s33, 1
      %p254 = por %p252, %p253
      %p256 = scmp.ne.s32.totalorder %s239, %s255
      %p257 = scmp.eq.s32.totalorder %s33, 0
      %p258 = por %p256, %p257
      %p259 = scmp.le.s32.totalorder 1, %s27
      %p260 = scmp.lt.s32.totalorder %s27, 3
      %p261 = pnand %p259, %p260
      %p262 = pneg %p261
      // Predicated region
      $region9: #{tpu_custom_call.1} parent=5 // pred_check
        _
      $region10: #{tpu_custom_call.1} parent=5 // pred_check_branch
        %264 = sbr.rel (%p261) target = $region12
      $region11: #{tpu_custom_call.1} parent=5 // pred_region
        %s265 = ssub.s32 %s27, 1
        // Predicated region
        $region13: #{tpu_custom_call.1} parent=11 // pred_check
          %p266 = pneg %p74
        $region14: #{tpu_custom_call.1} parent=11 // pred_check_branch
          %268 = sbr.rel (%p266) target = $region16
        $region15: #{tpu_custom_call.1} parent=11 // pred_region
          %270 = vsyncadd [#allocation6], 0
          %s271 = sshll.u32 %s1, 4
          %s272 = int_to_ptr.hbm [resolvable:$true] %s271
          %s273 = sshll.u32 [#allocation5], 4
          %s274 = int_to_ptr.vmem [resolvable:$true] %s273
          %279 = dma.hbm_to_vmem [thread:$0]  %s272, 1536, %s274, [#allocation6], 768, 768, 48
        $region16: #{tpu_custom_call.1} parent=11 // pred_fallthru
          _
        // Predicated region
        $region17: #{tpu_custom_call.1} parent=11 // pred_check
          %p280 = pneg %p95
        $region18: #{tpu_custom_call.1} parent=11 // pred_check_branch
          %282 = sbr.rel (%p280) target = $region20
        $region19: #{tpu_custom_call.1} parent=11 // pred_region
          %284 = vsyncadd [#allocation6], 0
          %s286 = sshll.u32 %s2, 4
          %s287 = int_to_ptr.hbm [resolvable:$true] %s286
          %s288 = sshll.u32 [#allocation7], 4
          %s289 = int_to_ptr.vmem [resolvable:$true] %s288
          %291 = dma.hbm_to_vmem [thread:$0]  %s287, 32, %s289, [#allocation6]
        $region20: #{tpu_custom_call.1} parent=11 // pred_fallthru
          _
      $region12: #{tpu_custom_call.1} parent=5 // pred_fallthru
        _
      %p292 = scmp.lt.s32.totalorder %s27, 2
      // Predicated region
      $region21: #{tpu_custom_call.1} parent=5 // pred_check
        %p293 = pneg %p292
      $region22: #{tpu_custom_call.1} parent=5 // pred_check_branch
        %295 = sbr.rel (%p293) target = $region24
      $region23: #{tpu_custom_call.1} parent=5 // pred_region
        // Predicated region
        $region25: #{tpu_custom_call.1} parent=23 // pred_check
          %p296 = pneg %p47
        $region26: #{tpu_custom_call.1} parent=23 // pred_check_branch
          %298 = sbr.rel (%p296) target = $region28
        $region27: #{tpu_custom_call.1} parent=23 // pred_region
          %s299 = sand.u32 %s37, 1
          %s300 = scalar_lea.sflag [#allocation3], %s299
          %s301 = sand.u32 %s37, 1
          %s302 = smul.addr %s301, 8
          %s303 = scalar_lea.vmem [#allocation2], %s302
          %305 = vsyncadd %s300, 0
          %s306 = smul.addr %s27, 4
          %s307 = smul.addr %s306, 2
          %s308 = scalar_lea.hbm %s0, %s307
          %s310 = sshll.u32 %s308, 4
          %s311 = int_to_ptr.hbm [resolvable:$true] %s310
          %s312 = sshll.u32 %s303, 4
          %s313 = int_to_ptr.vmem [resolvable:$true] %s312
          %315 = dma.hbm_to_vmem [thread:$0]  %s311, 128, %s313, %s300
        $region28: #{tpu_custom_call.1} parent=23 // pred_fallthru
          _
        // Predicated region
        $region29: #{tpu_custom_call.1} parent=23 // pred_check
          %p316 = pneg %p115
        $region30: #{tpu_custom_call.1} parent=23 // pred_check_branch
          %318 = sbr.rel (%p316) target = $region32
        $region31: #{tpu_custom_call.1} parent=23 // pred_region
          %s319 = sand.u32 %s27, 1
          %s320 = scalar_lea.sflag [#allocation9], %s319
          %s321 = sand.u32 %s105, 1
          %s322 = smul.addr %s321, 1536
          %s323 = scalar_lea.vmem [#allocation8], %s322
          %325 = vsyncadd %s320, 0
          %s326 = smul.addr %s27, 384
          %s327 = smul.addr %s326, 4
          %s328 = scalar_lea.hbm %s3, %s327
          %s329 = sshll.u32 %s328, 4
          %s330 = int_to_ptr.hbm [resolvable:$true] %s329
          %s331 = sshll.u32 %s323, 4
          %s332 = int_to_ptr.vmem [resolvable:$true] %s331
          %337 = dma.hbm_to_vmem [thread:$0]  %s330, 24576, %s332, %s320, 384, 384, 24
        $region32: #{tpu_custom_call.1} parent=23 // pred_fallthru
          _
        // Predicated region
        $region33: #{tpu_custom_call.1} parent=23 // pred_check
          %p338 = pneg %p141
        $region34: #{tpu_custom_call.1} parent=23 // pred_check_branch
          %340 = sbr.rel (%p338) target = $region36
        $region35: #{tpu_custom_call.1} parent=23 // pred_region
          %s341 = sand.u32 %s27, 1
          %s342 = scalar_lea.sflag [#allocation9], %s341
          %s343 = sand.u32 %s131, 1
          %s344 = smul.addr %s343, 2304
          %s345 = scalar_lea.vmem [#allocation10], %s344
          %347 = vsyncadd %s342, 0
          %s348 = smul.addr %s27, 576
          %s349 = smul.addr %s348, 4
          %s350 = scalar_lea.hbm %s4, %s349
          %s351 = sshll.u32 %s350, 4
          %s352 = int_to_ptr.hbm [resolvable:$true] %s351
          %s353 = sshll.u32 %s345, 4
          %s354 = int_to_ptr.vmem [resolvable:$true] %s353
          %359 = dma.hbm_to_vmem [thread:$0]  %s352, 36864, %s354, %s342, 384, 384, 24
        $region36: #{tpu_custom_call.1} parent=23 // pred_fallthru
          _
        // Predicated region
        $region37: #{tpu_custom_call.1} parent=23 // pred_check
          %p360 = pneg %p167
        $region38: #{tpu_custom_call.1} parent=23 // pred_check_branch
          %362 = sbr.rel (%p360) target = $region40
        $region39: #{tpu_custom_call.1} parent=23 // pred_region
          %s363 = sand.u32 %s27, 1
          %s364 = scalar_lea.sflag [#allocation12], %s363
          %s365 = sand.u32 %s157, 1
          %s366 = smul.addr %s365, 4608
          %s367 = scalar_lea.vmem [#allocation11], %s366
          %369 = vsyncadd %s364, 0
          %s370 = smul.addr %s27, 1152
          %s371 = smul.addr %s370, 4
          %s372 = scalar_lea.hbm %s5, %s371
          %s373 = sshll.u32 %s372, 4
          %s374 = int_to_ptr.hbm [resolvable:$true] %s373
          %s375 = sshll.u32 %s367, 4
          %s376 = int_to_ptr.vmem [resolvable:$true] %s375
          %381 = dma.hbm_to_vmem [thread:$0]  %s374, 73728, %s376, %s364, 768, 768, 48
        $region40: #{tpu_custom_call.1} parent=23 // pred_fallthru
          _
        // Predicated region
        $region41: #{tpu_custom_call.1} parent=23 // pred_check
          %p382 = pneg %p193
        $region42: #{tpu_custom_call.1} parent=23 // pred_check_branch
          %384 = sbr.rel (%p382) target = $region44
        $region43: #{tpu_custom_call.1} parent=23 // pred_region
          %s385 = sand.u32 %s27, 1
          %s386 = scalar_lea.sflag [#allocation12], %s385
          %s387 = sand.u32 %s183, 1
          %s388 = smul.addr %s387, 2304
          %s389 = scalar_lea.vmem [#allocation13], %s388
          %391 = vsyncadd %s386, 0
          %s392 = smul.addr %s27, 576
          %s393 = smul.addr %s392, 4
          %s394 = scalar_lea.hbm %s6, %s393
          %s395 = sshll.u32 %s394, 4
          %s396 = int_to_ptr.hbm [resolvable:$true] %s395
          %s397 = sshll.u32 %s389, 4
          %s398 = int_to_ptr.vmem [resolvable:$true] %s397
          %403 = dma.hbm_to_vmem [thread:$0]  %s396, 36864, %s398, %s386, 384, 384, 24
        $region44: #{tpu_custom_call.1} parent=23 // pred_fallthru
          _
        // Predicated region
        $region45: #{tpu_custom_call.1} parent=23 // pred_check
          %p404 = pneg %p219
        $region46: #{tpu_custom_call.1} parent=23 // pred_check_branch
          %406 = sbr.rel (%p404) target = $region48
        $region47: #{tpu_custom_call.1} parent=23 // pred_region
          %p407 = scmp.lt.s32.totalorder %s27, 1
          %s408 = scalar_select %p407, %s27, 1
          %s409 = smul.addr %s408, 6
          %s410 = smul.addr %s409, 8
          %s411 = scalar_lea.vmem %s7, %s410
        $region48: #{tpu_custom_call.1} parent=23 // pred_fallthru
          _
      $region24: #{tpu_custom_call.1} parent=5 // pred_fallthru
        _
      %p412 = scmp.le.s32.totalorder 1, %s27
      %p413 = scmp.lt.s32.totalorder %s27, 3
      %p414 = pnand %p412, %p413
      %p415 = pneg %p414
      // Predicated region
      $region49: #{tpu_custom_call.1} parent=5 // pred_check
        _
      $region50: #{tpu_custom_call.1} parent=5 // pred_check_branch
        %417 = sbr.rel (%p414) target = $region52
      $region51: #{tpu_custom_call.1} parent=5 // pred_region
        %s418 = ssub.s32 %s27, 1
        %s419 = sand.u32 %s40, 1
        %s420 = scalar_lea.sflag [#allocation3], %s419
        %s421 = sand.u32 %s40, 1
        %s422 = smul.addr %s421, 8
        %s423 = scalar_lea.vmem [#allocation2], %s422
        // Predicated region
        $region53: #{tpu_custom_call.1} parent=51 // pred_check
          %p424 = pneg %p53
        $region54: #{tpu_custom_call.1} parent=51 // pred_check_branch
          %426 = sbr.rel (%p424) target = $region56
        $region55: #{tpu_custom_call.1} parent=51 // pred_region
          %428 = dma.done %s420, 128
        $region56: #{tpu_custom_call.1} parent=51 // pred_fallthru
          _
        // Predicated region
        $region57: #{tpu_custom_call.1} parent=51 // pred_check
          %p429 = pneg %p74
        $region58: #{tpu_custom_call.1} parent=51 // pred_check_branch
          %431 = sbr.rel (%p429) target = $region60
        $region59: #{tpu_custom_call.1} parent=51 // pred_region
          %433 = dma.done [#allocation6], 1536
        $region60: #{tpu_custom_call.1} parent=51 // pred_fallthru
          _
        // Predicated region
        $region61: #{tpu_custom_call.1} parent=51 // pred_check
          %p434 = pneg %p95
        $region62: #{tpu_custom_call.1} parent=51 // pred_check_branch
          %436 = sbr.rel (%p434) target = $region64
        $region63: #{tpu_custom_call.1} parent=51 // pred_region
          %438 = dma.done [#allocation6], 32
        $region64: #{tpu_custom_call.1} parent=51 // pred_fallthru
          _
        %s439 = sand.u32 %s32, 1
        %s440 = scalar_lea.sflag [#allocation9], %s439
        %s441 = sand.u32 %s108, 1
        %s442 = smul.addr %s441, 1536
        %s443 = scalar_lea.vmem [#allocation8], %s442
        // Predicated region
        $region65: #{tpu_custom_call.1} parent=51 // pred_check
          %p444 = pneg %p121
        $region66: #{tpu_custom_call.1} parent=51 // pred_check_branch
          %446 = sbr.rel (%p444) target = $region68
        $region67: #{tpu_custom_call.1} parent=51 // pred_region
          %448 = dma.done %s440, 24576
        $region68: #{tpu_custom_call.1} parent=51 // pred_fallthru
          _
        %s449 = sand.u32 %s32, 1
        %s450 = scalar_lea.sflag [#allocation9], %s449
        %s451 = sand.u32 %s134, 1
        %s452 = smul.addr %s451, 2304
        %s453 = scalar_lea.vmem [#allocation10], %s452
        // Predicated region
        $region69: #{tpu_custom_call.1} parent=51 // pred_check
          %p454 = pneg %p147
        $region70: #{tpu_custom_call.1} parent=51 // pred_check_branch
          %456 = sbr.rel (%p454) target = $region72
        $region71: #{tpu_custom_call.1} parent=51 // pred_region
          %458 = dma.done %s450, 36864
        $region72: #{tpu_custom_call.1} parent=51 // pred_fallthru
          _
        %s459 = sand.u32 %s32, 1
        %s460 = scalar_lea.sflag [#allocation12], %s459
        %s461 = sand.u32 %s160, 1
        %s462 = smul.addr %s461, 4608
        %s463 = scalar_lea.vmem [#allocation11], %s462
        // Predicated region
        $region73: #{tpu_custom_call.1} parent=51 // pred_check
          %p464 = pneg %p173
        $region74: #{tpu_custom_call.1} parent=51 // pred_check_branch
          %466 = sbr.rel (%p464) target = $region76
        $region75: #{tpu_custom_call.1} parent=51 // pred_region
          %468 = dma.done %s460, 73728
        $region76: #{tpu_custom_call.1} parent=51 // pred_fallthru
          _
        %s469 = sand.u32 %s32, 1
        %s470 = scalar_lea.sflag [#allocation12], %s469
        %s471 = sand.u32 %s186, 1
        %s472 = smul.addr %s471, 2304
        %s473 = scalar_lea.vmem [#allocation13], %s472
        // Predicated region
        $region77: #{tpu_custom_call.1} parent=51 // pred_check
          %p474 = pneg %p199
        $region78: #{tpu_custom_call.1} parent=51 // pred_check_branch
          %476 = sbr.rel (%p474) target = $region80
        $region79: #{tpu_custom_call.1} parent=51 // pred_region
          %478 = dma.done %s470, 36864
        $region80: #{tpu_custom_call.1} parent=51 // pred_fallthru
          _
        %s479 = sand.u32 %s40, 1
        %s480 = scalar_lea.sflag [#allocation3], %s479
        %s481 = sand.u32 %s40, 1
        %s482 = smul.addr %s481, 8
        %s483 = scalar_lea.vmem [#allocation2], %s482
        %p484 = pneg %p53
        %p485 = pneg %p50
        %p486 = pneg %p74
        %p487 = pneg %p71
        %p488 = pneg %p95
        %p489 = pneg %p92
        %s490 = sand.u32 %s32, 1
        %s491 = scalar_lea.sflag [#allocation9], %s490
        %s492 = sand.u32 %s108, 1
        %s493 = smul.addr %s492, 1536
        %s494 = scalar_lea.vmem [#allocation8], %s493
        %p495 = pneg %p121
        %p496 = pneg %p118
        %s497 = sand.u32 %s32, 1
        %s498 = scalar_lea.sflag [#allocation9], %s497
        %s499 = sand.u32 %s134, 1
        %s500 = smul.addr %s499, 2304
        %s501 = scalar_lea.vmem [#allocation10], %s500
        %p502 = pneg %p147
        %p503 = pneg %p144
        %s504 = sand.u32 %s32, 1
        %s505 = scalar_lea.sflag [#allocation12], %s504
        %s506 = sand.u32 %s160, 1
        %s507 = smul.addr %s506, 4608
        %s508 = scalar_lea.vmem [#allocation11], %s507
        %p509 = pneg %p173
        %p510 = pneg %p170
        %s511 = sand.u32 %s32, 1
        %s512 = scalar_lea.sflag [#allocation12], %s511
        %s513 = sand.u32 %s186, 1
        %s514 = smul.addr %s513, 2304
        %s515 = scalar_lea.vmem [#allocation13], %s514
        %p516 = pneg %p199
        %p517 = pneg %p196
        %p518 = scmp.lt.s32.totalorder %s32, 1
        %s519 = scalar_select %p518, %s32, 1
        %s520 = smul.addr %s519, 6
        %s521 = smul.addr %s520, 8
        %s522 = scalar_lea.vmem %s7, %s521
        %p523 = pneg %p225
        %p524 = pneg %p222
        %p525 = pneg %p251
        %p526 = pneg %p248
        %s527 = sand.u32 %s238, 1
        %s528 = scalar_lea.sflag [#allocation4], %s527
        %s529 = sand.u32 %s238, 1
        %s530 = smul.addr %s529, 12
        %s531 = scalar_lea.vmem [#allocation14], %s530
        %p532 = scmp.lt.s32.totalorder %s32, 1
        %s533 = scalar_select %p532, %s32, 1
        %s534 = smul.addr %s533, 6
        %s535 = smul.addr %s534, 8
        %s536 = scalar_lea.vmem %s7, %s535
        %v537 = vld [vmem:[#allocation5] sm:$0xff]
        %v538 = vld [vmem:[#allocation5 + $0x8] sm:$0xff]
        %v539 = vld [vmem:[#allocation5 + $0x10] sm:$0xff]
        %v540 = vld [vmem:[#allocation5 + $0x18] sm:$0xff]
        %v541 = vld [vmem:[#allocation5 + $0x20] sm:$0xff]
        %v542 = vld [vmem:[#allocation5 + $0x28] sm:$0xff]
        %v543 = vld [vmem:[#allocation5 + $0x30] sm:$0xff]
        %v544 = vld [vmem:[#allocation5 + $0x38] sm:$0xff]
        %v545 = vld [vmem:[#allocation5 + $0x40] sm:$0xff]
        %v546 = vld [vmem:[#allocation5 + $0x48] sm:$0xff]
        %v547 = vld [vmem:[#allocation5 + $0x50] sm:$0xff]
        %v548 = vld [vmem:[#allocation5 + $0x58] sm:$0xff]
        %v549 = vld [vmem:[#allocation7] sm:$0x3]
        %v550 = vld [vmem:[%s423] sm:$0xff]
        %v551 = vld [vmem:[%s536] sm:$0x1f]
        %v552 = vld [vmem:[%s536 + $0x8] sm:$0x1f]
        %v553 = vld [vmem:[%s536 + $0x10] sm:$0x1f]
        %v554 = vld [vmem:[%s536 + $0x18] sm:$0x1f]
        %v555 = vld [vmem:[%s536 + $0x20] sm:$0x1f]
        %v556 = vld [vmem:[%s536 + $0x28] sm:$0x1f]
        %v557 = vld [vmem:[%s443] sm:$0xff]
        %v558 = vld [vmem:[%s443 + $0x8] sm:$0xff]
        %v559 = vld [vmem:[%s443 + $0x10] sm:$0xff]
        %v560 = vld [vmem:[%s443 + $0x18] sm:$0xff]
        %v561 = vld [vmem:[%s443 + $0x20] sm:$0xff]
        %v562 = vld [vmem:[%s443 + $0x28] sm:$0xff]
        %v563 = vld [vmem:[%s443 + $0x30] sm:$0xff]
        %v564 = vld [vmem:[%s443 + $0x38] sm:$0xff]
        %v565 = vld [vmem:[%s443 + $0x40] sm:$0xff]
        %v566 = vld [vmem:[%s443 + $0x48] sm:$0xff]
        %v567 = vld [vmem:[%s443 + $0x50] sm:$0xff]
        %v568 = vld [vmem:[%s443 + $0x58] sm:$0xff]
        %v569 = vld [vmem:[%s443 + $0x60] sm:$0xff]
        %v570 = vld [vmem:[%s443 + $0x68] sm:$0xff]
        %v571 = vld [vmem:[%s443 + $0x70] sm:$0xff]
        %v572 = vld [vmem:[%s443 + $0x78] sm:$0xff]
        %v573 = vld [vmem:[%s443 + $0x80] sm:$0xff]
        %v574 = vld [vmem:[%s443 + $0x88] sm:$0xff]
        %v575 = vld [vmem:[%s443 + $0x90] sm:$0xff]
        %v576 = vld [vmem:[%s443 + $0x98] sm:$0xff]
        %v577 = vld [vmem:[%s443 + $0xa0] sm:$0xff]
        %v578 = vld [vmem:[%s443 + $0xa8] sm:$0xff]
        %v579 = vld [vmem:[%s443 + $0xb0] sm:$0xff]
        %v580 = vld [vmem:[%s443 + $0xb8] sm:$0xff]
        %v581 = vld [vmem:[%s443 + $0xc0] sm:$0xff]
        %v582 = vld [vmem:[%s443 + $0xc8] sm:$0xff]
        %v583 = vld [vmem:[%s443 + $0xd0] sm:$0xff]
        %v584 = vld [vmem:[%s443 + $0xd8] sm:$0xff]
        %v585 = vld [vmem:[%s443 + $0xe0] sm:$0xff]
        %v586 = vld [vmem:[%s443 + $0xe8] sm:$0xff]
        %v587 = vld [vmem:[%s443 + $0xf0] sm:$0xff]
        %v588 = vld [vmem:[%s443 + $0xf8] sm:$0xff]
        %v589 = vld [vmem:[%s443 + $0x100] sm:$0xff]
        %v590 = vld [vmem:[%s443 + $0x108] sm:$0xff]
        %v591 = vld [vmem:[%s443 + $0x110] sm:$0xff]
        %v592 = vld [vmem:[%s443 + $0x118] sm:$0xff]
        %v593 = vld [vmem:[%s443 + $0x120] sm:$0xff]
        %v594 = vld [vmem:[%s443 + $0x128] sm:$0xff]
        %v595 = vld [vmem:[%s443 + $0x130] sm:$0xff]
        %v596 = vld [vmem:[%s443 + $0x138] sm:$0xff]
        %v597 = vld [vmem:[%s443 + $0x140] sm:$0xff]
        %v598 = vld [vmem:[%s443 + $0x148] sm:$0xff]
        %v599 = vld [vmem:[%s443 + $0x150] sm:$0xff]
        %v600 = vld [vmem:[%s443 + $0x158] sm:$0xff]
        %v601 = vld [vmem:[%s443 + $0x160] sm:$0xff]
        %v602 = vld [vmem:[%s443 + $0x168] sm:$0xff]
        %v603 = vld [vmem:[%s443 + $0x170] sm:$0xff]
        %v604 = vld [vmem:[%s443 + $0x178] sm:$0xff]
        %v605 = vld [vmem:[%s443 + $0x180] sm:$0xff]
        %v606 = vld [vmem:[%s443 + $0x188] sm:$0xff]
        %v607 = vld [vmem:[%s443 + $0x190] sm:$0xff]
        %v608 = vld [vmem:[%s443 + $0x198] sm:$0xff]
        %v609 = vld [vmem:[%s443 + $0x1a0] sm:$0xff]
        %v610 = vld [vmem:[%s443 + $0x1a8] sm:$0xff]
        %v611 = vld [vmem:[%s443 + $0x1b0] sm:$0xff]
        %v612 = vld [vmem:[%s443 + $0x1b8] sm:$0xff]
        %v613 = vld [vmem:[%s443 + $0x1c0] sm:$0xff]
        %v614 = vld [vmem:[%s443 + $0x1c8] sm:$0xff]
        %v615 = vld [vmem:[%s443 + $0x1d0] sm:$0xff]
        %v616 = vld [vmem:[%s443 + $0x1d8] sm:$0xff]
        %v617 = vld [vmem:[%s443 + $0x1e0] sm:$0xff]
        %v618 = vld [vmem:[%s443 + $0x1e8] sm:$0xff]
        %v619 = vld [vmem:[%s443 + $0x1f0] sm:$0xff]
        %v620 = vld [vmem:[%s443 + $0x1f8] sm:$0xff]
        %v621 = vld [vmem:[%s443 + $0x200] sm:$0xff]
        %v622 = vld [vmem:[%s443 + $0x208] sm:$0xff]
        %v623 = vld [vmem:[%s443 + $0x210] sm:$0xff]
        %v624 = vld [vmem:[%s443 + $0x218] sm:$0xff]
        %v625 = vld [vmem:[%s443 + $0x220] sm:$0xff]
        %v626 = vld [vmem:[%s443 + $0x228] sm:$0xff]
        %v627 = vld [vmem:[%s443 + $0x230] sm:$0xff]
        %v628 = vld [vmem:[%s443 + $0x238] sm:$0xff]
        %v629 = vld [vmem:[%s443 + $0x240] sm:$0xff]
        %v630 = vld [vmem:[%s443 + $0x248] sm:$0xff]
        %v631 = vld [vmem:[%s443 + $0x250] sm:$0xff]
        %v632 = vld [vmem:[%s443 + $0x258] sm:$0xff]
        %v633 = vld [vmem:[%s443 + $0x260] sm:$0xff]
        %v634 = vld [vmem:[%s443 + $0x268] sm:$0xff]
        %v635 = vld [vmem:[%s443 + $0x270] sm:$0xff]
        %v636 = vld [vmem:[%s443 + $0x278] sm:$0xff]
        %v637 = vld [vmem:[%s443 + $0x280] sm:$0xff]
        %v638 = vld [vmem:[%s443 + $0x288] sm:$0xff]
        %v639 = vld [vmem:[%s443 + $0x290] sm:$0xff]
        %v640 = vld [vmem:[%s443 + $0x298] sm:$0xff]
        %v641 = vld [vmem:[%s443 + $0x2a0] sm:$0xff]
        %v642 = vld [vmem:[%s443 + $0x2a8] sm:$0xff]
        %v643 = vld [vmem:[%s443 + $0x2b0] sm:$0xff]
        %v644 = vld [vmem:[%s443 + $0x2b8] sm:$0xff]
        %v645 = vld [vmem:[%s443 + $0x2c0] sm:$0xff]
        %v646 = vld [vmem:[%s443 + $0x2c8] sm:$0xff]
        %v647 = vld [vmem:[%s443 + $0x2d0] sm:$0xff]
        %v648 = vld [vmem:[%s443 + $0x2d8] sm:$0xff]
        %v649 = vld [vmem:[%s443 + $0x2e0] sm:$0xff]
        %v650 = vld [vmem:[%s443 + $0x2e8] sm:$0xff]
        %v651 = vld [vmem:[%s443 + $0x2f0] sm:$0xff]
        %v652 = vld [vmem:[%s443 + $0x2f8] sm:$0xff]
        %v653 = vld [vmem:[%s443 + $0x300] sm:$0xff]
        %v654 = vld [vmem:[%s443 + $0x308] sm:$0xff]
        %v655 = vld [vmem:[%s443 + $0x310] sm:$0xff]
        %v656 = vld [vmem:[%s443 + $0x318] sm:$0xff]
        %v657 = vld [vmem:[%s443 + $0x320] sm:$0xff]
        %v658 = vld [vmem:[%s443 + $0x328] sm:$0xff]
        %v659 = vld [vmem:[%s443 + $0x330] sm:$0xff]
        %v660 = vld [vmem:[%s443 + $0x338] sm:$0xff]
        %v661 = vld [vmem:[%s443 + $0x340] sm:$0xff]
        %v662 = vld [vmem:[%s443 + $0x348] sm:$0xff]
        %v663 = vld [vmem:[%s443 + $0x350] sm:$0xff]
        %v664 = vld [vmem:[%s443 + $0x358] sm:$0xff]
        %v665 = vld [vmem:[%s443 + $0x360] sm:$0xff]
        %v666 = vld [vmem:[%s443 + $0x368] sm:$0xff]
        %v667 = vld [vmem:[%s443 + $0x370] sm:$0xff]
        %v668 = vld [vmem:[%s443 + $0x378] sm:$0xff]
        %v669 = vld [vmem:[%s443 + $0x380] sm:$0xff]
        %v670 = vld [vmem:[%s443 + $0x388] sm:$0xff]
        %v671 = vld [vmem:[%s443 + $0x390] sm:$0xff]
        %v672 = vld [vmem:[%s443 + $0x398] sm:$0xff]
        %v673 = vld [vmem:[%s443 + $0x3a0] sm:$0xff]
        %v674 = vld [vmem:[%s443 + $0x3a8] sm:$0xff]
        %v675 = vld [vmem:[%s443 + $0x3b0] sm:$0xff]
        %v676 = vld [vmem:[%s443 + $0x3b8] sm:$0xff]
        %v677 = vld [vmem:[%s443 + $0x3c0] sm:$0xff]
        %v678 = vld [vmem:[%s443 + $0x3c8] sm:$0xff]
        %v679 = vld [vmem:[%s443 + $0x3d0] sm:$0xff]
        %v680 = vld [vmem:[%s443 + $0x3d8] sm:$0xff]
        %v681 = vld [vmem:[%s443 + $0x3e0] sm:$0xff]
        %v682 = vld [vmem:[%s443 + $0x3e8] sm:$0xff]
        %v683 = vld [vmem:[%s443 + $0x3f0] sm:$0xff]
        %v684 = vld [vmem:[%s443 + $0x3f8] sm:$0xff]
        %v685 = vld [vmem:[%s443 + $0x400] sm:$0xff]
        %v686 = vld [vmem:[%s443 + $0x408] sm:$0xff]
        %v687 = vld [vmem:[%s443 + $0x410] sm:$0xff]
        %v688 = vld [vmem:[%s443 + $0x418] sm:$0xff]
        %v689 = vld [vmem:[%s443 + $0x420] sm:$0xff]
        %v690 = vld [vmem:[%s443 + $0x428] sm:$0xff]
        %v691 = vld [vmem:[%s443 + $0x430] sm:$0xff]
        %v692 = vld [vmem:[%s443 + $0x438] sm:$0xff]
        %v693 = vld [vmem:[%s443 + $0x440] sm:$0xff]
        %v694 = vld [vmem:[%s443 + $0x448] sm:$0xff]
        %v695 = vld [vmem:[%s443 + $0x450] sm:$0xff]
        %v696 = vld [vmem:[%s443 + $0x458] sm:$0xff]
        %v697 = vld [vmem:[%s443 + $0x460] sm:$0xff]
        %v698 = vld [vmem:[%s443 + $0x468] sm:$0xff]
        %v699 = vld [vmem:[%s443 + $0x470] sm:$0xff]
        %v700 = vld [vmem:[%s443 + $0x478] sm:$0xff]
        %v701 = vld [vmem:[%s443 + $0x480] sm:$0xff]
        %v702 = vld [vmem:[%s443 + $0x488] sm:$0xff]
        %v703 = vld [vmem:[%s443 + $0x490] sm:$0xff]
        %v704 = vld [vmem:[%s443 + $0x498] sm:$0xff]
        %v705 = vld [vmem:[%s443 + $0x4a0] sm:$0xff]
        %v706 = vld [vmem:[%s443 + $0x4a8] sm:$0xff]
        %v707 = vld [vmem:[%s443 + $0x4b0] sm:$0xff]
        %v708 = vld [vmem:[%s443 + $0x4b8] sm:$0xff]
        %v709 = vld [vmem:[%s443 + $0x4c0] sm:$0xff]
        %v710 = vld [vmem:[%s443 + $0x4c8] sm:$0xff]
        %v711 = vld [vmem:[%s443 + $0x4d0] sm:$0xff]
        %v712 = vld [vmem:[%s443 + $0x4d8] sm:$0xff]
        %v713 = vld [vmem:[%s443 + $0x4e0] sm:$0xff]
        %v714 = vld [vmem:[%s443 + $0x4e8] sm:$0xff]
        %v715 = vld [vmem:[%s443 + $0x4f0] sm:$0xff]
        %v716 = vld [vmem:[%s443 + $0x4f8] sm:$0xff]
        %v717 = vld [vmem:[%s443 + $0x500] sm:$0xff]
        %v718 = vld [vmem:[%s443 + $0x508] sm:$0xff]
        %v719 = vld [vmem:[%s443 + $0x510] sm:$0xff]
        %v720 = vld [vmem:[%s443 + $0x518] sm:$0xff]
        %v721 = vld [vmem:[%s443 + $0x520] sm:$0xff]
        %v722 = vld [vmem:[%s443 + $0x528] sm:$0xff]
        %v723 = vld [vmem:[%s443 + $0x530] sm:$0xff]
        %v724 = vld [vmem:[%s443 + $0x538] sm:$0xff]
        %v725 = vld [vmem:[%s443 + $0x540] sm:$0xff]
        %v726 = vld [vmem:[%s443 + $0x548] sm:$0xff]
        %v727 = vld [vmem:[%s443 + $0x550] sm:$0xff]
        %v728 = vld [vmem:[%s443 + $0x558] sm:$0xff]
        %v729 = vld [vmem:[%s443 + $0x560] sm:$0xff]
        %v730 = vld [vmem:[%s443 + $0x568] sm:$0xff]
        %v731 = vld [vmem:[%s443 + $0x570] sm:$0xff]
        %v732 = vld [vmem:[%s443 + $0x578] sm:$0xff]
        %v733 = vld [vmem:[%s443 + $0x580] sm:$0xff]
        %v734 = vld [vmem:[%s443 + $0x588] sm:$0xff]
        %v735 = vld [vmem:[%s443 + $0x590] sm:$0xff]
        %v736 = vld [vmem:[%s443 + $0x598] sm:$0xff]
        %v737 = vld [vmem:[%s443 + $0x5a0] sm:$0xff]
        %v738 = vld [vmem:[%s443 + $0x5a8] sm:$0xff]
        %v739 = vld [vmem:[%s443 + $0x5b0] sm:$0xff]
        %v740 = vld [vmem:[%s443 + $0x5b8] sm:$0xff]
        %v741 = vld [vmem:[%s443 + $0x5c0] sm:$0xff]
        %v742 = vld [vmem:[%s443 + $0x5c8] sm:$0xff]
        %v743 = vld [vmem:[%s443 + $0x5d0] sm:$0xff]
        %v744 = vld [vmem:[%s443 + $0x5d8] sm:$0xff]
        %v745 = vld [vmem:[%s443 + $0x5e0] sm:$0xff]
        %v746 = vld [vmem:[%s443 + $0x5e8] sm:$0xff]
        %v747 = vld [vmem:[%s443 + $0x5f0] sm:$0xff]
        %v748 = vld [vmem:[%s443 + $0x5f8] sm:$0xff]
        %750 = vst [vmem:[#allocation1] ss:$4 sm:$0xff] %v550
        %v751 = vld.sshfl [vmem:[#allocation1] sm:$0xff pattern:$0x73625140]
        %v752 = vld.sshfl [vmem:[#allocation1 + $0x8] sm:$0xff pattern:$0x73625140]
        %v753 = vld.sshfl [vmem:[#allocation1 + $0x10] sm:$0xff pattern:$0x73625140]
        %v754 = vld.sshfl [vmem:[#allocation1 + $0x18] sm:$0xff pattern:$0x73625140]
        %v759 = vpack.c.bf16 %v751, %v751
        %v760 = vpack.c.bf16 %v752, %v752
        %v761 = vpack.c.bf16 %v753, %v753
        %v762 = vpack.c.bf16 %v754, %v754
        %v763 = vperm.slane %v551, 0
        %v764 = vperm.slane %v552, 0
        %v765 = vperm.slane %v553, 0
        %v766 = vperm.slane %v554, 0
        %v767 = vperm.slane %v555, 0
        %v768 = vperm.slane %v556, 0
        %v961 = vunpack.c.l.b16 %v557
        %v962 = vunpack.c.h.b16 %v557
        %v963 = vunpack.c.l.b16 %v558
        %v964 = vunpack.c.h.b16 %v558
        %v965 = vunpack.c.l.b16 %v559
        %v966 = vunpack.c.h.b16 %v559
        %v967 = vunpack.c.l.b16 %v560
        %v968 = vunpack.c.h.b16 %v560
        %v969 = vunpack.c.l.b16 %v561
        %v970 = vunpack.c.h.b16 %v561
        %v971 = vunpack.c.l.b16 %v562
        %v972 = vunpack.c.h.b16 %v562
        %v973 = vunpack.c.l.b16 %v563
        %v974 = vunpack.c.h.b16 %v563
        %v975 = vunpack.c.l.b16 %v564
        %v976 = vunpack.c.h.b16 %v564
        %v977 = vunpack.c.l.b16 %v565
        %v978 = vunpack.c.h.b16 %v565
        %v979 = vunpack.c.l.b16 %v566
        %v980 = vunpack.c.h.b16 %v566
        %v981 = vunpack.c.l.b16 %v567
        %v982 = vunpack.c.h.b16 %v567
        %v983 = vunpack.c.l.b16 %v568
        %v984 = vunpack.c.h.b16 %v568
        %v985 = vunpack.c.l.b16 %v569
        %v986 = vunpack.c.h.b16 %v569
        %v987 = vunpack.c.l.b16 %v570
        %v988 = vunpack.c.h.b16 %v570
        %v989 = vunpack.c.l.b16 %v571
        %v990 = vunpack.c.h.b16 %v571
        %v991 = vunpack.c.l.b16 %v572
        %v992 = vunpack.c.h.b16 %v572
        %v993 = vunpack.c.l.b16 %v573
        %v994 = vunpack.c.h.b16 %v573
        %v995 = vunpack.c.l.b16 %v574
        %v996 = vunpack.c.h.b16 %v574
        %v997 = vunpack.c.l.b16 %v575
        %v998 = vunpack.c.h.b16 %v575
        %v999 = vunpack.c.l.b16 %v576
        %v1000 = vunpack.c.h.b16 %v576
        %v1001 = vunpack.c.l.b16 %v577
        %v1002 = vunpack.c.h.b16 %v577
        %v1003 = vunpack.c.l.b16 %v578
        %v1004 = vunpack.c.h.b16 %v578
        %v1005 = vunpack.c.l.b16 %v579
        %v1006 = vunpack.c.h.b16 %v579
        %v1007 = vunpack.c.l.b16 %v580
        %v1008 = vunpack.c.h.b16 %v580
        %v1009 = vunpack.c.l.b16 %v581
        %v1010 = vunpack.c.h.b16 %v581
        %v1011 = vunpack.c.l.b16 %v582
        %v1012 = vunpack.c.h.b16 %v582
        %v1013 = vunpack.c.l.b16 %v583
        %v1014 = vunpack.c.h.b16 %v583
        %v1015 = vunpack.c.l.b16 %v584
        %v1016 = vunpack.c.h.b16 %v584
        %v1017 = vunpack.c.l.b16 %v585
        %v1018 = vunpack.c.h.b16 %v585
        %v1019 = vunpack.c.l.b16 %v586
        %v1020 = vunpack.c.h.b16 %v586
        %v1021 = vunpack.c.l.b16 %v587
        %v1022 = vunpack.c.h.b16 %v587
        %v1023 = vunpack.c.l.b16 %v588
        %v1024 = vunpack.c.h.b16 %v588
        %v1025 = vunpack.c.l.b16 %v589
        %v1026 = vunpack.c.h.b16 %v589
        %v1027 = vunpack.c.l.b16 %v590
        %v1028 = vunpack.c.h.b16 %v590
        %v1029 = vunpack.c.l.b16 %v591
        %v1030 = vunpack.c.h.b16 %v591
        %v1031 = vunpack.c.l.b16 %v592
        %v1032 = vunpack.c.h.b16 %v592
        %v1033 = vunpack.c.l.b16 %v593
        %v1034 = vunpack.c.h.b16 %v593
        %v1035 = vunpack.c.l.b16 %v594
        %v1036 = vunpack.c.h.b16 %v594
        %v1037 = vunpack.c.l.b16 %v595
        %v1038 = vunpack.c.h.b16 %v595
        %v1039 = vunpack.c.l.b16 %v596
        %v1040 = vunpack.c.h.b16 %v596
        %v1041 = vunpack.c.l.b16 %v597
        %v1042 = vunpack.c.h.b16 %v597
        %v1043 = vunpack.c.l.b16 %v598
        %v1044 = vunpack.c.h.b16 %v598
        %v1045 = vunpack.c.l.b16 %v599
        %v1046 = vunpack.c.h.b16 %v599
        %v1047 = vunpack.c.l.b16 %v600
        %v1048 = vunpack.c.h.b16 %v600
        %v1049 = vunpack.c.l.b16 %v601
        %v1050 = vunpack.c.h.b16 %v601
        %v1051 = vunpack.c.l.b16 %v602
        %v1052 = vunpack.c.h.b16 %v602
        %v1053 = vunpack.c.l.b16 %v603
        %v1054 = vunpack.c.h.b16 %v603
        %v1055 = vunpack.c.l.b16 %v604
        %v1056 = vunpack.c.h.b16 %v604
        %v1057 = vunpack.c.l.b16 %v605
        %v1058 = vunpack.c.h.b16 %v605
        %v1059 = vunpack.c.l.b16 %v606
        %v1060 = vunpack.c.h.b16 %v606
        %v1061 = vunpack.c.l.b16 %v607
        %v1062 = vunpack.c.h.b16 %v607
        %v1063 = vunpack.c.l.b16 %v608
        %v1064 = vunpack.c.h.b16 %v608
        %v1065 = vunpack.c.l.b16 %v609
        %v1066 = vunpack.c.h.b16 %v609
        %v1067 = vunpack.c.l.b16 %v610
        %v1068 = vunpack.c.h.b16 %v610
        %v1069 = vunpack.c.l.b16 %v611
        %v1070 = vunpack.c.h.b16 %v611
        %v1071 = vunpack.c.l.b16 %v612
        %v1072 = vunpack.c.h.b16 %v612
        %v1073 = vunpack.c.l.b16 %v613
        %v1074 = vunpack.c.h.b16 %v613
        %v1075 = vunpack.c.l.b16 %v614
        %v1076 = vunpack.c.h.b16 %v614
        %v1077 = vunpack.c.l.b16 %v615
        %v1078 = vunpack.c.h.b16 %v615
        %v1079 = vunpack.c.l.b16 %v616
        %v1080 = vunpack.c.h.b16 %v616
        %v1081 = vunpack.c.l.b16 %v617
        %v1082 = vunpack.c.h.b16 %v617
        %v1083 = vunpack.c.l.b16 %v618
        %v1084 = vunpack.c.h.b16 %v618
        %v1085 = vunpack.c.l.b16 %v619
        %v1086 = vunpack.c.h.b16 %v619
        %v1087 = vunpack.c.l.b16 %v620
        %v1088 = vunpack.c.h.b16 %v620
        %v1089 = vunpack.c.l.b16 %v621
        %v1090 = vunpack.c.h.b16 %v621
        %v1091 = vunpack.c.l.b16 %v622
        %v1092 = vunpack.c.h.b16 %v622
        %v1093 = vunpack.c.l.b16 %v623
        %v1094 = vunpack.c.h.b16 %v623
        %v1095 = vunpack.c.l.b16 %v624
        %v1096 = vunpack.c.h.b16 %v624
        %v1097 = vunpack.c.l.b16 %v625
        %v1098 = vunpack.c.h.b16 %v625
        %v1099 = vunpack.c.l.b16 %v626
        %v1100 = vunpack.c.h.b16 %v626
        %v1101 = vunpack.c.l.b16 %v627
        %v1102 = vunpack.c.h.b16 %v627
        %v1103 = vunpack.c.l.b16 %v628
        %v1104 = vunpack.c.h.b16 %v628
        %v1105 = vunpack.c.l.b16 %v629
        %v1106 = vunpack.c.h.b16 %v629
        %v1107 = vunpack.c.l.b16 %v630
        %v1108 = vunpack.c.h.b16 %v630
        %v1109 = vunpack.c.l.b16 %v631
        %v1110 = vunpack.c.h.b16 %v631
        %v1111 = vunpack.c.l.b16 %v632
        %v1112 = vunpack.c.h.b16 %v632
        %v1113 = vunpack.c.l.b16 %v633
        %v1114 = vunpack.c.h.b16 %v633
        %v1115 = vunpack.c.l.b16 %v634
        %v1116 = vunpack.c.h.b16 %v634
        %v1117 = vunpack.c.l.b16 %v635
        %v1118 = vunpack.c.h.b16 %v635
        %v1119 = vunpack.c.l.b16 %v636
        %v1120 = vunpack.c.h.b16 %v636
        %v1121 = vunpack.c.l.b16 %v637
        %v1122 = vunpack.c.h.b16 %v637
        %v1123 = vunpack.c.l.b16 %v638
        %v1124 = vunpack.c.h.b16 %v638
        %v1125 = vunpack.c.l.b16 %v639
        %v1126 = vunpack.c.h.b16 %v639
        %v1127 = vunpack.c.l.b16 %v640
        %v1128 = vunpack.c.h.b16 %v640
        %v1129 = vunpack.c.l.b16 %v641
        %v1130 = vunpack.c.h.b16 %v641
        %v1131 = vunpack.c.l.b16 %v642
        %v1132 = vunpack.c.h.b16 %v642
        %v1133 = vunpack.c.l.b16 %v643
        %v1134 = vunpack.c.h.b16 %v643
        %v1135 = vunpack.c.l.b16 %v644
        %v1136 = vunpack.c.h.b16 %v644
        %v1137 = vunpack.c.l.b16 %v645
        %v1138 = vunpack.c.h.b16 %v645
        %v1139 = vunpack.c.l.b16 %v646
        %v1140 = vunpack.c.h.b16 %v646
        %v1141 = vunpack.c.l.b16 %v647
        %v1142 = vunpack.c.h.b16 %v647
        %v1143 = vunpack.c.l.b16 %v648
        %v1144 = vunpack.c.h.b16 %v648
        %v1145 = vunpack.c.l.b16 %v649
        %v1146 = vunpack.c.h.b16 %v649
        %v1147 = vunpack.c.l.b16 %v650
        %v1148 = vunpack.c.h.b16 %v650
        %v1149 = vunpack.c.l.b16 %v651
        %v1150 = vunpack.c.h.b16 %v651
        %v1151 = vunpack.c.l.b16 %v652
        %v1152 = vunpack.c.h.b16 %v652
        %v1153 = vunpack.c.l.b16 %v653
        %v1154 = vunpack.c.h.b16 %v653
        %v1155 = vunpack.c.l.b16 %v654
        %v1156 = vunpack.c.h.b16 %v654
        %v1157 = vunpack.c.l.b16 %v655
        %v1158 = vunpack.c.h.b16 %v655
        %v1159 = vunpack.c.l.b16 %v656
        %v1160 = vunpack.c.h.b16 %v656
        %v1161 = vunpack.c.l.b16 %v657
        %v1162 = vunpack.c.h.b16 %v657
        %v1163 = vunpack.c.l.b16 %v658
        %v1164 = vunpack.c.h.b16 %v658
        %v1165 = vunpack.c.l.b16 %v659
        %v1166 = vunpack.c.h.b16 %v659
        %v1167 = vunpack.c.l.b16 %v660
        %v1168 = vunpack.c.h.b16 %v660
        %v1169 = vunpack.c.l.b16 %v661
        %v1170 = vunpack.c.h.b16 %v661
        %v1171 = vunpack.c.l.b16 %v662
        %v1172 = vunpack.c.h.b16 %v662
        %v1173 = vunpack.c.l.b16 %v663
        %v1174 = vunpack.c.h.b16 %v663
        %v1175 = vunpack.c.l.b16 %v664
        %v1176 = vunpack.c.h.b16 %v664
        %v1177 = vunpack.c.l.b16 %v665
        %v1178 = vunpack.c.h.b16 %v665
        %v1179 = vunpack.c.l.b16 %v666
        %v1180 = vunpack.c.h.b16 %v666
        %v1181 = vunpack.c.l.b16 %v667
        %v1182 = vunpack.c.h.b16 %v667
        %v1183 = vunpack.c.l.b16 %v668
        %v1184 = vunpack.c.h.b16 %v668
        %v1185 = vunpack.c.l.b16 %v669
        %v1186 = vunpack.c.h.b16 %v669
        %v1187 = vunpack.c.l.b16 %v670
        %v1188 = vunpack.c.h.b16 %v670
        %v1189 = vunpack.c.l.b16 %v671
        %v1190 = vunpack.c.h.b16 %v671
        %v1191 = vunpack.c.l.b16 %v672
        %v1192 = vunpack.c.h.b16 %v672
        %v1193 = vunpack.c.l.b16 %v673
        %v1194 = vunpack.c.h.b16 %v673
        %v1195 = vunpack.c.l.b16 %v674
        %v1196 = vunpack.c.h.b16 %v674
        %v1197 = vunpack.c.l.b16 %v675
        %v1198 = vunpack.c.h.b16 %v675
        %v1199 = vunpack.c.l.b16 %v676
        %v1200 = vunpack.c.h.b16 %v676
        %v1201 = vunpack.c.l.b16 %v677
        %v1202 = vunpack.c.h.b16 %v677
        %v1203 = vunpack.c.l.b16 %v678
        %v1204 = vunpack.c.h.b16 %v678
        %v1205 = vunpack.c.l.b16 %v679
        %v1206 = vunpack.c.h.b16 %v679
        %v1207 = vunpack.c.l.b16 %v680
        %v1208 = vunpack.c.h.b16 %v680
        %v1209 = vunpack.c.l.b16 %v681
        %v1210 = vunpack.c.h.b16 %v681
        %v1211 = vunpack.c.l.b16 %v682
        %v1212 = vunpack.c.h.b16 %v682
        %v1213 = vunpack.c.l.b16 %v683
        %v1214 = vunpack.c.h.b16 %v683
        %v1215 = vunpack.c.l.b16 %v684
        %v1216 = vunpack.c.h.b16 %v684
        %v1217 = vunpack.c.l.b16 %v685
        %v1218 = vunpack.c.h.b16 %v685
        %v1219 = vunpack.c.l.b16 %v686
        %v1220 = vunpack.c.h.b16 %v686
        %v1221 = vunpack.c.l.b16 %v687
        %v1222 = vunpack.c.h.b16 %v687
        %v1223 = vunpack.c.l.b16 %v688
        %v1224 = vunpack.c.h.b16 %v688
        %v1225 = vunpack.c.l.b16 %v689
        %v1226 = vunpack.c.h.b16 %v689
        %v1227 = vunpack.c.l.b16 %v690
        %v1228 = vunpack.c.h.b16 %v690
        %v1229 = vunpack.c.l.b16 %v691
        %v1230 = vunpack.c.h.b16 %v691
        %v1231 = vunpack.c.l.b16 %v692
        %v1232 = vunpack.c.h.b16 %v692
        %v1233 = vunpack.c.l.b16 %v693
        %v1234 = vunpack.c.h.b16 %v693
        %v1235 = vunpack.c.l.b16 %v694
        %v1236 = vunpack.c.h.b16 %v694
        %v1237 = vunpack.c.l.b16 %v695
        %v1238 = vunpack.c.h.b16 %v695
        %v1239 = vunpack.c.l.b16 %v696
        %v1240 = vunpack.c.h.b16 %v696
        %v1241 = vunpack.c.l.b16 %v697
        %v1242 = vunpack.c.h.b16 %v697
        %v1243 = vunpack.c.l.b16 %v698
        %v1244 = vunpack.c.h.b16 %v698
        %v1245 = vunpack.c.l.b16 %v699
        %v1246 = vunpack.c.h.b16 %v699
        %v1247 = vunpack.c.l.b16 %v700
        %v1248 = vunpack.c.h.b16 %v700
        %v1249 = vunpack.c.l.b16 %v701
        %v1250 = vunpack.c.h.b16 %v701
        %v1251 = vunpack.c.l.b16 %v702
        %v1252 = vunpack.c.h.b16 %v702
        %v1253 = vunpack.c.l.b16 %v703
        %v1254 = vunpack.c.h.b16 %v703
        %v1255 = vunpack.c.l.b16 %v704
        %v1256 = vunpack.c.h.b16 %v704
        %v1257 = vunpack.c.l.b16 %v705
        %v1258 = vunpack.c.h.b16 %v705
        %v1259 = vunpack.c.l.b16 %v706
        %v1260 = vunpack.c.h.b16 %v706
        %v1261 = vunpack.c.l.b16 %v707
        %v1262 = vunpack.c.h.b16 %v707
        %v1263 = vunpack.c.l.b16 %v708
        %v1264 = vunpack.c.h.b16 %v708
        %v1265 = vunpack.c.l.b16 %v709
        %v1266 = vunpack.c.h.b16 %v709
        %v1267 = vunpack.c.l.b16 %v710
        %v1268 = vunpack.c.h.b16 %v710
        %v1269 = vunpack.c.l.b16 %v711
        %v1270 = vunpack.c.h.b16 %v711
        %v1271 = vunpack.c.l.b16 %v712
        %v1272 = vunpack.c.h.b16 %v712
        %v1273 = vunpack.c.l.b16 %v713
        %v1274 = vunpack.c.h.b16 %v713
        %v1275 = vunpack.c.l.b16 %v714
        %v1276 = vunpack.c.h.b16 %v714
        %v1277 = vunpack.c.l.b16 %v715
        %v1278 = vunpack.c.h.b16 %v715
        %v1279 = vunpack.c.l.b16 %v716
        %v1280 = vunpack.c.h.b16 %v716
        %v1281 = vunpack.c.l.b16 %v717
        %v1282 = vunpack.c.h.b16 %v717
        %v1283 = vunpack.c.l.b16 %v718
        %v1284 = vunpack.c.h.b16 %v718
        %v1285 = vunpack.c.l.b16 %v719
        %v1286 = vunpack.c.h.b16 %v719
        %v1287 = vunpack.c.l.b16 %v720
        %v1288 = vunpack.c.h.b16 %v720
        %v1289 = vunpack.c.l.b16 %v721
        %v1290 = vunpack.c.h.b16 %v721
        %v1291 = vunpack.c.l.b16 %v722
        %v1292 = vunpack.c.h.b16 %v722
        %v1293 = vunpack.c.l.b16 %v723
        %v1294 = vunpack.c.h.b16 %v723
        %v1295 = vunpack.c.l.b16 %v724
        %v1296 = vunpack.c.h.b16 %v724
        %v1297 = vunpack.c.l.b16 %v725
        %v1298 = vunpack.c.h.b16 %v725
        %v1299 = vunpack.c.l.b16 %v726
        %v1300 = vunpack.c.h.b16 %v726
        %v1301 = vunpack.c.l.b16 %v727
        %v1302 = vunpack.c.h.b16 %v727
        %v1303 = vunpack.c.l.b16 %v728
        %v1304 = vunpack.c.h.b16 %v728
        %v1305 = vunpack.c.l.b16 %v729
        %v1306 = vunpack.c.h.b16 %v729
        %v1307 = vunpack.c.l.b16 %v730
        %v1308 = vunpack.c.h.b16 %v730
        %v1309 = vunpack.c.l.b16 %v731
        %v1310 = vunpack.c.h.b16 %v731
        %v1311 = vunpack.c.l.b16 %v732
        %v1312 = vunpack.c.h.b16 %v732
        %v1313 = vunpack.c.l.b16 %v733
        %v1314 = vunpack.c.h.b16 %v733
        %v1315 = vunpack.c.l.b16 %v734
        %v1316 = vunpack.c.h.b16 %v734
        %v1317 = vunpack.c.l.b16 %v735
        %v1318 = vunpack.c.h.b16 %v735
        %v1319 = vunpack.c.l.b16 %v736
        %v1320 = vunpack.c.h.b16 %v736
        %v1321 = vunpack.c.l.b16 %v737
        %v1322 = vunpack.c.h.b16 %v737
        %v1323 = vunpack.c.l.b16 %v738
        %v1324 = vunpack.c.h.b16 %v738
        %v1325 = vunpack.c.l.b16 %v739
        %v1326 = vunpack.c.h.b16 %v739
        %v1327 = vunpack.c.l.b16 %v740
        %v1328 = vunpack.c.h.b16 %v740
        %v1329 = vunpack.c.l.b16 %v741
        %v1330 = vunpack.c.h.b16 %v741
        %v1331 = vunpack.c.l.b16 %v742
        %v1332 = vunpack.c.h.b16 %v742
        %v1333 = vunpack.c.l.b16 %v743
        %v1334 = vunpack.c.h.b16 %v743
        %v1335 = vunpack.c.l.b16 %v744
        %v1336 = vunpack.c.h.b16 %v744
        %v1337 = vunpack.c.l.b16 %v745
        %v1338 = vunpack.c.h.b16 %v745
        %v1339 = vunpack.c.l.b16 %v746
        %v1340 = vunpack.c.h.b16 %v746
        %v1341 = vunpack.c.l.b16 %v747
        %v1342 = vunpack.c.h.b16 %v747
        %v1343 = vunpack.c.l.b16 %v748
        %v1344 = vunpack.c.h.b16 %v748
        %v1345 = vpack.c.b16 %v967, %v961
        %v1346 = vpack.c.b16 %v968, %v962
        %v1347 = vpack.c.b16 %v969, %v963
        %v1348 = vpack.c.b16 %v970, %v964
        %v1349 = vpack.c.b16 %v971, %v965
        %v1350 = vpack.c.b16 %v972, %v966
        %v1351 = vpack.c.b16 %v979, %v973
        %v1352 = vpack.c.b16 %v980, %v974
        %v1353 = vpack.c.b16 %v981, %v975
        %v1354 = vpack.c.b16 %v982, %v976
        %v1355 = vpack.c.b16 %v983, %v977
        %v1356 = vpack.c.b16 %v984, %v978
        %v1357 = vpack.c.b16 %v991, %v985
        %v1358 = vpack.c.b16 %v992, %v986
        %v1359 = vpack.c.b16 %v993, %v987
        %v1360 = vpack.c.b16 %v994, %v988
        %v1361 = vpack.c.b16 %v995, %v989
        %v1362 = vpack.c.b16 %v996, %v990
        %v1363 = vpack.c.b16 %v1003, %v997
        %v1364 = vpack.c.b16 %v1004, %v998
        %v1365 = vpack.c.b16 %v1005, %v999
        %v1366 = vpack.c.b16 %v1006, %v1000
        %v1367 = vpack.c.b16 %v1007, %v1001
        %v1368 = vpack.c.b16 %v1008, %v1002
        %v1369 = vpack.c.b16 %v1015, %v1009
        %v1370 = vpack.c.b16 %v1016, %v1010
        %v1371 = vpack.c.b16 %v1017, %v1011
        %v1372 = vpack.c.b16 %v1018, %v1012
        %v1373 = vpack.c.b16 %v1019, %v1013
        %v1374 = vpack.c.b16 %v1020, %v1014
        %v1375 = vpack.c.b16 %v1027, %v1021
        %v1376 = vpack.c.b16 %v1028, %v1022
        %v1377 = vpack.c.b16 %v1029, %v1023
        %v1378 = vpack.c.b16 %v1030, %v1024
        %v1379 = vpack.c.b16 %v1031, %v1025
        %v1380 = vpack.c.b16 %v1032, %v1026
        %v1381 = vpack.c.b16 %v1039, %v1033
        %v1382 = vpack.c.b16 %v1040, %v1034
        %v1383 = vpack.c.b16 %v1041, %v1035
        %v1384 = vpack.c.b16 %v1042, %v1036
        %v1385 = vpack.c.b16 %v1043, %v1037
        %v1386 = vpack.c.b16 %v1044, %v1038
        %v1387 = vpack.c.b16 %v1051, %v1045
        %v1388 = vpack.c.b16 %v1052, %v1046
        %v1389 = vpack.c.b16 %v1053, %v1047
        %v1390 = vpack.c.b16 %v1054, %v1048
        %v1391 = vpack.c.b16 %v1055, %v1049
        %v1392 = vpack.c.b16 %v1056, %v1050
        %v1393 = vpack.c.b16 %v1063, %v1057
        %v1394 = vpack.c.b16 %v1064, %v1058
        %v1395 = vpack.c.b16 %v1065, %v1059
        %v1396 = vpack.c.b16 %v1066, %v1060
        %v1397 = vpack.c.b16 %v1067, %v1061
        %v1398 = vpack.c.b16 %v1068, %v1062
        %v1399 = vpack.c.b16 %v1075, %v1069
        %v1400 = vpack.c.b16 %v1076, %v1070
        %v1401 = vpack.c.b16 %v1077, %v1071
        %v1402 = vpack.c.b16 %v1078, %v1072
        %v1403 = vpack.c.b16 %v1079, %v1073
        %v1404 = vpack.c.b16 %v1080, %v1074
        %v1405 = vpack.c.b16 %v1087, %v1081
        %v1406 = vpack.c.b16 %v1088, %v1082
        %v1407 = vpack.c.b16 %v1089, %v1083
        %v1408 = vpack.c.b16 %v1090, %v1084
        %v1409 = vpack.c.b16 %v1091, %v1085
        %v1410 = vpack.c.b16 %v1092, %v1086
        %v1411 = vpack.c.b16 %v1099, %v1093
        %v1412 = vpack.c.b16 %v1100, %v1094
        %v1413 = vpack.c.b16 %v1101, %v1095
        %v1414 = vpack.c.b16 %v1102, %v1096
        %v1415 = vpack.c.b16 %v1103, %v1097
        %v1416 = vpack.c.b16 %v1104, %v1098
        %v1417 = vpack.c.b16 %v1111, %v1105
        %v1418 = vpack.c.b16 %v1112, %v1106
        %v1419 = vpack.c.b16 %v1113, %v1107
        %v1420 = vpack.c.b16 %v1114, %v1108
        %v1421 = vpack.c.b16 %v1115, %v1109
        %v1422 = vpack.c.b16 %v1116, %v1110
        %v1423 = vpack.c.b16 %v1123, %v1117
        %v1424 = vpack.c.b16 %v1124, %v1118
        %v1425 = vpack.c.b16 %v1125, %v1119
        %v1426 = vpack.c.b16 %v1126, %v1120
        %v1427 = vpack.c.b16 %v1127, %v1121
        %v1428 = vpack.c.b16 %v1128, %v1122
        %v1429 = vpack.c.b16 %v1135, %v1129
        %v1430 = vpack.c.b16 %v1136, %v1130
        %v1431 = vpack.c.b16 %v1137, %v1131
        %v1432 = vpack.c.b16 %v1138, %v1132
        %v1433 = vpack.c.b16 %v1139, %v1133
        %v1434 = vpack.c.b16 %v1140, %v1134
        %v1435 = vpack.c.b16 %v1147, %v1141
        %v1436 = vpack.c.b16 %v1148, %v1142
        %v1437 = vpack.c.b16 %v1149, %v1143
        %v1438 = vpack.c.b16 %v1150, %v1144
        %v1439 = vpack.c.b16 %v1151, %v1145
        %v1440 = vpack.c.b16 %v1152, %v1146
        %v1441 = vpack.c.b16 %v1159, %v1153
        %v1442 = vpack.c.b16 %v1160, %v1154
        %v1443 = vpack.c.b16 %v1161, %v1155
        %v1444 = vpack.c.b16 %v1162, %v1156
        %v1445 = vpack.c.b16 %v1163, %v1157
        %v1446 = vpack.c.b16 %v1164, %v1158
        %v1447 = vpack.c.b16 %v1171, %v1165
        %v1448 = vpack.c.b16 %v1172, %v1166
        %v1449 = vpack.c.b16 %v1173, %v1167
        %v1450 = vpack.c.b16 %v1174, %v1168
        %v1451 = vpack.c.b16 %v1175, %v1169
        %v1452 = vpack.c.b16 %v1176, %v1170
        %v1453 = vpack.c.b16 %v1183, %v1177
        %v1454 = vpack.c.b16 %v1184, %v1178
        %v1455 = vpack.c.b16 %v1185, %v1179
        %v1456 = vpack.c.b16 %v1186, %v1180
        %v1457 = vpack.c.b16 %v1187, %v1181
        %v1458 = vpack.c.b16 %v1188, %v1182
        %v1459 = vpack.c.b16 %v1195, %v1189
        %v1460 = vpack.c.b16 %v1196, %v1190
        %v1461 = vpack.c.b16 %v1197, %v1191
        %v1462 = vpack.c.b16 %v1198, %v1192
        %v1463 = vpack.c.b16 %v1199, %v1193
        %v1464 = vpack.c.b16 %v1200, %v1194
        %v1465 = vpack.c.b16 %v1207, %v1201
        %v1466 = vpack.c.b16 %v1208, %v1202
        %v1467 = vpack.c.b16 %v1209, %v1203
        %v1468 = vpack.c.b16 %v1210, %v1204
        %v1469 = vpack.c.b16 %v1211, %v1205
        %v1470 = vpack.c.b16 %v1212, %v1206
        %v1471 = vpack.c.b16 %v1219, %v1213
        %v1472 = vpack.c.b16 %v1220, %v1214
        %v1473 = vpack.c.b16 %v1221, %v1215
        %v1474 = vpack.c.b16 %v1222, %v1216
        %v1475 = vpack.c.b16 %v1223, %v1217
        %v1476 = vpack.c.b16 %v1224, %v1218
        %v1477 = vpack.c.b16 %v1231, %v1225
        %v1478 = vpack.c.b16 %v1232, %v1226
        %v1479 = vpack.c.b16 %v1233, %v1227
        %v1480 = vpack.c.b16 %v1234, %v1228
        %v1481 = vpack.c.b16 %v1235, %v1229
        %v1482 = vpack.c.b16 %v1236, %v1230
        %v1483 = vpack.c.b16 %v1243, %v1237
        %v1484 = vpack.c.b16 %v1244, %v1238
        %v1485 = vpack.c.b16 %v1245, %v1239
        %v1486 = vpack.c.b16 %v1246, %v1240
        %v1487 = vpack.c.b16 %v1247, %v1241
        %v1488 = vpack.c.b16 %v1248, %v1242
        %v1489 = vpack.c.b16 %v1255, %v1249
        %v1490 = vpack.c.b16 %v1256, %v1250
        %v1491 = vpack.c.b16 %v1257, %v1251
        %v1492 = vpack.c.b16 %v1258, %v1252
        %v1493 = vpack.c.b16 %v1259, %v1253
        %v1494 = vpack.c.b16 %v1260, %v1254
        %v1495 = vpack.c.b16 %v1267, %v1261
        %v1496 = vpack.c.b16 %v1268, %v1262
        %v1497 = vpack.c.b16 %v1269, %v1263
        %v1498 = vpack.c.b16 %v1270, %v1264
        %v1499 = vpack.c.b16 %v1271, %v1265
        %v1500 = vpack.c.b16 %v1272, %v1266
        %v1501 = vpack.c.b16 %v1279, %v1273
        %v1502 = vpack.c.b16 %v1280, %v1274
        %v1503 = vpack.c.b16 %v1281, %v1275
        %v1504 = vpack.c.b16 %v1282, %v1276
        %v1505 = vpack.c.b16 %v1283, %v1277
        %v1506 = vpack.c.b16 %v1284, %v1278
        %v1507 = vpack.c.b16 %v1291, %v1285
        %v1508 = vpack.c.b16 %v1292, %v1286
        %v1509 = vpack.c.b16 %v1293, %v1287
        %v1510 = vpack.c.b16 %v1294, %v1288
        %v1511 = vpack.c.b16 %v1295, %v1289
        %v1512 = vpack.c.b16 %v1296, %v1290
        %v1513 = vpack.c.b16 %v1303, %v1297
        %v1514 = vpack.c.b16 %v1304, %v1298
        %v1515 = vpack.c.b16 %v1305, %v1299
        %v1516 = vpack.c.b16 %v1306, %v1300
        %v1517 = vpack.c.b16 %v1307, %v1301
        %v1518 = vpack.c.b16 %v1308, %v1302
        %v1519 = vpack.c.b16 %v1315, %v1309
        %v1520 = vpack.c.b16 %v1316, %v1310
        %v1521 = vpack.c.b16 %v1317, %v1311
        %v1522 = vpack.c.b16 %v1318, %v1312
        %v1523 = vpack.c.b16 %v1319, %v1313
        %v1524 = vpack.c.b16 %v1320, %v1314
        %v1525 = vpack.c.b16 %v1327, %v1321
        %v1526 = vpack.c.b16 %v1328, %v1322
        %v1527 = vpack.c.b16 %v1329, %v1323
        %v1528 = vpack.c.b16 %v1330, %v1324
        %v1529 = vpack.c.b16 %v1331, %v1325
        %v1530 = vpack.c.b16 %v1332, %v1326
        %v1531 = vpack.c.b16 %v1339, %v1333
        %v1532 = vpack.c.b16 %v1340, %v1334
        %v1533 = vpack.c.b16 %v1341, %v1335
        %v1534 = vpack.c.b16 %v1342, %v1336
        %v1535 = vpack.c.b16 %v1343, %v1337
        %v1536 = vpack.c.b16 %v1344, %v1338
        %1729 = vmatpush.bf16.msra.mxu0 %v1387
        %1730 = vmatpush.bf16.msra.mxu0 %v1381
        %1731 = vmatpush.bf16.msra.mxu0 %v1375
        %1732 = vmatpush.bf16.msra.mxu0 %v1369
        %1733 = vmatpush.bf16.msra.mxu0 %v1363
        %1734 = vmatpush.bf16.msra.mxu0 %v1357
        %1735 = vmatpush.bf16.msra.mxu0 %v1351
        %1736 = vmatpush.bf16.msra.mxu0 %v1345
        %1737 = vmatmul.bf16.gmra.mxu0 %v759
        %v1738 = vpop.f32.mrf.mxu0
        %v1739 = vadd.f32 %v763, %v1738
        %v1740 = vpop.f32.mrf.mxu0
        %1741 = vdwg.mxu0
        %1742 = vmatpush.bf16.msra.mxu0 %v1435
        %1743 = vmatpush.bf16.msra.mxu0 %v1429
        %1744 = vmatpush.bf16.msra.mxu0 %v1423
        %1745 = vmatpush.bf16.msra.mxu0 %v1417
        %1746 = vmatpush.bf16.msra.mxu0 %v1411
        %1747 = vmatpush.bf16.msra.mxu0 %v1405
        %1748 = vmatpush.bf16.msra.mxu0 %v1399
        %1749 = vmatpush.bf16.msra.mxu0 %v1393
        %1750 = vmatmul.bf16.gmra.mxu0 %v760
        %v1751 = vpop.f32.mrf.mxu0
        %v1752 = vadd.f32 %v1739, %v1751
        %v1753 = vpop.f32.mrf.mxu0
        %1754 = vdwg.mxu0
        %1755 = vmatpush.bf16.msra.mxu0 %v1483
        %1756 = vmatpush.bf16.msra.mxu0 %v1477
        %1757 = vmatpush.bf16.msra.mxu0 %v1471
        %1758 = vmatpush.bf16.msra.mxu0 %v1465
        %1759 = vmatpush.bf16.msra.mxu0 %v1459
        %1760 = vmatpush.bf16.msra.mxu0 %v1453
        %1761 = vmatpush.bf16.msra.mxu0 %v1447
        %1762 = vmatpush.bf16.msra.mxu0 %v1441
        %1763 = vmatmul.bf16.gmra.mxu0 %v761
        %v1764 = vpop.f32.mrf.mxu0
        %v1765 = vadd.f32 %v1752, %v1764
        %v1766 = vpop.f32.mrf.mxu0
        %1767 = vdwg.mxu0
        %1768 = vmatpush.bf16.msra.mxu0 %v1531
        %1769 = vmatpush.bf16.msra.mxu0 %v1525
        %1770 = vmatpush.bf16.msra.mxu0 %v1519
        %1771 = vmatpush.bf16.msra.mxu0 %v1513
        %1772 = vmatpush.bf16.msra.mxu0 %v1507
        %1773 = vmatpush.bf16.msra.mxu0 %v1501
        %1774 = vmatpush.bf16.msra.mxu0 %v1495
        %1775 = vmatpush.bf16.msra.mxu0 %v1489
        %1776 = vmatmul.bf16.gmra.mxu0 %v762
        %v1777 = vpop.f32.mrf.mxu0
        %v1778 = vadd.f32 %v1765, %v1777
        %v1779 = vpop.f32.mrf.mxu0
        %1780 = vdwg.mxu0
        %1781 = vmatpush.bf16.msra.mxu0 %v1388
        %1782 = vmatpush.bf16.msra.mxu0 %v1382
        %1783 = vmatpush.bf16.msra.mxu0 %v1376
        %1784 = vmatpush.bf16.msra.mxu0 %v1370
        %1785 = vmatpush.bf16.msra.mxu0 %v1364
        %1786 = vmatpush.bf16.msra.mxu0 %v1358
        %1787 = vmatpush.bf16.msra.mxu0 %v1352
        %1788 = vmatpush.bf16.msra.mxu0 %v1346
        %1789 = vmatmul.bf16.gmra.mxu0 %v759
        %v1790 = vpop.f32.mrf.mxu0
        %v1791 = vadd.f32 %v764, %v1790
        %v1792 = vpop.f32.mrf.mxu0
        %1793 = vdwg.mxu0
        %1794 = vmatpush.bf16.msra.mxu0 %v1436
        %1795 = vmatpush.bf16.msra.mxu0 %v1430
        %1796 = vmatpush.bf16.msra.mxu0 %v1424
        %1797 = vmatpush.bf16.msra.mxu0 %v1418
        %1798 = vmatpush.bf16.msra.mxu0 %v1412
        %1799 = vmatpush.bf16.msra.mxu0 %v1406
        %1800 = vmatpush.bf16.msra.mxu0 %v1400
        %1801 = vmatpush.bf16.msra.mxu0 %v1394
        %1802 = vmatmul.bf16.gmra.mxu0 %v760
        %v1803 = vpop.f32.mrf.mxu0
        %v1804 = vadd.f32 %v1791, %v1803
        %v1805 = vpop.f32.mrf.mxu0
        %1806 = vdwg.mxu0
        %1807 = vmatpush.bf16.msra.mxu0 %v1484
        %1808 = vmatpush.bf16.msra.mxu0 %v1478
        %1809 = vmatpush.bf16.msra.mxu0 %v1472
        %1810 = vmatpush.bf16.msra.mxu0 %v1466
        %1811 = vmatpush.bf16.msra.mxu0 %v1460
        %1812 = vmatpush.bf16.msra.mxu0 %v1454
        %1813 = vmatpush.bf16.msra.mxu0 %v1448
        %1814 = vmatpush.bf16.msra.mxu0 %v1442
        %1815 = vmatmul.bf16.gmra.mxu0 %v761
        %v1816 = vpop.f32.mrf.mxu0
        %v1817 = vadd.f32 %v1804, %v1816
        %v1818 = vpop.f32.mrf.mxu0
        %1819 = vdwg.mxu0
        %1820 = vmatpush.bf16.msra.mxu0 %v1532
        %1821 = vmatpush.bf16.msra.mxu0 %v1526
        %1822 = vmatpush.bf16.msra.mxu0 %v1520
        %1823 = vmatpush.bf16.msra.mxu0 %v1514
        %1824 = vmatpush.bf16.msra.mxu0 %v1508
        %1825 = vmatpush.bf16.msra.mxu0 %v1502
        %1826 = vmatpush.bf16.msra.mxu0 %v1496
        %1827 = vmatpush.bf16.msra.mxu0 %v1490
        %1828 = vmatmul.bf16.gmra.mxu0 %v762
        %v1829 = vpop.f32.mrf.mxu0
        %v1830 = vadd.f32 %v1817, %v1829
        %v1831 = vpop.f32.mrf.mxu0
        %1832 = vdwg.mxu0
        %1833 = vmatpush.bf16.msra.mxu0 %v1389
        %1834 = vmatpush.bf16.msra.mxu0 %v1383
        %1835 = vmatpush.bf16.msra.mxu0 %v1377
        %1836 = vmatpush.bf16.msra.mxu0 %v1371
        %1837 = vmatpush.bf16.msra.mxu0 %v1365
        %1838 = vmatpush.bf16.msra.mxu0 %v1359
        %1839 = vmatpush.bf16.msra.mxu0 %v1353
        %1840 = vmatpush.bf16.msra.mxu0 %v1347
        %1841 = vmatmul.bf16.gmra.mxu0 %v759
        %v1842 = vpop.f32.mrf.mxu0
        %v1843 = vadd.f32 %v765, %v1842
        %v1844 = vpop.f32.mrf.mxu0
        %1845 = vdwg.mxu0
        %1846 = vmatpush.bf16.msra.mxu0 %v1437
        %1847 = vmatpush.bf16.msra.mxu0 %v1431
        %1848 = vmatpush.bf16.msra.mxu0 %v1425
        %1849 = vmatpush.bf16.msra.mxu0 %v1419
        %1850 = vmatpush.bf16.msra.mxu0 %v1413
        %1851 = vmatpush.bf16.msra.mxu0 %v1407
        %1852 = vmatpush.bf16.msra.mxu0 %v1401
        %1853 = vmatpush.bf16.msra.mxu0 %v1395
        %1854 = vmatmul.bf16.gmra.mxu0 %v760
        %v1855 = vpop.f32.mrf.mxu0
        %v1856 = vadd.f32 %v1843, %v1855
        %v1857 = vpop.f32.mrf.mxu0
        %1858 = vdwg.mxu0
        %1859 = vmatpush.bf16.msra.mxu0 %v1485
        %1860 = vmatpush.bf16.msra.mxu0 %v1479
        %1861 = vmatpush.bf16.msra.mxu0 %v1473
        %1862 = vmatpush.bf16.msra.mxu0 %v1467
        %1863 = vmatpush.bf16.msra.mxu0 %v1461
        %1864 = vmatpush.bf16.msra.mxu0 %v1455
        %1865 = vmatpush.bf16.msra.mxu0 %v1449
        %1866 = vmatpush.bf16.msra.mxu0 %v1443
        %1867 = vmatmul.bf16.gmra.mxu0 %v761
        %v1868 = vpop.f32.mrf.mxu0
        %v1869 = vadd.f32 %v1856, %v1868
        %v1870 = vpop.f32.mrf.mxu0
        %1871 = vdwg.mxu0
        %1872 = vmatpush.bf16.msra.mxu0 %v1533
        %1873 = vmatpush.bf16.msra.mxu0 %v1527
        %1874 = vmatpush.bf16.msra.mxu0 %v1521
        %1875 = vmatpush.bf16.msra.mxu0 %v1515
        %1876 = vmatpush.bf16.msra.mxu0 %v1509
        %1877 = vmatpush.bf16.msra.mxu0 %v1503
        %1878 = vmatpush.bf16.msra.mxu0 %v1497
        %1879 = vmatpush.bf16.msra.mxu0 %v1491
        %1880 = vmatmul.bf16.gmra.mxu0 %v762
        %v1881 = vpop.f32.mrf.mxu0
        %v1882 = vadd.f32 %v1869, %v1881
        %v1883 = vpop.f32.mrf.mxu0
        %1884 = vdwg.mxu0
        %1885 = vmatpush.bf16.msra.mxu0 %v1390
        %1886 = vmatpush.bf16.msra.mxu0 %v1384
        %1887 = vmatpush.bf16.msra.mxu0 %v1378
        %1888 = vmatpush.bf16.msra.mxu0 %v1372
        %1889 = vmatpush.bf16.msra.mxu0 %v1366
        %1890 = vmatpush.bf16.msra.mxu0 %v1360
        %1891 = vmatpush.bf16.msra.mxu0 %v1354
        %1892 = vmatpush.bf16.msra.mxu0 %v1348
        %1893 = vmatmul.bf16.gmra.mxu0 %v759
        %v1894 = vpop.f32.mrf.mxu0
        %v1895 = vadd.f32 %v766, %v1894
        %v1896 = vpop.f32.mrf.mxu0
        %1897 = vdwg.mxu0
        %1898 = vmatpush.bf16.msra.mxu0 %v1438
        %1899 = vmatpush.bf16.msra.mxu0 %v1432
        %1900 = vmatpush.bf16.msra.mxu0 %v1426
        %1901 = vmatpush.bf16.msra.mxu0 %v1420
        %1902 = vmatpush.bf16.msra.mxu0 %v1414
        %1903 = vmatpush.bf16.msra.mxu0 %v1408
        %1904 = vmatpush.bf16.msra.mxu0 %v1402
        %1905 = vmatpush.bf16.msra.mxu0 %v1396
        %1906 = vmatmul.bf16.gmra.mxu0 %v760
        %v1907 = vpop.f32.mrf.mxu0
        %v1908 = vadd.f32 %v1895, %v1907
        %v1909 = vpop.f32.mrf.mxu0
        %1910 = vdwg.mxu0
        %1911 = vmatpush.bf16.msra.mxu0 %v1486
        %1912 = vmatpush.bf16.msra.mxu0 %v1480
        %1913 = vmatpush.bf16.msra.mxu0 %v1474
        %1914 = vmatpush.bf16.msra.mxu0 %v1468
        %1915 = vmatpush.bf16.msra.mxu0 %v1462
        %1916 = vmatpush.bf16.msra.mxu0 %v1456
        %1917 = vmatpush.bf16.msra.mxu0 %v1450
        %1918 = vmatpush.bf16.msra.mxu0 %v1444
        %1919 = vmatmul.bf16.gmra.mxu0 %v761
        %v1920 = vpop.f32.mrf.mxu0
        %v1921 = vadd.f32 %v1908, %v1920
        %v1922 = vpop.f32.mrf.mxu0
        %1923 = vdwg.mxu0
        %1924 = vmatpush.bf16.msra.mxu0 %v1534
        %1925 = vmatpush.bf16.msra.mxu0 %v1528
        %1926 = vmatpush.bf16.msra.mxu0 %v1522
        %1927 = vmatpush.bf16.msra.mxu0 %v1516
        %1928 = vmatpush.bf16.msra.mxu0 %v1510
        %1929 = vmatpush.bf16.msra.mxu0 %v1504
        %1930 = vmatpush.bf16.msra.mxu0 %v1498
        %1931 = vmatpush.bf16.msra.mxu0 %v1492
        %1932 = vmatmul.bf16.gmra.mxu0 %v762
        %v1933 = vpop.f32.mrf.mxu0
        %v1934 = vadd.f32 %v1921, %v1933
        %v1935 = vpop.f32.mrf.mxu0
        %1936 = vdwg.mxu0
        %1937 = vmatpush.bf16.msra.mxu0 %v1391
        %1938 = vmatpush.bf16.msra.mxu0 %v1385
        %1939 = vmatpush.bf16.msra.mxu0 %v1379
        %1940 = vmatpush.bf16.msra.mxu0 %v1373
        %1941 = vmatpush.bf16.msra.mxu0 %v1367
        %1942 = vmatpush.bf16.msra.mxu0 %v1361
        %1943 = vmatpush.bf16.msra.mxu0 %v1355
        %1944 = vmatpush.bf16.msra.mxu0 %v1349
        %1945 = vmatmul.bf16.gmra.mxu0 %v759
        %v1946 = vpop.f32.mrf.mxu0
        %v1947 = vadd.f32 %v767, %v1946
        %v1948 = vpop.f32.mrf.mxu0
        %1949 = vdwg.mxu0
        %1950 = vmatpush.bf16.msra.mxu0 %v1439
        %1951 = vmatpush.bf16.msra.mxu0 %v1433
        %1952 = vmatpush.bf16.msra.mxu0 %v1427
        %1953 = vmatpush.bf16.msra.mxu0 %v1421
        %1954 = vmatpush.bf16.msra.mxu0 %v1415
        %1955 = vmatpush.bf16.msra.mxu0 %v1409
        %1956 = vmatpush.bf16.msra.mxu0 %v1403
        %1957 = vmatpush.bf16.msra.mxu0 %v1397
        %1958 = vmatmul.bf16.gmra.mxu0 %v760
        %v1959 = vpop.f32.mrf.mxu0
        %v1960 = vadd.f32 %v1947, %v1959
        %v1961 = vpop.f32.mrf.mxu0
        %1962 = vdwg.mxu0
        %1963 = vmatpush.bf16.msra.mxu0 %v1487
        %1964 = vmatpush.bf16.msra.mxu0 %v1481
        %1965 = vmatpush.bf16.msra.mxu0 %v1475
        %1966 = vmatpush.bf16.msra.mxu0 %v1469
        %1967 = vmatpush.bf16.msra.mxu0 %v1463
        %1968 = vmatpush.bf16.msra.mxu0 %v1457
        %1969 = vmatpush.bf16.msra.mxu0 %v1451
        %1970 = vmatpush.bf16.msra.mxu0 %v1445
        %1971 = vmatmul.bf16.gmra.mxu0 %v761
        %v1972 = vpop.f32.mrf.mxu0
        %v1973 = vadd.f32 %v1960, %v1972
        %v1974 = vpop.f32.mrf.mxu0
        %1975 = vdwg.mxu0
        %1976 = vmatpush.bf16.msra.mxu0 %v1535
        %1977 = vmatpush.bf16.msra.mxu0 %v1529
        %1978 = vmatpush.bf16.msra.mxu0 %v1523
        %1979 = vmatpush.bf16.msra.mxu0 %v1517
        %1980 = vmatpush.bf16.msra.mxu0 %v1511
        %1981 = vmatpush.bf16.msra.mxu0 %v1505
        %1982 = vmatpush.bf16.msra.mxu0 %v1499
        %1983 = vmatpush.bf16.msra.mxu0 %v1493
        %1984 = vmatmul.bf16.gmra.mxu0 %v762
        %v1985 = vpop.f32.mrf.mxu0
        %v1986 = vadd.f32 %v1973, %v1985
        %v1987 = vpop.f32.mrf.mxu0
        %1988 = vdwg.mxu0
        %1989 = vmatpush.bf16.msra.mxu0 %v1392
        %1990 = vmatpush.bf16.msra.mxu0 %v1386
        %1991 = vmatpush.bf16.msra.mxu0 %v1380
        %1992 = vmatpush.bf16.msra.mxu0 %v1374
        %1993 = vmatpush.bf16.msra.mxu0 %v1368
        %1994 = vmatpush.bf16.msra.mxu0 %v1362
        %1995 = vmatpush.bf16.msra.mxu0 %v1356
        %1996 = vmatpush.bf16.msra.mxu0 %v1350
        %1997 = vmatmul.bf16.gmra.mxu0 %v759
        %v1998 = vpop.f32.mrf.mxu0
        %v1999 = vadd.f32 %v768, %v1998
        %v2000 = vpop.f32.mrf.mxu0
        %2001 = vdwg.mxu0
        %2002 = vmatpush.bf16.msra.mxu0 %v1440
        %2003 = vmatpush.bf16.msra.mxu0 %v1434
        %2004 = vmatpush.bf16.msra.mxu0 %v1428
        %2005 = vmatpush.bf16.msra.mxu0 %v1422
        %2006 = vmatpush.bf16.msra.mxu0 %v1416
        %2007 = vmatpush.bf16.msra.mxu0 %v1410
        %2008 = vmatpush.bf16.msra.mxu0 %v1404
        %2009 = vmatpush.bf16.msra.mxu0 %v1398
        %2010 = vmatmul.bf16.gmra.mxu0 %v760
        %v2011 = vpop.f32.mrf.mxu0
        %v2012 = vadd.f32 %v1999, %v2011
        %v2013 = vpop.f32.mrf.mxu0
        %2014 = vdwg.mxu0
        %2015 = vmatpush.bf16.msra.mxu0 %v1488
        %2016 = vmatpush.bf16.msra.mxu0 %v1482
        %2017 = vmatpush.bf16.msra.mxu0 %v1476
        %2018 = vmatpush.bf16.msra.mxu0 %v1470
        %2019 = vmatpush.bf16.msra.mxu0 %v1464
        %2020 = vmatpush.bf16.msra.mxu0 %v1458
        %2021 = vmatpush.bf16.msra.mxu0 %v1452
        %2022 = vmatpush.bf16.msra.mxu0 %v1446
        %2023 = vmatmul.bf16.gmra.mxu0 %v761
        %v2024 = vpop.f32.mrf.mxu0
        %v2025 = vadd.f32 %v2012, %v2024
        %v2026 = vpop.f32.mrf.mxu0
        %2027 = vdwg.mxu0
        %2028 = vmatpush.bf16.msra.mxu0 %v1536
        %2029 = vmatpush.bf16.msra.mxu0 %v1530
        %2030 = vmatpush.bf16.msra.mxu0 %v1524
        %2031 = vmatpush.bf16.msra.mxu0 %v1518
        %2032 = vmatpush.bf16.msra.mxu0 %v1512
        %2033 = vmatpush.bf16.msra.mxu0 %v1506
        %2034 = vmatpush.bf16.msra.mxu0 %v1500
        %2035 = vmatpush.bf16.msra.mxu0 %v1494
        %2036 = vmatmul.bf16.gmra.mxu0 %v762
        %v2037 = vpop.f32.mrf.mxu0
        %v2038 = vadd.f32 %v2025, %v2037
        %v2039 = vpop.f32.mrf.mxu0
        %2040 = vdwg.mxu0
        %v2041 = vmax.f32 %v1778, 0.0
        %v2042 = vmax.f32 %v1830, 0.0
        %v2043 = vmax.f32 %v1882, 0.0
        %v2044 = vmax.f32 %v1934, 0.0
        %v2045 = vmax.f32 %v1986, 0.0
        %v2046 = vmax.f32 %v2038, 0.0
        %v2047 = vld [vmem:[%s453] sm:$0xff]
        %v2048 = vld [vmem:[%s453 + $0x8] sm:$0xff]
        %v2049 = vld [vmem:[%s453 + $0x10] sm:$0xff]
        %v2050 = vld [vmem:[%s453 + $0x18] sm:$0xff]
        %v2051 = vld [vmem:[%s453 + $0x20] sm:$0xff]
        %v2052 = vld [vmem:[%s453 + $0x28] sm:$0xff]
        %v2053 = vld [vmem:[%s453 + $0x30] sm:$0xff]
        %v2054 = vld [vmem:[%s453 + $0x38] sm:$0xff]
        %v2055 = vld [vmem:[%s453 + $0x40] sm:$0xff]
        %v2056 = vld [vmem:[%s453 + $0x48] sm:$0xff]
        %v2057 = vld [vmem:[%s453 + $0x50] sm:$0xff]
        %v2058 = vld [vmem:[%s453 + $0x58] sm:$0xff]
        %v2059 = vld [vmem:[%s453 + $0x60] sm:$0xff]
        %v2060 = vld [vmem:[%s453 + $0x68] sm:$0xff]
        %v2061 = vld [vmem:[%s453 + $0x70] sm:$0xff]
        %v2062 = vld [vmem:[%s453 + $0x78] sm:$0xff]
        %v2063 = vld [vmem:[%s453 + $0x80] sm:$0xff]
        %v2064 = vld [vmem:[%s453 + $0x88] sm:$0xff]
        %v2065 = vld [vmem:[%s453 + $0x90] sm:$0xff]
        %v2066 = vld [vmem:[%s453 + $0x98] sm:$0xff]
        %v2067 = vld [vmem:[%s453 + $0xa0] sm:$0xff]
        %v2068 = vld [vmem:[%s453 + $0xa8] sm:$0xff]
        %v2069 = vld [vmem:[%s453 + $0xb0] sm:$0xff]
        %v2070 = vld [vmem:[%s453 + $0xb8] sm:$0xff]
        %v2071 = vld [vmem:[%s453 + $0xc0] sm:$0xff]
        %v2072 = vld [vmem:[%s453 + $0xc8] sm:$0xff]
        %v2073 = vld [vmem:[%s453 + $0xd0] sm:$0xff]
        %v2074 = vld [vmem:[%s453 + $0xd8] sm:$0xff]
        %v2075 = vld [vmem:[%s453 + $0xe0] sm:$0xff]
        %v2076 = vld [vmem:[%s453 + $0xe8] sm:$0xff]
        %v2077 = vld [vmem:[%s453 + $0xf0] sm:$0xff]
        %v2078 = vld [vmem:[%s453 + $0xf8] sm:$0xff]
        %v2079 = vld [vmem:[%s453 + $0x100] sm:$0xff]
        %v2080 = vld [vmem:[%s453 + $0x108] sm:$0xff]
        %v2081 = vld [vmem:[%s453 + $0x110] sm:$0xff]
        %v2082 = vld [vmem:[%s453 + $0x118] sm:$0xff]
        %v2083 = vld [vmem:[%s453 + $0x120] sm:$0xff]
        %v2084 = vld [vmem:[%s453 + $0x128] sm:$0xff]
        %v2085 = vld [vmem:[%s453 + $0x130] sm:$0xff]
        %v2086 = vld [vmem:[%s453 + $0x138] sm:$0xff]
        %v2087 = vld [vmem:[%s453 + $0x140] sm:$0xff]
        %v2088 = vld [vmem:[%s453 + $0x148] sm:$0xff]
        %v2089 = vld [vmem:[%s453 + $0x150] sm:$0xff]
        %v2090 = vld [vmem:[%s453 + $0x158] sm:$0xff]
        %v2091 = vld [vmem:[%s453 + $0x160] sm:$0xff]
        %v2092 = vld [vmem:[%s453 + $0x168] sm:$0xff]
        %v2093 = vld [vmem:[%s453 + $0x170] sm:$0xff]
        %v2094 = vld [vmem:[%s453 + $0x178] sm:$0xff]
        %v2095 = vld [vmem:[%s453 + $0x180] sm:$0xff]
        %v2096 = vld [vmem:[%s453 + $0x188] sm:$0xff]
        %v2097 = vld [vmem:[%s453 + $0x190] sm:$0xff]
        %v2098 = vld [vmem:[%s453 + $0x198] sm:$0xff]
        %v2099 = vld [vmem:[%s453 + $0x1a0] sm:$0xff]
        %v2100 = vld [vmem:[%s453 + $0x1a8] sm:$0xff]
        %v2101 = vld [vmem:[%s453 + $0x1b0] sm:$0xff]
        %v2102 = vld [vmem:[%s453 + $0x1b8] sm:$0xff]
        %v2103 = vld [vmem:[%s453 + $0x1c0] sm:$0xff]
        %v2104 = vld [vmem:[%s453 + $0x1c8] sm:$0xff]
        %v2105 = vld [vmem:[%s453 + $0x1d0] sm:$0xff]
        %v2106 = vld [vmem:[%s453 + $0x1d8] sm:$0xff]
        %v2107 = vld [vmem:[%s453 + $0x1e0] sm:$0xff]
        %v2108 = vld [vmem:[%s453 + $0x1e8] sm:$0xff]
        %v2109 = vld [vmem:[%s453 + $0x1f0] sm:$0xff]
        %v2110 = vld [vmem:[%s453 + $0x1f8] sm:$0xff]
        %v2111 = vld [vmem:[%s453 + $0x200] sm:$0xff]
        %v2112 = vld [vmem:[%s453 + $0x208] sm:$0xff]
        %v2113 = vld [vmem:[%s453 + $0x210] sm:$0xff]
        %v2114 = vld [vmem:[%s453 + $0x218] sm:$0xff]
        %v2115 = vld [vmem:[%s453 + $0x220] sm:$0xff]
        %v2116 = vld [vmem:[%s453 + $0x228] sm:$0xff]
        %v2117 = vld [vmem:[%s453 + $0x230] sm:$0xff]
        %v2118 = vld [vmem:[%s453 + $0x238] sm:$0xff]
        %v2119 = vld [vmem:[%s453 + $0x240] sm:$0xff]
        %v2120 = vld [vmem:[%s453 + $0x248] sm:$0xff]
        %v2121 = vld [vmem:[%s453 + $0x250] sm:$0xff]
        %v2122 = vld [vmem:[%s453 + $0x258] sm:$0xff]
        %v2123 = vld [vmem:[%s453 + $0x260] sm:$0xff]
        %v2124 = vld [vmem:[%s453 + $0x268] sm:$0xff]
        %v2125 = vld [vmem:[%s453 + $0x270] sm:$0xff]
        %v2126 = vld [vmem:[%s453 + $0x278] sm:$0xff]
        %v2127 = vld [vmem:[%s453 + $0x280] sm:$0xff]
        %v2128 = vld [vmem:[%s453 + $0x288] sm:$0xff]
        %v2129 = vld [vmem:[%s453 + $0x290] sm:$0xff]
        %v2130 = vld [vmem:[%s453 + $0x298] sm:$0xff]
        %v2131 = vld [vmem:[%s453 + $0x2a0] sm:$0xff]
        %v2132 = vld [vmem:[%s453 + $0x2a8] sm:$0xff]
        %v2133 = vld [vmem:[%s453 + $0x2b0] sm:$0xff]
        %v2134 = vld [vmem:[%s453 + $0x2b8] sm:$0xff]
        %v2135 = vld [vmem:[%s453 + $0x2c0] sm:$0xff]
        %v2136 = vld [vmem:[%s453 + $0x2c8] sm:$0xff]
        %v2137 = vld [vmem:[%s453 + $0x2d0] sm:$0xff]
        %v2138 = vld [vmem:[%s453 + $0x2d8] sm:$0xff]
        %v2139 = vld [vmem:[%s453 + $0x2e0] sm:$0xff]
        %v2140 = vld [vmem:[%s453 + $0x2e8] sm:$0xff]
        %v2141 = vld [vmem:[%s453 + $0x2f0] sm:$0xff]
        %v2142 = vld [vmem:[%s453 + $0x2f8] sm:$0xff]
        %v2143 = vld [vmem:[%s453 + $0x300] sm:$0xff]
        %v2144 = vld [vmem:[%s453 + $0x308] sm:$0xff]
        %v2145 = vld [vmem:[%s453 + $0x310] sm:$0xff]
        %v2146 = vld [vmem:[%s453 + $0x318] sm:$0xff]
        %v2147 = vld [vmem:[%s453 + $0x320] sm:$0xff]
        %v2148 = vld [vmem:[%s453 + $0x328] sm:$0xff]
        %v2149 = vld [vmem:[%s453 + $0x330] sm:$0xff]
        %v2150 = vld [vmem:[%s453 + $0x338] sm:$0xff]
        %v2151 = vld [vmem:[%s453 + $0x340] sm:$0xff]
        %v2152 = vld [vmem:[%s453 + $0x348] sm:$0xff]
        %v2153 = vld [vmem:[%s453 + $0x350] sm:$0xff]
        %v2154 = vld [vmem:[%s453 + $0x358] sm:$0xff]
        %v2155 = vld [vmem:[%s453 + $0x360] sm:$0xff]
        %v2156 = vld [vmem:[%s453 + $0x368] sm:$0xff]
        %v2157 = vld [vmem:[%s453 + $0x370] sm:$0xff]
        %v2158 = vld [vmem:[%s453 + $0x378] sm:$0xff]
        %v2159 = vld [vmem:[%s453 + $0x380] sm:$0xff]
        %v2160 = vld [vmem:[%s453 + $0x388] sm:$0xff]
        %v2161 = vld [vmem:[%s453 + $0x390] sm:$0xff]
        %v2162 = vld [vmem:[%s453 + $0x398] sm:$0xff]
        %v2163 = vld [vmem:[%s453 + $0x3a0] sm:$0xff]
        %v2164 = vld [vmem:[%s453 + $0x3a8] sm:$0xff]
        %v2165 = vld [vmem:[%s453 + $0x3b0] sm:$0xff]
        %v2166 = vld [vmem:[%s453 + $0x3b8] sm:$0xff]
        %v2167 = vld [vmem:[%s453 + $0x3c0] sm:$0xff]
        %v2168 = vld [vmem:[%s453 + $0x3c8] sm:$0xff]
        %v2169 = vld [vmem:[%s453 + $0x3d0] sm:$0xff]
        %v2170 = vld [vmem:[%s453 + $0x3d8] sm:$0xff]
        %v2171 = vld [vmem:[%s453 + $0x3e0] sm:$0xff]
        %v2172 = vld [vmem:[%s453 + $0x3e8] sm:$0xff]
        %v2173 = vld [vmem:[%s453 + $0x3f0] sm:$0xff]
        %v2174 = vld [vmem:[%s453 + $0x3f8] sm:$0xff]
        %v2175 = vld [vmem:[%s453 + $0x400] sm:$0xff]
        %v2176 = vld [vmem:[%s453 + $0x408] sm:$0xff]
        %v2177 = vld [vmem:[%s453 + $0x410] sm:$0xff]
        %v2178 = vld [vmem:[%s453 + $0x418] sm:$0xff]
        %v2179 = vld [vmem:[%s453 + $0x420] sm:$0xff]
        %v2180 = vld [vmem:[%s453 + $0x428] sm:$0xff]
        %v2181 = vld [vmem:[%s453 + $0x430] sm:$0xff]
        %v2182 = vld [vmem:[%s453 + $0x438] sm:$0xff]
        %v2183 = vld [vmem:[%s453 + $0x440] sm:$0xff]
        %v2184 = vld [vmem:[%s453 + $0x448] sm:$0xff]
        %v2185 = vld [vmem:[%s453 + $0x450] sm:$0xff]
        %v2186 = vld [vmem:[%s453 + $0x458] sm:$0xff]
        %v2187 = vld [vmem:[%s453 + $0x460] sm:$0xff]
        %v2188 = vld [vmem:[%s453 + $0x468] sm:$0xff]
        %v2189 = vld [vmem:[%s453 + $0x470] sm:$0xff]
        %v2190 = vld [vmem:[%s453 + $0x478] sm:$0xff]
        %v2191 = vld [vmem:[%s453 + $0x480] sm:$0xff]
        %v2192 = vld [vmem:[%s453 + $0x488] sm:$0xff]
        %v2193 = vld [vmem:[%s453 + $0x490] sm:$0xff]
        %v2194 = vld [vmem:[%s453 + $0x498] sm:$0xff]
        %v2195 = vld [vmem:[%s453 + $0x4a0] sm:$0xff]
        %v2196 = vld [vmem:[%s453 + $0x4a8] sm:$0xff]
        %v2197 = vld [vmem:[%s453 + $0x4b0] sm:$0xff]
        %v2198 = vld [vmem:[%s453 + $0x4b8] sm:$0xff]
        %v2199 = vld [vmem:[%s453 + $0x4c0] sm:$0xff]
        %v2200 = vld [vmem:[%s453 + $0x4c8] sm:$0xff]
        %v2201 = vld [vmem:[%s453 + $0x4d0] sm:$0xff]
        %v2202 = vld [vmem:[%s453 + $0x4d8] sm:$0xff]
        %v2203 = vld [vmem:[%s453 + $0x4e0] sm:$0xff]
        %v2204 = vld [vmem:[%s453 + $0x4e8] sm:$0xff]
        %v2205 = vld [vmem:[%s453 + $0x4f0] sm:$0xff]
        %v2206 = vld [vmem:[%s453 + $0x4f8] sm:$0xff]
        %v2207 = vld [vmem:[%s453 + $0x500] sm:$0xff]
        %v2208 = vld [vmem:[%s453 + $0x508] sm:$0xff]
        %v2209 = vld [vmem:[%s453 + $0x510] sm:$0xff]
        %v2210 = vld [vmem:[%s453 + $0x518] sm:$0xff]
        %v2211 = vld [vmem:[%s453 + $0x520] sm:$0xff]
        %v2212 = vld [vmem:[%s453 + $0x528] sm:$0xff]
        %v2213 = vld [vmem:[%s453 + $0x530] sm:$0xff]
        %v2214 = vld [vmem:[%s453 + $0x538] sm:$0xff]
        %v2215 = vld [vmem:[%s453 + $0x540] sm:$0xff]
        %v2216 = vld [vmem:[%s453 + $0x548] sm:$0xff]
        %v2217 = vld [vmem:[%s453 + $0x550] sm:$0xff]
        %v2218 = vld [vmem:[%s453 + $0x558] sm:$0xff]
        %v2219 = vld [vmem:[%s453 + $0x560] sm:$0xff]
        %v2220 = vld [vmem:[%s453 + $0x568] sm:$0xff]
        %v2221 = vld [vmem:[%s453 + $0x570] sm:$0xff]
        %v2222 = vld [vmem:[%s453 + $0x578] sm:$0xff]
        %v2223 = vld [vmem:[%s453 + $0x580] sm:$0xff]
        %v2224 = vld [vmem:[%s453 + $0x588] sm:$0xff]
        %v2225 = vld [vmem:[%s453 + $0x590] sm:$0xff]
        %v2226 = vld [vmem:[%s453 + $0x598] sm:$0xff]
        %v2227 = vld [vmem:[%s453 + $0x5a0] sm:$0xff]
        %v2228 = vld [vmem:[%s453 + $0x5a8] sm:$0xff]
        %v2229 = vld [vmem:[%s453 + $0x5b0] sm:$0xff]
        %v2230 = vld [vmem:[%s453 + $0x5b8] sm:$0xff]
        %v2231 = vld [vmem:[%s453 + $0x5c0] sm:$0xff]
        %v2232 = vld [vmem:[%s453 + $0x5c8] sm:$0xff]
        %v2233 = vld [vmem:[%s453 + $0x5d0] sm:$0xff]
        %v2234 = vld [vmem:[%s453 + $0x5d8] sm:$0xff]
        %v2235 = vld [vmem:[%s453 + $0x5e0] sm:$0xff]
        %v2236 = vld [vmem:[%s453 + $0x5e8] sm:$0xff]
        %v2237 = vld [vmem:[%s453 + $0x5f0] sm:$0xff]
        %v2238 = vld [vmem:[%s453 + $0x5f8] sm:$0xff]
        %v2239 = vld [vmem:[%s453 + $0x600] sm:$0xff]
        %v2240 = vld [vmem:[%s453 + $0x608] sm:$0xff]
        %v2241 = vld [vmem:[%s453 + $0x610] sm:$0xff]
        %v2242 = vld [vmem:[%s453 + $0x618] sm:$0xff]
        %v2243 = vld [vmem:[%s453 + $0x620] sm:$0xff]
        %v2244 = vld [vmem:[%s453 + $0x628] sm:$0xff]
        %v2245 = vld [vmem:[%s453 + $0x630] sm:$0xff]
        %v2246 = vld [vmem:[%s453 + $0x638] sm:$0xff]
        %v2247 = vld [vmem:[%s453 + $0x640] sm:$0xff]
        %v2248 = vld [vmem:[%s453 + $0x648] sm:$0xff]
        %v2249 = vld [vmem:[%s453 + $0x650] sm:$0xff]
        %v2250 = vld [vmem:[%s453 + $0x658] sm:$0xff]
        %v2251 = vld [vmem:[%s453 + $0x660] sm:$0xff]
        %v2252 = vld [vmem:[%s453 + $0x668] sm:$0xff]
        %v2253 = vld [vmem:[%s453 + $0x670] sm:$0xff]
        %v2254 = vld [vmem:[%s453 + $0x678] sm:$0xff]
        %v2255 = vld [vmem:[%s453 + $0x680] sm:$0xff]
        %v2256 = vld [vmem:[%s453 + $0x688] sm:$0xff]
        %v2257 = vld [vmem:[%s453 + $0x690] sm:$0xff]
        %v2258 = vld [vmem:[%s453 + $0x698] sm:$0xff]
        %v2259 = vld [vmem:[%s453 + $0x6a0] sm:$0xff]
        %v2260 = vld [vmem:[%s453 + $0x6a8] sm:$0xff]
        %v2261 = vld [vmem:[%s453 + $0x6b0] sm:$0xff]
        %v2262 = vld [vmem:[%s453 + $0x6b8] sm:$0xff]
        %v2263 = vld [vmem:[%s453 + $0x6c0] sm:$0xff]
        %v2264 = vld [vmem:[%s453 + $0x6c8] sm:$0xff]
        %v2265 = vld [vmem:[%s453 + $0x6d0] sm:$0xff]
        %v2266 = vld [vmem:[%s453 + $0x6d8] sm:$0xff]
        %v2267 = vld [vmem:[%s453 + $0x6e0] sm:$0xff]
        %v2268 = vld [vmem:[%s453 + $0x6e8] sm:$0xff]
        %v2269 = vld [vmem:[%s453 + $0x6f0] sm:$0xff]
        %v2270 = vld [vmem:[%s453 + $0x6f8] sm:$0xff]
        %v2271 = vld [vmem:[%s453 + $0x700] sm:$0xff]
        %v2272 = vld [vmem:[%s453 + $0x708] sm:$0xff]
        %v2273 = vld [vmem:[%s453 + $0x710] sm:$0xff]
        %v2274 = vld [vmem:[%s453 + $0x718] sm:$0xff]
        %v2275 = vld [vmem:[%s453 + $0x720] sm:$0xff]
        %v2276 = vld [vmem:[%s453 + $0x728] sm:$0xff]
        %v2277 = vld [vmem:[%s453 + $0x730] sm:$0xff]
        %v2278 = vld [vmem:[%s453 + $0x738] sm:$0xff]
        %v2279 = vld [vmem:[%s453 + $0x740] sm:$0xff]
        %v2280 = vld [vmem:[%s453 + $0x748] sm:$0xff]
        %v2281 = vld [vmem:[%s453 + $0x750] sm:$0xff]
        %v2282 = vld [vmem:[%s453 + $0x758] sm:$0xff]
        %v2283 = vld [vmem:[%s453 + $0x760] sm:$0xff]
        %v2284 = vld [vmem:[%s453 + $0x768] sm:$0xff]
        %v2285 = vld [vmem:[%s453 + $0x770] sm:$0xff]
        %v2286 = vld [vmem:[%s453 + $0x778] sm:$0xff]
        %v2287 = vld [vmem:[%s453 + $0x780] sm:$0xff]
        %v2288 = vld [vmem:[%s453 + $0x788] sm:$0xff]
        %v2289 = vld [vmem:[%s453 + $0x790] sm:$0xff]
        %v2290 = vld [vmem:[%s453 + $0x798] sm:$0xff]
        %v2291 = vld [vmem:[%s453 + $0x7a0] sm:$0xff]
        %v2292 = vld [vmem:[%s453 + $0x7a8] sm:$0xff]
        %v2293 = vld [vmem:[%s453 + $0x7b0] sm:$0xff]
        %v2294 = vld [vmem:[%s453 + $0x7b8] sm:$0xff]
        %v2295 = vld [vmem:[%s453 + $0x7c0] sm:$0xff]
        %v2296 = vld [vmem:[%s453 + $0x7c8] sm:$0xff]
        %v2297 = vld [vmem:[%s453 + $0x7d0] sm:$0xff]
        %v2298 = vld [vmem:[%s453 + $0x7d8] sm:$0xff]
        %v2299 = vld [vmem:[%s453 + $0x7e0] sm:$0xff]
        %v2300 = vld [vmem:[%s453 + $0x7e8] sm:$0xff]
        %v2301 = vld [vmem:[%s453 + $0x7f0] sm:$0xff]
        %v2302 = vld [vmem:[%s453 + $0x7f8] sm:$0xff]
        %v2303 = vld [vmem:[%s453 + $0x800] sm:$0xff]
        %v2304 = vld [vmem:[%s453 + $0x808] sm:$0xff]
        %v2305 = vld [vmem:[%s453 + $0x810] sm:$0xff]
        %v2306 = vld [vmem:[%s453 + $0x818] sm:$0xff]
        %v2307 = vld [vmem:[%s453 + $0x820] sm:$0xff]
        %v2308 = vld [vmem:[%s453 + $0x828] sm:$0xff]
        %v2309 = vld [vmem:[%s453 + $0x830] sm:$0xff]
        %v2310 = vld [vmem:[%s453 + $0x838] sm:$0xff]
        %v2311 = vld [vmem:[%s453 + $0x840] sm:$0xff]
        %v2312 = vld [vmem:[%s453 + $0x848] sm:$0xff]
        %v2313 = vld [vmem:[%s453 + $0x850] sm:$0xff]
        %v2314 = vld [vmem:[%s453 + $0x858] sm:$0xff]
        %v2315 = vld [vmem:[%s453 + $0x860] sm:$0xff]
        %v2316 = vld [vmem:[%s453 + $0x868] sm:$0xff]
        %v2317 = vld [vmem:[%s453 + $0x870] sm:$0xff]
        %v2318 = vld [vmem:[%s453 + $0x878] sm:$0xff]
        %v2319 = vld [vmem:[%s453 + $0x880] sm:$0xff]
        %v2320 = vld [vmem:[%s453 + $0x888] sm:$0xff]
        %v2321 = vld [vmem:[%s453 + $0x890] sm:$0xff]
        %v2322 = vld [vmem:[%s453 + $0x898] sm:$0xff]
        %v2323 = vld [vmem:[%s453 + $0x8a0] sm:$0xff]
        %v2324 = vld [vmem:[%s453 + $0x8a8] sm:$0xff]
        %v2325 = vld [vmem:[%s453 + $0x8b0] sm:$0xff]
        %v2326 = vld [vmem:[%s453 + $0x8b8] sm:$0xff]
        %v2327 = vld [vmem:[%s453 + $0x8c0] sm:$0xff]
        %v2328 = vld [vmem:[%s453 + $0x8c8] sm:$0xff]
        %v2329 = vld [vmem:[%s453 + $0x8d0] sm:$0xff]
        %v2330 = vld [vmem:[%s453 + $0x8d8] sm:$0xff]
        %v2331 = vld [vmem:[%s453 + $0x8e0] sm:$0xff]
        %v2332 = vld [vmem:[%s453 + $0x8e8] sm:$0xff]
        %v2333 = vld [vmem:[%s453 + $0x8f0] sm:$0xff]
        %v2334 = vld [vmem:[%s453 + $0x8f8] sm:$0xff]
        %v2335 = vpack.c.bf16 %v2041, %v2041
        %v2336 = vpack.c.bf16 %v2042, %v2042
        %v2337 = vpack.c.bf16 %v2043, %v2043
        %v2338 = vpack.c.bf16 %v2044, %v2044
        %v2339 = vpack.c.bf16 %v2045, %v2045
        %v2340 = vpack.c.bf16 %v2046, %v2046
        %v2341 = vperm.slane %v551, 1
        %v2342 = vperm.slane %v552, 1
        %v2343 = vperm.slane %v553, 1
        %v2344 = vperm.slane %v554, 1
        %v2345 = vperm.slane %v555, 1
        %v2346 = vperm.slane %v556, 1
        %v2635 = vunpack.c.l.b16 %v2047
        %v2636 = vunpack.c.h.b16 %v2047
        %v2637 = vunpack.c.l.b16 %v2048
        %v2638 = vunpack.c.h.b16 %v2048
        %v2639 = vunpack.c.l.b16 %v2049
        %v2640 = vunpack.c.h.b16 %v2049
        %v2641 = vunpack.c.l.b16 %v2050
        %v2642 = vunpack.c.h.b16 %v2050
        %v2643 = vunpack.c.l.b16 %v2051
        %v2644 = vunpack.c.h.b16 %v2051
        %v2645 = vunpack.c.l.b16 %v2052
        %v2646 = vunpack.c.h.b16 %v2052
        %v2647 = vunpack.c.l.b16 %v2053
        %v2648 = vunpack.c.h.b16 %v2053
        %v2649 = vunpack.c.l.b16 %v2054
        %v2650 = vunpack.c.h.b16 %v2054
        %v2651 = vunpack.c.l.b16 %v2055
        %v2652 = vunpack.c.h.b16 %v2055
        %v2653 = vunpack.c.l.b16 %v2056
        %v2654 = vunpack.c.h.b16 %v2056
        %v2655 = vunpack.c.l.b16 %v2057
        %v2656 = vunpack.c.h.b16 %v2057
        %v2657 = vunpack.c.l.b16 %v2058
        %v2658 = vunpack.c.h.b16 %v2058
        %v2659 = vunpack.c.l.b16 %v2059
        %v2660 = vunpack.c.h.b16 %v2059
        %v2661 = vunpack.c.l.b16 %v2060
        %v2662 = vunpack.c.h.b16 %v2060
        %v2663 = vunpack.c.l.b16 %v2061
        %v2664 = vunpack.c.h.b16 %v2061
        %v2665 = vunpack.c.l.b16 %v2062
        %v2666 = vunpack.c.h.b16 %v2062
        %v2667 = vunpack.c.l.b16 %v2063
        %v2668 = vunpack.c.h.b16 %v2063
        %v2669 = vunpack.c.l.b16 %v2064
        %v2670 = vunpack.c.h.b16 %v2064
        %v2671 = vunpack.c.l.b16 %v2065
        %v2672 = vunpack.c.h.b16 %v2065
        %v2673 = vunpack.c.l.b16 %v2066
        %v2674 = vunpack.c.h.b16 %v2066
        %v2675 = vunpack.c.l.b16 %v2067
        %v2676 = vunpack.c.h.b16 %v2067
        %v2677 = vunpack.c.l.b16 %v2068
        %v2678 = vunpack.c.h.b16 %v2068
        %v2679 = vunpack.c.l.b16 %v2069
        %v2680 = vunpack.c.h.b16 %v2069
        %v2681 = vunpack.c.l.b16 %v2070
        %v2682 = vunpack.c.h.b16 %v2070
        %v2683 = vunpack.c.l.b16 %v2071
        %v2684 = vunpack.c.h.b16 %v2071
        %v2685 = vunpack.c.l.b16 %v2072
        %v2686 = vunpack.c.h.b16 %v2072
        %v2687 = vunpack.c.l.b16 %v2073
        %v2688 = vunpack.c.h.b16 %v2073
        %v2689 = vunpack.c.l.b16 %v2074
        %v2690 = vunpack.c.h.b16 %v2074
        %v2691 = vunpack.c.l.b16 %v2075
        %v2692 = vunpack.c.h.b16 %v2075
        %v2693 = vunpack.c.l.b16 %v2076
        %v2694 = vunpack.c.h.b16 %v2076
        %v2695 = vunpack.c.l.b16 %v2077
        %v2696 = vunpack.c.h.b16 %v2077
        %v2697 = vunpack.c.l.b16 %v2078
        %v2698 = vunpack.c.h.b16 %v2078
        %v2699 = vunpack.c.l.b16 %v2079
        %v2700 = vunpack.c.h.b16 %v2079
        %v2701 = vunpack.c.l.b16 %v2080
        %v2702 = vunpack.c.h.b16 %v2080
        %v2703 = vunpack.c.l.b16 %v2081
        %v2704 = vunpack.c.h.b16 %v2081
        %v2705 = vunpack.c.l.b16 %v2082
        %v2706 = vunpack.c.h.b16 %v2082
        %v2707 = vunpack.c.l.b16 %v2083
        %v2708 = vunpack.c.h.b16 %v2083
        %v2709 = vunpack.c.l.b16 %v2084
        %v2710 = vunpack.c.h.b16 %v2084
        %v2711 = vunpack.c.l.b16 %v2085
        %v2712 = vunpack.c.h.b16 %v2085
        %v2713 = vunpack.c.l.b16 %v2086
        %v2714 = vunpack.c.h.b16 %v2086
        %v2715 = vunpack.c.l.b16 %v2087
        %v2716 = vunpack.c.h.b16 %v2087
        %v2717 = vunpack.c.l.b16 %v2088
        %v2718 = vunpack.c.h.b16 %v2088
        %v2719 = vunpack.c.l.b16 %v2089
        %v2720 = vunpack.c.h.b16 %v2089
        %v2721 = vunpack.c.l.b16 %v2090
        %v2722 = vunpack.c.h.b16 %v2090
        %v2723 = vunpack.c.l.b16 %v2091
        %v2724 = vunpack.c.h.b16 %v2091
        %v2725 = vunpack.c.l.b16 %v2092
        %v2726 = vunpack.c.h.b16 %v2092
        %v2727 = vunpack.c.l.b16 %v2093
        %v2728 = vunpack.c.h.b16 %v2093
        %v2729 = vunpack.c.l.b16 %v2094
        %v2730 = vunpack.c.h.b16 %v2094
        %v2731 = vunpack.c.l.b16 %v2095
        %v2732 = vunpack.c.h.b16 %v2095
        %v2733 = vunpack.c.l.b16 %v2096
        %v2734 = vunpack.c.h.b16 %v2096
        %v2735 = vunpack.c.l.b16 %v2097
        %v2736 = vunpack.c.h.b16 %v2097
        %v2737 = vunpack.c.l.b16 %v2098
        %v2738 = vunpack.c.h.b16 %v2098
        %v2739 = vunpack.c.l.b16 %v2099
        %v2740 = vunpack.c.h.b16 %v2099
        %v2741 = vunpack.c.l.b16 %v2100
        %v2742 = vunpack.c.h.b16 %v2100
        %v2743 = vunpack.c.l.b16 %v2101
        %v2744 = vunpack.c.h.b16 %v2101
        %v2745 = vunpack.c.l.b16 %v2102
        %v2746 = vunpack.c.h.b16 %v2102
        %v2747 = vunpack.c.l.b16 %v2103
        %v2748 = vunpack.c.h.b16 %v2103
        %v2749 = vunpack.c.l.b16 %v2104
        %v2750 = vunpack.c.h.b16 %v2104
        %v2751 = vunpack.c.l.b16 %v2105
        %v2752 = vunpack.c.h.b16 %v2105
        %v2753 = vunpack.c.l.b16 %v2106
        %v2754 = vunpack.c.h.b16 %v2106
        %v2755 = vunpack.c.l.b16 %v2107
        %v2756 = vunpack.c.h.b16 %v2107
        %v2757 = vunpack.c.l.b16 %v2108
        %v2758 = vunpack.c.h.b16 %v2108
        %v2759 = vunpack.c.l.b16 %v2109
        %v2760 = vunpack.c.h.b16 %v2109
        %v2761 = vunpack.c.l.b16 %v2110
        %v2762 = vunpack.c.h.b16 %v2110
        %v2763 = vunpack.c.l.b16 %v2111
        %v2764 = vunpack.c.h.b16 %v2111
        %v2765 = vunpack.c.l.b16 %v2112
        %v2766 = vunpack.c.h.b16 %v2112
        %v2767 = vunpack.c.l.b16 %v2113
        %v2768 = vunpack.c.h.b16 %v2113
        %v2769 = vunpack.c.l.b16 %v2114
        %v2770 = vunpack.c.h.b16 %v2114
        %v2771 = vunpack.c.l.b16 %v2115
        %v2772 = vunpack.c.h.b16 %v2115
        %v2773 = vunpack.c.l.b16 %v2116
        %v2774 = vunpack.c.h.b16 %v2116
        %v2775 = vunpack.c.l.b16 %v2117
        %v2776 = vunpack.c.h.b16 %v2117
        %v2777 = vunpack.c.l.b16 %v2118
        %v2778 = vunpack.c.h.b16 %v2118
        %v2779 = vunpack.c.l.b16 %v2119
        %v2780 = vunpack.c.h.b16 %v2119
        %v2781 = vunpack.c.l.b16 %v2120
        %v2782 = vunpack.c.h.b16 %v2120
        %v2783 = vunpack.c.l.b16 %v2121
        %v2784 = vunpack.c.h.b16 %v2121
        %v2785 = vunpack.c.l.b16 %v2122
        %v2786 = vunpack.c.h.b16 %v2122
        %v2787 = vunpack.c.l.b16 %v2123
        %v2788 = vunpack.c.h.b16 %v2123
        %v2789 = vunpack.c.l.b16 %v2124
        %v2790 = vunpack.c.h.b16 %v2124
        %v2791 = vunpack.c.l.b16 %v2125
        %v2792 = vunpack.c.h.b16 %v2125
        %v2793 = vunpack.c.l.b16 %v2126
        %v2794 = vunpack.c.h.b16 %v2126
        %v2795 = vunpack.c.l.b16 %v2127
        %v2796 = vunpack.c.h.b16 %v2127
        %v2797 = vunpack.c.l.b16 %v2128
        %v2798 = vunpack.c.h.b16 %v2128
        %v2799 = vunpack.c.l.b16 %v2129
        %v2800 = vunpack.c.h.b16 %v2129
        %v2801 = vunpack.c.l.b16 %v2130
        %v2802 = vunpack.c.h.b16 %v2130
        %v2803 = vunpack.c.l.b16 %v2131
        %v2804 = vunpack.c.h.b16 %v2131
        %v2805 = vunpack.c.l.b16 %v2132
        %v2806 = vunpack.c.h.b16 %v2132
        %v2807 = vunpack.c.l.b16 %v2133
        %v2808 = vunpack.c.h.b16 %v2133
        %v2809 = vunpack.c.l.b16 %v2134
        %v2810 = vunpack.c.h.b16 %v2134
        %v2811 = vunpack.c.l.b16 %v2135
        %v2812 = vunpack.c.h.b16 %v2135
        %v2813 = vunpack.c.l.b16 %v2136
        %v2814 = vunpack.c.h.b16 %v2136
        %v2815 = vunpack.c.l.b16 %v2137
        %v2816 = vunpack.c.h.b16 %v2137
        %v2817 = vunpack.c.l.b16 %v2138
        %v2818 = vunpack.c.h.b16 %v2138
        %v2819 = vunpack.c.l.b16 %v2139
        %v2820 = vunpack.c.h.b16 %v2139
        %v2821 = vunpack.c.l.b16 %v2140
        %v2822 = vunpack.c.h.b16 %v2140
        %v2823 = vunpack.c.l.b16 %v2141
        %v2824 = vunpack.c.h.b16 %v2141
        %v2825 = vunpack.c.l.b16 %v2142
        %v2826 = vunpack.c.h.b16 %v2142
        %v2827 = vunpack.c.l.b16 %v2143
        %v2828 = vunpack.c.h.b16 %v2143
        %v2829 = vunpack.c.l.b16 %v2144
        %v2830 = vunpack.c.h.b16 %v2144
        %v2831 = vunpack.c.l.b16 %v2145
        %v2832 = vunpack.c.h.b16 %v2145
        %v2833 = vunpack.c.l.b16 %v2146
        %v2834 = vunpack.c.h.b16 %v2146
        %v2835 = vunpack.c.l.b16 %v2147
        %v2836 = vunpack.c.h.b16 %v2147
        %v2837 = vunpack.c.l.b16 %v2148
        %v2838 = vunpack.c.h.b16 %v2148
        %v2839 = vunpack.c.l.b16 %v2149
        %v2840 = vunpack.c.h.b16 %v2149
        %v2841 = vunpack.c.l.b16 %v2150
        %v2842 = vunpack.c.h.b16 %v2150
        %v2843 = vunpack.c.l.b16 %v2151
        %v2844 = vunpack.c.h.b16 %v2151
        %v2845 = vunpack.c.l.b16 %v2152
        %v2846 = vunpack.c.h.b16 %v2152
        %v2847 = vunpack.c.l.b16 %v2153
        %v2848 = vunpack.c.h.b16 %v2153
        %v2849 = vunpack.c.l.b16 %v2154
        %v2850 = vunpack.c.h.b16 %v2154
        %v2851 = vunpack.c.l.b16 %v2155
        %v2852 = vunpack.c.h.b16 %v2155
        %v2853 = vunpack.c.l.b16 %v2156
        %v2854 = vunpack.c.h.b16 %v2156
        %v2855 = vunpack.c.l.b16 %v2157
        %v2856 = vunpack.c.h.b16 %v2157
        %v2857 = vunpack.c.l.b16 %v2158
        %v2858 = vunpack.c.h.b16 %v2158
        %v2859 = vunpack.c.l.b16 %v2159
        %v2860 = vunpack.c.h.b16 %v2159
        %v2861 = vunpack.c.l.b16 %v2160
        %v2862 = vunpack.c.h.b16 %v2160
        %v2863 = vunpack.c.l.b16 %v2161
        %v2864 = vunpack.c.h.b16 %v2161
        %v2865 = vunpack.c.l.b16 %v2162
        %v2866 = vunpack.c.h.b16 %v2162
        %v2867 = vunpack.c.l.b16 %v2163
        %v2868 = vunpack.c.h.b16 %v2163
        %v2869 = vunpack.c.l.b16 %v2164
        %v2870 = vunpack.c.h.b16 %v2164
        %v2871 = vunpack.c.l.b16 %v2165
        %v2872 = vunpack.c.h.b16 %v2165
        %v2873 = vunpack.c.l.b16 %v2166
        %v2874 = vunpack.c.h.b16 %v2166
        %v2875 = vunpack.c.l.b16 %v2167
        %v2876 = vunpack.c.h.b16 %v2167
        %v2877 = vunpack.c.l.b16 %v2168
        %v2878 = vunpack.c.h.b16 %v2168
        %v2879 = vunpack.c.l.b16 %v2169
        %v2880 = vunpack.c.h.b16 %v2169
        %v2881 = vunpack.c.l.b16 %v2170
        %v2882 = vunpack.c.h.b16 %v2170
        %v2883 = vunpack.c.l.b16 %v2171
        %v2884 = vunpack.c.h.b16 %v2171
        %v2885 = vunpack.c.l.b16 %v2172
        %v2886 = vunpack.c.h.b16 %v2172
        %v2887 = vunpack.c.l.b16 %v2173
        %v2888 = vunpack.c.h.b16 %v2173
        %v2889 = vunpack.c.l.b16 %v2174
        %v2890 = vunpack.c.h.b16 %v2174
        %v2891 = vunpack.c.l.b16 %v2175
        %v2892 = vunpack.c.h.b16 %v2175
        %v2893 = vunpack.c.l.b16 %v2176
        %v2894 = vunpack.c.h.b16 %v2176
        %v2895 = vunpack.c.l.b16 %v2177
        %v2896 = vunpack.c.h.b16 %v2177
        %v2897 = vunpack.c.l.b16 %v2178
        %v2898 = vunpack.c.h.b16 %v2178
        %v2899 = vunpack.c.l.b16 %v2179
        %v2900 = vunpack.c.h.b16 %v2179
        %v2901 = vunpack.c.l.b16 %v2180
        %v2902 = vunpack.c.h.b16 %v2180
        %v2903 = vunpack.c.l.b16 %v2181
        %v2904 = vunpack.c.h.b16 %v2181
        %v2905 = vunpack.c.l.b16 %v2182
        %v2906 = vunpack.c.h.b16 %v2182
        %v2907 = vunpack.c.l.b16 %v2183
        %v2908 = vunpack.c.h.b16 %v2183
        %v2909 = vunpack.c.l.b16 %v2184
        %v2910 = vunpack.c.h.b16 %v2184
        %v2911 = vunpack.c.l.b16 %v2185
        %v2912 = vunpack.c.h.b16 %v2185
        %v2913 = vunpack.c.l.b16 %v2186
        %v2914 = vunpack.c.h.b16 %v2186
        %v2915 = vunpack.c.l.b16 %v2187
        %v2916 = vunpack.c.h.b16 %v2187
        %v2917 = vunpack.c.l.b16 %v2188
        %v2918 = vunpack.c.h.b16 %v2188
        %v2919 = vunpack.c.l.b16 %v2189
        %v2920 = vunpack.c.h.b16 %v2189
        %v2921 = vunpack.c.l.b16 %v2190
        %v2922 = vunpack.c.h.b16 %v2190
        %v2923 = vunpack.c.l.b16 %v2191
        %v2924 = vunpack.c.h.b16 %v2191
        %v2925 = vunpack.c.l.b16 %v2192
        %v2926 = vunpack.c.h.b16 %v2192
        %v2927 = vunpack.c.l.b16 %v2193
        %v2928 = vunpack.c.h.b16 %v2193
        %v2929 = vunpack.c.l.b16 %v2194
        %v2930 = vunpack.c.h.b16 %v2194
        %v2931 = vunpack.c.l.b16 %v2195
        %v2932 = vunpack.c.h.b16 %v2195
        %v2933 = vunpack.c.l.b16 %v2196
        %v2934 = vunpack.c.h.b16 %v2196
        %v2935 = vunpack.c.l.b16 %v2197
        %v2936 = vunpack.c.h.b16 %v2197
        %v2937 = vunpack.c.l.b16 %v2198
        %v2938 = vunpack.c.h.b16 %v2198
        %v2939 = vunpack.c.l.b16 %v2199
        %v2940 = vunpack.c.h.b16 %v2199
        %v2941 = vunpack.c.l.b16 %v2200
        %v2942 = vunpack.c.h.b16 %v2200
        %v2943 = vunpack.c.l.b16 %v2201
        %v2944 = vunpack.c.h.b16 %v2201
        %v2945 = vunpack.c.l.b16 %v2202
        %v2946 = vunpack.c.h.b16 %v2202
        %v2947 = vunpack.c.l.b16 %v2203
        %v2948 = vunpack.c.h.b16 %v2203
        %v2949 = vunpack.c.l.b16 %v2204
        %v2950 = vunpack.c.h.b16 %v2204
        %v2951 = vunpack.c.l.b16 %v2205
        %v2952 = vunpack.c.h.b16 %v2205
        %v2953 = vunpack.c.l.b16 %v2206
        %v2954 = vunpack.c.h.b16 %v2206
        %v2955 = vunpack.c.l.b16 %v2207
        %v2956 = vunpack.c.h.b16 %v2207
        %v2957 = vunpack.c.l.b16 %v2208
        %v2958 = vunpack.c.h.b16 %v2208
        %v2959 = vunpack.c.l.b16 %v2209
        %v2960 = vunpack.c.h.b16 %v2209
        %v2961 = vunpack.c.l.b16 %v2210
        %v2962 = vunpack.c.h.b16 %v2210
        %v2963 = vunpack.c.l.b16 %v2211
        %v2964 = vunpack.c.h.b16 %v2211
        %v2965 = vunpack.c.l.b16 %v2212
        %v2966 = vunpack.c.h.b16 %v2212
        %v2967 = vunpack.c.l.b16 %v2213
        %v2968 = vunpack.c.h.b16 %v2213
        %v2969 = vunpack.c.l.b16 %v2214
        %v2970 = vunpack.c.h.b16 %v2214
        %v2971 = vunpack.c.l.b16 %v2215
        %v2972 = vunpack.c.h.b16 %v2215
        %v2973 = vunpack.c.l.b16 %v2216
        %v2974 = vunpack.c.h.b16 %v2216
        %v2975 = vunpack.c.l.b16 %v2217
        %v2976 = vunpack.c.h.b16 %v2217
        %v2977 = vunpack.c.l.b16 %v2218
        %v2978 = vunpack.c.h.b16 %v2218
        %v2979 = vunpack.c.l.b16 %v2219
        %v2980 = vunpack.c.h.b16 %v2219
        %v2981 = vunpack.c.l.b16 %v2220
        %v2982 = vunpack.c.h.b16 %v2220
        %v2983 = vunpack.c.l.b16 %v2221
        %v2984 = vunpack.c.h.b16 %v2221
        %v2985 = vunpack.c.l.b16 %v2222
        %v2986 = vunpack.c.h.b16 %v2222
        %v2987 = vunpack.c.l.b16 %v2223
        %v2988 = vunpack.c.h.b16 %v2223
        %v2989 = vunpack.c.l.b16 %v2224
        %v2990 = vunpack.c.h.b16 %v2224
        %v2991 = vunpack.c.l.b16 %v2225
        %v2992 = vunpack.c.h.b16 %v2225
        %v2993 = vunpack.c.l.b16 %v2226
        %v2994 = vunpack.c.h.b16 %v2226
        %v2995 = vunpack.c.l.b16 %v2227
        %v2996 = vunpack.c.h.b16 %v2227
        %v2997 = vunpack.c.l.b16 %v2228
        %v2998 = vunpack.c.h.b16 %v2228
        %v2999 = vunpack.c.l.b16 %v2229
        %v3000 = vunpack.c.h.b16 %v2229
        %v3001 = vunpack.c.l.b16 %v2230
        %v3002 = vunpack.c.h.b16 %v2230
        %v3003 = vunpack.c.l.b16 %v2231
        %v3004 = vunpack.c.h.b16 %v2231
        %v3005 = vunpack.c.l.b16 %v2232
        %v3006 = vunpack.c.h.b16 %v2232
        %v3007 = vunpack.c.l.b16 %v2233
        %v3008 = vunpack.c.h.b16 %v2233
        %v3009 = vunpack.c.l.b16 %v2234
        %v3010 = vunpack.c.h.b16 %v2234
        %v3011 = vunpack.c.l.b16 %v2235
        %v3012 = vunpack.c.h.b16 %v2235
        %v3013 = vunpack.c.l.b16 %v2236
        %v3014 = vunpack.c.h.b16 %v2236
        %v3015 = vunpack.c.l.b16 %v2237
        %v3016 = vunpack.c.h.b16 %v2237
        %v3017 = vunpack.c.l.b16 %v2238
        %v3018 = vunpack.c.h.b16 %v2238
        %v3019 = vunpack.c.l.b16 %v2239
        %v3020 = vunpack.c.h.b16 %v2239
        %v3021 = vunpack.c.l.b16 %v2240
        %v3022 = vunpack.c.h.b16 %v2240
        %v3023 = vunpack.c.l.b16 %v2241
        %v3024 = vunpack.c.h.b16 %v2241
        %v3025 = vunpack.c.l.b16 %v2242
        %v3026 = vunpack.c.h.b16 %v2242
        %v3027 = vunpack.c.l.b16 %v2243
        %v3028 = vunpack.c.h.b16 %v2243
        %v3029 = vunpack.c.l.b16 %v2244
        %v3030 = vunpack.c.h.b16 %v2244
        %v3031 = vunpack.c.l.b16 %v2245
        %v3032 = vunpack.c.h.b16 %v2245
        %v3033 = vunpack.c.l.b16 %v2246
        %v3034 = vunpack.c.h.b16 %v2246
        %v3035 = vunpack.c.l.b16 %v2247
        %v3036 = vunpack.c.h.b16 %v2247
        %v3037 = vunpack.c.l.b16 %v2248
        %v3038 = vunpack.c.h.b16 %v2248
        %v3039 = vunpack.c.l.b16 %v2249
        %v3040 = vunpack.c.h.b16 %v2249
        %v3041 = vunpack.c.l.b16 %v2250
        %v3042 = vunpack.c.h.b16 %v2250
        %v3043 = vunpack.c.l.b16 %v2251
        %v3044 = vunpack.c.h.b16 %v2251
        %v3045 = vunpack.c.l.b16 %v2252
        %v3046 = vunpack.c.h.b16 %v2252
        %v3047 = vunpack.c.l.b16 %v2253
        %v3048 = vunpack.c.h.b16 %v2253
        %v3049 = vunpack.c.l.b16 %v2254
        %v3050 = vunpack.c.h.b16 %v2254
        %v3051 = vunpack.c.l.b16 %v2255
        %v3052 = vunpack.c.h.b16 %v2255
        %v3053 = vunpack.c.l.b16 %v2256
        %v3054 = vunpack.c.h.b16 %v2256
        %v3055 = vunpack.c.l.b16 %v2257
        %v3056 = vunpack.c.h.b16 %v2257
        %v3057 = vunpack.c.l.b16 %v2258
        %v3058 = vunpack.c.h.b16 %v2258
        %v3059 = vunpack.c.l.b16 %v2259
        %v3060 = vunpack.c.h.b16 %v2259
        %v3061 = vunpack.c.l.b16 %v2260
        %v3062 = vunpack.c.h.b16 %v2260
        %v3063 = vunpack.c.l.b16 %v2261
        %v3064 = vunpack.c.h.b16 %v2261
        %v3065 = vunpack.c.l.b16 %v2262
        %v3066 = vunpack.c.h.b16 %v2262
        %v3067 = vunpack.c.l.b16 %v2263
        %v3068 = vunpack.c.h.b16 %v2263
        %v3069 = vunpack.c.l.b16 %v2264
        %v3070 = vunpack.c.h.b16 %v2264
        %v3071 = vunpack.c.l.b16 %v2265
        %v3072 = vunpack.c.h.b16 %v2265
        %v3073 = vunpack.c.l.b16 %v2266
        %v3074 = vunpack.c.h.b16 %v2266
        %v3075 = vunpack.c.l.b16 %v2267
        %v3076 = vunpack.c.h.b16 %v2267
        %v3077 = vunpack.c.l.b16 %v2268
        %v3078 = vunpack.c.h.b16 %v2268
        %v3079 = vunpack.c.l.b16 %v2269
        %v3080 = vunpack.c.h.b16 %v2269
        %v3081 = vunpack.c.l.b16 %v2270
        %v3082 = vunpack.c.h.b16 %v2270
        %v3083 = vunpack.c.l.b16 %v2271
        %v3084 = vunpack.c.h.b16 %v2271
        %v3085 = vunpack.c.l.b16 %v2272
        %v3086 = vunpack.c.h.b16 %v2272
        %v3087 = vunpack.c.l.b16 %v2273
        %v3088 = vunpack.c.h.b16 %v2273
        %v3089 = vunpack.c.l.b16 %v2274
        %v3090 = vunpack.c.h.b16 %v2274
        %v3091 = vunpack.c.l.b16 %v2275
        %v3092 = vunpack.c.h.b16 %v2275
        %v3093 = vunpack.c.l.b16 %v2276
        %v3094 = vunpack.c.h.b16 %v2276
        %v3095 = vunpack.c.l.b16 %v2277
        %v3096 = vunpack.c.h.b16 %v2277
        %v3097 = vunpack.c.l.b16 %v2278
        %v3098 = vunpack.c.h.b16 %v2278
        %v3099 = vunpack.c.l.b16 %v2279
        %v3100 = vunpack.c.h.b16 %v2279
        %v3101 = vunpack.c.l.b16 %v2280
        %v3102 = vunpack.c.h.b16 %v2280
        %v3103 = vunpack.c.l.b16 %v2281
        %v3104 = vunpack.c.h.b16 %v2281
        %v3105 = vunpack.c.l.b16 %v2282
        %v3106 = vunpack.c.h.b16 %v2282
        %v3107 = vunpack.c.l.b16 %v2283
        %v3108 = vunpack.c.h.b16 %v2283
        %v3109 = vunpack.c.l.b16 %v2284
        %v3110 = vunpack.c.h.b16 %v2284
        %v3111 = vunpack.c.l.b16 %v2285
        %v3112 = vunpack.c.h.b16 %v2285
        %v3113 = vunpack.c.l.b16 %v2286
        %v3114 = vunpack.c.h.b16 %v2286
        %v3115 = vunpack.c.l.b16 %v2287
        %v3116 = vunpack.c.h.b16 %v2287
        %v3117 = vunpack.c.l.b16 %v2288
        %v3118 = vunpack.c.h.b16 %v2288
        %v3119 = vunpack.c.l.b16 %v2289
        %v3120 = vunpack.c.h.b16 %v2289
        %v3121 = vunpack.c.l.b16 %v2290
        %v3122 = vunpack.c.h.b16 %v2290
        %v3123 = vunpack.c.l.b16 %v2291
        %v3124 = vunpack.c.h.b16 %v2291
        %v3125 = vunpack.c.l.b16 %v2292
        %v3126 = vunpack.c.h.b16 %v2292
        %v3127 = vunpack.c.l.b16 %v2293
        %v3128 = vunpack.c.h.b16 %v2293
        %v3129 = vunpack.c.l.b16 %v2294
        %v3130 = vunpack.c.h.b16 %v2294
        %v3131 = vunpack.c.l.b16 %v2295
        %v3132 = vunpack.c.h.b16 %v2295
        %v3133 = vunpack.c.l.b16 %v2296
        %v3134 = vunpack.c.h.b16 %v2296
        %v3135 = vunpack.c.l.b16 %v2297
        %v3136 = vunpack.c.h.b16 %v2297
        %v3137 = vunpack.c.l.b16 %v2298
        %v3138 = vunpack.c.h.b16 %v2298
        %v3139 = vunpack.c.l.b16 %v2299
        %v3140 = vunpack.c.h.b16 %v2299
        %v3141 = vunpack.c.l.b16 %v2300
        %v3142 = vunpack.c.h.b16 %v2300
        %v3143 = vunpack.c.l.b16 %v2301
        %v3144 = vunpack.c.h.b16 %v2301
        %v3145 = vunpack.c.l.b16 %v2302
        %v3146 = vunpack.c.h.b16 %v2302
        %v3147 = vunpack.c.l.b16 %v2303
        %v3148 = vunpack.c.h.b16 %v2303
        %v3149 = vunpack.c.l.b16 %v2304
        %v3150 = vunpack.c.h.b16 %v2304
        %v3151 = vunpack.c.l.b16 %v2305
        %v3152 = vunpack.c.h.b16 %v2305
        %v3153 = vunpack.c.l.b16 %v2306
        %v3154 = vunpack.c.h.b16 %v2306
        %v3155 = vunpack.c.l.b16 %v2307
        %v3156 = vunpack.c.h.b16 %v2307
        %v3157 = vunpack.c.l.b16 %v2308
        %v3158 = vunpack.c.h.b16 %v2308
        %v3159 = vunpack.c.l.b16 %v2309
        %v3160 = vunpack.c.h.b16 %v2309
        %v3161 = vunpack.c.l.b16 %v2310
        %v3162 = vunpack.c.h.b16 %v2310
        %v3163 = vunpack.c.l.b16 %v2311
        %v3164 = vunpack.c.h.b16 %v2311
        %v3165 = vunpack.c.l.b16 %v2312
        %v3166 = vunpack.c.h.b16 %v2312
        %v3167 = vunpack.c.l.b16 %v2313
        %v3168 = vunpack.c.h.b16 %v2313
        %v3169 = vunpack.c.l.b16 %v2314
        %v3170 = vunpack.c.h.b16 %v2314
        %v3171 = vunpack.c.l.b16 %v2315
        %v3172 = vunpack.c.h.b16 %v2315
        %v3173 = vunpack.c.l.b16 %v2316
        %v3174 = vunpack.c.h.b16 %v2316
        %v3175 = vunpack.c.l.b16 %v2317
        %v3176 = vunpack.c.h.b16 %v2317
        %v3177 = vunpack.c.l.b16 %v2318
        %v3178 = vunpack.c.h.b16 %v2318
        %v3179 = vunpack.c.l.b16 %v2319
        %v3180 = vunpack.c.h.b16 %v2319
        %v3181 = vunpack.c.l.b16 %v2320
        %v3182 = vunpack.c.h.b16 %v2320
        %v3183 = vunpack.c.l.b16 %v2321
        %v3184 = vunpack.c.h.b16 %v2321
        %v3185 = vunpack.c.l.b16 %v2322
        %v3186 = vunpack.c.h.b16 %v2322
        %v3187 = vunpack.c.l.b16 %v2323
        %v3188 = vunpack.c.h.b16 %v2323
        %v3189 = vunpack.c.l.b16 %v2324
        %v3190 = vunpack.c.h.b16 %v2324
        %v3191 = vunpack.c.l.b16 %v2325
        %v3192 = vunpack.c.h.b16 %v2325
        %v3193 = vunpack.c.l.b16 %v2326
        %v3194 = vunpack.c.h.b16 %v2326
        %v3195 = vunpack.c.l.b16 %v2327
        %v3196 = vunpack.c.h.b16 %v2327
        %v3197 = vunpack.c.l.b16 %v2328
        %v3198 = vunpack.c.h.b16 %v2328
        %v3199 = vunpack.c.l.b16 %v2329
        %v3200 = vunpack.c.h.b16 %v2329
        %v3201 = vunpack.c.l.b16 %v2330
        %v3202 = vunpack.c.h.b16 %v2330
        %v3203 = vunpack.c.l.b16 %v2331
        %v3204 = vunpack.c.h.b16 %v2331
        %v3205 = vunpack.c.l.b16 %v2332
        %v3206 = vunpack.c.h.b16 %v2332
        %v3207 = vunpack.c.l.b16 %v2333
        %v3208 = vunpack.c.h.b16 %v2333
        %v3209 = vunpack.c.l.b16 %v2334
        %v3210 = vunpack.c.h.b16 %v2334
        %v3211 = vpack.c.b16 %v2641, %v2635
        %v3212 = vpack.c.b16 %v2642, %v2636
        %v3213 = vpack.c.b16 %v2643, %v2637
        %v3214 = vpack.c.b16 %v2644, %v2638
        %v3215 = vpack.c.b16 %v2645, %v2639
        %v3216 = vpack.c.b16 %v2646, %v2640
        %v3217 = vpack.c.b16 %v2653, %v2647
        %v3218 = vpack.c.b16 %v2654, %v2648
        %v3219 = vpack.c.b16 %v2655, %v2649
        %v3220 = vpack.c.b16 %v2656, %v2650
        %v3221 = vpack.c.b16 %v2657, %v2651
        %v3222 = vpack.c.b16 %v2658, %v2652
        %v3223 = vpack.c.b16 %v2665, %v2659
        %v3224 = vpack.c.b16 %v2666, %v2660
        %v3225 = vpack.c.b16 %v2667, %v2661
        %v3226 = vpack.c.b16 %v2668, %v2662
        %v3227 = vpack.c.b16 %v2669, %v2663
        %v3228 = vpack.c.b16 %v2670, %v2664
        %v3229 = vpack.c.b16 %v2677, %v2671
        %v3230 = vpack.c.b16 %v2678, %v2672
        %v3231 = vpack.c.b16 %v2679, %v2673
        %v3232 = vpack.c.b16 %v2680, %v2674
        %v3233 = vpack.c.b16 %v2681, %v2675
        %v3234 = vpack.c.b16 %v2682, %v2676
        %v3235 = vpack.c.b16 %v2689, %v2683
        %v3236 = vpack.c.b16 %v2690, %v2684
        %v3237 = vpack.c.b16 %v2691, %v2685
        %v3238 = vpack.c.b16 %v2692, %v2686
        %v3239 = vpack.c.b16 %v2693, %v2687
        %v3240 = vpack.c.b16 %v2694, %v2688
        %v3241 = vpack.c.b16 %v2701, %v2695
        %v3242 = vpack.c.b16 %v2702, %v2696
        %v3243 = vpack.c.b16 %v2703, %v2697
        %v3244 = vpack.c.b16 %v2704, %v2698
        %v3245 = vpack.c.b16 %v2705, %v2699
        %v3246 = vpack.c.b16 %v2706, %v2700
        %v3247 = vpack.c.b16 %v2713, %v2707
        %v3248 = vpack.c.b16 %v2714, %v2708
        %v3249 = vpack.c.b16 %v2715, %v2709
        %v3250 = vpack.c.b16 %v2716, %v2710
        %v3251 = vpack.c.b16 %v2717, %v2711
        %v3252 = vpack.c.b16 %v2718, %v2712
        %v3253 = vpack.c.b16 %v2725, %v2719
        %v3254 = vpack.c.b16 %v2726, %v2720
        %v3255 = vpack.c.b16 %v2727, %v2721
        %v3256 = vpack.c.b16 %v2728, %v2722
        %v3257 = vpack.c.b16 %v2729, %v2723
        %v3258 = vpack.c.b16 %v2730, %v2724
        %v3259 = vpack.c.b16 %v2737, %v2731
        %v3260 = vpack.c.b16 %v2738, %v2732
        %v3261 = vpack.c.b16 %v2739, %v2733
        %v3262 = vpack.c.b16 %v2740, %v2734
        %v3263 = vpack.c.b16 %v2741, %v2735
        %v3264 = vpack.c.b16 %v2742, %v2736
        %v3265 = vpack.c.b16 %v2749, %v2743
        %v3266 = vpack.c.b16 %v2750, %v2744
        %v3267 = vpack.c.b16 %v2751, %v2745
        %v3268 = vpack.c.b16 %v2752, %v2746
        %v3269 = vpack.c.b16 %v2753, %v2747
        %v3270 = vpack.c.b16 %v2754, %v2748
        %v3271 = vpack.c.b16 %v2761, %v2755
        %v3272 = vpack.c.b16 %v2762, %v2756
        %v3273 = vpack.c.b16 %v2763, %v2757
        %v3274 = vpack.c.b16 %v2764, %v2758
        %v3275 = vpack.c.b16 %v2765, %v2759
        %v3276 = vpack.c.b16 %v2766, %v2760
        %v3277 = vpack.c.b16 %v2773, %v2767
        %v3278 = vpack.c.b16 %v2774, %v2768
        %v3279 = vpack.c.b16 %v2775, %v2769
        %v3280 = vpack.c.b16 %v2776, %v2770
        %v3281 = vpack.c.b16 %v2777, %v2771
        %v3282 = vpack.c.b16 %v2778, %v2772
        %v3283 = vpack.c.b16 %v2785, %v2779
        %v3284 = vpack.c.b16 %v2786, %v2780
        %v3285 = vpack.c.b16 %v2787, %v2781
        %v3286 = vpack.c.b16 %v2788, %v2782
        %v3287 = vpack.c.b16 %v2789, %v2783
        %v3288 = vpack.c.b16 %v2790, %v2784
        %v3289 = vpack.c.b16 %v2797, %v2791
        %v3290 = vpack.c.b16 %v2798, %v2792
        %v3291 = vpack.c.b16 %v2799, %v2793
        %v3292 = vpack.c.b16 %v2800, %v2794
        %v3293 = vpack.c.b16 %v2801, %v2795
        %v3294 = vpack.c.b16 %v2802, %v2796
        %v3295 = vpack.c.b16 %v2809, %v2803
        %v3296 = vpack.c.b16 %v2810, %v2804
        %v3297 = vpack.c.b16 %v2811, %v2805
        %v3298 = vpack.c.b16 %v2812, %v2806
        %v3299 = vpack.c.b16 %v2813, %v2807
        %v3300 = vpack.c.b16 %v2814, %v2808
        %v3301 = vpack.c.b16 %v2821, %v2815
        %v3302 = vpack.c.b16 %v2822, %v2816
        %v3303 = vpack.c.b16 %v2823, %v2817
        %v3304 = vpack.c.b16 %v2824, %v2818
        %v3305 = vpack.c.b16 %v2825, %v2819
        %v3306 = vpack.c.b16 %v2826, %v2820
        %v3307 = vpack.c.b16 %v2833, %v2827
        %v3308 = vpack.c.b16 %v2834, %v2828
        %v3309 = vpack.c.b16 %v2835, %v2829
        %v3310 = vpack.c.b16 %v2836, %v2830
        %v3311 = vpack.c.b16 %v2837, %v2831
        %v3312 = vpack.c.b16 %v2838, %v2832
        %v3313 = vpack.c.b16 %v2845, %v2839
        %v3314 = vpack.c.b16 %v2846, %v2840
        %v3315 = vpack.c.b16 %v2847, %v2841
        %v3316 = vpack.c.b16 %v2848, %v2842
        %v3317 = vpack.c.b16 %v2849, %v2843
        %v3318 = vpack.c.b16 %v2850, %v2844
        %v3319 = vpack.c.b16 %v2857, %v2851
        %v3320 = vpack.c.b16 %v2858, %v2852
        %v3321 = vpack.c.b16 %v2859, %v2853
        %v3322 = vpack.c.b16 %v2860, %v2854
        %v3323 = vpack.c.b16 %v2861, %v2855
        %v3324 = vpack.c.b16 %v2862, %v2856
        %v3325 = vpack.c.b16 %v2869, %v2863
        %v3326 = vpack.c.b16 %v2870, %v2864
        %v3327 = vpack.c.b16 %v2871, %v2865
        %v3328 = vpack.c.b16 %v2872, %v2866
        %v3329 = vpack.c.b16 %v2873, %v2867
        %v3330 = vpack.c.b16 %v2874, %v2868
        %v3331 = vpack.c.b16 %v2881, %v2875
        %v3332 = vpack.c.b16 %v2882, %v2876
        %v3333 = vpack.c.b16 %v2883, %v2877
        %v3334 = vpack.c.b16 %v2884, %v2878
        %v3335 = vpack.c.b16 %v2885, %v2879
        %v3336 = vpack.c.b16 %v2886, %v2880
        %v3337 = vpack.c.b16 %v2893, %v2887
        %v3338 = vpack.c.b16 %v2894, %v2888
        %v3339 = vpack.c.b16 %v2895, %v2889
        %v3340 = vpack.c.b16 %v2896, %v2890
        %v3341 = vpack.c.b16 %v2897, %v2891
        %v3342 = vpack.c.b16 %v2898, %v2892
        %v3343 = vpack.c.b16 %v2905, %v2899
        %v3344 = vpack.c.b16 %v2906, %v2900
        %v3345 = vpack.c.b16 %v2907, %v2901
        %v3346 = vpack.c.b16 %v2908, %v2902
        %v3347 = vpack.c.b16 %v2909, %v2903
        %v3348 = vpack.c.b16 %v2910, %v2904
        %v3349 = vpack.c.b16 %v2917, %v2911
        %v3350 = vpack.c.b16 %v2918, %v2912
        %v3351 = vpack.c.b16 %v2919, %v2913
        %v3352 = vpack.c.b16 %v2920, %v2914
        %v3353 = vpack.c.b16 %v2921, %v2915
        %v3354 = vpack.c.b16 %v2922, %v2916
        %v3355 = vpack.c.b16 %v2929, %v2923
        %v3356 = vpack.c.b16 %v2930, %v2924
        %v3357 = vpack.c.b16 %v2931, %v2925
        %v3358 = vpack.c.b16 %v2932, %v2926
        %v3359 = vpack.c.b16 %v2933, %v2927
        %v3360 = vpack.c.b16 %v2934, %v2928
        %v3361 = vpack.c.b16 %v2941, %v2935
        %v3362 = vpack.c.b16 %v2942, %v2936
        %v3363 = vpack.c.b16 %v2943, %v2937
        %v3364 = vpack.c.b16 %v2944, %v2938
        %v3365 = vpack.c.b16 %v2945, %v2939
        %v3366 = vpack.c.b16 %v2946, %v2940
        %v3367 = vpack.c.b16 %v2953, %v2947
        %v3368 = vpack.c.b16 %v2954, %v2948
        %v3369 = vpack.c.b16 %v2955, %v2949
        %v3370 = vpack.c.b16 %v2956, %v2950
        %v3371 = vpack.c.b16 %v2957, %v2951
        %v3372 = vpack.c.b16 %v2958, %v2952
        %v3373 = vpack.c.b16 %v2965, %v2959
        %v3374 = vpack.c.b16 %v2966, %v2960
        %v3375 = vpack.c.b16 %v2967, %v2961
        %v3376 = vpack.c.b16 %v2968, %v2962
        %v3377 = vpack.c.b16 %v2969, %v2963
        %v3378 = vpack.c.b16 %v2970, %v2964
        %v3379 = vpack.c.b16 %v2977, %v2971
        %v3380 = vpack.c.b16 %v2978, %v2972
        %v3381 = vpack.c.b16 %v2979, %v2973
        %v3382 = vpack.c.b16 %v2980, %v2974
        %v3383 = vpack.c.b16 %v2981, %v2975
        %v3384 = vpack.c.b16 %v2982, %v2976
        %v3385 = vpack.c.b16 %v2989, %v2983
        %v3386 = vpack.c.b16 %v2990, %v2984
        %v3387 = vpack.c.b16 %v2991, %v2985
        %v3388 = vpack.c.b16 %v2992, %v2986
        %v3389 = vpack.c.b16 %v2993, %v2987
        %v3390 = vpack.c.b16 %v2994, %v2988
        %v3391 = vpack.c.b16 %v3001, %v2995
        %v3392 = vpack.c.b16 %v3002, %v2996
        %v3393 = vpack.c.b16 %v3003, %v2997
        %v3394 = vpack.c.b16 %v3004, %v2998
        %v3395 = vpack.c.b16 %v3005, %v2999
        %v3396 = vpack.c.b16 %v3006, %v3000
        %v3397 = vpack.c.b16 %v3013, %v3007
        %v3398 = vpack.c.b16 %v3014, %v3008
        %v3399 = vpack.c.b16 %v3015, %v3009
        %v3400 = vpack.c.b16 %v3016, %v3010
        %v3401 = vpack.c.b16 %v3017, %v3011
        %v3402 = vpack.c.b16 %v3018, %v3012
        %v3403 = vpack.c.b16 %v3025, %v3019
        %v3404 = vpack.c.b16 %v3026, %v3020
        %v3405 = vpack.c.b16 %v3027, %v3021
        %v3406 = vpack.c.b16 %v3028, %v3022
        %v3407 = vpack.c.b16 %v3029, %v3023
        %v3408 = vpack.c.b16 %v3030, %v3024
        %v3409 = vpack.c.b16 %v3037, %v3031
        %v3410 = vpack.c.b16 %v3038, %v3032
        %v3411 = vpack.c.b16 %v3039, %v3033
        %v3412 = vpack.c.b16 %v3040, %v3034
        %v3413 = vpack.c.b16 %v3041, %v3035
        %v3414 = vpack.c.b16 %v3042, %v3036
        %v3415 = vpack.c.b16 %v3049, %v3043
        %v3416 = vpack.c.b16 %v3050, %v3044
        %v3417 = vpack.c.b16 %v3051, %v3045
        %v3418 = vpack.c.b16 %v3052, %v3046
        %v3419 = vpack.c.b16 %v3053, %v3047
        %v3420 = vpack.c.b16 %v3054, %v3048
        %v3421 = vpack.c.b16 %v3061, %v3055
        %v3422 = vpack.c.b16 %v3062, %v3056
        %v3423 = vpack.c.b16 %v3063, %v3057
        %v3424 = vpack.c.b16 %v3064, %v3058
        %v3425 = vpack.c.b16 %v3065, %v3059
        %v3426 = vpack.c.b16 %v3066, %v3060
        %v3427 = vpack.c.b16 %v3073, %v3067
        %v3428 = vpack.c.b16 %v3074, %v3068
        %v3429 = vpack.c.b16 %v3075, %v3069
        %v3430 = vpack.c.b16 %v3076, %v3070
        %v3431 = vpack.c.b16 %v3077, %v3071
        %v3432 = vpack.c.b16 %v3078, %v3072
        %v3433 = vpack.c.b16 %v3085, %v3079
        %v3434 = vpack.c.b16 %v3086, %v3080
        %v3435 = vpack.c.b16 %v3087, %v3081
        %v3436 = vpack.c.b16 %v3088, %v3082
        %v3437 = vpack.c.b16 %v3089, %v3083
        %v3438 = vpack.c.b16 %v3090, %v3084
        %v3439 = vpack.c.b16 %v3097, %v3091
        %v3440 = vpack.c.b16 %v3098, %v3092
        %v3441 = vpack.c.b16 %v3099, %v3093
        %v3442 = vpack.c.b16 %v3100, %v3094
        %v3443 = vpack.c.b16 %v3101, %v3095
        %v3444 = vpack.c.b16 %v3102, %v3096
        %v3445 = vpack.c.b16 %v3109, %v3103
        %v3446 = vpack.c.b16 %v3110, %v3104
        %v3447 = vpack.c.b16 %v3111, %v3105
        %v3448 = vpack.c.b16 %v3112, %v3106
        %v3449 = vpack.c.b16 %v3113, %v3107
        %v3450 = vpack.c.b16 %v3114, %v3108
        %v3451 = vpack.c.b16 %v3121, %v3115
        %v3452 = vpack.c.b16 %v3122, %v3116
        %v3453 = vpack.c.b16 %v3123, %v3117
        %v3454 = vpack.c.b16 %v3124, %v3118
        %v3455 = vpack.c.b16 %v3125, %v3119
        %v3456 = vpack.c.b16 %v3126, %v3120
        %v3457 = vpack.c.b16 %v3133, %v3127
        %v3458 = vpack.c.b16 %v3134, %v3128
        %v3459 = vpack.c.b16 %v3135, %v3129
        %v3460 = vpack.c.b16 %v3136, %v3130
        %v3461 = vpack.c.b16 %v3137, %v3131
        %v3462 = vpack.c.b16 %v3138, %v3132
        %v3463 = vpack.c.b16 %v3145, %v3139
        %v3464 = vpack.c.b16 %v3146, %v3140
        %v3465 = vpack.c.b16 %v3147, %v3141
        %v3466 = vpack.c.b16 %v3148, %v3142
        %v3467 = vpack.c.b16 %v3149, %v3143
        %v3468 = vpack.c.b16 %v3150, %v3144
        %v3469 = vpack.c.b16 %v3157, %v3151
        %v3470 = vpack.c.b16 %v3158, %v3152
        %v3471 = vpack.c.b16 %v3159, %v3153
        %v3472 = vpack.c.b16 %v3160, %v3154
        %v3473 = vpack.c.b16 %v3161, %v3155
        %v3474 = vpack.c.b16 %v3162, %v3156
        %v3475 = vpack.c.b16 %v3169, %v3163
        %v3476 = vpack.c.b16 %v3170, %v3164
        %v3477 = vpack.c.b16 %v3171, %v3165
        %v3478 = vpack.c.b16 %v3172, %v3166
        %v3479 = vpack.c.b16 %v3173, %v3167
        %v3480 = vpack.c.b16 %v3174, %v3168
        %v3481 = vpack.c.b16 %v3181, %v3175
        %v3482 = vpack.c.b16 %v3182, %v3176
        %v3483 = vpack.c.b16 %v3183, %v3177
        %v3484 = vpack.c.b16 %v3184, %v3178
        %v3485 = vpack.c.b16 %v3185, %v3179
        %v3486 = vpack.c.b16 %v3186, %v3180
        %v3487 = vpack.c.b16 %v3193, %v3187
        %v3488 = vpack.c.b16 %v3194, %v3188
        %v3489 = vpack.c.b16 %v3195, %v3189
        %v3490 = vpack.c.b16 %v3196, %v3190
        %v3491 = vpack.c.b16 %v3197, %v3191
        %v3492 = vpack.c.b16 %v3198, %v3192
        %v3493 = vpack.c.b16 %v3205, %v3199
        %v3494 = vpack.c.b16 %v3206, %v3200
        %v3495 = vpack.c.b16 %v3207, %v3201
        %v3496 = vpack.c.b16 %v3208, %v3202
        %v3497 = vpack.c.b16 %v3209, %v3203
        %v3498 = vpack.c.b16 %v3210, %v3204
        %3787 = vmatpush.bf16.msra.mxu0 %v3253
        %3788 = vmatpush.bf16.msra.mxu0 %v3247
        %3789 = vmatpush.bf16.msra.mxu0 %v3241
        %3790 = vmatpush.bf16.msra.mxu0 %v3235
        %3791 = vmatpush.bf16.msra.mxu0 %v3229
        %3792 = vmatpush.bf16.msra.mxu0 %v3223
        %3793 = vmatpush.bf16.msra.mxu0 %v3217
        %3794 = vmatpush.bf16.msra.mxu0 %v3211
        %3795 = vmatmul.bf16.gmra.mxu0 %v2335
        %v3796 = vpop.f32.mrf.mxu0
        %v3797 = vadd.f32 %v2341, %v3796
        %v3798 = vpop.f32.mrf.mxu0
        %3799 = vdwg.mxu0
        %3800 = vmatpush.bf16.msra.mxu0 %v3301
        %3801 = vmatpush.bf16.msra.mxu0 %v3295
        %3802 = vmatpush.bf16.msra.mxu0 %v3289
        %3803 = vmatpush.bf16.msra.mxu0 %v3283
        %3804 = vmatpush.bf16.msra.mxu0 %v3277
        %3805 = vmatpush.bf16.msra.mxu0 %v3271
        %3806 = vmatpush.bf16.msra.mxu0 %v3265
        %3807 = vmatpush.bf16.msra.mxu0 %v3259
        %3808 = vmatmul.bf16.gmra.mxu0 %v2336
        %v3809 = vpop.f32.mrf.mxu0
        %v3810 = vadd.f32 %v3797, %v3809
        %v3811 = vpop.f32.mrf.mxu0
        %3812 = vdwg.mxu0
        %3813 = vmatpush.bf16.msra.mxu0 %v3349
        %3814 = vmatpush.bf16.msra.mxu0 %v3343
        %3815 = vmatpush.bf16.msra.mxu0 %v3337
        %3816 = vmatpush.bf16.msra.mxu0 %v3331
        %3817 = vmatpush.bf16.msra.mxu0 %v3325
        %3818 = vmatpush.bf16.msra.mxu0 %v3319
        %3819 = vmatpush.bf16.msra.mxu0 %v3313
        %3820 = vmatpush.bf16.msra.mxu0 %v3307
        %3821 = vmatmul.bf16.gmra.mxu0 %v2337
        %v3822 = vpop.f32.mrf.mxu0
        %v3823 = vadd.f32 %v3810, %v3822
        %v3824 = vpop.f32.mrf.mxu0
        %3825 = vdwg.mxu0
        %3826 = vmatpush.bf16.msra.mxu0 %v3397
        %3827 = vmatpush.bf16.msra.mxu0 %v3391
        %3828 = vmatpush.bf16.msra.mxu0 %v3385
        %3829 = vmatpush.bf16.msra.mxu0 %v3379
        %3830 = vmatpush.bf16.msra.mxu0 %v3373
        %3831 = vmatpush.bf16.msra.mxu0 %v3367
        %3832 = vmatpush.bf16.msra.mxu0 %v3361
        %3833 = vmatpush.bf16.msra.mxu0 %v3355
        %3834 = vmatmul.bf16.gmra.mxu0 %v2338
        %v3835 = vpop.f32.mrf.mxu0
        %v3836 = vadd.f32 %v3823, %v3835
        %v3837 = vpop.f32.mrf.mxu0
        %3838 = vdwg.mxu0
        %3839 = vmatpush.bf16.msra.mxu0 %v3445
        %3840 = vmatpush.bf16.msra.mxu0 %v3439
        %3841 = vmatpush.bf16.msra.mxu0 %v3433
        %3842 = vmatpush.bf16.msra.mxu0 %v3427
        %3843 = vmatpush.bf16.msra.mxu0 %v3421
        %3844 = vmatpush.bf16.msra.mxu0 %v3415
        %3845 = vmatpush.bf16.msra.mxu0 %v3409
        %3846 = vmatpush.bf16.msra.mxu0 %v3403
        %3847 = vmatmul.bf16.gmra.mxu0 %v2339
        %v3848 = vpop.f32.mrf.mxu0
        %v3849 = vadd.f32 %v3836, %v3848
        %v3850 = vpop.f32.mrf.mxu0
        %3851 = vdwg.mxu0
        %3852 = vmatpush.bf16.msra.mxu0 %v3493
        %3853 = vmatpush.bf16.msra.mxu0 %v3487
        %3854 = vmatpush.bf16.msra.mxu0 %v3481
        %3855 = vmatpush.bf16.msra.mxu0 %v3475
        %3856 = vmatpush.bf16.msra.mxu0 %v3469
        %3857 = vmatpush.bf16.msra.mxu0 %v3463
        %3858 = vmatpush.bf16.msra.mxu0 %v3457
        %3859 = vmatpush.bf16.msra.mxu0 %v3451
        %3860 = vmatmul.bf16.gmra.mxu0 %v2340
        %v3861 = vpop.f32.mrf.mxu0
        %v3862 = vadd.f32 %v3849, %v3861
        %v3863 = vpop.f32.mrf.mxu0
        %3864 = vdwg.mxu0
        %3865 = vmatpush.bf16.msra.mxu0 %v3254
        %3866 = vmatpush.bf16.msra.mxu0 %v3248
        %3867 = vmatpush.bf16.msra.mxu0 %v3242
        %3868 = vmatpush.bf16.msra.mxu0 %v3236
        %3869 = vmatpush.bf16.msra.mxu0 %v3230
        %3870 = vmatpush.bf16.msra.mxu0 %v3224
        %3871 = vmatpush.bf16.msra.mxu0 %v3218
        %3872 = vmatpush.bf16.msra.mxu0 %v3212
        %3873 = vmatmul.bf16.gmra.mxu0 %v2335
        %v3874 = vpop.f32.mrf.mxu0
        %v3875 = vadd.f32 %v2342, %v3874
        %v3876 = vpop.f32.mrf.mxu0
        %3877 = vdwg.mxu0
        %3878 = vmatpush.bf16.msra.mxu0 %v3302
        %3879 = vmatpush.bf16.msra.mxu0 %v3296
        %3880 = vmatpush.bf16.msra.mxu0 %v3290
        %3881 = vmatpush.bf16.msra.mxu0 %v3284
        %3882 = vmatpush.bf16.msra.mxu0 %v3278
        %3883 = vmatpush.bf16.msra.mxu0 %v3272
        %3884 = vmatpush.bf16.msra.mxu0 %v3266
        %3885 = vmatpush.bf16.msra.mxu0 %v3260
        %3886 = vmatmul.bf16.gmra.mxu0 %v2336
        %v3887 = vpop.f32.mrf.mxu0
        %v3888 = vadd.f32 %v3875, %v3887
        %v3889 = vpop.f32.mrf.mxu0
        %3890 = vdwg.mxu0
        %3891 = vmatpush.bf16.msra.mxu0 %v3350
        %3892 = vmatpush.bf16.msra.mxu0 %v3344
        %3893 = vmatpush.bf16.msra.mxu0 %v3338
        %3894 = vmatpush.bf16.msra.mxu0 %v3332
        %3895 = vmatpush.bf16.msra.mxu0 %v3326
        %3896 = vmatpush.bf16.msra.mxu0 %v3320
        %3897 = vmatpush.bf16.msra.mxu0 %v3314
        %3898 = vmatpush.bf16.msra.mxu0 %v3308
        %3899 = vmatmul.bf16.gmra.mxu0 %v2337
        %v3900 = vpop.f32.mrf.mxu0
        %v3901 = vadd.f32 %v3888, %v3900
        %v3902 = vpop.f32.mrf.mxu0
        %3903 = vdwg.mxu0
        %3904 = vmatpush.bf16.msra.mxu0 %v3398
        %3905 = vmatpush.bf16.msra.mxu0 %v3392
        %3906 = vmatpush.bf16.msra.mxu0 %v3386
        %3907 = vmatpush.bf16.msra.mxu0 %v3380
        %3908 = vmatpush.bf16.msra.mxu0 %v3374
        %3909 = vmatpush.bf16.msra.mxu0 %v3368
        %3910 = vmatpush.bf16.msra.mxu0 %v3362
        %3911 = vmatpush.bf16.msra.mxu0 %v3356
        %3912 = vmatmul.bf16.gmra.mxu0 %v2338
        %v3913 = vpop.f32.mrf.mxu0
        %v3914 = vadd.f32 %v3901, %v3913
        %v3915 = vpop.f32.mrf.mxu0
        %3916 = vdwg.mxu0
        %3917 = vmatpush.bf16.msra.mxu0 %v3446
        %3918 = vmatpush.bf16.msra.mxu0 %v3440
        %3919 = vmatpush.bf16.msra.mxu0 %v3434
        %3920 = vmatpush.bf16.msra.mxu0 %v3428
        %3921 = vmatpush.bf16.msra.mxu0 %v3422
        %3922 = vmatpush.bf16.msra.mxu0 %v3416
        %3923 = vmatpush.bf16.msra.mxu0 %v3410
        %3924 = vmatpush.bf16.msra.mxu0 %v3404
        %3925 = vmatmul.bf16.gmra.mxu0 %v2339
        %v3926 = vpop.f32.mrf.mxu0
        %v3927 = vadd.f32 %v3914, %v3926
        %v3928 = vpop.f32.mrf.mxu0
        %3929 = vdwg.mxu0
        %3930 = vmatpush.bf16.msra.mxu0 %v3494
        %3931 = vmatpush.bf16.msra.mxu0 %v3488
        %3932 = vmatpush.bf16.msra.mxu0 %v3482
        %3933 = vmatpush.bf16.msra.mxu0 %v3476
        %3934 = vmatpush.bf16.msra.mxu0 %v3470
        %3935 = vmatpush.bf16.msra.mxu0 %v3464
        %3936 = vmatpush.bf16.msra.mxu0 %v3458
        %3937 = vmatpush.bf16.msra.mxu0 %v3452
        %3938 = vmatmul.bf16.gmra.mxu0 %v2340
        %v3939 = vpop.f32.mrf.mxu0
        %v3940 = vadd.f32 %v3927, %v3939
        %v3941 = vpop.f32.mrf.mxu0
        %3942 = vdwg.mxu0
        %3943 = vmatpush.bf16.msra.mxu0 %v3255
        %3944 = vmatpush.bf16.msra.mxu0 %v3249
        %3945 = vmatpush.bf16.msra.mxu0 %v3243
        %3946 = vmatpush.bf16.msra.mxu0 %v3237
        %3947 = vmatpush.bf16.msra.mxu0 %v3231
        %3948 = vmatpush.bf16.msra.mxu0 %v3225
        %3949 = vmatpush.bf16.msra.mxu0 %v3219
        %3950 = vmatpush.bf16.msra.mxu0 %v3213
        %3951 = vmatmul.bf16.gmra.mxu0 %v2335
        %v3952 = vpop.f32.mrf.mxu0
        %v3953 = vadd.f32 %v2343, %v3952
        %v3954 = vpop.f32.mrf.mxu0
        %3955 = vdwg.mxu0
        %3956 = vmatpush.bf16.msra.mxu0 %v3303
        %3957 = vmatpush.bf16.msra.mxu0 %v3297
        %3958 = vmatpush.bf16.msra.mxu0 %v3291
        %3959 = vmatpush.bf16.msra.mxu0 %v3285
        %3960 = vmatpush.bf16.msra.mxu0 %v3279
        %3961 = vmatpush.bf16.msra.mxu0 %v3273
        %3962 = vmatpush.bf16.msra.mxu0 %v3267
        %3963 = vmatpush.bf16.msra.mxu0 %v3261
        %3964 = vmatmul.bf16.gmra.mxu0 %v2336
        %v3965 = vpop.f32.mrf.mxu0
        %v3966 = vadd.f32 %v3953, %v3965
        %v3967 = vpop.f32.mrf.mxu0
        %3968 = vdwg.mxu0
        %3969 = vmatpush.bf16.msra.mxu0 %v3351
        %3970 = vmatpush.bf16.msra.mxu0 %v3345
        %3971 = vmatpush.bf16.msra.mxu0 %v3339
        %3972 = vmatpush.bf16.msra.mxu0 %v3333
        %3973 = vmatpush.bf16.msra.mxu0 %v3327
        %3974 = vmatpush.bf16.msra.mxu0 %v3321
        %3975 = vmatpush.bf16.msra.mxu0 %v3315
        %3976 = vmatpush.bf16.msra.mxu0 %v3309
        %3977 = vmatmul.bf16.gmra.mxu0 %v2337
        %v3978 = vpop.f32.mrf.mxu0
        %v3979 = vadd.f32 %v3966, %v3978
        %v3980 = vpop.f32.mrf.mxu0
        %3981 = vdwg.mxu0
        %3982 = vmatpush.bf16.msra.mxu0 %v3399
        %3983 = vmatpush.bf16.msra.mxu0 %v3393
        %3984 = vmatpush.bf16.msra.mxu0 %v3387
        %3985 = vmatpush.bf16.msra.mxu0 %v3381
        %3986 = vmatpush.bf16.msra.mxu0 %v3375
        %3987 = vmatpush.bf16.msra.mxu0 %v3369
        %3988 = vmatpush.bf16.msra.mxu0 %v3363
        %3989 = vmatpush.bf16.msra.mxu0 %v3357
        %3990 = vmatmul.bf16.gmra.mxu0 %v2338
        %v3991 = vpop.f32.mrf.mxu0
        %v3992 = vadd.f32 %v3979, %v3991
        %v3993 = vpop.f32.mrf.mxu0
        %3994 = vdwg.mxu0
        %3995 = vmatpush.bf16.msra.mxu0 %v3447
        %3996 = vmatpush.bf16.msra.mxu0 %v3441
        %3997 = vmatpush.bf16.msra.mxu0 %v3435
        %3998 = vmatpush.bf16.msra.mxu0 %v3429
        %3999 = vmatpush.bf16.msra.mxu0 %v3423
        %4000 = vmatpush.bf16.msra.mxu0 %v3417
        %4001 = vmatpush.bf16.msra.mxu0 %v3411
        %4002 = vmatpush.bf16.msra.mxu0 %v3405
        %4003 = vmatmul.bf16.gmra.mxu0 %v2339
        %v4004 = vpop.f32.mrf.mxu0
        %v4005 = vadd.f32 %v3992, %v4004
        %v4006 = vpop.f32.mrf.mxu0
        %4007 = vdwg.mxu0
        %4008 = vmatpush.bf16.msra.mxu0 %v3495
        %4009 = vmatpush.bf16.msra.mxu0 %v3489
        %4010 = vmatpush.bf16.msra.mxu0 %v3483
        %4011 = vmatpush.bf16.msra.mxu0 %v3477
        %4012 = vmatpush.bf16.msra.mxu0 %v3471
        %4013 = vmatpush.bf16.msra.mxu0 %v3465
        %4014 = vmatpush.bf16.msra.mxu0 %v3459
        %4015 = vmatpush.bf16.msra.mxu0 %v3453
        %4016 = vmatmul.bf16.gmra.mxu0 %v2340
        %v4017 = vpop.f32.mrf.mxu0
        %v4018 = vadd.f32 %v4005, %v4017
        %v4019 = vpop.f32.mrf.mxu0
        %4020 = vdwg.mxu0
        %4021 = vmatpush.bf16.msra.mxu0 %v3256
        %4022 = vmatpush.bf16.msra.mxu0 %v3250
        %4023 = vmatpush.bf16.msra.mxu0 %v3244
        %4024 = vmatpush.bf16.msra.mxu0 %v3238
        %4025 = vmatpush.bf16.msra.mxu0 %v3232
        %4026 = vmatpush.bf16.msra.mxu0 %v3226
        %4027 = vmatpush.bf16.msra.mxu0 %v3220
        %4028 = vmatpush.bf16.msra.mxu0 %v3214
        %4029 = vmatmul.bf16.gmra.mxu0 %v2335
        %v4030 = vpop.f32.mrf.mxu0
        %v4031 = vadd.f32 %v2344, %v4030
        %v4032 = vpop.f32.mrf.mxu0
        %4033 = vdwg.mxu0
        %4034 = vmatpush.bf16.msra.mxu0 %v3304
        %4035 = vmatpush.bf16.msra.mxu0 %v3298
        %4036 = vmatpush.bf16.msra.mxu0 %v3292
        %4037 = vmatpush.bf16.msra.mxu0 %v3286
        %4038 = vmatpush.bf16.msra.mxu0 %v3280
        %4039 = vmatpush.bf16.msra.mxu0 %v3274
        %4040 = vmatpush.bf16.msra.mxu0 %v3268
        %4041 = vmatpush.bf16.msra.mxu0 %v3262
        %4042 = vmatmul.bf16.gmra.mxu0 %v2336
        %v4043 = vpop.f32.mrf.mxu0
        %v4044 = vadd.f32 %v4031, %v4043
        %v4045 = vpop.f32.mrf.mxu0
        %4046 = vdwg.mxu0
        %4047 = vmatpush.bf16.msra.mxu0 %v3352
        %4048 = vmatpush.bf16.msra.mxu0 %v3346
        %4049 = vmatpush.bf16.msra.mxu0 %v3340
        %4050 = vmatpush.bf16.msra.mxu0 %v3334
        %4051 = vmatpush.bf16.msra.mxu0 %v3328
        %4052 = vmatpush.bf16.msra.mxu0 %v3322
        %4053 = vmatpush.bf16.msra.mxu0 %v3316
        %4054 = vmatpush.bf16.msra.mxu0 %v3310
        %4055 = vmatmul.bf16.gmra.mxu0 %v2337
        %v4056 = vpop.f32.mrf.mxu0
        %v4057 = vadd.f32 %v4044, %v4056
        %v4058 = vpop.f32.mrf.mxu0
        %4059 = vdwg.mxu0
        %4060 = vmatpush.bf16.msra.mxu0 %v3400
        %4061 = vmatpush.bf16.msra.mxu0 %v3394
        %4062 = vmatpush.bf16.msra.mxu0 %v3388
        %4063 = vmatpush.bf16.msra.mxu0 %v3382
        %4064 = vmatpush.bf16.msra.mxu0 %v3376
        %4065 = vmatpush.bf16.msra.mxu0 %v3370
        %4066 = vmatpush.bf16.msra.mxu0 %v3364
        %4067 = vmatpush.bf16.msra.mxu0 %v3358
        %4068 = vmatmul.bf16.gmra.mxu0 %v2338
        %v4069 = vpop.f32.mrf.mxu0
        %v4070 = vadd.f32 %v4057, %v4069
        %v4071 = vpop.f32.mrf.mxu0
        %4072 = vdwg.mxu0
        %4073 = vmatpush.bf16.msra.mxu0 %v3448
        %4074 = vmatpush.bf16.msra.mxu0 %v3442
        %4075 = vmatpush.bf16.msra.mxu0 %v3436
        %4076 = vmatpush.bf16.msra.mxu0 %v3430
        %4077 = vmatpush.bf16.msra.mxu0 %v3424
        %4078 = vmatpush.bf16.msra.mxu0 %v3418
        %4079 = vmatpush.bf16.msra.mxu0 %v3412
        %4080 = vmatpush.bf16.msra.mxu0 %v3406
        %4081 = vmatmul.bf16.gmra.mxu0 %v2339
        %v4082 = vpop.f32.mrf.mxu0
        %v4083 = vadd.f32 %v4070, %v4082
        %v4084 = vpop.f32.mrf.mxu0
        %4085 = vdwg.mxu0
        %4086 = vmatpush.bf16.msra.mxu0 %v3496
        %4087 = vmatpush.bf16.msra.mxu0 %v3490
        %4088 = vmatpush.bf16.msra.mxu0 %v3484
        %4089 = vmatpush.bf16.msra.mxu0 %v3478
        %4090 = vmatpush.bf16.msra.mxu0 %v3472
        %4091 = vmatpush.bf16.msra.mxu0 %v3466
        %4092 = vmatpush.bf16.msra.mxu0 %v3460
        %4093 = vmatpush.bf16.msra.mxu0 %v3454
        %4094 = vmatmul.bf16.gmra.mxu0 %v2340
        %v4095 = vpop.f32.mrf.mxu0
        %v4096 = vadd.f32 %v4083, %v4095
        %v4097 = vpop.f32.mrf.mxu0
        %4098 = vdwg.mxu0
        %4099 = vmatpush.bf16.msra.mxu0 %v3257
        %4100 = vmatpush.bf16.msra.mxu0 %v3251
        %4101 = vmatpush.bf16.msra.mxu0 %v3245
        %4102 = vmatpush.bf16.msra.mxu0 %v3239
        %4103 = vmatpush.bf16.msra.mxu0 %v3233
        %4104 = vmatpush.bf16.msra.mxu0 %v3227
        %4105 = vmatpush.bf16.msra.mxu0 %v3221
        %4106 = vmatpush.bf16.msra.mxu0 %v3215
        %4107 = vmatmul.bf16.gmra.mxu0 %v2335
        %v4108 = vpop.f32.mrf.mxu0
        %v4109 = vadd.f32 %v2345, %v4108
        %v4110 = vpop.f32.mrf.mxu0
        %4111 = vdwg.mxu0
        %4112 = vmatpush.bf16.msra.mxu0 %v3305
        %4113 = vmatpush.bf16.msra.mxu0 %v3299
        %4114 = vmatpush.bf16.msra.mxu0 %v3293
        %4115 = vmatpush.bf16.msra.mxu0 %v3287
        %4116 = vmatpush.bf16.msra.mxu0 %v3281
        %4117 = vmatpush.bf16.msra.mxu0 %v3275
        %4118 = vmatpush.bf16.msra.mxu0 %v3269
        %4119 = vmatpush.bf16.msra.mxu0 %v3263
        %4120 = vmatmul.bf16.gmra.mxu0 %v2336
        %v4121 = vpop.f32.mrf.mxu0
        %v4122 = vadd.f32 %v4109, %v4121
        %v4123 = vpop.f32.mrf.mxu0
        %4124 = vdwg.mxu0
        %4125 = vmatpush.bf16.msra.mxu0 %v3353
        %4126 = vmatpush.bf16.msra.mxu0 %v3347
        %4127 = vmatpush.bf16.msra.mxu0 %v3341
        %4128 = vmatpush.bf16.msra.mxu0 %v3335
        %4129 = vmatpush.bf16.msra.mxu0 %v3329
        %4130 = vmatpush.bf16.msra.mxu0 %v3323
        %4131 = vmatpush.bf16.msra.mxu0 %v3317
        %4132 = vmatpush.bf16.msra.mxu0 %v3311
        %4133 = vmatmul.bf16.gmra.mxu0 %v2337
        %v4134 = vpop.f32.mrf.mxu0
        %v4135 = vadd.f32 %v4122, %v4134
        %v4136 = vpop.f32.mrf.mxu0
        %4137 = vdwg.mxu0
        %4138 = vmatpush.bf16.msra.mxu0 %v3401
        %4139 = vmatpush.bf16.msra.mxu0 %v3395
        %4140 = vmatpush.bf16.msra.mxu0 %v3389
        %4141 = vmatpush.bf16.msra.mxu0 %v3383
        %4142 = vmatpush.bf16.msra.mxu0 %v3377
        %4143 = vmatpush.bf16.msra.mxu0 %v3371
        %4144 = vmatpush.bf16.msra.mxu0 %v3365
        %4145 = vmatpush.bf16.msra.mxu0 %v3359
        %4146 = vmatmul.bf16.gmra.mxu0 %v2338
        %v4147 = vpop.f32.mrf.mxu0
        %v4148 = vadd.f32 %v4135, %v4147
        %v4149 = vpop.f32.mrf.mxu0
        %4150 = vdwg.mxu0
        %4151 = vmatpush.bf16.msra.mxu0 %v3449
        %4152 = vmatpush.bf16.msra.mxu0 %v3443
        %4153 = vmatpush.bf16.msra.mxu0 %v3437
        %4154 = vmatpush.bf16.msra.mxu0 %v3431
        %4155 = vmatpush.bf16.msra.mxu0 %v3425
        %4156 = vmatpush.bf16.msra.mxu0 %v3419
        %4157 = vmatpush.bf16.msra.mxu0 %v3413
        %4158 = vmatpush.bf16.msra.mxu0 %v3407
        %4159 = vmatmul.bf16.gmra.mxu0 %v2339
        %v4160 = vpop.f32.mrf.mxu0
        %v4161 = vadd.f32 %v4148, %v4160
        %v4162 = vpop.f32.mrf.mxu0
        %4163 = vdwg.mxu0
        %4164 = vmatpush.bf16.msra.mxu0 %v3497
        %4165 = vmatpush.bf16.msra.mxu0 %v3491
        %4166 = vmatpush.bf16.msra.mxu0 %v3485
        %4167 = vmatpush.bf16.msra.mxu0 %v3479
        %4168 = vmatpush.bf16.msra.mxu0 %v3473
        %4169 = vmatpush.bf16.msra.mxu0 %v3467
        %4170 = vmatpush.bf16.msra.mxu0 %v3461
        %4171 = vmatpush.bf16.msra.mxu0 %v3455
        %4172 = vmatmul.bf16.gmra.mxu0 %v2340
        %v4173 = vpop.f32.mrf.mxu0
        %v4174 = vadd.f32 %v4161, %v4173
        %v4175 = vpop.f32.mrf.mxu0
        %4176 = vdwg.mxu0
        %4177 = vmatpush.bf16.msra.mxu0 %v3258
        %4178 = vmatpush.bf16.msra.mxu0 %v3252
        %4179 = vmatpush.bf16.msra.mxu0 %v3246
        %4180 = vmatpush.bf16.msra.mxu0 %v3240
        %4181 = vmatpush.bf16.msra.mxu0 %v3234
        %4182 = vmatpush.bf16.msra.mxu0 %v3228
        %4183 = vmatpush.bf16.msra.mxu0 %v3222
        %4184 = vmatpush.bf16.msra.mxu0 %v3216
        %4185 = vmatmul.bf16.gmra.mxu0 %v2335
        %v4186 = vpop.f32.mrf.mxu0
        %v4187 = vadd.f32 %v2346, %v4186
        %v4188 = vpop.f32.mrf.mxu0
        %4189 = vdwg.mxu0
        %4190 = vmatpush.bf16.msra.mxu0 %v3306
        %4191 = vmatpush.bf16.msra.mxu0 %v3300
        %4192 = vmatpush.bf16.msra.mxu0 %v3294
        %4193 = vmatpush.bf16.msra.mxu0 %v3288
        %4194 = vmatpush.bf16.msra.mxu0 %v3282
        %4195 = vmatpush.bf16.msra.mxu0 %v3276
        %4196 = vmatpush.bf16.msra.mxu0 %v3270
        %4197 = vmatpush.bf16.msra.mxu0 %v3264
        %4198 = vmatmul.bf16.gmra.mxu0 %v2336
        %v4199 = vpop.f32.mrf.mxu0
        %v4200 = vadd.f32 %v4187, %v4199
        %v4201 = vpop.f32.mrf.mxu0
        %4202 = vdwg.mxu0
        %4203 = vmatpush.bf16.msra.mxu0 %v3354
        %4204 = vmatpush.bf16.msra.mxu0 %v3348
        %4205 = vmatpush.bf16.msra.mxu0 %v3342
        %4206 = vmatpush.bf16.msra.mxu0 %v3336
        %4207 = vmatpush.bf16.msra.mxu0 %v3330
        %4208 = vmatpush.bf16.msra.mxu0 %v3324
        %4209 = vmatpush.bf16.msra.mxu0 %v3318
        %4210 = vmatpush.bf16.msra.mxu0 %v3312
        %4211 = vmatmul.bf16.gmra.mxu0 %v2337
        %v4212 = vpop.f32.mrf.mxu0
        %v4213 = vadd.f32 %v4200, %v4212
        %v4214 = vpop.f32.mrf.mxu0
        %4215 = vdwg.mxu0
        %4216 = vmatpush.bf16.msra.mxu0 %v3402
        %4217 = vmatpush.bf16.msra.mxu0 %v3396
        %4218 = vmatpush.bf16.msra.mxu0 %v3390
        %4219 = vmatpush.bf16.msra.mxu0 %v3384
        %4220 = vmatpush.bf16.msra.mxu0 %v3378
        %4221 = vmatpush.bf16.msra.mxu0 %v3372
        %4222 = vmatpush.bf16.msra.mxu0 %v3366
        %4223 = vmatpush.bf16.msra.mxu0 %v3360
        %4224 = vmatmul.bf16.gmra.mxu0 %v2338
        %v4225 = vpop.f32.mrf.mxu0
        %v4226 = vadd.f32 %v4213, %v4225
        %v4227 = vpop.f32.mrf.mxu0
        %4228 = vdwg.mxu0
        %4229 = vmatpush.bf16.msra.mxu0 %v3450
        %4230 = vmatpush.bf16.msra.mxu0 %v3444
        %4231 = vmatpush.bf16.msra.mxu0 %v3438
        %4232 = vmatpush.bf16.msra.mxu0 %v3432
        %4233 = vmatpush.bf16.msra.mxu0 %v3426
        %4234 = vmatpush.bf16.msra.mxu0 %v3420
        %4235 = vmatpush.bf16.msra.mxu0 %v3414
        %4236 = vmatpush.bf16.msra.mxu0 %v3408
        %4237 = vmatmul.bf16.gmra.mxu0 %v2339
        %v4238 = vpop.f32.mrf.mxu0
        %v4239 = vadd.f32 %v4226, %v4238
        %v4240 = vpop.f32.mrf.mxu0
        %4241 = vdwg.mxu0
        %4242 = vmatpush.bf16.msra.mxu0 %v3498
        %4243 = vmatpush.bf16.msra.mxu0 %v3492
        %4244 = vmatpush.bf16.msra.mxu0 %v3486
        %4245 = vmatpush.bf16.msra.mxu0 %v3480
        %4246 = vmatpush.bf16.msra.mxu0 %v3474
        %4247 = vmatpush.bf16.msra.mxu0 %v3468
        %4248 = vmatpush.bf16.msra.mxu0 %v3462
        %4249 = vmatpush.bf16.msra.mxu0 %v3456
        %4250 = vmatmul.bf16.gmra.mxu0 %v2340
        %v4251 = vpop.f32.mrf.mxu0
        %v4252 = vadd.f32 %v4239, %v4251
        %v4253 = vpop.f32.mrf.mxu0
        %4254 = vdwg.mxu0
        %v4255 = vld [vmem:[%s463] sm:$0xff]
        %v4256 = vld [vmem:[%s463 + $0x8] sm:$0xff]
        %v4257 = vld [vmem:[%s463 + $0x10] sm:$0xff]
        %v4258 = vld [vmem:[%s463 + $0x18] sm:$0xff]
        %v4259 = vld [vmem:[%s463 + $0x20] sm:$0xff]
        %v4260 = vld [vmem:[%s463 + $0x28] sm:$0xff]
        %v4261 = vld [vmem:[%s463 + $0x30] sm:$0xff]
        %v4262 = vld [vmem:[%s463 + $0x38] sm:$0xff]
        %v4263 = vld [vmem:[%s463 + $0x40] sm:$0xff]
        %v4264 = vld [vmem:[%s463 + $0x48] sm:$0xff]
        %v4265 = vld [vmem:[%s463 + $0x50] sm:$0xff]
        %v4266 = vld [vmem:[%s463 + $0x58] sm:$0xff]
        %v4267 = vld [vmem:[%s463 + $0x60] sm:$0xff]
        %v4268 = vld [vmem:[%s463 + $0x68] sm:$0xff]
        %v4269 = vld [vmem:[%s463 + $0x70] sm:$0xff]
        %v4270 = vld [vmem:[%s463 + $0x78] sm:$0xff]
        %v4271 = vld [vmem:[%s463 + $0x80] sm:$0xff]
        %v4272 = vld [vmem:[%s463 + $0x88] sm:$0xff]
        %v4273 = vld [vmem:[%s463 + $0x90] sm:$0xff]
        %v4274 = vld [vmem:[%s463 + $0x98] sm:$0xff]
        %v4275 = vld [vmem:[%s463 + $0xa0] sm:$0xff]
        %v4276 = vld [vmem:[%s463 + $0xa8] sm:$0xff]
        %v4277 = vld [vmem:[%s463 + $0xb0] sm:$0xff]
        %v4278 = vld [vmem:[%s463 + $0xb8] sm:$0xff]
        %v4279 = vld [vmem:[%s463 + $0xc0] sm:$0xff]
        %v4280 = vld [vmem:[%s463 + $0xc8] sm:$0xff]
        %v4281 = vld [vmem:[%s463 + $0xd0] sm:$0xff]
        %v4282 = vld [vmem:[%s463 + $0xd8] sm:$0xff]
        %v4283 = vld [vmem:[%s463 + $0xe0] sm:$0xff]
        %v4284 = vld [vmem:[%s463 + $0xe8] sm:$0xff]
        %v4285 = vld [vmem:[%s463 + $0xf0] sm:$0xff]
        %v4286 = vld [vmem:[%s463 + $0xf8] sm:$0xff]
        %v4287 = vld [vmem:[%s463 + $0x100] sm:$0xff]
        %v4288 = vld [vmem:[%s463 + $0x108] sm:$0xff]
        %v4289 = vld [vmem:[%s463 + $0x110] sm:$0xff]
        %v4290 = vld [vmem:[%s463 + $0x118] sm:$0xff]
        %v4291 = vld [vmem:[%s463 + $0x120] sm:$0xff]
        %v4292 = vld [vmem:[%s463 + $0x128] sm:$0xff]
        %v4293 = vld [vmem:[%s463 + $0x130] sm:$0xff]
        %v4294 = vld [vmem:[%s463 + $0x138] sm:$0xff]
        %v4295 = vld [vmem:[%s463 + $0x140] sm:$0xff]
        %v4296 = vld [vmem:[%s463 + $0x148] sm:$0xff]
        %v4297 = vld [vmem:[%s463 + $0x150] sm:$0xff]
        %v4298 = vld [vmem:[%s463 + $0x158] sm:$0xff]
        %v4299 = vld [vmem:[%s463 + $0x160] sm:$0xff]
        %v4300 = vld [vmem:[%s463 + $0x168] sm:$0xff]
        %v4301 = vld [vmem:[%s463 + $0x170] sm:$0xff]
        %v4302 = vld [vmem:[%s463 + $0x178] sm:$0xff]
        %v4303 = vld [vmem:[%s463 + $0x180] sm:$0xff]
        %v4304 = vld [vmem:[%s463 + $0x188] sm:$0xff]
        %v4305 = vld [vmem:[%s463 + $0x190] sm:$0xff]
        %v4306 = vld [vmem:[%s463 + $0x198] sm:$0xff]
        %v4307 = vld [vmem:[%s463 + $0x1a0] sm:$0xff]
        %v4308 = vld [vmem:[%s463 + $0x1a8] sm:$0xff]
        %v4309 = vld [vmem:[%s463 + $0x1b0] sm:$0xff]
        %v4310 = vld [vmem:[%s463 + $0x1b8] sm:$0xff]
        %v4311 = vld [vmem:[%s463 + $0x1c0] sm:$0xff]
        %v4312 = vld [vmem:[%s463 + $0x1c8] sm:$0xff]
        %v4313 = vld [vmem:[%s463 + $0x1d0] sm:$0xff]
        %v4314 = vld [vmem:[%s463 + $0x1d8] sm:$0xff]
        %v4315 = vld [vmem:[%s463 + $0x1e0] sm:$0xff]
        %v4316 = vld [vmem:[%s463 + $0x1e8] sm:$0xff]
        %v4317 = vld [vmem:[%s463 + $0x1f0] sm:$0xff]
        %v4318 = vld [vmem:[%s463 + $0x1f8] sm:$0xff]
        %v4319 = vld [vmem:[%s463 + $0x200] sm:$0xff]
        %v4320 = vld [vmem:[%s463 + $0x208] sm:$0xff]
        %v4321 = vld [vmem:[%s463 + $0x210] sm:$0xff]
        %v4322 = vld [vmem:[%s463 + $0x218] sm:$0xff]
        %v4323 = vld [vmem:[%s463 + $0x220] sm:$0xff]
        %v4324 = vld [vmem:[%s463 + $0x228] sm:$0xff]
        %v4325 = vld [vmem:[%s463 + $0x230] sm:$0xff]
        %v4326 = vld [vmem:[%s463 + $0x238] sm:$0xff]
        %v4327 = vld [vmem:[%s463 + $0x240] sm:$0xff]
        %v4328 = vld [vmem:[%s463 + $0x248] sm:$0xff]
        %v4329 = vld [vmem:[%s463 + $0x250] sm:$0xff]
        %v4330 = vld [vmem:[%s463 + $0x258] sm:$0xff]
        %v4331 = vld [vmem:[%s463 + $0x260] sm:$0xff]
        %v4332 = vld [vmem:[%s463 + $0x268] sm:$0xff]
        %v4333 = vld [vmem:[%s463 + $0x270] sm:$0xff]
        %v4334 = vld [vmem:[%s463 + $0x278] sm:$0xff]
        %v4335 = vld [vmem:[%s463 + $0x280] sm:$0xff]
        %v4336 = vld [vmem:[%s463 + $0x288] sm:$0xff]
        %v4337 = vld [vmem:[%s463 + $0x290] sm:$0xff]
        %v4338 = vld [vmem:[%s463 + $0x298] sm:$0xff]
        %v4339 = vld [vmem:[%s463 + $0x2a0] sm:$0xff]
        %v4340 = vld [vmem:[%s463 + $0x2a8] sm:$0xff]
        %v4341 = vld [vmem:[%s463 + $0x2b0] sm:$0xff]
        %v4342 = vld [vmem:[%s463 + $0x2b8] sm:$0xff]
        %v4343 = vld [vmem:[%s463 + $0x2c0] sm:$0xff]
        %v4344 = vld [vmem:[%s463 + $0x2c8] sm:$0xff]
        %v4345 = vld [vmem:[%s463 + $0x2d0] sm:$0xff]
        %v4346 = vld [vmem:[%s463 + $0x2d8] sm:$0xff]
        %v4347 = vld [vmem:[%s463 + $0x2e0] sm:$0xff]
        %v4348 = vld [vmem:[%s463 + $0x2e8] sm:$0xff]
        %v4349 = vld [vmem:[%s463 + $0x2f0] sm:$0xff]
        %v4350 = vld [vmem:[%s463 + $0x2f8] sm:$0xff]
        %v4351 = vld [vmem:[%s463 + $0x300] sm:$0xff]
        %v4352 = vld [vmem:[%s463 + $0x308] sm:$0xff]
        %v4353 = vld [vmem:[%s463 + $0x310] sm:$0xff]
        %v4354 = vld [vmem:[%s463 + $0x318] sm:$0xff]
        %v4355 = vld [vmem:[%s463 + $0x320] sm:$0xff]
        %v4356 = vld [vmem:[%s463 + $0x328] sm:$0xff]
        %v4357 = vld [vmem:[%s463 + $0x330] sm:$0xff]
        %v4358 = vld [vmem:[%s463 + $0x338] sm:$0xff]
        %v4359 = vld [vmem:[%s463 + $0x340] sm:$0xff]
        %v4360 = vld [vmem:[%s463 + $0x348] sm:$0xff]
        %v4361 = vld [vmem:[%s463 + $0x350] sm:$0xff]
        %v4362 = vld [vmem:[%s463 + $0x358] sm:$0xff]
        %v4363 = vld [vmem:[%s463 + $0x360] sm:$0xff]
        %v4364 = vld [vmem:[%s463 + $0x368] sm:$0xff]
        %v4365 = vld [vmem:[%s463 + $0x370] sm:$0xff]
        %v4366 = vld [vmem:[%s463 + $0x378] sm:$0xff]
        %v4367 = vld [vmem:[%s463 + $0x380] sm:$0xff]
        %v4368 = vld [vmem:[%s463 + $0x388] sm:$0xff]
        %v4369 = vld [vmem:[%s463 + $0x390] sm:$0xff]
        %v4370 = vld [vmem:[%s463 + $0x398] sm:$0xff]
        %v4371 = vld [vmem:[%s463 + $0x3a0] sm:$0xff]
        %v4372 = vld [vmem:[%s463 + $0x3a8] sm:$0xff]
        %v4373 = vld [vmem:[%s463 + $0x3b0] sm:$0xff]
        %v4374 = vld [vmem:[%s463 + $0x3b8] sm:$0xff]
        %v4375 = vld [vmem:[%s463 + $0x3c0] sm:$0xff]
        %v4376 = vld [vmem:[%s463 + $0x3c8] sm:$0xff]
        %v4377 = vld [vmem:[%s463 + $0x3d0] sm:$0xff]
        %v4378 = vld [vmem:[%s463 + $0x3d8] sm:$0xff]
        %v4379 = vld [vmem:[%s463 + $0x3e0] sm:$0xff]
        %v4380 = vld [vmem:[%s463 + $0x3e8] sm:$0xff]
        %v4381 = vld [vmem:[%s463 + $0x3f0] sm:$0xff]
        %v4382 = vld [vmem:[%s463 + $0x3f8] sm:$0xff]
        %v4383 = vld [vmem:[%s463 + $0x400] sm:$0xff]
        %v4384 = vld [vmem:[%s463 + $0x408] sm:$0xff]
        %v4385 = vld [vmem:[%s463 + $0x410] sm:$0xff]
        %v4386 = vld [vmem:[%s463 + $0x418] sm:$0xff]
        %v4387 = vld [vmem:[%s463 + $0x420] sm:$0xff]
        %v4388 = vld [vmem:[%s463 + $0x428] sm:$0xff]
        %v4389 = vld [vmem:[%s463 + $0x430] sm:$0xff]
        %v4390 = vld [vmem:[%s463 + $0x438] sm:$0xff]
        %v4391 = vld [vmem:[%s463 + $0x440] sm:$0xff]
        %v4392 = vld [vmem:[%s463 + $0x448] sm:$0xff]
        %v4393 = vld [vmem:[%s463 + $0x450] sm:$0xff]
        %v4394 = vld [vmem:[%s463 + $0x458] sm:$0xff]
        %v4395 = vld [vmem:[%s463 + $0x460] sm:$0xff]
        %v4396 = vld [vmem:[%s463 + $0x468] sm:$0xff]
        %v4397 = vld [vmem:[%s463 + $0x470] sm:$0xff]
        %v4398 = vld [vmem:[%s463 + $0x478] sm:$0xff]
        %v4399 = vld [vmem:[%s463 + $0x480] sm:$0xff]
        %v4400 = vld [vmem:[%s463 + $0x488] sm:$0xff]
        %v4401 = vld [vmem:[%s463 + $0x490] sm:$0xff]
        %v4402 = vld [vmem:[%s463 + $0x498] sm:$0xff]
        %v4403 = vld [vmem:[%s463 + $0x4a0] sm:$0xff]
        %v4404 = vld [vmem:[%s463 + $0x4a8] sm:$0xff]
        %v4405 = vld [vmem:[%s463 + $0x4b0] sm:$0xff]
        %v4406 = vld [vmem:[%s463 + $0x4b8] sm:$0xff]
        %v4407 = vld [vmem:[%s463 + $0x4c0] sm:$0xff]
        %v4408 = vld [vmem:[%s463 + $0x4c8] sm:$0xff]
        %v4409 = vld [vmem:[%s463 + $0x4d0] sm:$0xff]
        %v4410 = vld [vmem:[%s463 + $0x4d8] sm:$0xff]
        %v4411 = vld [vmem:[%s463 + $0x4e0] sm:$0xff]
        %v4412 = vld [vmem:[%s463 + $0x4e8] sm:$0xff]
        %v4413 = vld [vmem:[%s463 + $0x4f0] sm:$0xff]
        %v4414 = vld [vmem:[%s463 + $0x4f8] sm:$0xff]
        %v4415 = vld [vmem:[%s463 + $0x500] sm:$0xff]
        %v4416 = vld [vmem:[%s463 + $0x508] sm:$0xff]
        %v4417 = vld [vmem:[%s463 + $0x510] sm:$0xff]
        %v4418 = vld [vmem:[%s463 + $0x518] sm:$0xff]
        %v4419 = vld [vmem:[%s463 + $0x520] sm:$0xff]
        %v4420 = vld [vmem:[%s463 + $0x528] sm:$0xff]
        %v4421 = vld [vmem:[%s463 + $0x530] sm:$0xff]
        %v4422 = vld [vmem:[%s463 + $0x538] sm:$0xff]
        %v4423 = vld [vmem:[%s463 + $0x540] sm:$0xff]
        %v4424 = vld [vmem:[%s463 + $0x548] sm:$0xff]
        %v4425 = vld [vmem:[%s463 + $0x550] sm:$0xff]
        %v4426 = vld [vmem:[%s463 + $0x558] sm:$0xff]
        %v4427 = vld [vmem:[%s463 + $0x560] sm:$0xff]
        %v4428 = vld [vmem:[%s463 + $0x568] sm:$0xff]
        %v4429 = vld [vmem:[%s463 + $0x570] sm:$0xff]
        %v4430 = vld [vmem:[%s463 + $0x578] sm:$0xff]
        %v4431 = vld [vmem:[%s463 + $0x580] sm:$0xff]
        %v4432 = vld [vmem:[%s463 + $0x588] sm:$0xff]
        %v4433 = vld [vmem:[%s463 + $0x590] sm:$0xff]
        %v4434 = vld [vmem:[%s463 + $0x598] sm:$0xff]
        %v4435 = vld [vmem:[%s463 + $0x5a0] sm:$0xff]
        %v4436 = vld [vmem:[%s463 + $0x5a8] sm:$0xff]
        %v4437 = vld [vmem:[%s463 + $0x5b0] sm:$0xff]
        %v4438 = vld [vmem:[%s463 + $0x5b8] sm:$0xff]
        %v4439 = vld [vmem:[%s463 + $0x5c0] sm:$0xff]
        %v4440 = vld [vmem:[%s463 + $0x5c8] sm:$0xff]
        %v4441 = vld [vmem:[%s463 + $0x5d0] sm:$0xff]
        %v4442 = vld [vmem:[%s463 + $0x5d8] sm:$0xff]
        %v4443 = vld [vmem:[%s463 + $0x5e0] sm:$0xff]
        %v4444 = vld [vmem:[%s463 + $0x5e8] sm:$0xff]
        %v4445 = vld [vmem:[%s463 + $0x5f0] sm:$0xff]
        %v4446 = vld [vmem:[%s463 + $0x5f8] sm:$0xff]
        %v4447 = vld [vmem:[%s463 + $0x600] sm:$0xff]
        %v4448 = vld [vmem:[%s463 + $0x608] sm:$0xff]
        %v4449 = vld [vmem:[%s463 + $0x610] sm:$0xff]
        %v4450 = vld [vmem:[%s463 + $0x618] sm:$0xff]
        %v4451 = vld [vmem:[%s463 + $0x620] sm:$0xff]
        %v4452 = vld [vmem:[%s463 + $0x628] sm:$0xff]
        %v4453 = vld [vmem:[%s463 + $0x630] sm:$0xff]
        %v4454 = vld [vmem:[%s463 + $0x638] sm:$0xff]
        %v4455 = vld [vmem:[%s463 + $0x640] sm:$0xff]
        %v4456 = vld [vmem:[%s463 + $0x648] sm:$0xff]
        %v4457 = vld [vmem:[%s463 + $0x650] sm:$0xff]
        %v4458 = vld [vmem:[%s463 + $0x658] sm:$0xff]
        %v4459 = vld [vmem:[%s463 + $0x660] sm:$0xff]
        %v4460 = vld [vmem:[%s463 + $0x668] sm:$0xff]
        %v4461 = vld [vmem:[%s463 + $0x670] sm:$0xff]
        %v4462 = vld [vmem:[%s463 + $0x678] sm:$0xff]
        %v4463 = vld [vmem:[%s463 + $0x680] sm:$0xff]
        %v4464 = vld [vmem:[%s463 + $0x688] sm:$0xff]
        %v4465 = vld [vmem:[%s463 + $0x690] sm:$0xff]
        %v4466 = vld [vmem:[%s463 + $0x698] sm:$0xff]
        %v4467 = vld [vmem:[%s463 + $0x6a0] sm:$0xff]
        %v4468 = vld [vmem:[%s463 + $0x6a8] sm:$0xff]
        %v4469 = vld [vmem:[%s463 + $0x6b0] sm:$0xff]
        %v4470 = vld [vmem:[%s463 + $0x6b8] sm:$0xff]
        %v4471 = vld [vmem:[%s463 + $0x6c0] sm:$0xff]
        %v4472 = vld [vmem:[%s463 + $0x6c8] sm:$0xff]
        %v4473 = vld [vmem:[%s463 + $0x6d0] sm:$0xff]
        %v4474 = vld [vmem:[%s463 + $0x6d8] sm:$0xff]
        %v4475 = vld [vmem:[%s463 + $0x6e0] sm:$0xff]
        %v4476 = vld [vmem:[%s463 + $0x6e8] sm:$0xff]
        %v4477 = vld [vmem:[%s463 + $0x6f0] sm:$0xff]
        %v4478 = vld [vmem:[%s463 + $0x6f8] sm:$0xff]
        %v4479 = vld [vmem:[%s463 + $0x700] sm:$0xff]
        %v4480 = vld [vmem:[%s463 + $0x708] sm:$0xff]
        %v4481 = vld [vmem:[%s463 + $0x710] sm:$0xff]
        %v4482 = vld [vmem:[%s463 + $0x718] sm:$0xff]
        %v4483 = vld [vmem:[%s463 + $0x720] sm:$0xff]
        %v4484 = vld [vmem:[%s463 + $0x728] sm:$0xff]
        %v4485 = vld [vmem:[%s463 + $0x730] sm:$0xff]
        %v4486 = vld [vmem:[%s463 + $0x738] sm:$0xff]
        %v4487 = vld [vmem:[%s463 + $0x740] sm:$0xff]
        %v4488 = vld [vmem:[%s463 + $0x748] sm:$0xff]
        %v4489 = vld [vmem:[%s463 + $0x750] sm:$0xff]
        %v4490 = vld [vmem:[%s463 + $0x758] sm:$0xff]
        %v4491 = vld [vmem:[%s463 + $0x760] sm:$0xff]
        %v4492 = vld [vmem:[%s463 + $0x768] sm:$0xff]
        %v4493 = vld [vmem:[%s463 + $0x770] sm:$0xff]
        %v4494 = vld [vmem:[%s463 + $0x778] sm:$0xff]
        %v4495 = vld [vmem:[%s463 + $0x780] sm:$0xff]
        %v4496 = vld [vmem:[%s463 + $0x788] sm:$0xff]
        %v4497 = vld [vmem:[%s463 + $0x790] sm:$0xff]
        %v4498 = vld [vmem:[%s463 + $0x798] sm:$0xff]
        %v4499 = vld [vmem:[%s463 + $0x7a0] sm:$0xff]
        %v4500 = vld [vmem:[%s463 + $0x7a8] sm:$0xff]
        %v4501 = vld [vmem:[%s463 + $0x7b0] sm:$0xff]
        %v4502 = vld [vmem:[%s463 + $0x7b8] sm:$0xff]
        %v4503 = vld [vmem:[%s463 + $0x7c0] sm:$0xff]
        %v4504 = vld [vmem:[%s463 + $0x7c8] sm:$0xff]
        %v4505 = vld [vmem:[%s463 + $0x7d0] sm:$0xff]
        %v4506 = vld [vmem:[%s463 + $0x7d8] sm:$0xff]
        %v4507 = vld [vmem:[%s463 + $0x7e0] sm:$0xff]
        %v4508 = vld [vmem:[%s463 + $0x7e8] sm:$0xff]
        %v4509 = vld [vmem:[%s463 + $0x7f0] sm:$0xff]
        %v4510 = vld [vmem:[%s463 + $0x7f8] sm:$0xff]
        %v4511 = vld [vmem:[%s463 + $0x800] sm:$0xff]
        %v4512 = vld [vmem:[%s463 + $0x808] sm:$0xff]
        %v4513 = vld [vmem:[%s463 + $0x810] sm:$0xff]
        %v4514 = vld [vmem:[%s463 + $0x818] sm:$0xff]
        %v4515 = vld [vmem:[%s463 + $0x820] sm:$0xff]
        %v4516 = vld [vmem:[%s463 + $0x828] sm:$0xff]
        %v4517 = vld [vmem:[%s463 + $0x830] sm:$0xff]
        %v4518 = vld [vmem:[%s463 + $0x838] sm:$0xff]
        %v4519 = vld [vmem:[%s463 + $0x840] sm:$0xff]
        %v4520 = vld [vmem:[%s463 + $0x848] sm:$0xff]
        %v4521 = vld [vmem:[%s463 + $0x850] sm:$0xff]
        %v4522 = vld [vmem:[%s463 + $0x858] sm:$0xff]
        %v4523 = vld [vmem:[%s463 + $0x860] sm:$0xff]
        %v4524 = vld [vmem:[%s463 + $0x868] sm:$0xff]
        %v4525 = vld [vmem:[%s463 + $0x870] sm:$0xff]
        %v4526 = vld [vmem:[%s463 + $0x878] sm:$0xff]
        %v4527 = vld [vmem:[%s463 + $0x880] sm:$0xff]
        %v4528 = vld [vmem:[%s463 + $0x888] sm:$0xff]
        %v4529 = vld [vmem:[%s463 + $0x890] sm:$0xff]
        %v4530 = vld [vmem:[%s463 + $0x898] sm:$0xff]
        %v4531 = vld [vmem:[%s463 + $0x8a0] sm:$0xff]
        %v4532 = vld [vmem:[%s463 + $0x8a8] sm:$0xff]
        %v4533 = vld [vmem:[%s463 + $0x8b0] sm:$0xff]
        %v4534 = vld [vmem:[%s463 + $0x8b8] sm:$0xff]
        %v4535 = vld [vmem:[%s463 + $0x8c0] sm:$0xff]
        %v4536 = vld [vmem:[%s463 + $0x8c8] sm:$0xff]
        %v4537 = vld [vmem:[%s463 + $0x8d0] sm:$0xff]
        %v4538 = vld [vmem:[%s463 + $0x8d8] sm:$0xff]
        %v4539 = vld [vmem:[%s463 + $0x8e0] sm:$0xff]
        %v4540 = vld [vmem:[%s463 + $0x8e8] sm:$0xff]
        %v4541 = vld [vmem:[%s463 + $0x8f0] sm:$0xff]
        %v4542 = vld [vmem:[%s463 + $0x8f8] sm:$0xff]
        %v4543 = vld [vmem:[%s463 + $0x900] sm:$0xff]
        %v4544 = vld [vmem:[%s463 + $0x908] sm:$0xff]
        %v4545 = vld [vmem:[%s463 + $0x910] sm:$0xff]
        %v4546 = vld [vmem:[%s463 + $0x918] sm:$0xff]
        %v4547 = vld [vmem:[%s463 + $0x920] sm:$0xff]
        %v4548 = vld [vmem:[%s463 + $0x928] sm:$0xff]
        %v4549 = vld [vmem:[%s463 + $0x930] sm:$0xff]
        %v4550 = vld [vmem:[%s463 + $0x938] sm:$0xff]
        %v4551 = vld [vmem:[%s463 + $0x940] sm:$0xff]
        %v4552 = vld [vmem:[%s463 + $0x948] sm:$0xff]
        %v4553 = vld [vmem:[%s463 + $0x950] sm:$0xff]
        %v4554 = vld [vmem:[%s463 + $0x958] sm:$0xff]
        %v4555 = vld [vmem:[%s463 + $0x960] sm:$0xff]
        %v4556 = vld [vmem:[%s463 + $0x968] sm:$0xff]
        %v4557 = vld [vmem:[%s463 + $0x970] sm:$0xff]
        %v4558 = vld [vmem:[%s463 + $0x978] sm:$0xff]
        %v4559 = vld [vmem:[%s463 + $0x980] sm:$0xff]
        %v4560 = vld [vmem:[%s463 + $0x988] sm:$0xff]
        %v4561 = vld [vmem:[%s463 + $0x990] sm:$0xff]
        %v4562 = vld [vmem:[%s463 + $0x998] sm:$0xff]
        %v4563 = vld [vmem:[%s463 + $0x9a0] sm:$0xff]
        %v4564 = vld [vmem:[%s463 + $0x9a8] sm:$0xff]
        %v4565 = vld [vmem:[%s463 + $0x9b0] sm:$0xff]
        %v4566 = vld [vmem:[%s463 + $0x9b8] sm:$0xff]
        %v4567 = vld [vmem:[%s463 + $0x9c0] sm:$0xff]
        %v4568 = vld [vmem:[%s463 + $0x9c8] sm:$0xff]
        %v4569 = vld [vmem:[%s463 + $0x9d0] sm:$0xff]
        %v4570 = vld [vmem:[%s463 + $0x9d8] sm:$0xff]
        %v4571 = vld [vmem:[%s463 + $0x9e0] sm:$0xff]
        %v4572 = vld [vmem:[%s463 + $0x9e8] sm:$0xff]
        %v4573 = vld [vmem:[%s463 + $0x9f0] sm:$0xff]
        %v4574 = vld [vmem:[%s463 + $0x9f8] sm:$0xff]
        %v4575 = vld [vmem:[%s463 + $0xa00] sm:$0xff]
        %v4576 = vld [vmem:[%s463 + $0xa08] sm:$0xff]
        %v4577 = vld [vmem:[%s463 + $0xa10] sm:$0xff]
        %v4578 = vld [vmem:[%s463 + $0xa18] sm:$0xff]
        %v4579 = vld [vmem:[%s463 + $0xa20] sm:$0xff]
        %v4580 = vld [vmem:[%s463 + $0xa28] sm:$0xff]
        %v4581 = vld [vmem:[%s463 + $0xa30] sm:$0xff]
        %v4582 = vld [vmem:[%s463 + $0xa38] sm:$0xff]
        %v4583 = vld [vmem:[%s463 + $0xa40] sm:$0xff]
        %v4584 = vld [vmem:[%s463 + $0xa48] sm:$0xff]
        %v4585 = vld [vmem:[%s463 + $0xa50] sm:$0xff]
        %v4586 = vld [vmem:[%s463 + $0xa58] sm:$0xff]
        %v4587 = vld [vmem:[%s463 + $0xa60] sm:$0xff]
        %v4588 = vld [vmem:[%s463 + $0xa68] sm:$0xff]
        %v4589 = vld [vmem:[%s463 + $0xa70] sm:$0xff]
        %v4590 = vld [vmem:[%s463 + $0xa78] sm:$0xff]
        %v4591 = vld [vmem:[%s463 + $0xa80] sm:$0xff]
        %v4592 = vld [vmem:[%s463 + $0xa88] sm:$0xff]
        %v4593 = vld [vmem:[%s463 + $0xa90] sm:$0xff]
        %v4594 = vld [vmem:[%s463 + $0xa98] sm:$0xff]
        %v4595 = vld [vmem:[%s463 + $0xaa0] sm:$0xff]
        %v4596 = vld [vmem:[%s463 + $0xaa8] sm:$0xff]
        %v4597 = vld [vmem:[%s463 + $0xab0] sm:$0xff]
        %v4598 = vld [vmem:[%s463 + $0xab8] sm:$0xff]
        %v4599 = vld [vmem:[%s463 + $0xac0] sm:$0xff]
        %v4600 = vld [vmem:[%s463 + $0xac8] sm:$0xff]
        %v4601 = vld [vmem:[%s463 + $0xad0] sm:$0xff]
        %v4602 = vld [vmem:[%s463 + $0xad8] sm:$0xff]
        %v4603 = vld [vmem:[%s463 + $0xae0] sm:$0xff]
        %v4604 = vld [vmem:[%s463 + $0xae8] sm:$0xff]
        %v4605 = vld [vmem:[%s463 + $0xaf0] sm:$0xff]
        %v4606 = vld [vmem:[%s463 + $0xaf8] sm:$0xff]
        %v4607 = vld [vmem:[%s463 + $0xb00] sm:$0xff]
        %v4608 = vld [vmem:[%s463 + $0xb08] sm:$0xff]
        %v4609 = vld [vmem:[%s463 + $0xb10] sm:$0xff]
        %v4610 = vld [vmem:[%s463 + $0xb18] sm:$0xff]
        %v4611 = vld [vmem:[%s463 + $0xb20] sm:$0xff]
        %v4612 = vld [vmem:[%s463 + $0xb28] sm:$0xff]
        %v4613 = vld [vmem:[%s463 + $0xb30] sm:$0xff]
        %v4614 = vld [vmem:[%s463 + $0xb38] sm:$0xff]
        %v4615 = vld [vmem:[%s463 + $0xb40] sm:$0xff]
        %v4616 = vld [vmem:[%s463 + $0xb48] sm:$0xff]
        %v4617 = vld [vmem:[%s463 + $0xb50] sm:$0xff]
        %v4618 = vld [vmem:[%s463 + $0xb58] sm:$0xff]
        %v4619 = vld [vmem:[%s463 + $0xb60] sm:$0xff]
        %v4620 = vld [vmem:[%s463 + $0xb68] sm:$0xff]
        %v4621 = vld [vmem:[%s463 + $0xb70] sm:$0xff]
        %v4622 = vld [vmem:[%s463 + $0xb78] sm:$0xff]
        %v4623 = vld [vmem:[%s463 + $0xb80] sm:$0xff]
        %v4624 = vld [vmem:[%s463 + $0xb88] sm:$0xff]
        %v4625 = vld [vmem:[%s463 + $0xb90] sm:$0xff]
        %v4626 = vld [vmem:[%s463 + $0xb98] sm:$0xff]
        %v4627 = vld [vmem:[%s463 + $0xba0] sm:$0xff]
        %v4628 = vld [vmem:[%s463 + $0xba8] sm:$0xff]
        %v4629 = vld [vmem:[%s463 + $0xbb0] sm:$0xff]
        %v4630 = vld [vmem:[%s463 + $0xbb8] sm:$0xff]
        %v4631 = vld [vmem:[%s463 + $0xbc0] sm:$0xff]
        %v4632 = vld [vmem:[%s463 + $0xbc8] sm:$0xff]
        %v4633 = vld [vmem:[%s463 + $0xbd0] sm:$0xff]
        %v4634 = vld [vmem:[%s463 + $0xbd8] sm:$0xff]
        %v4635 = vld [vmem:[%s463 + $0xbe0] sm:$0xff]
        %v4636 = vld [vmem:[%s463 + $0xbe8] sm:$0xff]
        %v4637 = vld [vmem:[%s463 + $0xbf0] sm:$0xff]
        %v4638 = vld [vmem:[%s463 + $0xbf8] sm:$0xff]
        %v4639 = vld [vmem:[%s463 + $0xc00] sm:$0xff]
        %v4640 = vld [vmem:[%s463 + $0xc08] sm:$0xff]
        %v4641 = vld [vmem:[%s463 + $0xc10] sm:$0xff]
        %v4642 = vld [vmem:[%s463 + $0xc18] sm:$0xff]
        %v4643 = vld [vmem:[%s463 + $0xc20] sm:$0xff]
        %v4644 = vld [vmem:[%s463 + $0xc28] sm:$0xff]
        %v4645 = vld [vmem:[%s463 + $0xc30] sm:$0xff]
        %v4646 = vld [vmem:[%s463 + $0xc38] sm:$0xff]
        %v4647 = vld [vmem:[%s463 + $0xc40] sm:$0xff]
        %v4648 = vld [vmem:[%s463 + $0xc48] sm:$0xff]
        %v4649 = vld [vmem:[%s463 + $0xc50] sm:$0xff]
        %v4650 = vld [vmem:[%s463 + $0xc58] sm:$0xff]
        %v4651 = vld [vmem:[%s463 + $0xc60] sm:$0xff]
        %v4652 = vld [vmem:[%s463 + $0xc68] sm:$0xff]
        %v4653 = vld [vmem:[%s463 + $0xc70] sm:$0xff]
        %v4654 = vld [vmem:[%s463 + $0xc78] sm:$0xff]
        %v4655 = vld [vmem:[%s463 + $0xc80] sm:$0xff]
        %v4656 = vld [vmem:[%s463 + $0xc88] sm:$0xff]
        %v4657 = vld [vmem:[%s463 + $0xc90] sm:$0xff]
        %v4658 = vld [vmem:[%s463 + $0xc98] sm:$0xff]
        %v4659 = vld [vmem:[%s463 + $0xca0] sm:$0xff]
        %v4660 = vld [vmem:[%s463 + $0xca8] sm:$0xff]
        %v4661 = vld [vmem:[%s463 + $0xcb0] sm:$0xff]
        %v4662 = vld [vmem:[%s463 + $0xcb8] sm:$0xff]
        %v4663 = vld [vmem:[%s463 + $0xcc0] sm:$0xff]
        %v4664 = vld [vmem:[%s463 + $0xcc8] sm:$0xff]
        %v4665 = vld [vmem:[%s463 + $0xcd0] sm:$0xff]
        %v4666 = vld [vmem:[%s463 + $0xcd8] sm:$0xff]
        %v4667 = vld [vmem:[%s463 + $0xce0] sm:$0xff]
        %v4668 = vld [vmem:[%s463 + $0xce8] sm:$0xff]
        %v4669 = vld [vmem:[%s463 + $0xcf0] sm:$0xff]
        %v4670 = vld [vmem:[%s463 + $0xcf8] sm:$0xff]
        %v4671 = vld [vmem:[%s463 + $0xd00] sm:$0xff]
        %v4672 = vld [vmem:[%s463 + $0xd08] sm:$0xff]
        %v4673 = vld [vmem:[%s463 + $0xd10] sm:$0xff]
        %v4674 = vld [vmem:[%s463 + $0xd18] sm:$0xff]
        %v4675 = vld [vmem:[%s463 + $0xd20] sm:$0xff]
        %v4676 = vld [vmem:[%s463 + $0xd28] sm:$0xff]
        %v4677 = vld [vmem:[%s463 + $0xd30] sm:$0xff]
        %v4678 = vld [vmem:[%s463 + $0xd38] sm:$0xff]
        %v4679 = vld [vmem:[%s463 + $0xd40] sm:$0xff]
        %v4680 = vld [vmem:[%s463 + $0xd48] sm:$0xff]
        %v4681 = vld [vmem:[%s463 + $0xd50] sm:$0xff]
        %v4682 = vld [vmem:[%s463 + $0xd58] sm:$0xff]
        %v4683 = vld [vmem:[%s463 + $0xd60] sm:$0xff]
        %v4684 = vld [vmem:[%s463 + $0xd68] sm:$0xff]
        %v4685 = vld [vmem:[%s463 + $0xd70] sm:$0xff]
        %v4686 = vld [vmem:[%s463 + $0xd78] sm:$0xff]
        %v4687 = vld [vmem:[%s463 + $0xd80] sm:$0xff]
        %v4688 = vld [vmem:[%s463 + $0xd88] sm:$0xff]
        %v4689 = vld [vmem:[%s463 + $0xd90] sm:$0xff]
        %v4690 = vld [vmem:[%s463 + $0xd98] sm:$0xff]
        %v4691 = vld [vmem:[%s463 + $0xda0] sm:$0xff]
        %v4692 = vld [vmem:[%s463 + $0xda8] sm:$0xff]
        %v4693 = vld [vmem:[%s463 + $0xdb0] sm:$0xff]
        %v4694 = vld [vmem:[%s463 + $0xdb8] sm:$0xff]
        %v4695 = vld [vmem:[%s463 + $0xdc0] sm:$0xff]
        %v4696 = vld [vmem:[%s463 + $0xdc8] sm:$0xff]
        %v4697 = vld [vmem:[%s463 + $0xdd0] sm:$0xff]
        %v4698 = vld [vmem:[%s463 + $0xdd8] sm:$0xff]
        %v4699 = vld [vmem:[%s463 + $0xde0] sm:$0xff]
        %v4700 = vld [vmem:[%s463 + $0xde8] sm:$0xff]
        %v4701 = vld [vmem:[%s463 + $0xdf0] sm:$0xff]
        %v4702 = vld [vmem:[%s463 + $0xdf8] sm:$0xff]
        %v4703 = vld [vmem:[%s463 + $0xe00] sm:$0xff]
        %v4704 = vld [vmem:[%s463 + $0xe08] sm:$0xff]
        %v4705 = vld [vmem:[%s463 + $0xe10] sm:$0xff]
        %v4706 = vld [vmem:[%s463 + $0xe18] sm:$0xff]
        %v4707 = vld [vmem:[%s463 + $0xe20] sm:$0xff]
        %v4708 = vld [vmem:[%s463 + $0xe28] sm:$0xff]
        %v4709 = vld [vmem:[%s463 + $0xe30] sm:$0xff]
        %v4710 = vld [vmem:[%s463 + $0xe38] sm:$0xff]
        %v4711 = vld [vmem:[%s463 + $0xe40] sm:$0xff]
        %v4712 = vld [vmem:[%s463 + $0xe48] sm:$0xff]
        %v4713 = vld [vmem:[%s463 + $0xe50] sm:$0xff]
        %v4714 = vld [vmem:[%s463 + $0xe58] sm:$0xff]
        %v4715 = vld [vmem:[%s463 + $0xe60] sm:$0xff]
        %v4716 = vld [vmem:[%s463 + $0xe68] sm:$0xff]
        %v4717 = vld [vmem:[%s463 + $0xe70] sm:$0xff]
        %v4718 = vld [vmem:[%s463 + $0xe78] sm:$0xff]
        %v4719 = vld [vmem:[%s463 + $0xe80] sm:$0xff]
        %v4720 = vld [vmem:[%s463 + $0xe88] sm:$0xff]
        %v4721 = vld [vmem:[%s463 + $0xe90] sm:$0xff]
        %v4722 = vld [vmem:[%s463 + $0xe98] sm:$0xff]
        %v4723 = vld [vmem:[%s463 + $0xea0] sm:$0xff]
        %v4724 = vld [vmem:[%s463 + $0xea8] sm:$0xff]
        %v4725 = vld [vmem:[%s463 + $0xeb0] sm:$0xff]
        %v4726 = vld [vmem:[%s463 + $0xeb8] sm:$0xff]
        %v4727 = vld [vmem:[%s463 + $0xec0] sm:$0xff]
        %v4728 = vld [vmem:[%s463 + $0xec8] sm:$0xff]
        %v4729 = vld [vmem:[%s463 + $0xed0] sm:$0xff]
        %v4730 = vld [vmem:[%s463 + $0xed8] sm:$0xff]
        %v4731 = vld [vmem:[%s463 + $0xee0] sm:$0xff]
        %v4732 = vld [vmem:[%s463 + $0xee8] sm:$0xff]
        %v4733 = vld [vmem:[%s463 + $0xef0] sm:$0xff]
        %v4734 = vld [vmem:[%s463 + $0xef8] sm:$0xff]
        %v4735 = vld [vmem:[%s463 + $0xf00] sm:$0xff]
        %v4736 = vld [vmem:[%s463 + $0xf08] sm:$0xff]
        %v4737 = vld [vmem:[%s463 + $0xf10] sm:$0xff]
        %v4738 = vld [vmem:[%s463 + $0xf18] sm:$0xff]
        %v4739 = vld [vmem:[%s463 + $0xf20] sm:$0xff]
        %v4740 = vld [vmem:[%s463 + $0xf28] sm:$0xff]
        %v4741 = vld [vmem:[%s463 + $0xf30] sm:$0xff]
        %v4742 = vld [vmem:[%s463 + $0xf38] sm:$0xff]
        %v4743 = vld [vmem:[%s463 + $0xf40] sm:$0xff]
        %v4744 = vld [vmem:[%s463 + $0xf48] sm:$0xff]
        %v4745 = vld [vmem:[%s463 + $0xf50] sm:$0xff]
        %v4746 = vld [vmem:[%s463 + $0xf58] sm:$0xff]
        %v4747 = vld [vmem:[%s463 + $0xf60] sm:$0xff]
        %v4748 = vld [vmem:[%s463 + $0xf68] sm:$0xff]
        %v4749 = vld [vmem:[%s463 + $0xf70] sm:$0xff]
        %v4750 = vld [vmem:[%s463 + $0xf78] sm:$0xff]
        %v4751 = vld [vmem:[%s463 + $0xf80] sm:$0xff]
        %v4752 = vld [vmem:[%s463 + $0xf88] sm:$0xff]
        %v4753 = vld [vmem:[%s463 + $0xf90] sm:$0xff]
        %v4754 = vld [vmem:[%s463 + $0xf98] sm:$0xff]
        %v4755 = vld [vmem:[%s463 + $0xfa0] sm:$0xff]
        %v4756 = vld [vmem:[%s463 + $0xfa8] sm:$0xff]
        %v4757 = vld [vmem:[%s463 + $0xfb0] sm:$0xff]
        %v4758 = vld [vmem:[%s463 + $0xfb8] sm:$0xff]
        %v4759 = vld [vmem:[%s463 + $0xfc0] sm:$0xff]
        %v4760 = vld [vmem:[%s463 + $0xfc8] sm:$0xff]
        %v4761 = vld [vmem:[%s463 + $0xfd0] sm:$0xff]
        %v4762 = vld [vmem:[%s463 + $0xfd8] sm:$0xff]
        %v4763 = vld [vmem:[%s463 + $0xfe0] sm:$0xff]
        %v4764 = vld [vmem:[%s463 + $0xfe8] sm:$0xff]
        %v4765 = vld [vmem:[%s463 + $0xff0] sm:$0xff]
        %v4766 = vld [vmem:[%s463 + $0xff8] sm:$0xff]
        %v4767 = vld [vmem:[%s463 + $0x1000] sm:$0xff]
        %v4768 = vld [vmem:[%s463 + $0x1008] sm:$0xff]
        %v4769 = vld [vmem:[%s463 + $0x1010] sm:$0xff]
        %v4770 = vld [vmem:[%s463 + $0x1018] sm:$0xff]
        %v4771 = vld [vmem:[%s463 + $0x1020] sm:$0xff]
        %v4772 = vld [vmem:[%s463 + $0x1028] sm:$0xff]
        %v4773 = vld [vmem:[%s463 + $0x1030] sm:$0xff]
        %v4774 = vld [vmem:[%s463 + $0x1038] sm:$0xff]
        %v4775 = vld [vmem:[%s463 + $0x1040] sm:$0xff]
        %v4776 = vld [vmem:[%s463 + $0x1048] sm:$0xff]
        %v4777 = vld [vmem:[%s463 + $0x1050] sm:$0xff]
        %v4778 = vld [vmem:[%s463 + $0x1058] sm:$0xff]
        %v4779 = vld [vmem:[%s463 + $0x1060] sm:$0xff]
        %v4780 = vld [vmem:[%s463 + $0x1068] sm:$0xff]
        %v4781 = vld [vmem:[%s463 + $0x1070] sm:$0xff]
        %v4782 = vld [vmem:[%s463 + $0x1078] sm:$0xff]
        %v4783 = vld [vmem:[%s463 + $0x1080] sm:$0xff]
        %v4784 = vld [vmem:[%s463 + $0x1088] sm:$0xff]
        %v4785 = vld [vmem:[%s463 + $0x1090] sm:$0xff]
        %v4786 = vld [vmem:[%s463 + $0x1098] sm:$0xff]
        %v4787 = vld [vmem:[%s463 + $0x10a0] sm:$0xff]
        %v4788 = vld [vmem:[%s463 + $0x10a8] sm:$0xff]
        %v4789 = vld [vmem:[%s463 + $0x10b0] sm:$0xff]
        %v4790 = vld [vmem:[%s463 + $0x10b8] sm:$0xff]
        %v4791 = vld [vmem:[%s463 + $0x10c0] sm:$0xff]
        %v4792 = vld [vmem:[%s463 + $0x10c8] sm:$0xff]
        %v4793 = vld [vmem:[%s463 + $0x10d0] sm:$0xff]
        %v4794 = vld [vmem:[%s463 + $0x10d8] sm:$0xff]
        %v4795 = vld [vmem:[%s463 + $0x10e0] sm:$0xff]
        %v4796 = vld [vmem:[%s463 + $0x10e8] sm:$0xff]
        %v4797 = vld [vmem:[%s463 + $0x10f0] sm:$0xff]
        %v4798 = vld [vmem:[%s463 + $0x10f8] sm:$0xff]
        %v4799 = vld [vmem:[%s463 + $0x1100] sm:$0xff]
        %v4800 = vld [vmem:[%s463 + $0x1108] sm:$0xff]
        %v4801 = vld [vmem:[%s463 + $0x1110] sm:$0xff]
        %v4802 = vld [vmem:[%s463 + $0x1118] sm:$0xff]
        %v4803 = vld [vmem:[%s463 + $0x1120] sm:$0xff]
        %v4804 = vld [vmem:[%s463 + $0x1128] sm:$0xff]
        %v4805 = vld [vmem:[%s463 + $0x1130] sm:$0xff]
        %v4806 = vld [vmem:[%s463 + $0x1138] sm:$0xff]
        %v4807 = vld [vmem:[%s463 + $0x1140] sm:$0xff]
        %v4808 = vld [vmem:[%s463 + $0x1148] sm:$0xff]
        %v4809 = vld [vmem:[%s463 + $0x1150] sm:$0xff]
        %v4810 = vld [vmem:[%s463 + $0x1158] sm:$0xff]
        %v4811 = vld [vmem:[%s463 + $0x1160] sm:$0xff]
        %v4812 = vld [vmem:[%s463 + $0x1168] sm:$0xff]
        %v4813 = vld [vmem:[%s463 + $0x1170] sm:$0xff]
        %v4814 = vld [vmem:[%s463 + $0x1178] sm:$0xff]
        %v4815 = vld [vmem:[%s463 + $0x1180] sm:$0xff]
        %v4816 = vld [vmem:[%s463 + $0x1188] sm:$0xff]
        %v4817 = vld [vmem:[%s463 + $0x1190] sm:$0xff]
        %v4818 = vld [vmem:[%s463 + $0x1198] sm:$0xff]
        %v4819 = vld [vmem:[%s463 + $0x11a0] sm:$0xff]
        %v4820 = vld [vmem:[%s463 + $0x11a8] sm:$0xff]
        %v4821 = vld [vmem:[%s463 + $0x11b0] sm:$0xff]
        %v4822 = vld [vmem:[%s463 + $0x11b8] sm:$0xff]
        %v4823 = vld [vmem:[%s463 + $0x11c0] sm:$0xff]
        %v4824 = vld [vmem:[%s463 + $0x11c8] sm:$0xff]
        %v4825 = vld [vmem:[%s463 + $0x11d0] sm:$0xff]
        %v4826 = vld [vmem:[%s463 + $0x11d8] sm:$0xff]
        %v4827 = vld [vmem:[%s463 + $0x11e0] sm:$0xff]
        %v4828 = vld [vmem:[%s463 + $0x11e8] sm:$0xff]
        %v4829 = vld [vmem:[%s463 + $0x11f0] sm:$0xff]
        %v4830 = vld [vmem:[%s463 + $0x11f8] sm:$0xff]
        %v4831 = vpack.c.bf16 %v543, %v537
        %v4832 = vpack.c.bf16 %v544, %v538
        %v4833 = vpack.c.bf16 %v545, %v539
        %v4834 = vpack.c.bf16 %v546, %v540
        %v4835 = vpack.c.bf16 %v547, %v541
        %v4836 = vpack.c.bf16 %v548, %v542
        %v5413 = vunpack.c.l.b16 %v4255
        %v5414 = vunpack.c.h.b16 %v4255
        %v5415 = vunpack.c.l.b16 %v4256
        %v5416 = vunpack.c.h.b16 %v4256
        %v5417 = vunpack.c.l.b16 %v4257
        %v5418 = vunpack.c.h.b16 %v4257
        %v5419 = vunpack.c.l.b16 %v4258
        %v5420 = vunpack.c.h.b16 %v4258
        %v5421 = vunpack.c.l.b16 %v4259
        %v5422 = vunpack.c.h.b16 %v4259
        %v5423 = vunpack.c.l.b16 %v4260
        %v5424 = vunpack.c.h.b16 %v4260
        %v5425 = vunpack.c.l.b16 %v4261
        %v5426 = vunpack.c.h.b16 %v4261
        %v5427 = vunpack.c.l.b16 %v4262
        %v5428 = vunpack.c.h.b16 %v4262
        %v5429 = vunpack.c.l.b16 %v4263
        %v5430 = vunpack.c.h.b16 %v4263
        %v5431 = vunpack.c.l.b16 %v4264
        %v5432 = vunpack.c.h.b16 %v4264
        %v5433 = vunpack.c.l.b16 %v4265
        %v5434 = vunpack.c.h.b16 %v4265
        %v5435 = vunpack.c.l.b16 %v4266
        %v5436 = vunpack.c.h.b16 %v4266
        %v5437 = vunpack.c.l.b16 %v4267
        %v5438 = vunpack.c.h.b16 %v4267
        %v5439 = vunpack.c.l.b16 %v4268
        %v5440 = vunpack.c.h.b16 %v4268
        %v5441 = vunpack.c.l.b16 %v4269
        %v5442 = vunpack.c.h.b16 %v4269
        %v5443 = vunpack.c.l.b16 %v4270
        %v5444 = vunpack.c.h.b16 %v4270
        %v5445 = vunpack.c.l.b16 %v4271
        %v5446 = vunpack.c.h.b16 %v4271
        %v5447 = vunpack.c.l.b16 %v4272
        %v5448 = vunpack.c.h.b16 %v4272
        %v5449 = vunpack.c.l.b16 %v4273
        %v5450 = vunpack.c.h.b16 %v4273
        %v5451 = vunpack.c.l.b16 %v4274
        %v5452 = vunpack.c.h.b16 %v4274
        %v5453 = vunpack.c.l.b16 %v4275
        %v5454 = vunpack.c.h.b16 %v4275
        %v5455 = vunpack.c.l.b16 %v4276
        %v5456 = vunpack.c.h.b16 %v4276
        %v5457 = vunpack.c.l.b16 %v4277
        %v5458 = vunpack.c.h.b16 %v4277
        %v5459 = vunpack.c.l.b16 %v4278
        %v5460 = vunpack.c.h.b16 %v4278
        %v5461 = vunpack.c.l.b16 %v4279
        %v5462 = vunpack.c.h.b16 %v4279
        %v5463 = vunpack.c.l.b16 %v4280
        %v5464 = vunpack.c.h.b16 %v4280
        %v5465 = vunpack.c.l.b16 %v4281
        %v5466 = vunpack.c.h.b16 %v4281
        %v5467 = vunpack.c.l.b16 %v4282
        %v5468 = vunpack.c.h.b16 %v4282
        %v5469 = vunpack.c.l.b16 %v4283
        %v5470 = vunpack.c.h.b16 %v4283
        %v5471 = vunpack.c.l.b16 %v4284
        %v5472 = vunpack.c.h.b16 %v4284
        %v5473 = vunpack.c.l.b16 %v4285
        %v5474 = vunpack.c.h.b16 %v4285
        %v5475 = vunpack.c.l.b16 %v4286
        %v5476 = vunpack.c.h.b16 %v4286
        %v5477 = vunpack.c.l.b16 %v4287
        %v5478 = vunpack.c.h.b16 %v4287
        %v5479 = vunpack.c.l.b16 %v4288
        %v5480 = vunpack.c.h.b16 %v4288
        %v5481 = vunpack.c.l.b16 %v4289
        %v5482 = vunpack.c.h.b16 %v4289
        %v5483 = vunpack.c.l.b16 %v4290
        %v5484 = vunpack.c.h.b16 %v4290
        %v5485 = vunpack.c.l.b16 %v4291
        %v5486 = vunpack.c.h.b16 %v4291
        %v5487 = vunpack.c.l.b16 %v4292
        %v5488 = vunpack.c.h.b16 %v4292
        %v5489 = vunpack.c.l.b16 %v4293
        %v5490 = vunpack.c.h.b16 %v4293
        %v5491 = vunpack.c.l.b16 %v4294
        %v5492 = vunpack.c.h.b16 %v4294
        %v5493 = vunpack.c.l.b16 %v4295
        %v5494 = vunpack.c.h.b16 %v4295
        %v5495 = vunpack.c.l.b16 %v4296
        %v5496 = vunpack.c.h.b16 %v4296
        %v5497 = vunpack.c.l.b16 %v4297
        %v5498 = vunpack.c.h.b16 %v4297
        %v5499 = vunpack.c.l.b16 %v4298
        %v5500 = vunpack.c.h.b16 %v4298
        %v5501 = vunpack.c.l.b16 %v4299
        %v5502 = vunpack.c.h.b16 %v4299
        %v5503 = vunpack.c.l.b16 %v4300
        %v5504 = vunpack.c.h.b16 %v4300
        %v5505 = vunpack.c.l.b16 %v4301
        %v5506 = vunpack.c.h.b16 %v4301
        %v5507 = vunpack.c.l.b16 %v4302
        %v5508 = vunpack.c.h.b16 %v4302
        %v5509 = vunpack.c.l.b16 %v4303
        %v5510 = vunpack.c.h.b16 %v4303
        %v5511 = vunpack.c.l.b16 %v4304
        %v5512 = vunpack.c.h.b16 %v4304
        %v5513 = vunpack.c.l.b16 %v4305
        %v5514 = vunpack.c.h.b16 %v4305
        %v5515 = vunpack.c.l.b16 %v4306
        %v5516 = vunpack.c.h.b16 %v4306
        %v5517 = vunpack.c.l.b16 %v4307
        %v5518 = vunpack.c.h.b16 %v4307
        %v5519 = vunpack.c.l.b16 %v4308
        %v5520 = vunpack.c.h.b16 %v4308
        %v5521 = vunpack.c.l.b16 %v4309
        %v5522 = vunpack.c.h.b16 %v4309
        %v5523 = vunpack.c.l.b16 %v4310
        %v5524 = vunpack.c.h.b16 %v4310
        %v5525 = vunpack.c.l.b16 %v4311
        %v5526 = vunpack.c.h.b16 %v4311
        %v5527 = vunpack.c.l.b16 %v4312
        %v5528 = vunpack.c.h.b16 %v4312
        %v5529 = vunpack.c.l.b16 %v4313
        %v5530 = vunpack.c.h.b16 %v4313
        %v5531 = vunpack.c.l.b16 %v4314
        %v5532 = vunpack.c.h.b16 %v4314
        %v5533 = vunpack.c.l.b16 %v4315
        %v5534 = vunpack.c.h.b16 %v4315
        %v5535 = vunpack.c.l.b16 %v4316
        %v5536 = vunpack.c.h.b16 %v4316
        %v5537 = vunpack.c.l.b16 %v4317
        %v5538 = vunpack.c.h.b16 %v4317
        %v5539 = vunpack.c.l.b16 %v4318
        %v5540 = vunpack.c.h.b16 %v4318
        %v5541 = vunpack.c.l.b16 %v4319
        %v5542 = vunpack.c.h.b16 %v4319
        %v5543 = vunpack.c.l.b16 %v4320
        %v5544 = vunpack.c.h.b16 %v4320
        %v5545 = vunpack.c.l.b16 %v4321
        %v5546 = vunpack.c.h.b16 %v4321
        %v5547 = vunpack.c.l.b16 %v4322
        %v5548 = vunpack.c.h.b16 %v4322
        %v5549 = vunpack.c.l.b16 %v4323
        %v5550 = vunpack.c.h.b16 %v4323
        %v5551 = vunpack.c.l.b16 %v4324
        %v5552 = vunpack.c.h.b16 %v4324
        %v5553 = vunpack.c.l.b16 %v4325
        %v5554 = vunpack.c.h.b16 %v4325
        %v5555 = vunpack.c.l.b16 %v4326
        %v5556 = vunpack.c.h.b16 %v4326
        %v5557 = vunpack.c.l.b16 %v4327
        %v5558 = vunpack.c.h.b16 %v4327
        %v5559 = vunpack.c.l.b16 %v4328
        %v5560 = vunpack.c.h.b16 %v4328
        %v5561 = vunpack.c.l.b16 %v4329
        %v5562 = vunpack.c.h.b16 %v4329
        %v5563 = vunpack.c.l.b16 %v4330
        %v5564 = vunpack.c.h.b16 %v4330
        %v5565 = vunpack.c.l.b16 %v4331
        %v5566 = vunpack.c.h.b16 %v4331
        %v5567 = vunpack.c.l.b16 %v4332
        %v5568 = vunpack.c.h.b16 %v4332
        %v5569 = vunpack.c.l.b16 %v4333
        %v5570 = vunpack.c.h.b16 %v4333
        %v5571 = vunpack.c.l.b16 %v4334
        %v5572 = vunpack.c.h.b16 %v4334
        %v5573 = vunpack.c.l.b16 %v4335
        %v5574 = vunpack.c.h.b16 %v4335
        %v5575 = vunpack.c.l.b16 %v4336
        %v5576 = vunpack.c.h.b16 %v4336
        %v5577 = vunpack.c.l.b16 %v4337
        %v5578 = vunpack.c.h.b16 %v4337
        %v5579 = vunpack.c.l.b16 %v4338
        %v5580 = vunpack.c.h.b16 %v4338
        %v5581 = vunpack.c.l.b16 %v4339
        %v5582 = vunpack.c.h.b16 %v4339
        %v5583 = vunpack.c.l.b16 %v4340
        %v5584 = vunpack.c.h.b16 %v4340
        %v5585 = vunpack.c.l.b16 %v4341
        %v5586 = vunpack.c.h.b16 %v4341
        %v5587 = vunpack.c.l.b16 %v4342
        %v5588 = vunpack.c.h.b16 %v4342
        %v5589 = vunpack.c.l.b16 %v4343
        %v5590 = vunpack.c.h.b16 %v4343
        %v5591 = vunpack.c.l.b16 %v4344
        %v5592 = vunpack.c.h.b16 %v4344
        %v5593 = vunpack.c.l.b16 %v4345
        %v5594 = vunpack.c.h.b16 %v4345
        %v5595 = vunpack.c.l.b16 %v4346
        %v5596 = vunpack.c.h.b16 %v4346
        %v5597 = vunpack.c.l.b16 %v4347
        %v5598 = vunpack.c.h.b16 %v4347
        %v5599 = vunpack.c.l.b16 %v4348
        %v5600 = vunpack.c.h.b16 %v4348
        %v5601 = vunpack.c.l.b16 %v4349
        %v5602 = vunpack.c.h.b16 %v4349
        %v5603 = vunpack.c.l.b16 %v4350
        %v5604 = vunpack.c.h.b16 %v4350
        %v5605 = vunpack.c.l.b16 %v4351
        %v5606 = vunpack.c.h.b16 %v4351
        %v5607 = vunpack.c.l.b16 %v4352
        %v5608 = vunpack.c.h.b16 %v4352
        %v5609 = vunpack.c.l.b16 %v4353
        %v5610 = vunpack.c.h.b16 %v4353
        %v5611 = vunpack.c.l.b16 %v4354
        %v5612 = vunpack.c.h.b16 %v4354
        %v5613 = vunpack.c.l.b16 %v4355
        %v5614 = vunpack.c.h.b16 %v4355
        %v5615 = vunpack.c.l.b16 %v4356
        %v5616 = vunpack.c.h.b16 %v4356
        %v5617 = vunpack.c.l.b16 %v4357
        %v5618 = vunpack.c.h.b16 %v4357
        %v5619 = vunpack.c.l.b16 %v4358
        %v5620 = vunpack.c.h.b16 %v4358
        %v5621 = vunpack.c.l.b16 %v4359
        %v5622 = vunpack.c.h.b16 %v4359
        %v5623 = vunpack.c.l.b16 %v4360
        %v5624 = vunpack.c.h.b16 %v4360
        %v5625 = vunpack.c.l.b16 %v4361
        %v5626 = vunpack.c.h.b16 %v4361
        %v5627 = vunpack.c.l.b16 %v4362
        %v5628 = vunpack.c.h.b16 %v4362
        %v5629 = vunpack.c.l.b16 %v4363
        %v5630 = vunpack.c.h.b16 %v4363
        %v5631 = vunpack.c.l.b16 %v4364
        %v5632 = vunpack.c.h.b16 %v4364
        %v5633 = vunpack.c.l.b16 %v4365
        %v5634 = vunpack.c.h.b16 %v4365
        %v5635 = vunpack.c.l.b16 %v4366
        %v5636 = vunpack.c.h.b16 %v4366
        %v5637 = vunpack.c.l.b16 %v4367
        %v5638 = vunpack.c.h.b16 %v4367
        %v5639 = vunpack.c.l.b16 %v4368
        %v5640 = vunpack.c.h.b16 %v4368
        %v5641 = vunpack.c.l.b16 %v4369
        %v5642 = vunpack.c.h.b16 %v4369
        %v5643 = vunpack.c.l.b16 %v4370
        %v5644 = vunpack.c.h.b16 %v4370
        %v5645 = vunpack.c.l.b16 %v4371
        %v5646 = vunpack.c.h.b16 %v4371
        %v5647 = vunpack.c.l.b16 %v4372
        %v5648 = vunpack.c.h.b16 %v4372
        %v5649 = vunpack.c.l.b16 %v4373
        %v5650 = vunpack.c.h.b16 %v4373
        %v5651 = vunpack.c.l.b16 %v4374
        %v5652 = vunpack.c.h.b16 %v4374
        %v5653 = vunpack.c.l.b16 %v4375
        %v5654 = vunpack.c.h.b16 %v4375
        %v5655 = vunpack.c.l.b16 %v4376
        %v5656 = vunpack.c.h.b16 %v4376
        %v5657 = vunpack.c.l.b16 %v4377
        %v5658 = vunpack.c.h.b16 %v4377
        %v5659 = vunpack.c.l.b16 %v4378
        %v5660 = vunpack.c.h.b16 %v4378
        %v5661 = vunpack.c.l.b16 %v4379
        %v5662 = vunpack.c.h.b16 %v4379
        %v5663 = vunpack.c.l.b16 %v4380
        %v5664 = vunpack.c.h.b16 %v4380
        %v5665 = vunpack.c.l.b16 %v4381
        %v5666 = vunpack.c.h.b16 %v4381
        %v5667 = vunpack.c.l.b16 %v4382
        %v5668 = vunpack.c.h.b16 %v4382
        %v5669 = vunpack.c.l.b16 %v4383
        %v5670 = vunpack.c.h.b16 %v4383
        %v5671 = vunpack.c.l.b16 %v4384
        %v5672 = vunpack.c.h.b16 %v4384
        %v5673 = vunpack.c.l.b16 %v4385
        %v5674 = vunpack.c.h.b16 %v4385
        %v5675 = vunpack.c.l.b16 %v4386
        %v5676 = vunpack.c.h.b16 %v4386
        %v5677 = vunpack.c.l.b16 %v4387
        %v5678 = vunpack.c.h.b16 %v4387
        %v5679 = vunpack.c.l.b16 %v4388
        %v5680 = vunpack.c.h.b16 %v4388
        %v5681 = vunpack.c.l.b16 %v4389
        %v5682 = vunpack.c.h.b16 %v4389
        %v5683 = vunpack.c.l.b16 %v4390
        %v5684 = vunpack.c.h.b16 %v4390
        %v5685 = vunpack.c.l.b16 %v4391
        %v5686 = vunpack.c.h.b16 %v4391
        %v5687 = vunpack.c.l.b16 %v4392
        %v5688 = vunpack.c.h.b16 %v4392
        %v5689 = vunpack.c.l.b16 %v4393
        %v5690 = vunpack.c.h.b16 %v4393
        %v5691 = vunpack.c.l.b16 %v4394
        %v5692 = vunpack.c.h.b16 %v4394
        %v5693 = vunpack.c.l.b16 %v4395
        %v5694 = vunpack.c.h.b16 %v4395
        %v5695 = vunpack.c.l.b16 %v4396
        %v5696 = vunpack.c.h.b16 %v4396
        %v5697 = vunpack.c.l.b16 %v4397
        %v5698 = vunpack.c.h.b16 %v4397
        %v5699 = vunpack.c.l.b16 %v4398
        %v5700 = vunpack.c.h.b16 %v4398
        %v5701 = vunpack.c.l.b16 %v4399
        %v5702 = vunpack.c.h.b16 %v4399
        %v5703 = vunpack.c.l.b16 %v4400
        %v5704 = vunpack.c.h.b16 %v4400
        %v5705 = vunpack.c.l.b16 %v4401
        %v5706 = vunpack.c.h.b16 %v4401
        %v5707 = vunpack.c.l.b16 %v4402
        %v5708 = vunpack.c.h.b16 %v4402
        %v5709 = vunpack.c.l.b16 %v4403
        %v5710 = vunpack.c.h.b16 %v4403
        %v5711 = vunpack.c.l.b16 %v4404
        %v5712 = vunpack.c.h.b16 %v4404
        %v5713 = vunpack.c.l.b16 %v4405
        %v5714 = vunpack.c.h.b16 %v4405
        %v5715 = vunpack.c.l.b16 %v4406
        %v5716 = vunpack.c.h.b16 %v4406
        %v5717 = vunpack.c.l.b16 %v4407
        %v5718 = vunpack.c.h.b16 %v4407
        %v5719 = vunpack.c.l.b16 %v4408
        %v5720 = vunpack.c.h.b16 %v4408
        %v5721 = vunpack.c.l.b16 %v4409
        %v5722 = vunpack.c.h.b16 %v4409
        %v5723 = vunpack.c.l.b16 %v4410
        %v5724 = vunpack.c.h.b16 %v4410
        %v5725 = vunpack.c.l.b16 %v4411
        %v5726 = vunpack.c.h.b16 %v4411
        %v5727 = vunpack.c.l.b16 %v4412
        %v5728 = vunpack.c.h.b16 %v4412
        %v5729 = vunpack.c.l.b16 %v4413
        %v5730 = vunpack.c.h.b16 %v4413
        %v5731 = vunpack.c.l.b16 %v4414
        %v5732 = vunpack.c.h.b16 %v4414
        %v5733 = vunpack.c.l.b16 %v4415
        %v5734 = vunpack.c.h.b16 %v4415
        %v5735 = vunpack.c.l.b16 %v4416
        %v5736 = vunpack.c.h.b16 %v4416
        %v5737 = vunpack.c.l.b16 %v4417
        %v5738 = vunpack.c.h.b16 %v4417
        %v5739 = vunpack.c.l.b16 %v4418
        %v5740 = vunpack.c.h.b16 %v4418
        %v5741 = vunpack.c.l.b16 %v4419
        %v5742 = vunpack.c.h.b16 %v4419
        %v5743 = vunpack.c.l.b16 %v4420
        %v5744 = vunpack.c.h.b16 %v4420
        %v5745 = vunpack.c.l.b16 %v4421
        %v5746 = vunpack.c.h.b16 %v4421
        %v5747 = vunpack.c.l.b16 %v4422
        %v5748 = vunpack.c.h.b16 %v4422
        %v5749 = vunpack.c.l.b16 %v4423
        %v5750 = vunpack.c.h.b16 %v4423
        %v5751 = vunpack.c.l.b16 %v4424
        %v5752 = vunpack.c.h.b16 %v4424
        %v5753 = vunpack.c.l.b16 %v4425
        %v5754 = vunpack.c.h.b16 %v4425
        %v5755 = vunpack.c.l.b16 %v4426
        %v5756 = vunpack.c.h.b16 %v4426
        %v5757 = vunpack.c.l.b16 %v4427
        %v5758 = vunpack.c.h.b16 %v4427
        %v5759 = vunpack.c.l.b16 %v4428
        %v5760 = vunpack.c.h.b16 %v4428
        %v5761 = vunpack.c.l.b16 %v4429
        %v5762 = vunpack.c.h.b16 %v4429
        %v5763 = vunpack.c.l.b16 %v4430
        %v5764 = vunpack.c.h.b16 %v4430
        %v5765 = vunpack.c.l.b16 %v4431
        %v5766 = vunpack.c.h.b16 %v4431
        %v5767 = vunpack.c.l.b16 %v4432
        %v5768 = vunpack.c.h.b16 %v4432
        %v5769 = vunpack.c.l.b16 %v4433
        %v5770 = vunpack.c.h.b16 %v4433
        %v5771 = vunpack.c.l.b16 %v4434
        %v5772 = vunpack.c.h.b16 %v4434
        %v5773 = vunpack.c.l.b16 %v4435
        %v5774 = vunpack.c.h.b16 %v4435
        %v5775 = vunpack.c.l.b16 %v4436
        %v5776 = vunpack.c.h.b16 %v4436
        %v5777 = vunpack.c.l.b16 %v4437
        %v5778 = vunpack.c.h.b16 %v4437
        %v5779 = vunpack.c.l.b16 %v4438
        %v5780 = vunpack.c.h.b16 %v4438
        %v5781 = vunpack.c.l.b16 %v4439
        %v5782 = vunpack.c.h.b16 %v4439
        %v5783 = vunpack.c.l.b16 %v4440
        %v5784 = vunpack.c.h.b16 %v4440
        %v5785 = vunpack.c.l.b16 %v4441
        %v5786 = vunpack.c.h.b16 %v4441
        %v5787 = vunpack.c.l.b16 %v4442
        %v5788 = vunpack.c.h.b16 %v4442
        %v5789 = vunpack.c.l.b16 %v4443
        %v5790 = vunpack.c.h.b16 %v4443
        %v5791 = vunpack.c.l.b16 %v4444
        %v5792 = vunpack.c.h.b16 %v4444
        %v5793 = vunpack.c.l.b16 %v4445
        %v5794 = vunpack.c.h.b16 %v4445
        %v5795 = vunpack.c.l.b16 %v4446
        %v5796 = vunpack.c.h.b16 %v4446
        %v5797 = vunpack.c.l.b16 %v4447
        %v5798 = vunpack.c.h.b16 %v4447
        %v5799 = vunpack.c.l.b16 %v4448
        %v5800 = vunpack.c.h.b16 %v4448
        %v5801 = vunpack.c.l.b16 %v4449
        %v5802 = vunpack.c.h.b16 %v4449
        %v5803 = vunpack.c.l.b16 %v4450
        %v5804 = vunpack.c.h.b16 %v4450
        %v5805 = vunpack.c.l.b16 %v4451
        %v5806 = vunpack.c.h.b16 %v4451
        %v5807 = vunpack.c.l.b16 %v4452
        %v5808 = vunpack.c.h.b16 %v4452
        %v5809 = vunpack.c.l.b16 %v4453
        %v5810 = vunpack.c.h.b16 %v4453
        %v5811 = vunpack.c.l.b16 %v4454
        %v5812 = vunpack.c.h.b16 %v4454
        %v5813 = vunpack.c.l.b16 %v4455
        %v5814 = vunpack.c.h.b16 %v4455
        %v5815 = vunpack.c.l.b16 %v4456
        %v5816 = vunpack.c.h.b16 %v4456
        %v5817 = vunpack.c.l.b16 %v4457
        %v5818 = vunpack.c.h.b16 %v4457
        %v5819 = vunpack.c.l.b16 %v4458
        %v5820 = vunpack.c.h.b16 %v4458
        %v5821 = vunpack.c.l.b16 %v4459
        %v5822 = vunpack.c.h.b16 %v4459
        %v5823 = vunpack.c.l.b16 %v4460
        %v5824 = vunpack.c.h.b16 %v4460
        %v5825 = vunpack.c.l.b16 %v4461
        %v5826 = vunpack.c.h.b16 %v4461
        %v5827 = vunpack.c.l.b16 %v4462
        %v5828 = vunpack.c.h.b16 %v4462
        %v5829 = vunpack.c.l.b16 %v4463
        %v5830 = vunpack.c.h.b16 %v4463
        %v5831 = vunpack.c.l.b16 %v4464
        %v5832 = vunpack.c.h.b16 %v4464
        %v5833 = vunpack.c.l.b16 %v4465
        %v5834 = vunpack.c.h.b16 %v4465
        %v5835 = vunpack.c.l.b16 %v4466
        %v5836 = vunpack.c.h.b16 %v4466
        %v5837 = vunpack.c.l.b16 %v4467
        %v5838 = vunpack.c.h.b16 %v4467
        %v5839 = vunpack.c.l.b16 %v4468
        %v5840 = vunpack.c.h.b16 %v4468
        %v5841 = vunpack.c.l.b16 %v4469
        %v5842 = vunpack.c.h.b16 %v4469
        %v5843 = vunpack.c.l.b16 %v4470
        %v5844 = vunpack.c.h.b16 %v4470
        %v5845 = vunpack.c.l.b16 %v4471
        %v5846 = vunpack.c.h.b16 %v4471
        %v5847 = vunpack.c.l.b16 %v4472
        %v5848 = vunpack.c.h.b16 %v4472
        %v5849 = vunpack.c.l.b16 %v4473
        %v5850 = vunpack.c.h.b16 %v4473
        %v5851 = vunpack.c.l.b16 %v4474
        %v5852 = vunpack.c.h.b16 %v4474
        %v5853 = vunpack.c.l.b16 %v4475
        %v5854 = vunpack.c.h.b16 %v4475
        %v5855 = vunpack.c.l.b16 %v4476
        %v5856 = vunpack.c.h.b16 %v4476
        %v5857 = vunpack.c.l.b16 %v4477
        %v5858 = vunpack.c.h.b16 %v4477
        %v5859 = vunpack.c.l.b16 %v4478
        %v5860 = vunpack.c.h.b16 %v4478
        %v5861 = vunpack.c.l.b16 %v4479
        %v5862 = vunpack.c.h.b16 %v4479
        %v5863 = vunpack.c.l.b16 %v4480
        %v5864 = vunpack.c.h.b16 %v4480
        %v5865 = vunpack.c.l.b16 %v4481
        %v5866 = vunpack.c.h.b16 %v4481
        %v5867 = vunpack.c.l.b16 %v4482
        %v5868 = vunpack.c.h.b16 %v4482
        %v5869 = vunpack.c.l.b16 %v4483
        %v5870 = vunpack.c.h.b16 %v4483
        %v5871 = vunpack.c.l.b16 %v4484
        %v5872 = vunpack.c.h.b16 %v4484
        %v5873 = vunpack.c.l.b16 %v4485
        %v5874 = vunpack.c.h.b16 %v4485
        %v5875 = vunpack.c.l.b16 %v4486
        %v5876 = vunpack.c.h.b16 %v4486
        %v5877 = vunpack.c.l.b16 %v4487
        %v5878 = vunpack.c.h.b16 %v4487
        %v5879 = vunpack.c.l.b16 %v4488
        %v5880 = vunpack.c.h.b16 %v4488
        %v5881 = vunpack.c.l.b16 %v4489
        %v5882 = vunpack.c.h.b16 %v4489
        %v5883 = vunpack.c.l.b16 %v4490
        %v5884 = vunpack.c.h.b16 %v4490
        %v5885 = vunpack.c.l.b16 %v4491
        %v5886 = vunpack.c.h.b16 %v4491
        %v5887 = vunpack.c.l.b16 %v4492
        %v5888 = vunpack.c.h.b16 %v4492
        %v5889 = vunpack.c.l.b16 %v4493
        %v5890 = vunpack.c.h.b16 %v4493
        %v5891 = vunpack.c.l.b16 %v4494
        %v5892 = vunpack.c.h.b16 %v4494
        %v5893 = vunpack.c.l.b16 %v4495
        %v5894 = vunpack.c.h.b16 %v4495
        %v5895 = vunpack.c.l.b16 %v4496
        %v5896 = vunpack.c.h.b16 %v4496
        %v5897 = vunpack.c.l.b16 %v4497
        %v5898 = vunpack.c.h.b16 %v4497
        %v5899 = vunpack.c.l.b16 %v4498
        %v5900 = vunpack.c.h.b16 %v4498
        %v5901 = vunpack.c.l.b16 %v4499
        %v5902 = vunpack.c.h.b16 %v4499
        %v5903 = vunpack.c.l.b16 %v4500
        %v5904 = vunpack.c.h.b16 %v4500
        %v5905 = vunpack.c.l.b16 %v4501
        %v5906 = vunpack.c.h.b16 %v4501
        %v5907 = vunpack.c.l.b16 %v4502
        %v5908 = vunpack.c.h.b16 %v4502
        %v5909 = vunpack.c.l.b16 %v4503
        %v5910 = vunpack.c.h.b16 %v4503
        %v5911 = vunpack.c.l.b16 %v4504
        %v5912 = vunpack.c.h.b16 %v4504
        %v5913 = vunpack.c.l.b16 %v4505
        %v5914 = vunpack.c.h.b16 %v4505
        %v5915 = vunpack.c.l.b16 %v4506
        %v5916 = vunpack.c.h.b16 %v4506
        %v5917 = vunpack.c.l.b16 %v4507
        %v5918 = vunpack.c.h.b16 %v4507
        %v5919 = vunpack.c.l.b16 %v4508
        %v5920 = vunpack.c.h.b16 %v4508
        %v5921 = vunpack.c.l.b16 %v4509
        %v5922 = vunpack.c.h.b16 %v4509
        %v5923 = vunpack.c.l.b16 %v4510
        %v5924 = vunpack.c.h.b16 %v4510
        %v5925 = vunpack.c.l.b16 %v4511
        %v5926 = vunpack.c.h.b16 %v4511
        %v5927 = vunpack.c.l.b16 %v4512
        %v5928 = vunpack.c.h.b16 %v4512
        %v5929 = vunpack.c.l.b16 %v4513
        %v5930 = vunpack.c.h.b16 %v4513
        %v5931 = vunpack.c.l.b16 %v4514
        %v5932 = vunpack.c.h.b16 %v4514
        %v5933 = vunpack.c.l.b16 %v4515
        %v5934 = vunpack.c.h.b16 %v4515
        %v5935 = vunpack.c.l.b16 %v4516
        %v5936 = vunpack.c.h.b16 %v4516
        %v5937 = vunpack.c.l.b16 %v4517
        %v5938 = vunpack.c.h.b16 %v4517
        %v5939 = vunpack.c.l.b16 %v4518
        %v5940 = vunpack.c.h.b16 %v4518
        %v5941 = vunpack.c.l.b16 %v4519
        %v5942 = vunpack.c.h.b16 %v4519
        %v5943 = vunpack.c.l.b16 %v4520
        %v5944 = vunpack.c.h.b16 %v4520
        %v5945 = vunpack.c.l.b16 %v4521
        %v5946 = vunpack.c.h.b16 %v4521
        %v5947 = vunpack.c.l.b16 %v4522
        %v5948 = vunpack.c.h.b16 %v4522
        %v5949 = vunpack.c.l.b16 %v4523
        %v5950 = vunpack.c.h.b16 %v4523
        %v5951 = vunpack.c.l.b16 %v4524
        %v5952 = vunpack.c.h.b16 %v4524
        %v5953 = vunpack.c.l.b16 %v4525
        %v5954 = vunpack.c.h.b16 %v4525
        %v5955 = vunpack.c.l.b16 %v4526
        %v5956 = vunpack.c.h.b16 %v4526
        %v5957 = vunpack.c.l.b16 %v4527
        %v5958 = vunpack.c.h.b16 %v4527
        %v5959 = vunpack.c.l.b16 %v4528
        %v5960 = vunpack.c.h.b16 %v4528
        %v5961 = vunpack.c.l.b16 %v4529
        %v5962 = vunpack.c.h.b16 %v4529
        %v5963 = vunpack.c.l.b16 %v4530
        %v5964 = vunpack.c.h.b16 %v4530
        %v5965 = vunpack.c.l.b16 %v4531
        %v5966 = vunpack.c.h.b16 %v4531
        %v5967 = vunpack.c.l.b16 %v4532
        %v5968 = vunpack.c.h.b16 %v4532
        %v5969 = vunpack.c.l.b16 %v4533
        %v5970 = vunpack.c.h.b16 %v4533
        %v5971 = vunpack.c.l.b16 %v4534
        %v5972 = vunpack.c.h.b16 %v4534
        %v5973 = vunpack.c.l.b16 %v4535
        %v5974 = vunpack.c.h.b16 %v4535
        %v5975 = vunpack.c.l.b16 %v4536
        %v5976 = vunpack.c.h.b16 %v4536
        %v5977 = vunpack.c.l.b16 %v4537
        %v5978 = vunpack.c.h.b16 %v4537
        %v5979 = vunpack.c.l.b16 %v4538
        %v5980 = vunpack.c.h.b16 %v4538
        %v5981 = vunpack.c.l.b16 %v4539
        %v5982 = vunpack.c.h.b16 %v4539
        %v5983 = vunpack.c.l.b16 %v4540
        %v5984 = vunpack.c.h.b16 %v4540
        %v5985 = vunpack.c.l.b16 %v4541
        %v5986 = vunpack.c.h.b16 %v4541
        %v5987 = vunpack.c.l.b16 %v4542
        %v5988 = vunpack.c.h.b16 %v4542
        %v5989 = vunpack.c.l.b16 %v4543
        %v5990 = vunpack.c.h.b16 %v4543
        %v5991 = vunpack.c.l.b16 %v4544
        %v5992 = vunpack.c.h.b16 %v4544
        %v5993 = vunpack.c.l.b16 %v4545
        %v5994 = vunpack.c.h.b16 %v4545
        %v5995 = vunpack.c.l.b16 %v4546
        %v5996 = vunpack.c.h.b16 %v4546
        %v5997 = vunpack.c.l.b16 %v4547
        %v5998 = vunpack.c.h.b16 %v4547
        %v5999 = vunpack.c.l.b16 %v4548
        %v6000 = vunpack.c.h.b16 %v4548
        %v6001 = vunpack.c.l.b16 %v4549
        %v6002 = vunpack.c.h.b16 %v4549
        %v6003 = vunpack.c.l.b16 %v4550
        %v6004 = vunpack.c.h.b16 %v4550
        %v6005 = vunpack.c.l.b16 %v4551
        %v6006 = vunpack.c.h.b16 %v4551
        %v6007 = vunpack.c.l.b16 %v4552
        %v6008 = vunpack.c.h.b16 %v4552
        %v6009 = vunpack.c.l.b16 %v4553
        %v6010 = vunpack.c.h.b16 %v4553
        %v6011 = vunpack.c.l.b16 %v4554
        %v6012 = vunpack.c.h.b16 %v4554
        %v6013 = vunpack.c.l.b16 %v4555
        %v6014 = vunpack.c.h.b16 %v4555
        %v6015 = vunpack.c.l.b16 %v4556
        %v6016 = vunpack.c.h.b16 %v4556
        %v6017 = vunpack.c.l.b16 %v4557
        %v6018 = vunpack.c.h.b16 %v4557
        %v6019 = vunpack.c.l.b16 %v4558
        %v6020 = vunpack.c.h.b16 %v4558
        %v6021 = vunpack.c.l.b16 %v4559
        %v6022 = vunpack.c.h.b16 %v4559
        %v6023 = vunpack.c.l.b16 %v4560
        %v6024 = vunpack.c.h.b16 %v4560
        %v6025 = vunpack.c.l.b16 %v4561
        %v6026 = vunpack.c.h.b16 %v4561
        %v6027 = vunpack.c.l.b16 %v4562
        %v6028 = vunpack.c.h.b16 %v4562
        %v6029 = vunpack.c.l.b16 %v4563
        %v6030 = vunpack.c.h.b16 %v4563
        %v6031 = vunpack.c.l.b16 %v4564
        %v6032 = vunpack.c.h.b16 %v4564
        %v6033 = vunpack.c.l.b16 %v4565
        %v6034 = vunpack.c.h.b16 %v4565
        %v6035 = vunpack.c.l.b16 %v4566
        %v6036 = vunpack.c.h.b16 %v4566
        %v6037 = vunpack.c.l.b16 %v4567
        %v6038 = vunpack.c.h.b16 %v4567
        %v6039 = vunpack.c.l.b16 %v4568
        %v6040 = vunpack.c.h.b16 %v4568
        %v6041 = vunpack.c.l.b16 %v4569
        %v6042 = vunpack.c.h.b16 %v4569
        %v6043 = vunpack.c.l.b16 %v4570
        %v6044 = vunpack.c.h.b16 %v4570
        %v6045 = vunpack.c.l.b16 %v4571
        %v6046 = vunpack.c.h.b16 %v4571
        %v6047 = vunpack.c.l.b16 %v4572
        %v6048 = vunpack.c.h.b16 %v4572
        %v6049 = vunpack.c.l.b16 %v4573
        %v6050 = vunpack.c.h.b16 %v4573
        %v6051 = vunpack.c.l.b16 %v4574
        %v6052 = vunpack.c.h.b16 %v4574
        %v6053 = vunpack.c.l.b16 %v4575
        %v6054 = vunpack.c.h.b16 %v4575
        %v6055 = vunpack.c.l.b16 %v4576
        %v6056 = vunpack.c.h.b16 %v4576
        %v6057 = vunpack.c.l.b16 %v4577
        %v6058 = vunpack.c.h.b16 %v4577
        %v6059 = vunpack.c.l.b16 %v4578
        %v6060 = vunpack.c.h.b16 %v4578
        %v6061 = vunpack.c.l.b16 %v4579
        %v6062 = vunpack.c.h.b16 %v4579
        %v6063 = vunpack.c.l.b16 %v4580
        %v6064 = vunpack.c.h.b16 %v4580
        %v6065 = vunpack.c.l.b16 %v4581
        %v6066 = vunpack.c.h.b16 %v4581
        %v6067 = vunpack.c.l.b16 %v4582
        %v6068 = vunpack.c.h.b16 %v4582
        %v6069 = vunpack.c.l.b16 %v4583
        %v6070 = vunpack.c.h.b16 %v4583
        %v6071 = vunpack.c.l.b16 %v4584
        %v6072 = vunpack.c.h.b16 %v4584
        %v6073 = vunpack.c.l.b16 %v4585
        %v6074 = vunpack.c.h.b16 %v4585
        %v6075 = vunpack.c.l.b16 %v4586
        %v6076 = vunpack.c.h.b16 %v4586
        %v6077 = vunpack.c.l.b16 %v4587
        %v6078 = vunpack.c.h.b16 %v4587
        %v6079 = vunpack.c.l.b16 %v4588
        %v6080 = vunpack.c.h.b16 %v4588
        %v6081 = vunpack.c.l.b16 %v4589
        %v6082 = vunpack.c.h.b16 %v4589
        %v6083 = vunpack.c.l.b16 %v4590
        %v6084 = vunpack.c.h.b16 %v4590
        %v6085 = vunpack.c.l.b16 %v4591
        %v6086 = vunpack.c.h.b16 %v4591
        %v6087 = vunpack.c.l.b16 %v4592
        %v6088 = vunpack.c.h.b16 %v4592
        %v6089 = vunpack.c.l.b16 %v4593
        %v6090 = vunpack.c.h.b16 %v4593
        %v6091 = vunpack.c.l.b16 %v4594
        %v6092 = vunpack.c.h.b16 %v4594
        %v6093 = vunpack.c.l.b16 %v4595
        %v6094 = vunpack.c.h.b16 %v4595
        %v6095 = vunpack.c.l.b16 %v4596
        %v6096 = vunpack.c.h.b16 %v4596
        %v6097 = vunpack.c.l.b16 %v4597
        %v6098 = vunpack.c.h.b16 %v4597
        %v6099 = vunpack.c.l.b16 %v4598
        %v6100 = vunpack.c.h.b16 %v4598
        %v6101 = vunpack.c.l.b16 %v4599
        %v6102 = vunpack.c.h.b16 %v4599
        %v6103 = vunpack.c.l.b16 %v4600
        %v6104 = vunpack.c.h.b16 %v4600
        %v6105 = vunpack.c.l.b16 %v4601
        %v6106 = vunpack.c.h.b16 %v4601
        %v6107 = vunpack.c.l.b16 %v4602
        %v6108 = vunpack.c.h.b16 %v4602
        %v6109 = vunpack.c.l.b16 %v4603
        %v6110 = vunpack.c.h.b16 %v4603
        %v6111 = vunpack.c.l.b16 %v4604
        %v6112 = vunpack.c.h.b16 %v4604
        %v6113 = vunpack.c.l.b16 %v4605
        %v6114 = vunpack.c.h.b16 %v4605
        %v6115 = vunpack.c.l.b16 %v4606
        %v6116 = vunpack.c.h.b16 %v4606
        %v6117 = vunpack.c.l.b16 %v4607
        %v6118 = vunpack.c.h.b16 %v4607
        %v6119 = vunpack.c.l.b16 %v4608
        %v6120 = vunpack.c.h.b16 %v4608
        %v6121 = vunpack.c.l.b16 %v4609
        %v6122 = vunpack.c.h.b16 %v4609
        %v6123 = vunpack.c.l.b16 %v4610
        %v6124 = vunpack.c.h.b16 %v4610
        %v6125 = vunpack.c.l.b16 %v4611
        %v6126 = vunpack.c.h.b16 %v4611
        %v6127 = vunpack.c.l.b16 %v4612
        %v6128 = vunpack.c.h.b16 %v4612
        %v6129 = vunpack.c.l.b16 %v4613
        %v6130 = vunpack.c.h.b16 %v4613
        %v6131 = vunpack.c.l.b16 %v4614
        %v6132 = vunpack.c.h.b16 %v4614
        %v6133 = vunpack.c.l.b16 %v4615
        %v6134 = vunpack.c.h.b16 %v4615
        %v6135 = vunpack.c.l.b16 %v4616
        %v6136 = vunpack.c.h.b16 %v4616
        %v6137 = vunpack.c.l.b16 %v4617
        %v6138 = vunpack.c.h.b16 %v4617
        %v6139 = vunpack.c.l.b16 %v4618
        %v6140 = vunpack.c.h.b16 %v4618
        %v6141 = vunpack.c.l.b16 %v4619
        %v6142 = vunpack.c.h.b16 %v4619
        %v6143 = vunpack.c.l.b16 %v4620
        %v6144 = vunpack.c.h.b16 %v4620
        %v6145 = vunpack.c.l.b16 %v4621
        %v6146 = vunpack.c.h.b16 %v4621
        %v6147 = vunpack.c.l.b16 %v4622
        %v6148 = vunpack.c.h.b16 %v4622
        %v6149 = vunpack.c.l.b16 %v4623
        %v6150 = vunpack.c.h.b16 %v4623
        %v6151 = vunpack.c.l.b16 %v4624
        %v6152 = vunpack.c.h.b16 %v4624
        %v6153 = vunpack.c.l.b16 %v4625
        %v6154 = vunpack.c.h.b16 %v4625
        %v6155 = vunpack.c.l.b16 %v4626
        %v6156 = vunpack.c.h.b16 %v4626
        %v6157 = vunpack.c.l.b16 %v4627
        %v6158 = vunpack.c.h.b16 %v4627
        %v6159 = vunpack.c.l.b16 %v4628
        %v6160 = vunpack.c.h.b16 %v4628
        %v6161 = vunpack.c.l.b16 %v4629
        %v6162 = vunpack.c.h.b16 %v4629
        %v6163 = vunpack.c.l.b16 %v4630
        %v6164 = vunpack.c.h.b16 %v4630
        %v6165 = vunpack.c.l.b16 %v4631
        %v6166 = vunpack.c.h.b16 %v4631
        %v6167 = vunpack.c.l.b16 %v4632
        %v6168 = vunpack.c.h.b16 %v4632
        %v6169 = vunpack.c.l.b16 %v4633
        %v6170 = vunpack.c.h.b16 %v4633
        %v6171 = vunpack.c.l.b16 %v4634
        %v6172 = vunpack.c.h.b16 %v4634
        %v6173 = vunpack.c.l.b16 %v4635
        %v6174 = vunpack.c.h.b16 %v4635
        %v6175 = vunpack.c.l.b16 %v4636
        %v6176 = vunpack.c.h.b16 %v4636
        %v6177 = vunpack.c.l.b16 %v4637
        %v6178 = vunpack.c.h.b16 %v4637
        %v6179 = vunpack.c.l.b16 %v4638
        %v6180 = vunpack.c.h.b16 %v4638
        %v6181 = vunpack.c.l.b16 %v4639
        %v6182 = vunpack.c.h.b16 %v4639
        %v6183 = vunpack.c.l.b16 %v4640
        %v6184 = vunpack.c.h.b16 %v4640
        %v6185 = vunpack.c.l.b16 %v4641
        %v6186 = vunpack.c.h.b16 %v4641
        %v6187 = vunpack.c.l.b16 %v4642
        %v6188 = vunpack.c.h.b16 %v4642
        %v6189 = vunpack.c.l.b16 %v4643
        %v6190 = vunpack.c.h.b16 %v4643
        %v6191 = vunpack.c.l.b16 %v4644
        %v6192 = vunpack.c.h.b16 %v4644
        %v6193 = vunpack.c.l.b16 %v4645
        %v6194 = vunpack.c.h.b16 %v4645
        %v6195 = vunpack.c.l.b16 %v4646
        %v6196 = vunpack.c.h.b16 %v4646
        %v6197 = vunpack.c.l.b16 %v4647
        %v6198 = vunpack.c.h.b16 %v4647
        %v6199 = vunpack.c.l.b16 %v4648
        %v6200 = vunpack.c.h.b16 %v4648
        %v6201 = vunpack.c.l.b16 %v4649
        %v6202 = vunpack.c.h.b16 %v4649
        %v6203 = vunpack.c.l.b16 %v4650
        %v6204 = vunpack.c.h.b16 %v4650
        %v6205 = vunpack.c.l.b16 %v4651
        %v6206 = vunpack.c.h.b16 %v4651
        %v6207 = vunpack.c.l.b16 %v4652
        %v6208 = vunpack.c.h.b16 %v4652
        %v6209 = vunpack.c.l.b16 %v4653
        %v6210 = vunpack.c.h.b16 %v4653
        %v6211 = vunpack.c.l.b16 %v4654
        %v6212 = vunpack.c.h.b16 %v4654
        %v6213 = vunpack.c.l.b16 %v4655
        %v6214 = vunpack.c.h.b16 %v4655
        %v6215 = vunpack.c.l.b16 %v4656
        %v6216 = vunpack.c.h.b16 %v4656
        %v6217 = vunpack.c.l.b16 %v4657
        %v6218 = vunpack.c.h.b16 %v4657
        %v6219 = vunpack.c.l.b16 %v4658
        %v6220 = vunpack.c.h.b16 %v4658
        %v6221 = vunpack.c.l.b16 %v4659
        %v6222 = vunpack.c.h.b16 %v4659
        %v6223 = vunpack.c.l.b16 %v4660
        %v6224 = vunpack.c.h.b16 %v4660
        %v6225 = vunpack.c.l.b16 %v4661
        %v6226 = vunpack.c.h.b16 %v4661
        %v6227 = vunpack.c.l.b16 %v4662
        %v6228 = vunpack.c.h.b16 %v4662
        %v6229 = vunpack.c.l.b16 %v4663
        %v6230 = vunpack.c.h.b16 %v4663
        %v6231 = vunpack.c.l.b16 %v4664
        %v6232 = vunpack.c.h.b16 %v4664
        %v6233 = vunpack.c.l.b16 %v4665
        %v6234 = vunpack.c.h.b16 %v4665
        %v6235 = vunpack.c.l.b16 %v4666
        %v6236 = vunpack.c.h.b16 %v4666
        %v6237 = vunpack.c.l.b16 %v4667
        %v6238 = vunpack.c.h.b16 %v4667
        %v6239 = vunpack.c.l.b16 %v4668
        %v6240 = vunpack.c.h.b16 %v4668
        %v6241 = vunpack.c.l.b16 %v4669
        %v6242 = vunpack.c.h.b16 %v4669
        %v6243 = vunpack.c.l.b16 %v4670
        %v6244 = vunpack.c.h.b16 %v4670
        %v6245 = vunpack.c.l.b16 %v4671
        %v6246 = vunpack.c.h.b16 %v4671
        %v6247 = vunpack.c.l.b16 %v4672
        %v6248 = vunpack.c.h.b16 %v4672
        %v6249 = vunpack.c.l.b16 %v4673
        %v6250 = vunpack.c.h.b16 %v4673
        %v6251 = vunpack.c.l.b16 %v4674
        %v6252 = vunpack.c.h.b16 %v4674
        %v6253 = vunpack.c.l.b16 %v4675
        %v6254 = vunpack.c.h.b16 %v4675
        %v6255 = vunpack.c.l.b16 %v4676
        %v6256 = vunpack.c.h.b16 %v4676
        %v6257 = vunpack.c.l.b16 %v4677
        %v6258 = vunpack.c.h.b16 %v4677
        %v6259 = vunpack.c.l.b16 %v4678
        %v6260 = vunpack.c.h.b16 %v4678
        %v6261 = vunpack.c.l.b16 %v4679
        %v6262 = vunpack.c.h.b16 %v4679
        %v6263 = vunpack.c.l.b16 %v4680
        %v6264 = vunpack.c.h.b16 %v4680
        %v6265 = vunpack.c.l.b16 %v4681
        %v6266 = vunpack.c.h.b16 %v4681
        %v6267 = vunpack.c.l.b16 %v4682
        %v6268 = vunpack.c.h.b16 %v4682
        %v6269 = vunpack.c.l.b16 %v4683
        %v6270 = vunpack.c.h.b16 %v4683
        %v6271 = vunpack.c.l.b16 %v4684
        %v6272 = vunpack.c.h.b16 %v4684
        %v6273 = vunpack.c.l.b16 %v4685
        %v6274 = vunpack.c.h.b16 %v4685
        %v6275 = vunpack.c.l.b16 %v4686
        %v6276 = vunpack.c.h.b16 %v4686
        %v6277 = vunpack.c.l.b16 %v4687
        %v6278 = vunpack.c.h.b16 %v4687
        %v6279 = vunpack.c.l.b16 %v4688
        %v6280 = vunpack.c.h.b16 %v4688
        %v6281 = vunpack.c.l.b16 %v4689
        %v6282 = vunpack.c.h.b16 %v4689
        %v6283 = vunpack.c.l.b16 %v4690
        %v6284 = vunpack.c.h.b16 %v4690
        %v6285 = vunpack.c.l.b16 %v4691
        %v6286 = vunpack.c.h.b16 %v4691
        %v6287 = vunpack.c.l.b16 %v4692
        %v6288 = vunpack.c.h.b16 %v4692
        %v6289 = vunpack.c.l.b16 %v4693
        %v6290 = vunpack.c.h.b16 %v4693
        %v6291 = vunpack.c.l.b16 %v4694
        %v6292 = vunpack.c.h.b16 %v4694
        %v6293 = vunpack.c.l.b16 %v4695
        %v6294 = vunpack.c.h.b16 %v4695
        %v6295 = vunpack.c.l.b16 %v4696
        %v6296 = vunpack.c.h.b16 %v4696
        %v6297 = vunpack.c.l.b16 %v4697
        %v6298 = vunpack.c.h.b16 %v4697
        %v6299 = vunpack.c.l.b16 %v4698
        %v6300 = vunpack.c.h.b16 %v4698
        %v6301 = vunpack.c.l.b16 %v4699
        %v6302 = vunpack.c.h.b16 %v4699
        %v6303 = vunpack.c.l.b16 %v4700
        %v6304 = vunpack.c.h.b16 %v4700
        %v6305 = vunpack.c.l.b16 %v4701
        %v6306 = vunpack.c.h.b16 %v4701
        %v6307 = vunpack.c.l.b16 %v4702
        %v6308 = vunpack.c.h.b16 %v4702
        %v6309 = vunpack.c.l.b16 %v4703
        %v6310 = vunpack.c.h.b16 %v4703
        %v6311 = vunpack.c.l.b16 %v4704
        %v6312 = vunpack.c.h.b16 %v4704
        %v6313 = vunpack.c.l.b16 %v4705
        %v6314 = vunpack.c.h.b16 %v4705
        %v6315 = vunpack.c.l.b16 %v4706
        %v6316 = vunpack.c.h.b16 %v4706
        %v6317 = vunpack.c.l.b16 %v4707
        %v6318 = vunpack.c.h.b16 %v4707
        %v6319 = vunpack.c.l.b16 %v4708
        %v6320 = vunpack.c.h.b16 %v4708
        %v6321 = vunpack.c.l.b16 %v4709
        %v6322 = vunpack.c.h.b16 %v4709
        %v6323 = vunpack.c.l.b16 %v4710
        %v6324 = vunpack.c.h.b16 %v4710
        %v6325 = vunpack.c.l.b16 %v4711
        %v6326 = vunpack.c.h.b16 %v4711
        %v6327 = vunpack.c.l.b16 %v4712
        %v6328 = vunpack.c.h.b16 %v4712
        %v6329 = vunpack.c.l.b16 %v4713
        %v6330 = vunpack.c.h.b16 %v4713
        %v6331 = vunpack.c.l.b16 %v4714
        %v6332 = vunpack.c.h.b16 %v4714
        %v6333 = vunpack.c.l.b16 %v4715
        %v6334 = vunpack.c.h.b16 %v4715
        %v6335 = vunpack.c.l.b16 %v4716
        %v6336 = vunpack.c.h.b16 %v4716
        %v6337 = vunpack.c.l.b16 %v4717
        %v6338 = vunpack.c.h.b16 %v4717
        %v6339 = vunpack.c.l.b16 %v4718
        %v6340 = vunpack.c.h.b16 %v4718
        %v6341 = vunpack.c.l.b16 %v4719
        %v6342 = vunpack.c.h.b16 %v4719
        %v6343 = vunpack.c.l.b16 %v4720
        %v6344 = vunpack.c.h.b16 %v4720
        %v6345 = vunpack.c.l.b16 %v4721
        %v6346 = vunpack.c.h.b16 %v4721
        %v6347 = vunpack.c.l.b16 %v4722
        %v6348 = vunpack.c.h.b16 %v4722
        %v6349 = vunpack.c.l.b16 %v4723
        %v6350 = vunpack.c.h.b16 %v4723
        %v6351 = vunpack.c.l.b16 %v4724
        %v6352 = vunpack.c.h.b16 %v4724
        %v6353 = vunpack.c.l.b16 %v4725
        %v6354 = vunpack.c.h.b16 %v4725
        %v6355 = vunpack.c.l.b16 %v4726
        %v6356 = vunpack.c.h.b16 %v4726
        %v6357 = vunpack.c.l.b16 %v4727
        %v6358 = vunpack.c.h.b16 %v4727
        %v6359 = vunpack.c.l.b16 %v4728
        %v6360 = vunpack.c.h.b16 %v4728
        %v6361 = vunpack.c.l.b16 %v4729
        %v6362 = vunpack.c.h.b16 %v4729
        %v6363 = vunpack.c.l.b16 %v4730
        %v6364 = vunpack.c.h.b16 %v4730
        %v6365 = vunpack.c.l.b16 %v4731
        %v6366 = vunpack.c.h.b16 %v4731
        %v6367 = vunpack.c.l.b16 %v4732
        %v6368 = vunpack.c.h.b16 %v4732
        %v6369 = vunpack.c.l.b16 %v4733
        %v6370 = vunpack.c.h.b16 %v4733
        %v6371 = vunpack.c.l.b16 %v4734
        %v6372 = vunpack.c.h.b16 %v4734
        %v6373 = vunpack.c.l.b16 %v4735
        %v6374 = vunpack.c.h.b16 %v4735
        %v6375 = vunpack.c.l.b16 %v4736
        %v6376 = vunpack.c.h.b16 %v4736
        %v6377 = vunpack.c.l.b16 %v4737
        %v6378 = vunpack.c.h.b16 %v4737
        %v6379 = vunpack.c.l.b16 %v4738
        %v6380 = vunpack.c.h.b16 %v4738
        %v6381 = vunpack.c.l.b16 %v4739
        %v6382 = vunpack.c.h.b16 %v4739
        %v6383 = vunpack.c.l.b16 %v4740
        %v6384 = vunpack.c.h.b16 %v4740
        %v6385 = vunpack.c.l.b16 %v4741
        %v6386 = vunpack.c.h.b16 %v4741
        %v6387 = vunpack.c.l.b16 %v4742
        %v6388 = vunpack.c.h.b16 %v4742
        %v6389 = vunpack.c.l.b16 %v4743
        %v6390 = vunpack.c.h.b16 %v4743
        %v6391 = vunpack.c.l.b16 %v4744
        %v6392 = vunpack.c.h.b16 %v4744
        %v6393 = vunpack.c.l.b16 %v4745
        %v6394 = vunpack.c.h.b16 %v4745
        %v6395 = vunpack.c.l.b16 %v4746
        %v6396 = vunpack.c.h.b16 %v4746
        %v6397 = vunpack.c.l.b16 %v4747
        %v6398 = vunpack.c.h.b16 %v4747
        %v6399 = vunpack.c.l.b16 %v4748
        %v6400 = vunpack.c.h.b16 %v4748
        %v6401 = vunpack.c.l.b16 %v4749
        %v6402 = vunpack.c.h.b16 %v4749
        %v6403 = vunpack.c.l.b16 %v4750
        %v6404 = vunpack.c.h.b16 %v4750
        %v6405 = vunpack.c.l.b16 %v4751
        %v6406 = vunpack.c.h.b16 %v4751
        %v6407 = vunpack.c.l.b16 %v4752
        %v6408 = vunpack.c.h.b16 %v4752
        %v6409 = vunpack.c.l.b16 %v4753
        %v6410 = vunpack.c.h.b16 %v4753
        %v6411 = vunpack.c.l.b16 %v4754
        %v6412 = vunpack.c.h.b16 %v4754
        %v6413 = vunpack.c.l.b16 %v4755
        %v6414 = vunpack.c.h.b16 %v4755
        %v6415 = vunpack.c.l.b16 %v4756
        %v6416 = vunpack.c.h.b16 %v4756
        %v6417 = vunpack.c.l.b16 %v4757
        %v6418 = vunpack.c.h.b16 %v4757
        %v6419 = vunpack.c.l.b16 %v4758
        %v6420 = vunpack.c.h.b16 %v4758
        %v6421 = vunpack.c.l.b16 %v4759
        %v6422 = vunpack.c.h.b16 %v4759
        %v6423 = vunpack.c.l.b16 %v4760
        %v6424 = vunpack.c.h.b16 %v4760
        %v6425 = vunpack.c.l.b16 %v4761
        %v6426 = vunpack.c.h.b16 %v4761
        %v6427 = vunpack.c.l.b16 %v4762
        %v6428 = vunpack.c.h.b16 %v4762
        %v6429 = vunpack.c.l.b16 %v4763
        %v6430 = vunpack.c.h.b16 %v4763
        %v6431 = vunpack.c.l.b16 %v4764
        %v6432 = vunpack.c.h.b16 %v4764
        %v6433 = vunpack.c.l.b16 %v4765
        %v6434 = vunpack.c.h.b16 %v4765
        %v6435 = vunpack.c.l.b16 %v4766
        %v6436 = vunpack.c.h.b16 %v4766
        %v6437 = vunpack.c.l.b16 %v4767
        %v6438 = vunpack.c.h.b16 %v4767
        %v6439 = vunpack.c.l.b16 %v4768
        %v6440 = vunpack.c.h.b16 %v4768
        %v6441 = vunpack.c.l.b16 %v4769
        %v6442 = vunpack.c.h.b16 %v4769
        %v6443 = vunpack.c.l.b16 %v4770
        %v6444 = vunpack.c.h.b16 %v4770
        %v6445 = vunpack.c.l.b16 %v4771
        %v6446 = vunpack.c.h.b16 %v4771
        %v6447 = vunpack.c.l.b16 %v4772
        %v6448 = vunpack.c.h.b16 %v4772
        %v6449 = vunpack.c.l.b16 %v4773
        %v6450 = vunpack.c.h.b16 %v4773
        %v6451 = vunpack.c.l.b16 %v4774
        %v6452 = vunpack.c.h.b16 %v4774
        %v6453 = vunpack.c.l.b16 %v4775
        %v6454 = vunpack.c.h.b16 %v4775
        %v6455 = vunpack.c.l.b16 %v4776
        %v6456 = vunpack.c.h.b16 %v4776
        %v6457 = vunpack.c.l.b16 %v4777
        %v6458 = vunpack.c.h.b16 %v4777
        %v6459 = vunpack.c.l.b16 %v4778
        %v6460 = vunpack.c.h.b16 %v4778
        %v6461 = vunpack.c.l.b16 %v4779
        %v6462 = vunpack.c.h.b16 %v4779
        %v6463 = vunpack.c.l.b16 %v4780
        %v6464 = vunpack.c.h.b16 %v4780
        %v6465 = vunpack.c.l.b16 %v4781
        %v6466 = vunpack.c.h.b16 %v4781
        %v6467 = vunpack.c.l.b16 %v4782
        %v6468 = vunpack.c.h.b16 %v4782
        %v6469 = vunpack.c.l.b16 %v4783
        %v6470 = vunpack.c.h.b16 %v4783
        %v6471 = vunpack.c.l.b16 %v4784
        %v6472 = vunpack.c.h.b16 %v4784
        %v6473 = vunpack.c.l.b16 %v4785
        %v6474 = vunpack.c.h.b16 %v4785
        %v6475 = vunpack.c.l.b16 %v4786
        %v6476 = vunpack.c.h.b16 %v4786
        %v6477 = vunpack.c.l.b16 %v4787
        %v6478 = vunpack.c.h.b16 %v4787
        %v6479 = vunpack.c.l.b16 %v4788
        %v6480 = vunpack.c.h.b16 %v4788
        %v6481 = vunpack.c.l.b16 %v4789
        %v6482 = vunpack.c.h.b16 %v4789
        %v6483 = vunpack.c.l.b16 %v4790
        %v6484 = vunpack.c.h.b16 %v4790
        %v6485 = vunpack.c.l.b16 %v4791
        %v6486 = vunpack.c.h.b16 %v4791
        %v6487 = vunpack.c.l.b16 %v4792
        %v6488 = vunpack.c.h.b16 %v4792
        %v6489 = vunpack.c.l.b16 %v4793
        %v6490 = vunpack.c.h.b16 %v4793
        %v6491 = vunpack.c.l.b16 %v4794
        %v6492 = vunpack.c.h.b16 %v4794
        %v6493 = vunpack.c.l.b16 %v4795
        %v6494 = vunpack.c.h.b16 %v4795
        %v6495 = vunpack.c.l.b16 %v4796
        %v6496 = vunpack.c.h.b16 %v4796
        %v6497 = vunpack.c.l.b16 %v4797
        %v6498 = vunpack.c.h.b16 %v4797
        %v6499 = vunpack.c.l.b16 %v4798
        %v6500 = vunpack.c.h.b16 %v4798
        %v6501 = vunpack.c.l.b16 %v4799
        %v6502 = vunpack.c.h.b16 %v4799
        %v6503 = vunpack.c.l.b16 %v4800
        %v6504 = vunpack.c.h.b16 %v4800
        %v6505 = vunpack.c.l.b16 %v4801
        %v6506 = vunpack.c.h.b16 %v4801
        %v6507 = vunpack.c.l.b16 %v4802
        %v6508 = vunpack.c.h.b16 %v4802
        %v6509 = vunpack.c.l.b16 %v4803
        %v6510 = vunpack.c.h.b16 %v4803
        %v6511 = vunpack.c.l.b16 %v4804
        %v6512 = vunpack.c.h.b16 %v4804
        %v6513 = vunpack.c.l.b16 %v4805
        %v6514 = vunpack.c.h.b16 %v4805
        %v6515 = vunpack.c.l.b16 %v4806
        %v6516 = vunpack.c.h.b16 %v4806
        %v6517 = vunpack.c.l.b16 %v4807
        %v6518 = vunpack.c.h.b16 %v4807
        %v6519 = vunpack.c.l.b16 %v4808
        %v6520 = vunpack.c.h.b16 %v4808
        %v6521 = vunpack.c.l.b16 %v4809
        %v6522 = vunpack.c.h.b16 %v4809
        %v6523 = vunpack.c.l.b16 %v4810
        %v6524 = vunpack.c.h.b16 %v4810
        %v6525 = vunpack.c.l.b16 %v4811
        %v6526 = vunpack.c.h.b16 %v4811
        %v6527 = vunpack.c.l.b16 %v4812
        %v6528 = vunpack.c.h.b16 %v4812
        %v6529 = vunpack.c.l.b16 %v4813
        %v6530 = vunpack.c.h.b16 %v4813
        %v6531 = vunpack.c.l.b16 %v4814
        %v6532 = vunpack.c.h.b16 %v4814
        %v6533 = vunpack.c.l.b16 %v4815
        %v6534 = vunpack.c.h.b16 %v4815
        %v6535 = vunpack.c.l.b16 %v4816
        %v6536 = vunpack.c.h.b16 %v4816
        %v6537 = vunpack.c.l.b16 %v4817
        %v6538 = vunpack.c.h.b16 %v4817
        %v6539 = vunpack.c.l.b16 %v4818
        %v6540 = vunpack.c.h.b16 %v4818
        %v6541 = vunpack.c.l.b16 %v4819
        %v6542 = vunpack.c.h.b16 %v4819
        %v6543 = vunpack.c.l.b16 %v4820
        %v6544 = vunpack.c.h.b16 %v4820
        %v6545 = vunpack.c.l.b16 %v4821
        %v6546 = vunpack.c.h.b16 %v4821
        %v6547 = vunpack.c.l.b16 %v4822
        %v6548 = vunpack.c.h.b16 %v4822
        %v6549 = vunpack.c.l.b16 %v4823
        %v6550 = vunpack.c.h.b16 %v4823
        %v6551 = vunpack.c.l.b16 %v4824
        %v6552 = vunpack.c.h.b16 %v4824
        %v6553 = vunpack.c.l.b16 %v4825
        %v6554 = vunpack.c.h.b16 %v4825
        %v6555 = vunpack.c.l.b16 %v4826
        %v6556 = vunpack.c.h.b16 %v4826
        %v6557 = vunpack.c.l.b16 %v4827
        %v6558 = vunpack.c.h.b16 %v4827
        %v6559 = vunpack.c.l.b16 %v4828
        %v6560 = vunpack.c.h.b16 %v4828
        %v6561 = vunpack.c.l.b16 %v4829
        %v6562 = vunpack.c.h.b16 %v4829
        %v6563 = vunpack.c.l.b16 %v4830
        %v6564 = vunpack.c.h.b16 %v4830
        %v6565 = vpack.c.b16 %v5425, %v5413
        %v6566 = vpack.c.b16 %v5426, %v5414
        %v6567 = vpack.c.b16 %v5427, %v5415
        %v6568 = vpack.c.b16 %v5428, %v5416
        %v6569 = vpack.c.b16 %v5429, %v5417
        %v6570 = vpack.c.b16 %v5430, %v5418
        %v6571 = vpack.c.b16 %v5431, %v5419
        %v6572 = vpack.c.b16 %v5432, %v5420
        %v6573 = vpack.c.b16 %v5433, %v5421
        %v6574 = vpack.c.b16 %v5434, %v5422
        %v6575 = vpack.c.b16 %v5435, %v5423
        %v6576 = vpack.c.b16 %v5436, %v5424
        %v6577 = vpack.c.b16 %v5449, %v5437
        %v6578 = vpack.c.b16 %v5450, %v5438
        %v6579 = vpack.c.b16 %v5451, %v5439
        %v6580 = vpack.c.b16 %v5452, %v5440
        %v6581 = vpack.c.b16 %v5453, %v5441
        %v6582 = vpack.c.b16 %v5454, %v5442
        %v6583 = vpack.c.b16 %v5455, %v5443
        %v6584 = vpack.c.b16 %v5456, %v5444
        %v6585 = vpack.c.b16 %v5457, %v5445
        %v6586 = vpack.c.b16 %v5458, %v5446
        %v6587 = vpack.c.b16 %v5459, %v5447
        %v6588 = vpack.c.b16 %v5460, %v5448
        %v6589 = vpack.c.b16 %v5473, %v5461
        %v6590 = vpack.c.b16 %v5474, %v5462
        %v6591 = vpack.c.b16 %v5475, %v5463
        %v6592 = vpack.c.b16 %v5476, %v5464
        %v6593 = vpack.c.b16 %v5477, %v5465
        %v6594 = vpack.c.b16 %v5478, %v5466
        %v6595 = vpack.c.b16 %v5479, %v5467
        %v6596 = vpack.c.b16 %v5480, %v5468
        %v6597 = vpack.c.b16 %v5481, %v5469
        %v6598 = vpack.c.b16 %v5482, %v5470
        %v6599 = vpack.c.b16 %v5483, %v5471
        %v6600 = vpack.c.b16 %v5484, %v5472
        %v6601 = vpack.c.b16 %v5497, %v5485
        %v6602 = vpack.c.b16 %v5498, %v5486
        %v6603 = vpack.c.b16 %v5499, %v5487
        %v6604 = vpack.c.b16 %v5500, %v5488
        %v6605 = vpack.c.b16 %v5501, %v5489
        %v6606 = vpack.c.b16 %v5502, %v5490
        %v6607 = vpack.c.b16 %v5503, %v5491
        %v6608 = vpack.c.b16 %v5504, %v5492
        %v6609 = vpack.c.b16 %v5505, %v5493
        %v6610 = vpack.c.b16 %v5506, %v5494
        %v6611 = vpack.c.b16 %v5507, %v5495
        %v6612 = vpack.c.b16 %v5508, %v5496
        %v6613 = vpack.c.b16 %v5521, %v5509
        %v6614 = vpack.c.b16 %v5522, %v5510
        %v6615 = vpack.c.b16 %v5523, %v5511
        %v6616 = vpack.c.b16 %v5524, %v5512
        %v6617 = vpack.c.b16 %v5525, %v5513
        %v6618 = vpack.c.b16 %v5526, %v5514
        %v6619 = vpack.c.b16 %v5527, %v5515
        %v6620 = vpack.c.b16 %v5528, %v5516
        %v6621 = vpack.c.b16 %v5529, %v5517
        %v6622 = vpack.c.b16 %v5530, %v5518
        %v6623 = vpack.c.b16 %v5531, %v5519
        %v6624 = vpack.c.b16 %v5532, %v5520
        %v6625 = vpack.c.b16 %v5545, %v5533
        %v6626 = vpack.c.b16 %v5546, %v5534
        %v6627 = vpack.c.b16 %v5547, %v5535
        %v6628 = vpack.c.b16 %v5548, %v5536
        %v6629 = vpack.c.b16 %v5549, %v5537
        %v6630 = vpack.c.b16 %v5550, %v5538
        %v6631 = vpack.c.b16 %v5551, %v5539
        %v6632 = vpack.c.b16 %v5552, %v5540
        %v6633 = vpack.c.b16 %v5553, %v5541
        %v6634 = vpack.c.b16 %v5554, %v5542
        %v6635 = vpack.c.b16 %v5555, %v5543
        %v6636 = vpack.c.b16 %v5556, %v5544
        %v6637 = vpack.c.b16 %v5569, %v5557
        %v6638 = vpack.c.b16 %v5570, %v5558
        %v6639 = vpack.c.b16 %v5571, %v5559
        %v6640 = vpack.c.b16 %v5572, %v5560
        %v6641 = vpack.c.b16 %v5573, %v5561
        %v6642 = vpack.c.b16 %v5574, %v5562
        %v6643 = vpack.c.b16 %v5575, %v5563
        %v6644 = vpack.c.b16 %v5576, %v5564
        %v6645 = vpack.c.b16 %v5577, %v5565
        %v6646 = vpack.c.b16 %v5578, %v5566
        %v6647 = vpack.c.b16 %v5579, %v5567
        %v6648 = vpack.c.b16 %v5580, %v5568
        %v6649 = vpack.c.b16 %v5593, %v5581
        %v6650 = vpack.c.b16 %v5594, %v5582
        %v6651 = vpack.c.b16 %v5595, %v5583
        %v6652 = vpack.c.b16 %v5596, %v5584
        %v6653 = vpack.c.b16 %v5597, %v5585
        %v6654 = vpack.c.b16 %v5598, %v5586
        %v6655 = vpack.c.b16 %v5599, %v5587
        %v6656 = vpack.c.b16 %v5600, %v5588
        %v6657 = vpack.c.b16 %v5601, %v5589
        %v6658 = vpack.c.b16 %v5602, %v5590
        %v6659 = vpack.c.b16 %v5603, %v5591
        %v6660 = vpack.c.b16 %v5604, %v5592
        %v6661 = vpack.c.b16 %v5617, %v5605
        %v6662 = vpack.c.b16 %v5618, %v5606
        %v6663 = vpack.c.b16 %v5619, %v5607
        %v6664 = vpack.c.b16 %v5620, %v5608
        %v6665 = vpack.c.b16 %v5621, %v5609
        %v6666 = vpack.c.b16 %v5622, %v5610
        %v6667 = vpack.c.b16 %v5623, %v5611
        %v6668 = vpack.c.b16 %v5624, %v5612
        %v6669 = vpack.c.b16 %v5625, %v5613
        %v6670 = vpack.c.b16 %v5626, %v5614
        %v6671 = vpack.c.b16 %v5627, %v5615
        %v6672 = vpack.c.b16 %v5628, %v5616
        %v6673 = vpack.c.b16 %v5641, %v5629
        %v6674 = vpack.c.b16 %v5642, %v5630
        %v6675 = vpack.c.b16 %v5643, %v5631
        %v6676 = vpack.c.b16 %v5644, %v5632
        %v6677 = vpack.c.b16 %v5645, %v5633
        %v6678 = vpack.c.b16 %v5646, %v5634
        %v6679 = vpack.c.b16 %v5647, %v5635
        %v6680 = vpack.c.b16 %v5648, %v5636
        %v6681 = vpack.c.b16 %v5649, %v5637
        %v6682 = vpack.c.b16 %v5650, %v5638
        %v6683 = vpack.c.b16 %v5651, %v5639
        %v6684 = vpack.c.b16 %v5652, %v5640
        %v6685 = vpack.c.b16 %v5665, %v5653
        %v6686 = vpack.c.b16 %v5666, %v5654
        %v6687 = vpack.c.b16 %v5667, %v5655
        %v6688 = vpack.c.b16 %v5668, %v5656
        %v6689 = vpack.c.b16 %v5669, %v5657
        %v6690 = vpack.c.b16 %v5670, %v5658
        %v6691 = vpack.c.b16 %v5671, %v5659
        %v6692 = vpack.c.b16 %v5672, %v5660
        %v6693 = vpack.c.b16 %v5673, %v5661
        %v6694 = vpack.c.b16 %v5674, %v5662
        %v6695 = vpack.c.b16 %v5675, %v5663
        %v6696 = vpack.c.b16 %v5676, %v5664
        %v6697 = vpack.c.b16 %v5689, %v5677
        %v6698 = vpack.c.b16 %v5690, %v5678
        %v6699 = vpack.c.b16 %v5691, %v5679
        %v6700 = vpack.c.b16 %v5692, %v5680
        %v6701 = vpack.c.b16 %v5693, %v5681
        %v6702 = vpack.c.b16 %v5694, %v5682
        %v6703 = vpack.c.b16 %v5695, %v5683
        %v6704 = vpack.c.b16 %v5696, %v5684
        %v6705 = vpack.c.b16 %v5697, %v5685
        %v6706 = vpack.c.b16 %v5698, %v5686
        %v6707 = vpack.c.b16 %v5699, %v5687
        %v6708 = vpack.c.b16 %v5700, %v5688
        %v6709 = vpack.c.b16 %v5713, %v5701
        %v6710 = vpack.c.b16 %v5714, %v5702
        %v6711 = vpack.c.b16 %v5715, %v5703
        %v6712 = vpack.c.b16 %v5716, %v5704
        %v6713 = vpack.c.b16 %v5717, %v5705
        %v6714 = vpack.c.b16 %v5718, %v5706
        %v6715 = vpack.c.b16 %v5719, %v5707
        %v6716 = vpack.c.b16 %v5720, %v5708
        %v6717 = vpack.c.b16 %v5721, %v5709
        %v6718 = vpack.c.b16 %v5722, %v5710
        %v6719 = vpack.c.b16 %v5723, %v5711
        %v6720 = vpack.c.b16 %v5724, %v5712
        %v6721 = vpack.c.b16 %v5737, %v5725
        %v6722 = vpack.c.b16 %v5738, %v5726
        %v6723 = vpack.c.b16 %v5739, %v5727
        %v6724 = vpack.c.b16 %v5740, %v5728
        %v6725 = vpack.c.b16 %v5741, %v5729
        %v6726 = vpack.c.b16 %v5742, %v5730
        %v6727 = vpack.c.b16 %v5743, %v5731
        %v6728 = vpack.c.b16 %v5744, %v5732
        %v6729 = vpack.c.b16 %v5745, %v5733
        %v6730 = vpack.c.b16 %v5746, %v5734
        %v6731 = vpack.c.b16 %v5747, %v5735
        %v6732 = vpack.c.b16 %v5748, %v5736
        %v6733 = vpack.c.b16 %v5761, %v5749
        %v6734 = vpack.c.b16 %v5762, %v5750
        %v6735 = vpack.c.b16 %v5763, %v5751
        %v6736 = vpack.c.b16 %v5764, %v5752
        %v6737 = vpack.c.b16 %v5765, %v5753
        %v6738 = vpack.c.b16 %v5766, %v5754
        %v6739 = vpack.c.b16 %v5767, %v5755
        %v6740 = vpack.c.b16 %v5768, %v5756
        %v6741 = vpack.c.b16 %v5769, %v5757
        %v6742 = vpack.c.b16 %v5770, %v5758
        %v6743 = vpack.c.b16 %v5771, %v5759
        %v6744 = vpack.c.b16 %v5772, %v5760
        %v6745 = vpack.c.b16 %v5785, %v5773
        %v6746 = vpack.c.b16 %v5786, %v5774
        %v6747 = vpack.c.b16 %v5787, %v5775
        %v6748 = vpack.c.b16 %v5788, %v5776
        %v6749 = vpack.c.b16 %v5789, %v5777
        %v6750 = vpack.c.b16 %v5790, %v5778
        %v6751 = vpack.c.b16 %v5791, %v5779
        %v6752 = vpack.c.b16 %v5792, %v5780
        %v6753 = vpack.c.b16 %v5793, %v5781
        %v6754 = vpack.c.b16 %v5794, %v5782
        %v6755 = vpack.c.b16 %v5795, %v5783
        %v6756 = vpack.c.b16 %v5796, %v5784
        %v6757 = vpack.c.b16 %v5809, %v5797
        %v6758 = vpack.c.b16 %v5810, %v5798
        %v6759 = vpack.c.b16 %v5811, %v5799
        %v6760 = vpack.c.b16 %v5812, %v5800
        %v6761 = vpack.c.b16 %v5813, %v5801
        %v6762 = vpack.c.b16 %v5814, %v5802
        %v6763 = vpack.c.b16 %v5815, %v5803
        %v6764 = vpack.c.b16 %v5816, %v5804
        %v6765 = vpack.c.b16 %v5817, %v5805
        %v6766 = vpack.c.b16 %v5818, %v5806
        %v6767 = vpack.c.b16 %v5819, %v5807
        %v6768 = vpack.c.b16 %v5820, %v5808
        %v6769 = vpack.c.b16 %v5833, %v5821
        %v6770 = vpack.c.b16 %v5834, %v5822
        %v6771 = vpack.c.b16 %v5835, %v5823
        %v6772 = vpack.c.b16 %v5836, %v5824
        %v6773 = vpack.c.b16 %v5837, %v5825
        %v6774 = vpack.c.b16 %v5838, %v5826
        %v6775 = vpack.c.b16 %v5839, %v5827
        %v6776 = vpack.c.b16 %v5840, %v5828
        %v6777 = vpack.c.b16 %v5841, %v5829
        %v6778 = vpack.c.b16 %v5842, %v5830
        %v6779 = vpack.c.b16 %v5843, %v5831
        %v6780 = vpack.c.b16 %v5844, %v5832
        %v6781 = vpack.c.b16 %v5857, %v5845
        %v6782 = vpack.c.b16 %v5858, %v5846
        %v6783 = vpack.c.b16 %v5859, %v5847
        %v6784 = vpack.c.b16 %v5860, %v5848
        %v6785 = vpack.c.b16 %v5861, %v5849
        %v6786 = vpack.c.b16 %v5862, %v5850
        %v6787 = vpack.c.b16 %v5863, %v5851
        %v6788 = vpack.c.b16 %v5864, %v5852
        %v6789 = vpack.c.b16 %v5865, %v5853
        %v6790 = vpack.c.b16 %v5866, %v5854
        %v6791 = vpack.c.b16 %v5867, %v5855
        %v6792 = vpack.c.b16 %v5868, %v5856
        %v6793 = vpack.c.b16 %v5881, %v5869
        %v6794 = vpack.c.b16 %v5882, %v5870
        %v6795 = vpack.c.b16 %v5883, %v5871
        %v6796 = vpack.c.b16 %v5884, %v5872
        %v6797 = vpack.c.b16 %v5885, %v5873
        %v6798 = vpack.c.b16 %v5886, %v5874
        %v6799 = vpack.c.b16 %v5887, %v5875
        %v6800 = vpack.c.b16 %v5888, %v5876
        %v6801 = vpack.c.b16 %v5889, %v5877
        %v6802 = vpack.c.b16 %v5890, %v5878
        %v6803 = vpack.c.b16 %v5891, %v5879
        %v6804 = vpack.c.b16 %v5892, %v5880
        %v6805 = vpack.c.b16 %v5905, %v5893
        %v6806 = vpack.c.b16 %v5906, %v5894
        %v6807 = vpack.c.b16 %v5907, %v5895
        %v6808 = vpack.c.b16 %v5908, %v5896
        %v6809 = vpack.c.b16 %v5909, %v5897
        %v6810 = vpack.c.b16 %v5910, %v5898
        %v6811 = vpack.c.b16 %v5911, %v5899
        %v6812 = vpack.c.b16 %v5912, %v5900
        %v6813 = vpack.c.b16 %v5913, %v5901
        %v6814 = vpack.c.b16 %v5914, %v5902
        %v6815 = vpack.c.b16 %v5915, %v5903
        %v6816 = vpack.c.b16 %v5916, %v5904
        %v6817 = vpack.c.b16 %v5929, %v5917
        %v6818 = vpack.c.b16 %v5930, %v5918
        %v6819 = vpack.c.b16 %v5931, %v5919
        %v6820 = vpack.c.b16 %v5932, %v5920
        %v6821 = vpack.c.b16 %v5933, %v5921
        %v6822 = vpack.c.b16 %v5934, %v5922
        %v6823 = vpack.c.b16 %v5935, %v5923
        %v6824 = vpack.c.b16 %v5936, %v5924
        %v6825 = vpack.c.b16 %v5937, %v5925
        %v6826 = vpack.c.b16 %v5938, %v5926
        %v6827 = vpack.c.b16 %v5939, %v5927
        %v6828 = vpack.c.b16 %v5940, %v5928
        %v6829 = vpack.c.b16 %v5953, %v5941
        %v6830 = vpack.c.b16 %v5954, %v5942
        %v6831 = vpack.c.b16 %v5955, %v5943
        %v6832 = vpack.c.b16 %v5956, %v5944
        %v6833 = vpack.c.b16 %v5957, %v5945
        %v6834 = vpack.c.b16 %v5958, %v5946
        %v6835 = vpack.c.b16 %v5959, %v5947
        %v6836 = vpack.c.b16 %v5960, %v5948
        %v6837 = vpack.c.b16 %v5961, %v5949
        %v6838 = vpack.c.b16 %v5962, %v5950
        %v6839 = vpack.c.b16 %v5963, %v5951
        %v6840 = vpack.c.b16 %v5964, %v5952
        %v6841 = vpack.c.b16 %v5977, %v5965
        %v6842 = vpack.c.b16 %v5978, %v5966
        %v6843 = vpack.c.b16 %v5979, %v5967
        %v6844 = vpack.c.b16 %v5980, %v5968
        %v6845 = vpack.c.b16 %v5981, %v5969
        %v6846 = vpack.c.b16 %v5982, %v5970
        %v6847 = vpack.c.b16 %v5983, %v5971
        %v6848 = vpack.c.b16 %v5984, %v5972
        %v6849 = vpack.c.b16 %v5985, %v5973
        %v6850 = vpack.c.b16 %v5986, %v5974
        %v6851 = vpack.c.b16 %v5987, %v5975
        %v6852 = vpack.c.b16 %v5988, %v5976
        %v6853 = vpack.c.b16 %v6001, %v5989
        %v6854 = vpack.c.b16 %v6002, %v5990
        %v6855 = vpack.c.b16 %v6003, %v5991
        %v6856 = vpack.c.b16 %v6004, %v5992
        %v6857 = vpack.c.b16 %v6005, %v5993
        %v6858 = vpack.c.b16 %v6006, %v5994
        %v6859 = vpack.c.b16 %v6007, %v5995
        %v6860 = vpack.c.b16 %v6008, %v5996
        %v6861 = vpack.c.b16 %v6009, %v5997
        %v6862 = vpack.c.b16 %v6010, %v5998
        %v6863 = vpack.c.b16 %v6011, %v5999
        %v6864 = vpack.c.b16 %v6012, %v6000
        %v6865 = vpack.c.b16 %v6025, %v6013
        %v6866 = vpack.c.b16 %v6026, %v6014
        %v6867 = vpack.c.b16 %v6027, %v6015
        %v6868 = vpack.c.b16 %v6028, %v6016
        %v6869 = vpack.c.b16 %v6029, %v6017
        %v6870 = vpack.c.b16 %v6030, %v6018
        %v6871 = vpack.c.b16 %v6031, %v6019
        %v6872 = vpack.c.b16 %v6032, %v6020
        %v6873 = vpack.c.b16 %v6033, %v6021
        %v6874 = vpack.c.b16 %v6034, %v6022
        %v6875 = vpack.c.b16 %v6035, %v6023
        %v6876 = vpack.c.b16 %v6036, %v6024
        %v6877 = vpack.c.b16 %v6049, %v6037
        %v6878 = vpack.c.b16 %v6050, %v6038
        %v6879 = vpack.c.b16 %v6051, %v6039
        %v6880 = vpack.c.b16 %v6052, %v6040
        %v6881 = vpack.c.b16 %v6053, %v6041
        %v6882 = vpack.c.b16 %v6054, %v6042
        %v6883 = vpack.c.b16 %v6055, %v6043
        %v6884 = vpack.c.b16 %v6056, %v6044
        %v6885 = vpack.c.b16 %v6057, %v6045
        %v6886 = vpack.c.b16 %v6058, %v6046
        %v6887 = vpack.c.b16 %v6059, %v6047
        %v6888 = vpack.c.b16 %v6060, %v6048
        %v6889 = vpack.c.b16 %v6073, %v6061
        %v6890 = vpack.c.b16 %v6074, %v6062
        %v6891 = vpack.c.b16 %v6075, %v6063
        %v6892 = vpack.c.b16 %v6076, %v6064
        %v6893 = vpack.c.b16 %v6077, %v6065
        %v6894 = vpack.c.b16 %v6078, %v6066
        %v6895 = vpack.c.b16 %v6079, %v6067
        %v6896 = vpack.c.b16 %v6080, %v6068
        %v6897 = vpack.c.b16 %v6081, %v6069
        %v6898 = vpack.c.b16 %v6082, %v6070
        %v6899 = vpack.c.b16 %v6083, %v6071
        %v6900 = vpack.c.b16 %v6084, %v6072
        %v6901 = vpack.c.b16 %v6097, %v6085
        %v6902 = vpack.c.b16 %v6098, %v6086
        %v6903 = vpack.c.b16 %v6099, %v6087
        %v6904 = vpack.c.b16 %v6100, %v6088
        %v6905 = vpack.c.b16 %v6101, %v6089
        %v6906 = vpack.c.b16 %v6102, %v6090
        %v6907 = vpack.c.b16 %v6103, %v6091
        %v6908 = vpack.c.b16 %v6104, %v6092
        %v6909 = vpack.c.b16 %v6105, %v6093
        %v6910 = vpack.c.b16 %v6106, %v6094
        %v6911 = vpack.c.b16 %v6107, %v6095
        %v6912 = vpack.c.b16 %v6108, %v6096
        %v6913 = vpack.c.b16 %v6121, %v6109
        %v6914 = vpack.c.b16 %v6122, %v6110
        %v6915 = vpack.c.b16 %v6123, %v6111
        %v6916 = vpack.c.b16 %v6124, %v6112
        %v6917 = vpack.c.b16 %v6125, %v6113
        %v6918 = vpack.c.b16 %v6126, %v6114
        %v6919 = vpack.c.b16 %v6127, %v6115
        %v6920 = vpack.c.b16 %v6128, %v6116
        %v6921 = vpack.c.b16 %v6129, %v6117
        %v6922 = vpack.c.b16 %v6130, %v6118
        %v6923 = vpack.c.b16 %v6131, %v6119
        %v6924 = vpack.c.b16 %v6132, %v6120
        %v6925 = vpack.c.b16 %v6145, %v6133
        %v6926 = vpack.c.b16 %v6146, %v6134
        %v6927 = vpack.c.b16 %v6147, %v6135
        %v6928 = vpack.c.b16 %v6148, %v6136
        %v6929 = vpack.c.b16 %v6149, %v6137
        %v6930 = vpack.c.b16 %v6150, %v6138
        %v6931 = vpack.c.b16 %v6151, %v6139
        %v6932 = vpack.c.b16 %v6152, %v6140
        %v6933 = vpack.c.b16 %v6153, %v6141
        %v6934 = vpack.c.b16 %v6154, %v6142
        %v6935 = vpack.c.b16 %v6155, %v6143
        %v6936 = vpack.c.b16 %v6156, %v6144
        %v6937 = vpack.c.b16 %v6169, %v6157
        %v6938 = vpack.c.b16 %v6170, %v6158
        %v6939 = vpack.c.b16 %v6171, %v6159
        %v6940 = vpack.c.b16 %v6172, %v6160
        %v6941 = vpack.c.b16 %v6173, %v6161
        %v6942 = vpack.c.b16 %v6174, %v6162
        %v6943 = vpack.c.b16 %v6175, %v6163
        %v6944 = vpack.c.b16 %v6176, %v6164
        %v6945 = vpack.c.b16 %v6177, %v6165
        %v6946 = vpack.c.b16 %v6178, %v6166
        %v6947 = vpack.c.b16 %v6179, %v6167
        %v6948 = vpack.c.b16 %v6180, %v6168
        %v6949 = vpack.c.b16 %v6193, %v6181
        %v6950 = vpack.c.b16 %v6194, %v6182
        %v6951 = vpack.c.b16 %v6195, %v6183
        %v6952 = vpack.c.b16 %v6196, %v6184
        %v6953 = vpack.c.b16 %v6197, %v6185
        %v6954 = vpack.c.b16 %v6198, %v6186
        %v6955 = vpack.c.b16 %v6199, %v6187
        %v6956 = vpack.c.b16 %v6200, %v6188
        %v6957 = vpack.c.b16 %v6201, %v6189
        %v6958 = vpack.c.b16 %v6202, %v6190
        %v6959 = vpack.c.b16 %v6203, %v6191
        %v6960 = vpack.c.b16 %v6204, %v6192
        %v6961 = vpack.c.b16 %v6217, %v6205
        %v6962 = vpack.c.b16 %v6218, %v6206
        %v6963 = vpack.c.b16 %v6219, %v6207
        %v6964 = vpack.c.b16 %v6220, %v6208
        %v6965 = vpack.c.b16 %v6221, %v6209
        %v6966 = vpack.c.b16 %v6222, %v6210
        %v6967 = vpack.c.b16 %v6223, %v6211
        %v6968 = vpack.c.b16 %v6224, %v6212
        %v6969 = vpack.c.b16 %v6225, %v6213
        %v6970 = vpack.c.b16 %v6226, %v6214
        %v6971 = vpack.c.b16 %v6227, %v6215
        %v6972 = vpack.c.b16 %v6228, %v6216
        %v6973 = vpack.c.b16 %v6241, %v6229
        %v6974 = vpack.c.b16 %v6242, %v6230
        %v6975 = vpack.c.b16 %v6243, %v6231
        %v6976 = vpack.c.b16 %v6244, %v6232
        %v6977 = vpack.c.b16 %v6245, %v6233
        %v6978 = vpack.c.b16 %v6246, %v6234
        %v6979 = vpack.c.b16 %v6247, %v6235
        %v6980 = vpack.c.b16 %v6248, %v6236
        %v6981 = vpack.c.b16 %v6249, %v6237
        %v6982 = vpack.c.b16 %v6250, %v6238
        %v6983 = vpack.c.b16 %v6251, %v6239
        %v6984 = vpack.c.b16 %v6252, %v6240
        %v6985 = vpack.c.b16 %v6265, %v6253
        %v6986 = vpack.c.b16 %v6266, %v6254
        %v6987 = vpack.c.b16 %v6267, %v6255
        %v6988 = vpack.c.b16 %v6268, %v6256
        %v6989 = vpack.c.b16 %v6269, %v6257
        %v6990 = vpack.c.b16 %v6270, %v6258
        %v6991 = vpack.c.b16 %v6271, %v6259
        %v6992 = vpack.c.b16 %v6272, %v6260
        %v6993 = vpack.c.b16 %v6273, %v6261
        %v6994 = vpack.c.b16 %v6274, %v6262
        %v6995 = vpack.c.b16 %v6275, %v6263
        %v6996 = vpack.c.b16 %v6276, %v6264
        %v6997 = vpack.c.b16 %v6289, %v6277
        %v6998 = vpack.c.b16 %v6290, %v6278
        %v6999 = vpack.c.b16 %v6291, %v6279
        %v7000 = vpack.c.b16 %v6292, %v6280
        %v7001 = vpack.c.b16 %v6293, %v6281
        %v7002 = vpack.c.b16 %v6294, %v6282
        %v7003 = vpack.c.b16 %v6295, %v6283
        %v7004 = vpack.c.b16 %v6296, %v6284
        %v7005 = vpack.c.b16 %v6297, %v6285
        %v7006 = vpack.c.b16 %v6298, %v6286
        %v7007 = vpack.c.b16 %v6299, %v6287
        %v7008 = vpack.c.b16 %v6300, %v6288
        %v7009 = vpack.c.b16 %v6313, %v6301
        %v7010 = vpack.c.b16 %v6314, %v6302
        %v7011 = vpack.c.b16 %v6315, %v6303
        %v7012 = vpack.c.b16 %v6316, %v6304
        %v7013 = vpack.c.b16 %v6317, %v6305
        %v7014 = vpack.c.b16 %v6318, %v6306
        %v7015 = vpack.c.b16 %v6319, %v6307
        %v7016 = vpack.c.b16 %v6320, %v6308
        %v7017 = vpack.c.b16 %v6321, %v6309
        %v7018 = vpack.c.b16 %v6322, %v6310
        %v7019 = vpack.c.b16 %v6323, %v6311
        %v7020 = vpack.c.b16 %v6324, %v6312
        %v7021 = vpack.c.b16 %v6337, %v6325
        %v7022 = vpack.c.b16 %v6338, %v6326
        %v7023 = vpack.c.b16 %v6339, %v6327
        %v7024 = vpack.c.b16 %v6340, %v6328
        %v7025 = vpack.c.b16 %v6341, %v6329
        %v7026 = vpack.c.b16 %v6342, %v6330
        %v7027 = vpack.c.b16 %v6343, %v6331
        %v7028 = vpack.c.b16 %v6344, %v6332
        %v7029 = vpack.c.b16 %v6345, %v6333
        %v7030 = vpack.c.b16 %v6346, %v6334
        %v7031 = vpack.c.b16 %v6347, %v6335
        %v7032 = vpack.c.b16 %v6348, %v6336
        %v7033 = vpack.c.b16 %v6361, %v6349
        %v7034 = vpack.c.b16 %v6362, %v6350
        %v7035 = vpack.c.b16 %v6363, %v6351
        %v7036 = vpack.c.b16 %v6364, %v6352
        %v7037 = vpack.c.b16 %v6365, %v6353
        %v7038 = vpack.c.b16 %v6366, %v6354
        %v7039 = vpack.c.b16 %v6367, %v6355
        %v7040 = vpack.c.b16 %v6368, %v6356
        %v7041 = vpack.c.b16 %v6369, %v6357
        %v7042 = vpack.c.b16 %v6370, %v6358
        %v7043 = vpack.c.b16 %v6371, %v6359
        %v7044 = vpack.c.b16 %v6372, %v6360
        %v7045 = vpack.c.b16 %v6385, %v6373
        %v7046 = vpack.c.b16 %v6386, %v6374
        %v7047 = vpack.c.b16 %v6387, %v6375
        %v7048 = vpack.c.b16 %v6388, %v6376
        %v7049 = vpack.c.b16 %v6389, %v6377
        %v7050 = vpack.c.b16 %v6390, %v6378
        %v7051 = vpack.c.b16 %v6391, %v6379
        %v7052 = vpack.c.b16 %v6392, %v6380
        %v7053 = vpack.c.b16 %v6393, %v6381
        %v7054 = vpack.c.b16 %v6394, %v6382
        %v7055 = vpack.c.b16 %v6395, %v6383
        %v7056 = vpack.c.b16 %v6396, %v6384
        %v7057 = vpack.c.b16 %v6409, %v6397
        %v7058 = vpack.c.b16 %v6410, %v6398
        %v7059 = vpack.c.b16 %v6411, %v6399
        %v7060 = vpack.c.b16 %v6412, %v6400
        %v7061 = vpack.c.b16 %v6413, %v6401
        %v7062 = vpack.c.b16 %v6414, %v6402
        %v7063 = vpack.c.b16 %v6415, %v6403
        %v7064 = vpack.c.b16 %v6416, %v6404
        %v7065 = vpack.c.b16 %v6417, %v6405
        %v7066 = vpack.c.b16 %v6418, %v6406
        %v7067 = vpack.c.b16 %v6419, %v6407
        %v7068 = vpack.c.b16 %v6420, %v6408
        %v7069 = vpack.c.b16 %v6433, %v6421
        %v7070 = vpack.c.b16 %v6434, %v6422
        %v7071 = vpack.c.b16 %v6435, %v6423
        %v7072 = vpack.c.b16 %v6436, %v6424
        %v7073 = vpack.c.b16 %v6437, %v6425
        %v7074 = vpack.c.b16 %v6438, %v6426
        %v7075 = vpack.c.b16 %v6439, %v6427
        %v7076 = vpack.c.b16 %v6440, %v6428
        %v7077 = vpack.c.b16 %v6441, %v6429
        %v7078 = vpack.c.b16 %v6442, %v6430
        %v7079 = vpack.c.b16 %v6443, %v6431
        %v7080 = vpack.c.b16 %v6444, %v6432
        %v7081 = vpack.c.b16 %v6457, %v6445
        %v7082 = vpack.c.b16 %v6458, %v6446
        %v7083 = vpack.c.b16 %v6459, %v6447
        %v7084 = vpack.c.b16 %v6460, %v6448
        %v7085 = vpack.c.b16 %v6461, %v6449
        %v7086 = vpack.c.b16 %v6462, %v6450
        %v7087 = vpack.c.b16 %v6463, %v6451
        %v7088 = vpack.c.b16 %v6464, %v6452
        %v7089 = vpack.c.b16 %v6465, %v6453
        %v7090 = vpack.c.b16 %v6466, %v6454
        %v7091 = vpack.c.b16 %v6467, %v6455
        %v7092 = vpack.c.b16 %v6468, %v6456
        %v7093 = vpack.c.b16 %v6481, %v6469
        %v7094 = vpack.c.b16 %v6482, %v6470
        %v7095 = vpack.c.b16 %v6483, %v6471
        %v7096 = vpack.c.b16 %v6484, %v6472
        %v7097 = vpack.c.b16 %v6485, %v6473
        %v7098 = vpack.c.b16 %v6486, %v6474
        %v7099 = vpack.c.b16 %v6487, %v6475
        %v7100 = vpack.c.b16 %v6488, %v6476
        %v7101 = vpack.c.b16 %v6489, %v6477
        %v7102 = vpack.c.b16 %v6490, %v6478
        %v7103 = vpack.c.b16 %v6491, %v6479
        %v7104 = vpack.c.b16 %v6492, %v6480
        %v7105 = vpack.c.b16 %v6505, %v6493
        %v7106 = vpack.c.b16 %v6506, %v6494
        %v7107 = vpack.c.b16 %v6507, %v6495
        %v7108 = vpack.c.b16 %v6508, %v6496
        %v7109 = vpack.c.b16 %v6509, %v6497
        %v7110 = vpack.c.b16 %v6510, %v6498
        %v7111 = vpack.c.b16 %v6511, %v6499
        %v7112 = vpack.c.b16 %v6512, %v6500
        %v7113 = vpack.c.b16 %v6513, %v6501
        %v7114 = vpack.c.b16 %v6514, %v6502
        %v7115 = vpack.c.b16 %v6515, %v6503
        %v7116 = vpack.c.b16 %v6516, %v6504
        %v7117 = vpack.c.b16 %v6529, %v6517
        %v7118 = vpack.c.b16 %v6530, %v6518
        %v7119 = vpack.c.b16 %v6531, %v6519
        %v7120 = vpack.c.b16 %v6532, %v6520
        %v7121 = vpack.c.b16 %v6533, %v6521
        %v7122 = vpack.c.b16 %v6534, %v6522
        %v7123 = vpack.c.b16 %v6535, %v6523
        %v7124 = vpack.c.b16 %v6536, %v6524
        %v7125 = vpack.c.b16 %v6537, %v6525
        %v7126 = vpack.c.b16 %v6538, %v6526
        %v7127 = vpack.c.b16 %v6539, %v6527
        %v7128 = vpack.c.b16 %v6540, %v6528
        %v7129 = vpack.c.b16 %v6553, %v6541
        %v7130 = vpack.c.b16 %v6554, %v6542
        %v7131 = vpack.c.b16 %v6555, %v6543
        %v7132 = vpack.c.b16 %v6556, %v6544
        %v7133 = vpack.c.b16 %v6557, %v6545
        %v7134 = vpack.c.b16 %v6558, %v6546
        %v7135 = vpack.c.b16 %v6559, %v6547
        %v7136 = vpack.c.b16 %v6560, %v6548
        %v7137 = vpack.c.b16 %v6561, %v6549
        %v7138 = vpack.c.b16 %v6562, %v6550
        %v7139 = vpack.c.b16 %v6563, %v6551
        %v7140 = vpack.c.b16 %v6564, %v6552
        %7717 = vmatpush.bf16.msra.mxu0 %v6649
        %7718 = vmatpush.bf16.msra.mxu0 %v6637
        %7719 = vmatpush.bf16.msra.mxu0 %v6625
        %7720 = vmatpush.bf16.msra.mxu0 %v6613
        %7721 = vmatpush.bf16.msra.mxu0 %v6601
        %7722 = vmatpush.bf16.msra.mxu0 %v6589
        %7723 = vmatpush.bf16.msra.mxu0 %v6577
        %7724 = vmatpush.bf16.msra.mxu0 %v6565
        %7725 = vmatmul.bf16.gmra.mxu0 %v4831
        %v7726 = vpop.f32.mrf.mxu0
        %v7727 = vadd.f32 0.0, %v7726
        %v7728 = vpop.f32.mrf.mxu0
        %v7729 = vadd.f32 0.0, %v7728
        %7730 = vdwg.mxu0
        %7731 = vmatpush.bf16.msra.mxu0 %v6745
        %7732 = vmatpush.bf16.msra.mxu0 %v6733
        %7733 = vmatpush.bf16.msra.mxu0 %v6721
        %7734 = vmatpush.bf16.msra.mxu0 %v6709
        %7735 = vmatpush.bf16.msra.mxu0 %v6697
        %7736 = vmatpush.bf16.msra.mxu0 %v6685
        %7737 = vmatpush.bf16.msra.mxu0 %v6673
        %7738 = vmatpush.bf16.msra.mxu0 %v6661
        %7739 = vmatmul.bf16.gmra.mxu0 %v4832
        %v7740 = vpop.f32.mrf.mxu0
        %v7741 = vadd.f32 %v7727, %v7740
        %v7742 = vpop.f32.mrf.mxu0
        %v7743 = vadd.f32 %v7729, %v7742
        %7744 = vdwg.mxu0
        %7745 = vmatpush.bf16.msra.mxu0 %v6841
        %7746 = vmatpush.bf16.msra.mxu0 %v6829
        %7747 = vmatpush.bf16.msra.mxu0 %v6817
        %7748 = vmatpush.bf16.msra.mxu0 %v6805
        %7749 = vmatpush.bf16.msra.mxu0 %v6793
        %7750 = vmatpush.bf16.msra.mxu0 %v6781
        %7751 = vmatpush.bf16.msra.mxu0 %v6769
        %7752 = vmatpush.bf16.msra.mxu0 %v6757
        %7753 = vmatmul.bf16.gmra.mxu0 %v4833
        %v7754 = vpop.f32.mrf.mxu0
        %v7755 = vadd.f32 %v7741, %v7754
        %v7756 = vpop.f32.mrf.mxu0
        %v7757 = vadd.f32 %v7743, %v7756
        %7758 = vdwg.mxu0
        %7759 = vmatpush.bf16.msra.mxu0 %v6937
        %7760 = vmatpush.bf16.msra.mxu0 %v6925
        %7761 = vmatpush.bf16.msra.mxu0 %v6913
        %7762 = vmatpush.bf16.msra.mxu0 %v6901
        %7763 = vmatpush.bf16.msra.mxu0 %v6889
        %7764 = vmatpush.bf16.msra.mxu0 %v6877
        %7765 = vmatpush.bf16.msra.mxu0 %v6865
        %7766 = vmatpush.bf16.msra.mxu0 %v6853
        %7767 = vmatmul.bf16.gmra.mxu0 %v4834
        %v7768 = vpop.f32.mrf.mxu0
        %v7769 = vadd.f32 %v7755, %v7768
        %v7770 = vpop.f32.mrf.mxu0
        %v7771 = vadd.f32 %v7757, %v7770
        %7772 = vdwg.mxu0
        %7773 = vmatpush.bf16.msra.mxu0 %v7033
        %7774 = vmatpush.bf16.msra.mxu0 %v7021
        %7775 = vmatpush.bf16.msra.mxu0 %v7009
        %7776 = vmatpush.bf16.msra.mxu0 %v6997
        %7777 = vmatpush.bf16.msra.mxu0 %v6985
        %7778 = vmatpush.bf16.msra.mxu0 %v6973
        %7779 = vmatpush.bf16.msra.mxu0 %v6961
        %7780 = vmatpush.bf16.msra.mxu0 %v6949
        %7781 = vmatmul.bf16.gmra.mxu0 %v4835
        %v7782 = vpop.f32.mrf.mxu0
        %v7783 = vadd.f32 %v7769, %v7782
        %v7784 = vpop.f32.mrf.mxu0
        %v7785 = vadd.f32 %v7771, %v7784
        %7786 = vdwg.mxu0
        %7787 = vmatpush.bf16.msra.mxu0 %v7129
        %7788 = vmatpush.bf16.msra.mxu0 %v7117
        %7789 = vmatpush.bf16.msra.mxu0 %v7105
        %7790 = vmatpush.bf16.msra.mxu0 %v7093
        %7791 = vmatpush.bf16.msra.mxu0 %v7081
        %7792 = vmatpush.bf16.msra.mxu0 %v7069
        %7793 = vmatpush.bf16.msra.mxu0 %v7057
        %7794 = vmatpush.bf16.msra.mxu0 %v7045
        %7795 = vmatmul.bf16.gmra.mxu0 %v4836
        %v7796 = vpop.f32.mrf.mxu0
        %v7797 = vadd.f32 %v7783, %v7796
        %v7798 = vpop.f32.mrf.mxu0
        %v7799 = vadd.f32 %v7785, %v7798
        %7800 = vdwg.mxu0
        %7801 = vmatpush.bf16.msra.mxu0 %v6650
        %7802 = vmatpush.bf16.msra.mxu0 %v6638
        %7803 = vmatpush.bf16.msra.mxu0 %v6626
        %7804 = vmatpush.bf16.msra.mxu0 %v6614
        %7805 = vmatpush.bf16.msra.mxu0 %v6602
        %7806 = vmatpush.bf16.msra.mxu0 %v6590
        %7807 = vmatpush.bf16.msra.mxu0 %v6578
        %7808 = vmatpush.bf16.msra.mxu0 %v6566
        %7809 = vmatmul.bf16.gmra.mxu0 %v4831
        %v7810 = vpop.f32.mrf.mxu0
        %v7811 = vadd.f32 0.0, %v7810
        %v7812 = vpop.f32.mrf.mxu0
        %v7813 = vadd.f32 0.0, %v7812
        %7814 = vdwg.mxu0
        %7815 = vmatpush.bf16.msra.mxu0 %v6746
        %7816 = vmatpush.bf16.msra.mxu0 %v6734
        %7817 = vmatpush.bf16.msra.mxu0 %v6722
        %7818 = vmatpush.bf16.msra.mxu0 %v6710
        %7819 = vmatpush.bf16.msra.mxu0 %v6698
        %7820 = vmatpush.bf16.msra.mxu0 %v6686
        %7821 = vmatpush.bf16.msra.mxu0 %v6674
        %7822 = vmatpush.bf16.msra.mxu0 %v6662
        %7823 = vmatmul.bf16.gmra.mxu0 %v4832
        %v7824 = vpop.f32.mrf.mxu0
        %v7825 = vadd.f32 %v7811, %v7824
        %v7826 = vpop.f32.mrf.mxu0
        %v7827 = vadd.f32 %v7813, %v7826
        %7828 = vdwg.mxu0
        %7829 = vmatpush.bf16.msra.mxu0 %v6842
        %7830 = vmatpush.bf16.msra.mxu0 %v6830
        %7831 = vmatpush.bf16.msra.mxu0 %v6818
        %7832 = vmatpush.bf16.msra.mxu0 %v6806
        %7833 = vmatpush.bf16.msra.mxu0 %v6794
        %7834 = vmatpush.bf16.msra.mxu0 %v6782
        %7835 = vmatpush.bf16.msra.mxu0 %v6770
        %7836 = vmatpush.bf16.msra.mxu0 %v6758
        %7837 = vmatmul.bf16.gmra.mxu0 %v4833
        %v7838 = vpop.f32.mrf.mxu0
        %v7839 = vadd.f32 %v7825, %v7838
        %v7840 = vpop.f32.mrf.mxu0
        %v7841 = vadd.f32 %v7827, %v7840
        %7842 = vdwg.mxu0
        %7843 = vmatpush.bf16.msra.mxu0 %v6938
        %7844 = vmatpush.bf16.msra.mxu0 %v6926
        %7845 = vmatpush.bf16.msra.mxu0 %v6914
        %7846 = vmatpush.bf16.msra.mxu0 %v6902
        %7847 = vmatpush.bf16.msra.mxu0 %v6890
        %7848 = vmatpush.bf16.msra.mxu0 %v6878
        %7849 = vmatpush.bf16.msra.mxu0 %v6866
        %7850 = vmatpush.bf16.msra.mxu0 %v6854
        %7851 = vmatmul.bf16.gmra.mxu0 %v4834
        %v7852 = vpop.f32.mrf.mxu0
        %v7853 = vadd.f32 %v7839, %v7852
        %v7854 = vpop.f32.mrf.mxu0
        %v7855 = vadd.f32 %v7841, %v7854
        %7856 = vdwg.mxu0
        %7857 = vmatpush.bf16.msra.mxu0 %v7034
        %7858 = vmatpush.bf16.msra.mxu0 %v7022
        %7859 = vmatpush.bf16.msra.mxu0 %v7010
        %7860 = vmatpush.bf16.msra.mxu0 %v6998
        %7861 = vmatpush.bf16.msra.mxu0 %v6986
        %7862 = vmatpush.bf16.msra.mxu0 %v6974
        %7863 = vmatpush.bf16.msra.mxu0 %v6962
        %7864 = vmatpush.bf16.msra.mxu0 %v6950
        %7865 = vmatmul.bf16.gmra.mxu0 %v4835
        %v7866 = vpop.f32.mrf.mxu0
        %v7867 = vadd.f32 %v7853, %v7866
        %v7868 = vpop.f32.mrf.mxu0
        %v7869 = vadd.f32 %v7855, %v7868
        %7870 = vdwg.mxu0
        %7871 = vmatpush.bf16.msra.mxu0 %v7130
        %7872 = vmatpush.bf16.msra.mxu0 %v7118
        %7873 = vmatpush.bf16.msra.mxu0 %v7106
        %7874 = vmatpush.bf16.msra.mxu0 %v7094
        %7875 = vmatpush.bf16.msra.mxu0 %v7082
        %7876 = vmatpush.bf16.msra.mxu0 %v7070
        %7877 = vmatpush.bf16.msra.mxu0 %v7058
        %7878 = vmatpush.bf16.msra.mxu0 %v7046
        %7879 = vmatmul.bf16.gmra.mxu0 %v4836
        %v7880 = vpop.f32.mrf.mxu0
        %v7881 = vadd.f32 %v7867, %v7880
        %v7882 = vpop.f32.mrf.mxu0
        %v7883 = vadd.f32 %v7869, %v7882
        %7884 = vdwg.mxu0
        %7885 = vmatpush.bf16.msra.mxu0 %v6651
        %7886 = vmatpush.bf16.msra.mxu0 %v6639
        %7887 = vmatpush.bf16.msra.mxu0 %v6627
        %7888 = vmatpush.bf16.msra.mxu0 %v6615
        %7889 = vmatpush.bf16.msra.mxu0 %v6603
        %7890 = vmatpush.bf16.msra.mxu0 %v6591
        %7891 = vmatpush.bf16.msra.mxu0 %v6579
        %7892 = vmatpush.bf16.msra.mxu0 %v6567
        %7893 = vmatmul.bf16.gmra.mxu0 %v4831
        %v7894 = vpop.f32.mrf.mxu0
        %v7895 = vadd.f32 0.0, %v7894
        %v7896 = vpop.f32.mrf.mxu0
        %v7897 = vadd.f32 0.0, %v7896
        %7898 = vdwg.mxu0
        %7899 = vmatpush.bf16.msra.mxu0 %v6747
        %7900 = vmatpush.bf16.msra.mxu0 %v6735
        %7901 = vmatpush.bf16.msra.mxu0 %v6723
        %7902 = vmatpush.bf16.msra.mxu0 %v6711
        %7903 = vmatpush.bf16.msra.mxu0 %v6699
        %7904 = vmatpush.bf16.msra.mxu0 %v6687
        %7905 = vmatpush.bf16.msra.mxu0 %v6675
        %7906 = vmatpush.bf16.msra.mxu0 %v6663
        %7907 = vmatmul.bf16.gmra.mxu0 %v4832
        %v7908 = vpop.f32.mrf.mxu0
        %v7909 = vadd.f32 %v7895, %v7908
        %v7910 = vpop.f32.mrf.mxu0
        %v7911 = vadd.f32 %v7897, %v7910
        %7912 = vdwg.mxu0
        %7913 = vmatpush.bf16.msra.mxu0 %v6843
        %7914 = vmatpush.bf16.msra.mxu0 %v6831
        %7915 = vmatpush.bf16.msra.mxu0 %v6819
        %7916 = vmatpush.bf16.msra.mxu0 %v6807
        %7917 = vmatpush.bf16.msra.mxu0 %v6795
        %7918 = vmatpush.bf16.msra.mxu0 %v6783
        %7919 = vmatpush.bf16.msra.mxu0 %v6771
        %7920 = vmatpush.bf16.msra.mxu0 %v6759
        %7921 = vmatmul.bf16.gmra.mxu0 %v4833
        %v7922 = vpop.f32.mrf.mxu0
        %v7923 = vadd.f32 %v7909, %v7922
        %v7924 = vpop.f32.mrf.mxu0
        %v7925 = vadd.f32 %v7911, %v7924
        %7926 = vdwg.mxu0
        %7927 = vmatpush.bf16.msra.mxu0 %v6939
        %7928 = vmatpush.bf16.msra.mxu0 %v6927
        %7929 = vmatpush.bf16.msra.mxu0 %v6915
        %7930 = vmatpush.bf16.msra.mxu0 %v6903
        %7931 = vmatpush.bf16.msra.mxu0 %v6891
        %7932 = vmatpush.bf16.msra.mxu0 %v6879
        %7933 = vmatpush.bf16.msra.mxu0 %v6867
        %7934 = vmatpush.bf16.msra.mxu0 %v6855
        %7935 = vmatmul.bf16.gmra.mxu0 %v4834
        %v7936 = vpop.f32.mrf.mxu0
        %v7937 = vadd.f32 %v7923, %v7936
        %v7938 = vpop.f32.mrf.mxu0
        %v7939 = vadd.f32 %v7925, %v7938
        %7940 = vdwg.mxu0
        %7941 = vmatpush.bf16.msra.mxu0 %v7035
        %7942 = vmatpush.bf16.msra.mxu0 %v7023
        %7943 = vmatpush.bf16.msra.mxu0 %v7011
        %7944 = vmatpush.bf16.msra.mxu0 %v6999
        %7945 = vmatpush.bf16.msra.mxu0 %v6987
        %7946 = vmatpush.bf16.msra.mxu0 %v6975
        %7947 = vmatpush.bf16.msra.mxu0 %v6963
        %7948 = vmatpush.bf16.msra.mxu0 %v6951
        %7949 = vmatmul.bf16.gmra.mxu0 %v4835
        %v7950 = vpop.f32.mrf.mxu0
        %v7951 = vadd.f32 %v7937, %v7950
        %v7952 = vpop.f32.mrf.mxu0
        %v7953 = vadd.f32 %v7939, %v7952
        %7954 = vdwg.mxu0
        %7955 = vmatpush.bf16.msra.mxu0 %v7131
        %7956 = vmatpush.bf16.msra.mxu0 %v7119
        %7957 = vmatpush.bf16.msra.mxu0 %v7107
        %7958 = vmatpush.bf16.msra.mxu0 %v7095
        %7959 = vmatpush.bf16.msra.mxu0 %v7083
        %7960 = vmatpush.bf16.msra.mxu0 %v7071
        %7961 = vmatpush.bf16.msra.mxu0 %v7059
        %7962 = vmatpush.bf16.msra.mxu0 %v7047
        %7963 = vmatmul.bf16.gmra.mxu0 %v4836
        %v7964 = vpop.f32.mrf.mxu0
        %v7965 = vadd.f32 %v7951, %v7964
        %v7966 = vpop.f32.mrf.mxu0
        %v7967 = vadd.f32 %v7953, %v7966
        %7968 = vdwg.mxu0
        %7969 = vmatpush.bf16.msra.mxu0 %v6652
        %7970 = vmatpush.bf16.msra.mxu0 %v6640
        %7971 = vmatpush.bf16.msra.mxu0 %v6628
        %7972 = vmatpush.bf16.msra.mxu0 %v6616
        %7973 = vmatpush.bf16.msra.mxu0 %v6604
        %7974 = vmatpush.bf16.msra.mxu0 %v6592
        %7975 = vmatpush.bf16.msra.mxu0 %v6580
        %7976 = vmatpush.bf16.msra.mxu0 %v6568
        %7977 = vmatmul.bf16.gmra.mxu0 %v4831
        %v7978 = vpop.f32.mrf.mxu0
        %v7979 = vadd.f32 0.0, %v7978
        %v7980 = vpop.f32.mrf.mxu0
        %v7981 = vadd.f32 0.0, %v7980
        %7982 = vdwg.mxu0
        %7983 = vmatpush.bf16.msra.mxu0 %v6748
        %7984 = vmatpush.bf16.msra.mxu0 %v6736
        %7985 = vmatpush.bf16.msra.mxu0 %v6724
        %7986 = vmatpush.bf16.msra.mxu0 %v6712
        %7987 = vmatpush.bf16.msra.mxu0 %v6700
        %7988 = vmatpush.bf16.msra.mxu0 %v6688
        %7989 = vmatpush.bf16.msra.mxu0 %v6676
        %7990 = vmatpush.bf16.msra.mxu0 %v6664
        %7991 = vmatmul.bf16.gmra.mxu0 %v4832
        %v7992 = vpop.f32.mrf.mxu0
        %v7993 = vadd.f32 %v7979, %v7992
        %v7994 = vpop.f32.mrf.mxu0
        %v7995 = vadd.f32 %v7981, %v7994
        %7996 = vdwg.mxu0
        %7997 = vmatpush.bf16.msra.mxu0 %v6844
        %7998 = vmatpush.bf16.msra.mxu0 %v6832
        %7999 = vmatpush.bf16.msra.mxu0 %v6820
        %8000 = vmatpush.bf16.msra.mxu0 %v6808
        %8001 = vmatpush.bf16.msra.mxu0 %v6796
        %8002 = vmatpush.bf16.msra.mxu0 %v6784
        %8003 = vmatpush.bf16.msra.mxu0 %v6772
        %8004 = vmatpush.bf16.msra.mxu0 %v6760
        %8005 = vmatmul.bf16.gmra.mxu0 %v4833
        %v8006 = vpop.f32.mrf.mxu0
        %v8007 = vadd.f32 %v7993, %v8006
        %v8008 = vpop.f32.mrf.mxu0
        %v8009 = vadd.f32 %v7995, %v8008
        %8010 = vdwg.mxu0
        %8011 = vmatpush.bf16.msra.mxu0 %v6940
        %8012 = vmatpush.bf16.msra.mxu0 %v6928
        %8013 = vmatpush.bf16.msra.mxu0 %v6916
        %8014 = vmatpush.bf16.msra.mxu0 %v6904
        %8015 = vmatpush.bf16.msra.mxu0 %v6892
        %8016 = vmatpush.bf16.msra.mxu0 %v6880
        %8017 = vmatpush.bf16.msra.mxu0 %v6868
        %8018 = vmatpush.bf16.msra.mxu0 %v6856
        %8019 = vmatmul.bf16.gmra.mxu0 %v4834
        %v8020 = vpop.f32.mrf.mxu0
        %v8021 = vadd.f32 %v8007, %v8020
        %v8022 = vpop.f32.mrf.mxu0
        %v8023 = vadd.f32 %v8009, %v8022
        %8024 = vdwg.mxu0
        %8025 = vmatpush.bf16.msra.mxu0 %v7036
        %8026 = vmatpush.bf16.msra.mxu0 %v7024
        %8027 = vmatpush.bf16.msra.mxu0 %v7012
        %8028 = vmatpush.bf16.msra.mxu0 %v7000
        %8029 = vmatpush.bf16.msra.mxu0 %v6988
        %8030 = vmatpush.bf16.msra.mxu0 %v6976
        %8031 = vmatpush.bf16.msra.mxu0 %v6964
        %8032 = vmatpush.bf16.msra.mxu0 %v6952
        %8033 = vmatmul.bf16.gmra.mxu0 %v4835
        %v8034 = vpop.f32.mrf.mxu0
        %v8035 = vadd.f32 %v8021, %v8034
        %v8036 = vpop.f32.mrf.mxu0
        %v8037 = vadd.f32 %v8023, %v8036
        %8038 = vdwg.mxu0
        %8039 = vmatpush.bf16.msra.mxu0 %v7132
        %8040 = vmatpush.bf16.msra.mxu0 %v7120
        %8041 = vmatpush.bf16.msra.mxu0 %v7108
        %8042 = vmatpush.bf16.msra.mxu0 %v7096
        %8043 = vmatpush.bf16.msra.mxu0 %v7084
        %8044 = vmatpush.bf16.msra.mxu0 %v7072
        %8045 = vmatpush.bf16.msra.mxu0 %v7060
        %8046 = vmatpush.bf16.msra.mxu0 %v7048
        %8047 = vmatmul.bf16.gmra.mxu0 %v4836
        %v8048 = vpop.f32.mrf.mxu0
        %v8049 = vadd.f32 %v8035, %v8048
        %v8050 = vpop.f32.mrf.mxu0
        %v8051 = vadd.f32 %v8037, %v8050
        %8052 = vdwg.mxu0
        %8053 = vmatpush.bf16.msra.mxu0 %v6653
        %8054 = vmatpush.bf16.msra.mxu0 %v6641
        %8055 = vmatpush.bf16.msra.mxu0 %v6629
        %8056 = vmatpush.bf16.msra.mxu0 %v6617
        %8057 = vmatpush.bf16.msra.mxu0 %v6605
        %8058 = vmatpush.bf16.msra.mxu0 %v6593
        %8059 = vmatpush.bf16.msra.mxu0 %v6581
        %8060 = vmatpush.bf16.msra.mxu0 %v6569
        %8061 = vmatmul.bf16.gmra.mxu0 %v4831
        %v8062 = vpop.f32.mrf.mxu0
        %v8063 = vadd.f32 0.0, %v8062
        %v8064 = vpop.f32.mrf.mxu0
        %v8065 = vadd.f32 0.0, %v8064
        %8066 = vdwg.mxu0
        %8067 = vmatpush.bf16.msra.mxu0 %v6749
        %8068 = vmatpush.bf16.msra.mxu0 %v6737
        %8069 = vmatpush.bf16.msra.mxu0 %v6725
        %8070 = vmatpush.bf16.msra.mxu0 %v6713
        %8071 = vmatpush.bf16.msra.mxu0 %v6701
        %8072 = vmatpush.bf16.msra.mxu0 %v6689
        %8073 = vmatpush.bf16.msra.mxu0 %v6677
        %8074 = vmatpush.bf16.msra.mxu0 %v6665
        %8075 = vmatmul.bf16.gmra.mxu0 %v4832
        %v8076 = vpop.f32.mrf.mxu0
        %v8077 = vadd.f32 %v8063, %v8076
        %v8078 = vpop.f32.mrf.mxu0
        %v8079 = vadd.f32 %v8065, %v8078
        %8080 = vdwg.mxu0
        %8081 = vmatpush.bf16.msra.mxu0 %v6845
        %8082 = vmatpush.bf16.msra.mxu0 %v6833
        %8083 = vmatpush.bf16.msra.mxu0 %v6821
        %8084 = vmatpush.bf16.msra.mxu0 %v6809
        %8085 = vmatpush.bf16.msra.mxu0 %v6797
        %8086 = vmatpush.bf16.msra.mxu0 %v6785
        %8087 = vmatpush.bf16.msra.mxu0 %v6773
        %8088 = vmatpush.bf16.msra.mxu0 %v6761
        %8089 = vmatmul.bf16.gmra.mxu0 %v4833
        %v8090 = vpop.f32.mrf.mxu0
        %v8091 = vadd.f32 %v8077, %v8090
        %v8092 = vpop.f32.mrf.mxu0
        %v8093 = vadd.f32 %v8079, %v8092
        %8094 = vdwg.mxu0
        %8095 = vmatpush.bf16.msra.mxu0 %v6941
        %8096 = vmatpush.bf16.msra.mxu0 %v6929
        %8097 = vmatpush.bf16.msra.mxu0 %v6917
        %8098 = vmatpush.bf16.msra.mxu0 %v6905
        %8099 = vmatpush.bf16.msra.mxu0 %v6893
        %8100 = vmatpush.bf16.msra.mxu0 %v6881
        %8101 = vmatpush.bf16.msra.mxu0 %v6869
        %8102 = vmatpush.bf16.msra.mxu0 %v6857
        %8103 = vmatmul.bf16.gmra.mxu0 %v4834
        %v8104 = vpop.f32.mrf.mxu0
        %v8105 = vadd.f32 %v8091, %v8104
        %v8106 = vpop.f32.mrf.mxu0
        %v8107 = vadd.f32 %v8093, %v8106
        %8108 = vdwg.mxu0
        %8109 = vmatpush.bf16.msra.mxu0 %v7037
        %8110 = vmatpush.bf16.msra.mxu0 %v7025
        %8111 = vmatpush.bf16.msra.mxu0 %v7013
        %8112 = vmatpush.bf16.msra.mxu0 %v7001
        %8113 = vmatpush.bf16.msra.mxu0 %v6989
        %8114 = vmatpush.bf16.msra.mxu0 %v6977
        %8115 = vmatpush.bf16.msra.mxu0 %v6965
        %8116 = vmatpush.bf16.msra.mxu0 %v6953
        %8117 = vmatmul.bf16.gmra.mxu0 %v4835
        %v8118 = vpop.f32.mrf.mxu0
        %v8119 = vadd.f32 %v8105, %v8118
        %v8120 = vpop.f32.mrf.mxu0
        %v8121 = vadd.f32 %v8107, %v8120
        %8122 = vdwg.mxu0
        %8123 = vmatpush.bf16.msra.mxu0 %v7133
        %8124 = vmatpush.bf16.msra.mxu0 %v7121
        %8125 = vmatpush.bf16.msra.mxu0 %v7109
        %8126 = vmatpush.bf16.msra.mxu0 %v7097
        %8127 = vmatpush.bf16.msra.mxu0 %v7085
        %8128 = vmatpush.bf16.msra.mxu0 %v7073
        %8129 = vmatpush.bf16.msra.mxu0 %v7061
        %8130 = vmatpush.bf16.msra.mxu0 %v7049
        %8131 = vmatmul.bf16.gmra.mxu0 %v4836
        %v8132 = vpop.f32.mrf.mxu0
        %v8133 = vadd.f32 %v8119, %v8132
        %v8134 = vpop.f32.mrf.mxu0
        %v8135 = vadd.f32 %v8121, %v8134
        %8136 = vdwg.mxu0
        %8137 = vmatpush.bf16.msra.mxu0 %v6654
        %8138 = vmatpush.bf16.msra.mxu0 %v6642
        %8139 = vmatpush.bf16.msra.mxu0 %v6630
        %8140 = vmatpush.bf16.msra.mxu0 %v6618
        %8141 = vmatpush.bf16.msra.mxu0 %v6606
        %8142 = vmatpush.bf16.msra.mxu0 %v6594
        %8143 = vmatpush.bf16.msra.mxu0 %v6582
        %8144 = vmatpush.bf16.msra.mxu0 %v6570
        %8145 = vmatmul.bf16.gmra.mxu0 %v4831
        %v8146 = vpop.f32.mrf.mxu0
        %v8147 = vadd.f32 0.0, %v8146
        %v8148 = vpop.f32.mrf.mxu0
        %v8149 = vadd.f32 0.0, %v8148
        %8150 = vdwg.mxu0
        %8151 = vmatpush.bf16.msra.mxu0 %v6750
        %8152 = vmatpush.bf16.msra.mxu0 %v6738
        %8153 = vmatpush.bf16.msra.mxu0 %v6726
        %8154 = vmatpush.bf16.msra.mxu0 %v6714
        %8155 = vmatpush.bf16.msra.mxu0 %v6702
        %8156 = vmatpush.bf16.msra.mxu0 %v6690
        %8157 = vmatpush.bf16.msra.mxu0 %v6678
        %8158 = vmatpush.bf16.msra.mxu0 %v6666
        %8159 = vmatmul.bf16.gmra.mxu0 %v4832
        %v8160 = vpop.f32.mrf.mxu0
        %v8161 = vadd.f32 %v8147, %v8160
        %v8162 = vpop.f32.mrf.mxu0
        %v8163 = vadd.f32 %v8149, %v8162
        %8164 = vdwg.mxu0
        %8165 = vmatpush.bf16.msra.mxu0 %v6846
        %8166 = vmatpush.bf16.msra.mxu0 %v6834
        %8167 = vmatpush.bf16.msra.mxu0 %v6822
        %8168 = vmatpush.bf16.msra.mxu0 %v6810
        %8169 = vmatpush.bf16.msra.mxu0 %v6798
        %8170 = vmatpush.bf16.msra.mxu0 %v6786
        %8171 = vmatpush.bf16.msra.mxu0 %v6774
        %8172 = vmatpush.bf16.msra.mxu0 %v6762
        %8173 = vmatmul.bf16.gmra.mxu0 %v4833
        %v8174 = vpop.f32.mrf.mxu0
        %v8175 = vadd.f32 %v8161, %v8174
        %v8176 = vpop.f32.mrf.mxu0
        %v8177 = vadd.f32 %v8163, %v8176
        %8178 = vdwg.mxu0
        %8179 = vmatpush.bf16.msra.mxu0 %v6942
        %8180 = vmatpush.bf16.msra.mxu0 %v6930
        %8181 = vmatpush.bf16.msra.mxu0 %v6918
        %8182 = vmatpush.bf16.msra.mxu0 %v6906
        %8183 = vmatpush.bf16.msra.mxu0 %v6894
        %8184 = vmatpush.bf16.msra.mxu0 %v6882
        %8185 = vmatpush.bf16.msra.mxu0 %v6870
        %8186 = vmatpush.bf16.msra.mxu0 %v6858
        %8187 = vmatmul.bf16.gmra.mxu0 %v4834
        %v8188 = vpop.f32.mrf.mxu0
        %v8189 = vadd.f32 %v8175, %v8188
        %v8190 = vpop.f32.mrf.mxu0
        %v8191 = vadd.f32 %v8177, %v8190
        %8192 = vdwg.mxu0
        %8193 = vmatpush.bf16.msra.mxu0 %v7038
        %8194 = vmatpush.bf16.msra.mxu0 %v7026
        %8195 = vmatpush.bf16.msra.mxu0 %v7014
        %8196 = vmatpush.bf16.msra.mxu0 %v7002
        %8197 = vmatpush.bf16.msra.mxu0 %v6990
        %8198 = vmatpush.bf16.msra.mxu0 %v6978
        %8199 = vmatpush.bf16.msra.mxu0 %v6966
        %8200 = vmatpush.bf16.msra.mxu0 %v6954
        %8201 = vmatmul.bf16.gmra.mxu0 %v4835
        %v8202 = vpop.f32.mrf.mxu0
        %v8203 = vadd.f32 %v8189, %v8202
        %v8204 = vpop.f32.mrf.mxu0
        %v8205 = vadd.f32 %v8191, %v8204
        %8206 = vdwg.mxu0
        %8207 = vmatpush.bf16.msra.mxu0 %v7134
        %8208 = vmatpush.bf16.msra.mxu0 %v7122
        %8209 = vmatpush.bf16.msra.mxu0 %v7110
        %8210 = vmatpush.bf16.msra.mxu0 %v7098
        %8211 = vmatpush.bf16.msra.mxu0 %v7086
        %8212 = vmatpush.bf16.msra.mxu0 %v7074
        %8213 = vmatpush.bf16.msra.mxu0 %v7062
        %8214 = vmatpush.bf16.msra.mxu0 %v7050
        %8215 = vmatmul.bf16.gmra.mxu0 %v4836
        %v8216 = vpop.f32.mrf.mxu0
        %v8217 = vadd.f32 %v8203, %v8216
        %v8218 = vpop.f32.mrf.mxu0
        %v8219 = vadd.f32 %v8205, %v8218
        %8220 = vdwg.mxu0
        %8221 = vmatpush.bf16.msra.mxu0 %v6655
        %8222 = vmatpush.bf16.msra.mxu0 %v6643
        %8223 = vmatpush.bf16.msra.mxu0 %v6631
        %8224 = vmatpush.bf16.msra.mxu0 %v6619
        %8225 = vmatpush.bf16.msra.mxu0 %v6607
        %8226 = vmatpush.bf16.msra.mxu0 %v6595
        %8227 = vmatpush.bf16.msra.mxu0 %v6583
        %8228 = vmatpush.bf16.msra.mxu0 %v6571
        %8229 = vmatmul.bf16.gmra.mxu0 %v4831
        %v8230 = vpop.f32.mrf.mxu0
        %v8231 = vadd.f32 0.0, %v8230
        %v8232 = vpop.f32.mrf.mxu0
        %v8233 = vadd.f32 0.0, %v8232
        %8234 = vdwg.mxu0
        %8235 = vmatpush.bf16.msra.mxu0 %v6751
        %8236 = vmatpush.bf16.msra.mxu0 %v6739
        %8237 = vmatpush.bf16.msra.mxu0 %v6727
        %8238 = vmatpush.bf16.msra.mxu0 %v6715
        %8239 = vmatpush.bf16.msra.mxu0 %v6703
        %8240 = vmatpush.bf16.msra.mxu0 %v6691
        %8241 = vmatpush.bf16.msra.mxu0 %v6679
        %8242 = vmatpush.bf16.msra.mxu0 %v6667
        %8243 = vmatmul.bf16.gmra.mxu0 %v4832
        %v8244 = vpop.f32.mrf.mxu0
        %v8245 = vadd.f32 %v8231, %v8244
        %v8246 = vpop.f32.mrf.mxu0
        %v8247 = vadd.f32 %v8233, %v8246
        %8248 = vdwg.mxu0
        %8249 = vmatpush.bf16.msra.mxu0 %v6847
        %8250 = vmatpush.bf16.msra.mxu0 %v6835
        %8251 = vmatpush.bf16.msra.mxu0 %v6823
        %8252 = vmatpush.bf16.msra.mxu0 %v6811
        %8253 = vmatpush.bf16.msra.mxu0 %v6799
        %8254 = vmatpush.bf16.msra.mxu0 %v6787
        %8255 = vmatpush.bf16.msra.mxu0 %v6775
        %8256 = vmatpush.bf16.msra.mxu0 %v6763
        %8257 = vmatmul.bf16.gmra.mxu0 %v4833
        %v8258 = vpop.f32.mrf.mxu0
        %v8259 = vadd.f32 %v8245, %v8258
        %v8260 = vpop.f32.mrf.mxu0
        %v8261 = vadd.f32 %v8247, %v8260
        %8262 = vdwg.mxu0
        %8263 = vmatpush.bf16.msra.mxu0 %v6943
        %8264 = vmatpush.bf16.msra.mxu0 %v6931
        %8265 = vmatpush.bf16.msra.mxu0 %v6919
        %8266 = vmatpush.bf16.msra.mxu0 %v6907
        %8267 = vmatpush.bf16.msra.mxu0 %v6895
        %8268 = vmatpush.bf16.msra.mxu0 %v6883
        %8269 = vmatpush.bf16.msra.mxu0 %v6871
        %8270 = vmatpush.bf16.msra.mxu0 %v6859
        %8271 = vmatmul.bf16.gmra.mxu0 %v4834
        %v8272 = vpop.f32.mrf.mxu0
        %v8273 = vadd.f32 %v8259, %v8272
        %v8274 = vpop.f32.mrf.mxu0
        %v8275 = vadd.f32 %v8261, %v8274
        %8276 = vdwg.mxu0
        %8277 = vmatpush.bf16.msra.mxu0 %v7039
        %8278 = vmatpush.bf16.msra.mxu0 %v7027
        %8279 = vmatpush.bf16.msra.mxu0 %v7015
        %8280 = vmatpush.bf16.msra.mxu0 %v7003
        %8281 = vmatpush.bf16.msra.mxu0 %v6991
        %8282 = vmatpush.bf16.msra.mxu0 %v6979
        %8283 = vmatpush.bf16.msra.mxu0 %v6967
        %8284 = vmatpush.bf16.msra.mxu0 %v6955
        %8285 = vmatmul.bf16.gmra.mxu0 %v4835
        %v8286 = vpop.f32.mrf.mxu0
        %v8287 = vadd.f32 %v8273, %v8286
        %v8288 = vpop.f32.mrf.mxu0
        %v8289 = vadd.f32 %v8275, %v8288
        %8290 = vdwg.mxu0
        %8291 = vmatpush.bf16.msra.mxu0 %v7135
        %8292 = vmatpush.bf16.msra.mxu0 %v7123
        %8293 = vmatpush.bf16.msra.mxu0 %v7111
        %8294 = vmatpush.bf16.msra.mxu0 %v7099
        %8295 = vmatpush.bf16.msra.mxu0 %v7087
        %8296 = vmatpush.bf16.msra.mxu0 %v7075
        %8297 = vmatpush.bf16.msra.mxu0 %v7063
        %8298 = vmatpush.bf16.msra.mxu0 %v7051
        %8299 = vmatmul.bf16.gmra.mxu0 %v4836
        %v8300 = vpop.f32.mrf.mxu0
        %v8301 = vadd.f32 %v8287, %v8300
        %v8302 = vpop.f32.mrf.mxu0
        %v8303 = vadd.f32 %v8289, %v8302
        %8304 = vdwg.mxu0
        %8305 = vmatpush.bf16.msra.mxu0 %v6656
        %8306 = vmatpush.bf16.msra.mxu0 %v6644
        %8307 = vmatpush.bf16.msra.mxu0 %v6632
        %8308 = vmatpush.bf16.msra.mxu0 %v6620
        %8309 = vmatpush.bf16.msra.mxu0 %v6608
        %8310 = vmatpush.bf16.msra.mxu0 %v6596
        %8311 = vmatpush.bf16.msra.mxu0 %v6584
        %8312 = vmatpush.bf16.msra.mxu0 %v6572
        %8313 = vmatmul.bf16.gmra.mxu0 %v4831
        %v8314 = vpop.f32.mrf.mxu0
        %v8315 = vadd.f32 0.0, %v8314
        %v8316 = vpop.f32.mrf.mxu0
        %v8317 = vadd.f32 0.0, %v8316
        %8318 = vdwg.mxu0
        %8319 = vmatpush.bf16.msra.mxu0 %v6752
        %8320 = vmatpush.bf16.msra.mxu0 %v6740
        %8321 = vmatpush.bf16.msra.mxu0 %v6728
        %8322 = vmatpush.bf16.msra.mxu0 %v6716
        %8323 = vmatpush.bf16.msra.mxu0 %v6704
        %8324 = vmatpush.bf16.msra.mxu0 %v6692
        %8325 = vmatpush.bf16.msra.mxu0 %v6680
        %8326 = vmatpush.bf16.msra.mxu0 %v6668
        %8327 = vmatmul.bf16.gmra.mxu0 %v4832
        %v8328 = vpop.f32.mrf.mxu0
        %v8329 = vadd.f32 %v8315, %v8328
        %v8330 = vpop.f32.mrf.mxu0
        %v8331 = vadd.f32 %v8317, %v8330
        %8332 = vdwg.mxu0
        %8333 = vmatpush.bf16.msra.mxu0 %v6848
        %8334 = vmatpush.bf16.msra.mxu0 %v6836
        %8335 = vmatpush.bf16.msra.mxu0 %v6824
        %8336 = vmatpush.bf16.msra.mxu0 %v6812
        %8337 = vmatpush.bf16.msra.mxu0 %v6800
        %8338 = vmatpush.bf16.msra.mxu0 %v6788
        %8339 = vmatpush.bf16.msra.mxu0 %v6776
        %8340 = vmatpush.bf16.msra.mxu0 %v6764
        %8341 = vmatmul.bf16.gmra.mxu0 %v4833
        %v8342 = vpop.f32.mrf.mxu0
        %v8343 = vadd.f32 %v8329, %v8342
        %v8344 = vpop.f32.mrf.mxu0
        %v8345 = vadd.f32 %v8331, %v8344
        %8346 = vdwg.mxu0
        %8347 = vmatpush.bf16.msra.mxu0 %v6944
        %8348 = vmatpush.bf16.msra.mxu0 %v6932
        %8349 = vmatpush.bf16.msra.mxu0 %v6920
        %8350 = vmatpush.bf16.msra.mxu0 %v6908
        %8351 = vmatpush.bf16.msra.mxu0 %v6896
        %8352 = vmatpush.bf16.msra.mxu0 %v6884
        %8353 = vmatpush.bf16.msra.mxu0 %v6872
        %8354 = vmatpush.bf16.msra.mxu0 %v6860
        %8355 = vmatmul.bf16.gmra.mxu0 %v4834
        %v8356 = vpop.f32.mrf.mxu0
        %v8357 = vadd.f32 %v8343, %v8356
        %v8358 = vpop.f32.mrf.mxu0
        %v8359 = vadd.f32 %v8345, %v8358
        %8360 = vdwg.mxu0
        %8361 = vmatpush.bf16.msra.mxu0 %v7040
        %8362 = vmatpush.bf16.msra.mxu0 %v7028
        %8363 = vmatpush.bf16.msra.mxu0 %v7016
        %8364 = vmatpush.bf16.msra.mxu0 %v7004
        %8365 = vmatpush.bf16.msra.mxu0 %v6992
        %8366 = vmatpush.bf16.msra.mxu0 %v6980
        %8367 = vmatpush.bf16.msra.mxu0 %v6968
        %8368 = vmatpush.bf16.msra.mxu0 %v6956
        %8369 = vmatmul.bf16.gmra.mxu0 %v4835
        %v8370 = vpop.f32.mrf.mxu0
        %v8371 = vadd.f32 %v8357, %v8370
        %v8372 = vpop.f32.mrf.mxu0
        %v8373 = vadd.f32 %v8359, %v8372
        %8374 = vdwg.mxu0
        %8375 = vmatpush.bf16.msra.mxu0 %v7136
        %8376 = vmatpush.bf16.msra.mxu0 %v7124
        %8377 = vmatpush.bf16.msra.mxu0 %v7112
        %8378 = vmatpush.bf16.msra.mxu0 %v7100
        %8379 = vmatpush.bf16.msra.mxu0 %v7088
        %8380 = vmatpush.bf16.msra.mxu0 %v7076
        %8381 = vmatpush.bf16.msra.mxu0 %v7064
        %8382 = vmatpush.bf16.msra.mxu0 %v7052
        %8383 = vmatmul.bf16.gmra.mxu0 %v4836
        %v8384 = vpop.f32.mrf.mxu0
        %v8385 = vadd.f32 %v8371, %v8384
        %v8386 = vpop.f32.mrf.mxu0
        %v8387 = vadd.f32 %v8373, %v8386
        %8388 = vdwg.mxu0
        %8389 = vmatpush.bf16.msra.mxu0 %v6657
        %8390 = vmatpush.bf16.msra.mxu0 %v6645
        %8391 = vmatpush.bf16.msra.mxu0 %v6633
        %8392 = vmatpush.bf16.msra.mxu0 %v6621
        %8393 = vmatpush.bf16.msra.mxu0 %v6609
        %8394 = vmatpush.bf16.msra.mxu0 %v6597
        %8395 = vmatpush.bf16.msra.mxu0 %v6585
        %8396 = vmatpush.bf16.msra.mxu0 %v6573
        %8397 = vmatmul.bf16.gmra.mxu0 %v4831
        %v8398 = vpop.f32.mrf.mxu0
        %v8399 = vadd.f32 0.0, %v8398
        %v8400 = vpop.f32.mrf.mxu0
        %v8401 = vadd.f32 0.0, %v8400
        %8402 = vdwg.mxu0
        %8403 = vmatpush.bf16.msra.mxu0 %v6753
        %8404 = vmatpush.bf16.msra.mxu0 %v6741
        %8405 = vmatpush.bf16.msra.mxu0 %v6729
        %8406 = vmatpush.bf16.msra.mxu0 %v6717
        %8407 = vmatpush.bf16.msra.mxu0 %v6705
        %8408 = vmatpush.bf16.msra.mxu0 %v6693
        %8409 = vmatpush.bf16.msra.mxu0 %v6681
        %8410 = vmatpush.bf16.msra.mxu0 %v6669
        %8411 = vmatmul.bf16.gmra.mxu0 %v4832
        %v8412 = vpop.f32.mrf.mxu0
        %v8413 = vadd.f32 %v8399, %v8412
        %v8414 = vpop.f32.mrf.mxu0
        %v8415 = vadd.f32 %v8401, %v8414
        %8416 = vdwg.mxu0
        %8417 = vmatpush.bf16.msra.mxu0 %v6849
        %8418 = vmatpush.bf16.msra.mxu0 %v6837
        %8419 = vmatpush.bf16.msra.mxu0 %v6825
        %8420 = vmatpush.bf16.msra.mxu0 %v6813
        %8421 = vmatpush.bf16.msra.mxu0 %v6801
        %8422 = vmatpush.bf16.msra.mxu0 %v6789
        %8423 = vmatpush.bf16.msra.mxu0 %v6777
        %8424 = vmatpush.bf16.msra.mxu0 %v6765
        %8425 = vmatmul.bf16.gmra.mxu0 %v4833
        %v8426 = vpop.f32.mrf.mxu0
        %v8427 = vadd.f32 %v8413, %v8426
        %v8428 = vpop.f32.mrf.mxu0
        %v8429 = vadd.f32 %v8415, %v8428
        %8430 = vdwg.mxu0
        %8431 = vmatpush.bf16.msra.mxu0 %v6945
        %8432 = vmatpush.bf16.msra.mxu0 %v6933
        %8433 = vmatpush.bf16.msra.mxu0 %v6921
        %8434 = vmatpush.bf16.msra.mxu0 %v6909
        %8435 = vmatpush.bf16.msra.mxu0 %v6897
        %8436 = vmatpush.bf16.msra.mxu0 %v6885
        %8437 = vmatpush.bf16.msra.mxu0 %v6873
        %8438 = vmatpush.bf16.msra.mxu0 %v6861
        %8439 = vmatmul.bf16.gmra.mxu0 %v4834
        %v8440 = vpop.f32.mrf.mxu0
        %v8441 = vadd.f32 %v8427, %v8440
        %v8442 = vpop.f32.mrf.mxu0
        %v8443 = vadd.f32 %v8429, %v8442
        %8444 = vdwg.mxu0
        %8445 = vmatpush.bf16.msra.mxu0 %v7041
        %8446 = vmatpush.bf16.msra.mxu0 %v7029
        %8447 = vmatpush.bf16.msra.mxu0 %v7017
        %8448 = vmatpush.bf16.msra.mxu0 %v7005
        %8449 = vmatpush.bf16.msra.mxu0 %v6993
        %8450 = vmatpush.bf16.msra.mxu0 %v6981
        %8451 = vmatpush.bf16.msra.mxu0 %v6969
        %8452 = vmatpush.bf16.msra.mxu0 %v6957
        %8453 = vmatmul.bf16.gmra.mxu0 %v4835
        %v8454 = vpop.f32.mrf.mxu0
        %v8455 = vadd.f32 %v8441, %v8454
        %v8456 = vpop.f32.mrf.mxu0
        %v8457 = vadd.f32 %v8443, %v8456
        %8458 = vdwg.mxu0
        %8459 = vmatpush.bf16.msra.mxu0 %v7137
        %8460 = vmatpush.bf16.msra.mxu0 %v7125
        %8461 = vmatpush.bf16.msra.mxu0 %v7113
        %8462 = vmatpush.bf16.msra.mxu0 %v7101
        %8463 = vmatpush.bf16.msra.mxu0 %v7089
        %8464 = vmatpush.bf16.msra.mxu0 %v7077
        %8465 = vmatpush.bf16.msra.mxu0 %v7065
        %8466 = vmatpush.bf16.msra.mxu0 %v7053
        %8467 = vmatmul.bf16.gmra.mxu0 %v4836
        %v8468 = vpop.f32.mrf.mxu0
        %v8469 = vadd.f32 %v8455, %v8468
        %v8470 = vpop.f32.mrf.mxu0
        %v8471 = vadd.f32 %v8457, %v8470
        %8472 = vdwg.mxu0
        %8473 = vmatpush.bf16.msra.mxu0 %v6658
        %8474 = vmatpush.bf16.msra.mxu0 %v6646
        %8475 = vmatpush.bf16.msra.mxu0 %v6634
        %8476 = vmatpush.bf16.msra.mxu0 %v6622
        %8477 = vmatpush.bf16.msra.mxu0 %v6610
        %8478 = vmatpush.bf16.msra.mxu0 %v6598
        %8479 = vmatpush.bf16.msra.mxu0 %v6586
        %8480 = vmatpush.bf16.msra.mxu0 %v6574
        %8481 = vmatmul.bf16.gmra.mxu0 %v4831
        %v8482 = vpop.f32.mrf.mxu0
        %v8483 = vadd.f32 0.0, %v8482
        %v8484 = vpop.f32.mrf.mxu0
        %v8485 = vadd.f32 0.0, %v8484
        %8486 = vdwg.mxu0
        %8487 = vmatpush.bf16.msra.mxu0 %v6754
        %8488 = vmatpush.bf16.msra.mxu0 %v6742
        %8489 = vmatpush.bf16.msra.mxu0 %v6730
        %8490 = vmatpush.bf16.msra.mxu0 %v6718
        %8491 = vmatpush.bf16.msra.mxu0 %v6706
        %8492 = vmatpush.bf16.msra.mxu0 %v6694
        %8493 = vmatpush.bf16.msra.mxu0 %v6682
        %8494 = vmatpush.bf16.msra.mxu0 %v6670
        %8495 = vmatmul.bf16.gmra.mxu0 %v4832
        %v8496 = vpop.f32.mrf.mxu0
        %v8497 = vadd.f32 %v8483, %v8496
        %v8498 = vpop.f32.mrf.mxu0
        %v8499 = vadd.f32 %v8485, %v8498
        %8500 = vdwg.mxu0
        %8501 = vmatpush.bf16.msra.mxu0 %v6850
        %8502 = vmatpush.bf16.msra.mxu0 %v6838
        %8503 = vmatpush.bf16.msra.mxu0 %v6826
        %8504 = vmatpush.bf16.msra.mxu0 %v6814
        %8505 = vmatpush.bf16.msra.mxu0 %v6802
        %8506 = vmatpush.bf16.msra.mxu0 %v6790
        %8507 = vmatpush.bf16.msra.mxu0 %v6778
        %8508 = vmatpush.bf16.msra.mxu0 %v6766
        %8509 = vmatmul.bf16.gmra.mxu0 %v4833
        %v8510 = vpop.f32.mrf.mxu0
        %v8511 = vadd.f32 %v8497, %v8510
        %v8512 = vpop.f32.mrf.mxu0
        %v8513 = vadd.f32 %v8499, %v8512
        %8514 = vdwg.mxu0
        %8515 = vmatpush.bf16.msra.mxu0 %v6946
        %8516 = vmatpush.bf16.msra.mxu0 %v6934
        %8517 = vmatpush.bf16.msra.mxu0 %v6922
        %8518 = vmatpush.bf16.msra.mxu0 %v6910
        %8519 = vmatpush.bf16.msra.mxu0 %v6898
        %8520 = vmatpush.bf16.msra.mxu0 %v6886
        %8521 = vmatpush.bf16.msra.mxu0 %v6874
        %8522 = vmatpush.bf16.msra.mxu0 %v6862
        %8523 = vmatmul.bf16.gmra.mxu0 %v4834
        %v8524 = vpop.f32.mrf.mxu0
        %v8525 = vadd.f32 %v8511, %v8524
        %v8526 = vpop.f32.mrf.mxu0
        %v8527 = vadd.f32 %v8513, %v8526
        %8528 = vdwg.mxu0
        %8529 = vmatpush.bf16.msra.mxu0 %v7042
        %8530 = vmatpush.bf16.msra.mxu0 %v7030
        %8531 = vmatpush.bf16.msra.mxu0 %v7018
        %8532 = vmatpush.bf16.msra.mxu0 %v7006
        %8533 = vmatpush.bf16.msra.mxu0 %v6994
        %8534 = vmatpush.bf16.msra.mxu0 %v6982
        %8535 = vmatpush.bf16.msra.mxu0 %v6970
        %8536 = vmatpush.bf16.msra.mxu0 %v6958
        %8537 = vmatmul.bf16.gmra.mxu0 %v4835
        %v8538 = vpop.f32.mrf.mxu0
        %v8539 = vadd.f32 %v8525, %v8538
        %v8540 = vpop.f32.mrf.mxu0
        %v8541 = vadd.f32 %v8527, %v8540
        %8542 = vdwg.mxu0
        %8543 = vmatpush.bf16.msra.mxu0 %v7138
        %8544 = vmatpush.bf16.msra.mxu0 %v7126
        %8545 = vmatpush.bf16.msra.mxu0 %v7114
        %8546 = vmatpush.bf16.msra.mxu0 %v7102
        %8547 = vmatpush.bf16.msra.mxu0 %v7090
        %8548 = vmatpush.bf16.msra.mxu0 %v7078
        %8549 = vmatpush.bf16.msra.mxu0 %v7066
        %8550 = vmatpush.bf16.msra.mxu0 %v7054
        %8551 = vmatmul.bf16.gmra.mxu0 %v4836
        %v8552 = vpop.f32.mrf.mxu0
        %v8553 = vadd.f32 %v8539, %v8552
        %v8554 = vpop.f32.mrf.mxu0
        %v8555 = vadd.f32 %v8541, %v8554
        %8556 = vdwg.mxu0
        %8557 = vmatpush.bf16.msra.mxu0 %v6659
        %8558 = vmatpush.bf16.msra.mxu0 %v6647
        %8559 = vmatpush.bf16.msra.mxu0 %v6635
        %8560 = vmatpush.bf16.msra.mxu0 %v6623
        %8561 = vmatpush.bf16.msra.mxu0 %v6611
        %8562 = vmatpush.bf16.msra.mxu0 %v6599
        %8563 = vmatpush.bf16.msra.mxu0 %v6587
        %8564 = vmatpush.bf16.msra.mxu0 %v6575
        %8565 = vmatmul.bf16.gmra.mxu0 %v4831
        %v8566 = vpop.f32.mrf.mxu0
        %v8567 = vadd.f32 0.0, %v8566
        %v8568 = vpop.f32.mrf.mxu0
        %v8569 = vadd.f32 0.0, %v8568
        %8570 = vdwg.mxu0
        %8571 = vmatpush.bf16.msra.mxu0 %v6755
        %8572 = vmatpush.bf16.msra.mxu0 %v6743
        %8573 = vmatpush.bf16.msra.mxu0 %v6731
        %8574 = vmatpush.bf16.msra.mxu0 %v6719
        %8575 = vmatpush.bf16.msra.mxu0 %v6707
        %8576 = vmatpush.bf16.msra.mxu0 %v6695
        %8577 = vmatpush.bf16.msra.mxu0 %v6683
        %8578 = vmatpush.bf16.msra.mxu0 %v6671
        %8579 = vmatmul.bf16.gmra.mxu0 %v4832
        %v8580 = vpop.f32.mrf.mxu0
        %v8581 = vadd.f32 %v8567, %v8580
        %v8582 = vpop.f32.mrf.mxu0
        %v8583 = vadd.f32 %v8569, %v8582
        %8584 = vdwg.mxu0
        %8585 = vmatpush.bf16.msra.mxu0 %v6851
        %8586 = vmatpush.bf16.msra.mxu0 %v6839
        %8587 = vmatpush.bf16.msra.mxu0 %v6827
        %8588 = vmatpush.bf16.msra.mxu0 %v6815
        %8589 = vmatpush.bf16.msra.mxu0 %v6803
        %8590 = vmatpush.bf16.msra.mxu0 %v6791
        %8591 = vmatpush.bf16.msra.mxu0 %v6779
        %8592 = vmatpush.bf16.msra.mxu0 %v6767
        %8593 = vmatmul.bf16.gmra.mxu0 %v4833
        %v8594 = vpop.f32.mrf.mxu0
        %v8595 = vadd.f32 %v8581, %v8594
        %v8596 = vpop.f32.mrf.mxu0
        %v8597 = vadd.f32 %v8583, %v8596
        %8598 = vdwg.mxu0
        %8599 = vmatpush.bf16.msra.mxu0 %v6947
        %8600 = vmatpush.bf16.msra.mxu0 %v6935
        %8601 = vmatpush.bf16.msra.mxu0 %v6923
        %8602 = vmatpush.bf16.msra.mxu0 %v6911
        %8603 = vmatpush.bf16.msra.mxu0 %v6899
        %8604 = vmatpush.bf16.msra.mxu0 %v6887
        %8605 = vmatpush.bf16.msra.mxu0 %v6875
        %8606 = vmatpush.bf16.msra.mxu0 %v6863
        %8607 = vmatmul.bf16.gmra.mxu0 %v4834
        %v8608 = vpop.f32.mrf.mxu0
        %v8609 = vadd.f32 %v8595, %v8608
        %v8610 = vpop.f32.mrf.mxu0
        %v8611 = vadd.f32 %v8597, %v8610
        %8612 = vdwg.mxu0
        %8613 = vmatpush.bf16.msra.mxu0 %v7043
        %8614 = vmatpush.bf16.msra.mxu0 %v7031
        %8615 = vmatpush.bf16.msra.mxu0 %v7019
        %8616 = vmatpush.bf16.msra.mxu0 %v7007
        %8617 = vmatpush.bf16.msra.mxu0 %v6995
        %8618 = vmatpush.bf16.msra.mxu0 %v6983
        %8619 = vmatpush.bf16.msra.mxu0 %v6971
        %8620 = vmatpush.bf16.msra.mxu0 %v6959
        %8621 = vmatmul.bf16.gmra.mxu0 %v4835
        %v8622 = vpop.f32.mrf.mxu0
        %v8623 = vadd.f32 %v8609, %v8622
        %v8624 = vpop.f32.mrf.mxu0
        %v8625 = vadd.f32 %v8611, %v8624
        %8626 = vdwg.mxu0
        %8627 = vmatpush.bf16.msra.mxu0 %v7139
        %8628 = vmatpush.bf16.msra.mxu0 %v7127
        %8629 = vmatpush.bf16.msra.mxu0 %v7115
        %8630 = vmatpush.bf16.msra.mxu0 %v7103
        %8631 = vmatpush.bf16.msra.mxu0 %v7091
        %8632 = vmatpush.bf16.msra.mxu0 %v7079
        %8633 = vmatpush.bf16.msra.mxu0 %v7067
        %8634 = vmatpush.bf16.msra.mxu0 %v7055
        %8635 = vmatmul.bf16.gmra.mxu0 %v4836
        %v8636 = vpop.f32.mrf.mxu0
        %v8637 = vadd.f32 %v8623, %v8636
        %v8638 = vpop.f32.mrf.mxu0
        %v8639 = vadd.f32 %v8625, %v8638
        %8640 = vdwg.mxu0
        %8641 = vmatpush.bf16.msra.mxu0 %v6660
        %8642 = vmatpush.bf16.msra.mxu0 %v6648
        %8643 = vmatpush.bf16.msra.mxu0 %v6636
        %8644 = vmatpush.bf16.msra.mxu0 %v6624
        %8645 = vmatpush.bf16.msra.mxu0 %v6612
        %8646 = vmatpush.bf16.msra.mxu0 %v6600
        %8647 = vmatpush.bf16.msra.mxu0 %v6588
        %8648 = vmatpush.bf16.msra.mxu0 %v6576
        %8649 = vmatmul.bf16.gmra.mxu0 %v4831
        %v8650 = vpop.f32.mrf.mxu0
        %v8651 = vadd.f32 0.0, %v8650
        %v8652 = vpop.f32.mrf.mxu0
        %v8653 = vadd.f32 0.0, %v8652
        %8654 = vdwg.mxu0
        %8655 = vmatpush.bf16.msra.mxu0 %v6756
        %8656 = vmatpush.bf16.msra.mxu0 %v6744
        %8657 = vmatpush.bf16.msra.mxu0 %v6732
        %8658 = vmatpush.bf16.msra.mxu0 %v6720
        %8659 = vmatpush.bf16.msra.mxu0 %v6708
        %8660 = vmatpush.bf16.msra.mxu0 %v6696
        %8661 = vmatpush.bf16.msra.mxu0 %v6684
        %8662 = vmatpush.bf16.msra.mxu0 %v6672
        %8663 = vmatmul.bf16.gmra.mxu0 %v4832
        %v8664 = vpop.f32.mrf.mxu0
        %v8665 = vadd.f32 %v8651, %v8664
        %v8666 = vpop.f32.mrf.mxu0
        %v8667 = vadd.f32 %v8653, %v8666
        %8668 = vdwg.mxu0
        %8669 = vmatpush.bf16.msra.mxu0 %v6852
        %8670 = vmatpush.bf16.msra.mxu0 %v6840
        %8671 = vmatpush.bf16.msra.mxu0 %v6828
        %8672 = vmatpush.bf16.msra.mxu0 %v6816
        %8673 = vmatpush.bf16.msra.mxu0 %v6804
        %8674 = vmatpush.bf16.msra.mxu0 %v6792
        %8675 = vmatpush.bf16.msra.mxu0 %v6780
        %8676 = vmatpush.bf16.msra.mxu0 %v6768
        %8677 = vmatmul.bf16.gmra.mxu0 %v4833
        %v8678 = vpop.f32.mrf.mxu0
        %v8679 = vadd.f32 %v8665, %v8678
        %v8680 = vpop.f32.mrf.mxu0
        %v8681 = vadd.f32 %v8667, %v8680
        %8682 = vdwg.mxu0
        %8683 = vmatpush.bf16.msra.mxu0 %v6948
        %8684 = vmatpush.bf16.msra.mxu0 %v6936
        %8685 = vmatpush.bf16.msra.mxu0 %v6924
        %8686 = vmatpush.bf16.msra.mxu0 %v6912
        %8687 = vmatpush.bf16.msra.mxu0 %v6900
        %8688 = vmatpush.bf16.msra.mxu0 %v6888
        %8689 = vmatpush.bf16.msra.mxu0 %v6876
        %8690 = vmatpush.bf16.msra.mxu0 %v6864
        %8691 = vmatmul.bf16.gmra.mxu0 %v4834
        %v8692 = vpop.f32.mrf.mxu0
        %v8693 = vadd.f32 %v8679, %v8692
        %v8694 = vpop.f32.mrf.mxu0
        %v8695 = vadd.f32 %v8681, %v8694
        %8696 = vdwg.mxu0
        %8697 = vmatpush.bf16.msra.mxu0 %v7044
        %8698 = vmatpush.bf16.msra.mxu0 %v7032
        %8699 = vmatpush.bf16.msra.mxu0 %v7020
        %8700 = vmatpush.bf16.msra.mxu0 %v7008
        %8701 = vmatpush.bf16.msra.mxu0 %v6996
        %8702 = vmatpush.bf16.msra.mxu0 %v6984
        %8703 = vmatpush.bf16.msra.mxu0 %v6972
        %8704 = vmatpush.bf16.msra.mxu0 %v6960
        %8705 = vmatmul.bf16.gmra.mxu0 %v4835
        %v8706 = vpop.f32.mrf.mxu0
        %v8707 = vadd.f32 %v8693, %v8706
        %v8708 = vpop.f32.mrf.mxu0
        %v8709 = vadd.f32 %v8695, %v8708
        %8710 = vdwg.mxu0
        %8711 = vmatpush.bf16.msra.mxu0 %v7140
        %8712 = vmatpush.bf16.msra.mxu0 %v7128
        %8713 = vmatpush.bf16.msra.mxu0 %v7116
        %8714 = vmatpush.bf16.msra.mxu0 %v7104
        %8715 = vmatpush.bf16.msra.mxu0 %v7092
        %8716 = vmatpush.bf16.msra.mxu0 %v7080
        %8717 = vmatpush.bf16.msra.mxu0 %v7068
        %8718 = vmatpush.bf16.msra.mxu0 %v7056
        %8719 = vmatmul.bf16.gmra.mxu0 %v4836
        %v8720 = vpop.f32.mrf.mxu0
        %v8721 = vadd.f32 %v8707, %v8720
        %v8722 = vpop.f32.mrf.mxu0
        %v8723 = vadd.f32 %v8709, %v8722
        %8724 = vdwg.mxu0
        %v8725 = vperm.slane %v551, 2
        %v8726 = vperm.slane %v552, 2
        %v8727 = vperm.slane %v553, 2
        %v8728 = vperm.slane %v554, 2
        %v8729 = vperm.slane %v555, 2
        %v8730 = vperm.slane %v556, 2
        %v8731 = vadd.f32 %v7797, %v8725
        %v8732 = vadd.f32 %v7881, %v8726
        %v8733 = vadd.f32 %v7965, %v8727
        %v8734 = vadd.f32 %v8049, %v8728
        %v8735 = vadd.f32 %v8133, %v8729
        %v8736 = vadd.f32 %v8217, %v8730
        %v8737 = vadd.f32 %v7799, %v8725
        %v8738 = vadd.f32 %v7883, %v8726
        %v8739 = vadd.f32 %v7967, %v8727
        %v8740 = vadd.f32 %v8051, %v8728
        %v8741 = vadd.f32 %v8135, %v8729
        %v8742 = vadd.f32 %v8219, %v8730
        %v8743 = vperm.slane %v551, 3
        %v8744 = vperm.slane %v552, 3
        %v8745 = vperm.slane %v553, 3
        %v8746 = vperm.slane %v554, 3
        %v8747 = vperm.slane %v555, 3
        %v8748 = vperm.slane %v556, 3
        %v8749 = vadd.f32 %v8301, %v8743
        %v8750 = vadd.f32 %v8385, %v8744
        %v8751 = vadd.f32 %v8469, %v8745
        %v8752 = vadd.f32 %v8553, %v8746
        %v8753 = vadd.f32 %v8637, %v8747
        %v8754 = vadd.f32 %v8721, %v8748
        %v8755 = vadd.f32 %v8303, %v8743
        %v8756 = vadd.f32 %v8387, %v8744
        %v8757 = vadd.f32 %v8471, %v8745
        %v8758 = vadd.f32 %v8555, %v8746
        %v8759 = vadd.f32 %v8639, %v8747
        %v8760 = vadd.f32 %v8723, %v8748
        %v8767 = vrot.slane %v3940, 7
        %v8768 = vrot.slane %v4018, 6
        %v8769 = vrot.slane %v4096, 5
        %v8770 = vrot.slane %v4174, 4
        %v8771 = vrot.slane %v4252, 3
        %vm8772 = vcmask 1040384
        %v8773 = vsel %vm8772, %v3862, %v8767
        %vm8774 = vcmask 1041408
        %v8775 = vsel %vm8774, %v8773, %v8768
        %vm8776 = vcmask 1043459
        %v8777 = vsel %vm8776, %v8769, %v8770
        %vm8778 = vcmask 1044483
        %v8779 = vsel %vm8778, %v8777, %v8771
        %vm8780 = vcmask 1042432
        %v8781 = vsel %vm8780, %v8775, %v8779
        %vm8782 = vcmask 1041409
        %v8783 = vsel %vm8782, %v3862, %v8767
        %vm8784 = vcmask 1042433
        %v8785 = vsel %vm8784, %v8783, %v8768
        %vm8786 = vcmask 1044484
        %v8787 = vsel %vm8786, %v8769, %v8770
        %vm8788 = vcmask 1045508
        %v8789 = vsel %vm8788, %v8787, %v8771
        %vm8790 = vcmask 1043457
        %v8791 = vsel %vm8790, %v8785, %v8789
        %v8792 = vrot.slane %v8791, 1
        %v8793 = vperm.slane %v8781, 0
        %v8794 = vperm.slane %v8781, 1
        %v8795 = vperm.slane %v8781, 2
        %v8796 = vperm.slane %v8781, 3
        %v8797 = vperm.slane %v8781, 4
        %v8798 = vperm.slane %v8781, 5
        %8805 = vmatpush.xpose.msra.mxu0 0.0
        %8806 = vmatpush.xpose.msra.mxu0 0.0
        %8807 = vmatpush.xpose.msra.mxu0 0.0
        %8808 = vmatpush.xpose.msra.mxu0 0.0
        %8809 = vmatpush.xpose.msra.mxu0 0.0
        %8810 = vmatpush.xpose.msra.mxu0 0.0
        %8811 = vmatpush.xpose.msra.mxu0 0.0
        %8812 = vmatpush.xpose.msra.mxu0 0.0
        %8813 = vmatpush.xpose.msra.mxu0 0.0
        %8814 = vmatpush.xpose.msra.mxu0 0.0
        %8815 = vmatpush.xpose.msra.mxu0 0.0
        %8816 = vmatpush.xpose.msra.mxu0 0.0
        %8817 = vmatpush.xpose.msra.mxu0 0.0
        %8818 = vmatpush.xpose.msra.mxu0 0.0
        %8819 = vmatpush.xpose.msra.mxu0 0.0
        %8820 = vmatpush.xpose.msra.mxu0 %v8731
        %8821 = vmatmul.f32.gmra.mxu0 %v8793
        %v8822 = vpop.f32.mrf.mxu0
        %v8823 = vadd.f32 0.0, %v8822
        %8824 = vdwg.mxu0
        %8825 = vmatpush.xpose.msra.mxu0 0.0
        %8826 = vmatpush.xpose.msra.mxu0 0.0
        %8827 = vmatpush.xpose.msra.mxu0 0.0
        %8828 = vmatpush.xpose.msra.mxu0 0.0
        %8829 = vmatpush.xpose.msra.mxu0 0.0
        %8830 = vmatpush.xpose.msra.mxu0 0.0
        %8831 = vmatpush.xpose.msra.mxu0 0.0
        %8832 = vmatpush.xpose.msra.mxu0 0.0
        %8833 = vmatpush.xpose.msra.mxu0 0.0
        %8834 = vmatpush.xpose.msra.mxu0 0.0
        %8835 = vmatpush.xpose.msra.mxu0 0.0
        %8836 = vmatpush.xpose.msra.mxu0 0.0
        %8837 = vmatpush.xpose.msra.mxu0 0.0
        %8838 = vmatpush.xpose.msra.mxu0 0.0
        %8839 = vmatpush.xpose.msra.mxu0 0.0
        %8840 = vmatpush.xpose.msra.mxu0 %v8732
        %8841 = vmatmul.f32.gmra.mxu0 %v8794
        %v8842 = vpop.f32.mrf.mxu0
        %v8843 = vadd.f32 %v8823, %v8842
        %8844 = vdwg.mxu0
        %8845 = vmatpush.xpose.msra.mxu0 0.0
        %8846 = vmatpush.xpose.msra.mxu0 0.0
        %8847 = vmatpush.xpose.msra.mxu0 0.0
        %8848 = vmatpush.xpose.msra.mxu0 0.0
        %8849 = vmatpush.xpose.msra.mxu0 0.0
        %8850 = vmatpush.xpose.msra.mxu0 0.0
        %8851 = vmatpush.xpose.msra.mxu0 0.0
        %8852 = vmatpush.xpose.msra.mxu0 0.0
        %8853 = vmatpush.xpose.msra.mxu0 0.0
        %8854 = vmatpush.xpose.msra.mxu0 0.0
        %8855 = vmatpush.xpose.msra.mxu0 0.0
        %8856 = vmatpush.xpose.msra.mxu0 0.0
        %8857 = vmatpush.xpose.msra.mxu0 0.0
        %8858 = vmatpush.xpose.msra.mxu0 0.0
        %8859 = vmatpush.xpose.msra.mxu0 0.0
        %8860 = vmatpush.xpose.msra.mxu0 %v8733
        %8861 = vmatmul.f32.gmra.mxu0 %v8795
        %v8862 = vpop.f32.mrf.mxu0
        %v8863 = vadd.f32 %v8843, %v8862
        %8864 = vdwg.mxu0
        %8865 = vmatpush.xpose.msra.mxu0 0.0
        %8866 = vmatpush.xpose.msra.mxu0 0.0
        %8867 = vmatpush.xpose.msra.mxu0 0.0
        %8868 = vmatpush.xpose.msra.mxu0 0.0
        %8869 = vmatpush.xpose.msra.mxu0 0.0
        %8870 = vmatpush.xpose.msra.mxu0 0.0
        %8871 = vmatpush.xpose.msra.mxu0 0.0
        %8872 = vmatpush.xpose.msra.mxu0 0.0
        %8873 = vmatpush.xpose.msra.mxu0 0.0
        %8874 = vmatpush.xpose.msra.mxu0 0.0
        %8875 = vmatpush.xpose.msra.mxu0 0.0
        %8876 = vmatpush.xpose.msra.mxu0 0.0
        %8877 = vmatpush.xpose.msra.mxu0 0.0
        %8878 = vmatpush.xpose.msra.mxu0 0.0
        %8879 = vmatpush.xpose.msra.mxu0 0.0
        %8880 = vmatpush.xpose.msra.mxu0 %v8734
        %8881 = vmatmul.f32.gmra.mxu0 %v8796
        %v8882 = vpop.f32.mrf.mxu0
        %v8883 = vadd.f32 %v8863, %v8882
        %8884 = vdwg.mxu0
        %8885 = vmatpush.xpose.msra.mxu0 0.0
        %8886 = vmatpush.xpose.msra.mxu0 0.0
        %8887 = vmatpush.xpose.msra.mxu0 0.0
        %8888 = vmatpush.xpose.msra.mxu0 0.0
        %8889 = vmatpush.xpose.msra.mxu0 0.0
        %8890 = vmatpush.xpose.msra.mxu0 0.0
        %8891 = vmatpush.xpose.msra.mxu0 0.0
        %8892 = vmatpush.xpose.msra.mxu0 0.0
        %8893 = vmatpush.xpose.msra.mxu0 0.0
        %8894 = vmatpush.xpose.msra.mxu0 0.0
        %8895 = vmatpush.xpose.msra.mxu0 0.0
        %8896 = vmatpush.xpose.msra.mxu0 0.0
        %8897 = vmatpush.xpose.msra.mxu0 0.0
        %8898 = vmatpush.xpose.msra.mxu0 0.0
        %8899 = vmatpush.xpose.msra.mxu0 0.0
        %8900 = vmatpush.xpose.msra.mxu0 %v8735
        %8901 = vmatmul.f32.gmra.mxu0 %v8797
        %v8902 = vpop.f32.mrf.mxu0
        %v8903 = vadd.f32 %v8883, %v8902
        %8904 = vdwg.mxu0
        %8905 = vmatpush.xpose.msra.mxu0 0.0
        %8906 = vmatpush.xpose.msra.mxu0 0.0
        %8907 = vmatpush.xpose.msra.mxu0 0.0
        %8908 = vmatpush.xpose.msra.mxu0 0.0
        %8909 = vmatpush.xpose.msra.mxu0 0.0
        %8910 = vmatpush.xpose.msra.mxu0 0.0
        %8911 = vmatpush.xpose.msra.mxu0 0.0
        %8912 = vmatpush.xpose.msra.mxu0 0.0
        %8913 = vmatpush.xpose.msra.mxu0 0.0
        %8914 = vmatpush.xpose.msra.mxu0 0.0
        %8915 = vmatpush.xpose.msra.mxu0 0.0
        %8916 = vmatpush.xpose.msra.mxu0 0.0
        %8917 = vmatpush.xpose.msra.mxu0 0.0
        %8918 = vmatpush.xpose.msra.mxu0 0.0
        %8919 = vmatpush.xpose.msra.mxu0 0.0
        %8920 = vmatpush.xpose.msra.mxu0 %v8736
        %8921 = vmatmul.f32.gmra.mxu0 %v8798
        %v8922 = vpop.f32.mrf.mxu0
        %v8923 = vadd.f32 %v8903, %v8922
        %8924 = vdwg.mxu0
        %v8925 = vperm.slane %v8792, 0
        %v8926 = vperm.slane %v8792, 1
        %v8927 = vperm.slane %v8792, 2
        %v8928 = vperm.slane %v8792, 3
        %v8929 = vperm.slane %v8792, 4
        %v8930 = vperm.slane %v8792, 5
        %8937 = vmatpush.xpose.msra.mxu0 0.0
        %8938 = vmatpush.xpose.msra.mxu0 0.0
        %8939 = vmatpush.xpose.msra.mxu0 0.0
        %8940 = vmatpush.xpose.msra.mxu0 0.0
        %8941 = vmatpush.xpose.msra.mxu0 0.0
        %8942 = vmatpush.xpose.msra.mxu0 0.0
        %8943 = vmatpush.xpose.msra.mxu0 0.0
        %8944 = vmatpush.xpose.msra.mxu0 0.0
        %8945 = vmatpush.xpose.msra.mxu0 0.0
        %8946 = vmatpush.xpose.msra.mxu0 0.0
        %8947 = vmatpush.xpose.msra.mxu0 0.0
        %8948 = vmatpush.xpose.msra.mxu0 0.0
        %8949 = vmatpush.xpose.msra.mxu0 0.0
        %8950 = vmatpush.xpose.msra.mxu0 0.0
        %8951 = vmatpush.xpose.msra.mxu0 0.0
        %8952 = vmatpush.xpose.msra.mxu0 %v8737
        %8953 = vmatmul.f32.gmra.mxu0 %v8925
        %v8954 = vpop.f32.mrf.mxu0
        %v8955 = vadd.f32 0.0, %v8954
        %8956 = vdwg.mxu0
        %8957 = vmatpush.xpose.msra.mxu0 0.0
        %8958 = vmatpush.xpose.msra.mxu0 0.0
        %8959 = vmatpush.xpose.msra.mxu0 0.0
        %8960 = vmatpush.xpose.msra.mxu0 0.0
        %8961 = vmatpush.xpose.msra.mxu0 0.0
        %8962 = vmatpush.xpose.msra.mxu0 0.0
        %8963 = vmatpush.xpose.msra.mxu0 0.0
        %8964 = vmatpush.xpose.msra.mxu0 0.0
        %8965 = vmatpush.xpose.msra.mxu0 0.0
        %8966 = vmatpush.xpose.msra.mxu0 0.0
        %8967 = vmatpush.xpose.msra.mxu0 0.0
        %8968 = vmatpush.xpose.msra.mxu0 0.0
        %8969 = vmatpush.xpose.msra.mxu0 0.0
        %8970 = vmatpush.xpose.msra.mxu0 0.0
        %8971 = vmatpush.xpose.msra.mxu0 0.0
        %8972 = vmatpush.xpose.msra.mxu0 %v8738
        %8973 = vmatmul.f32.gmra.mxu0 %v8926
        %v8974 = vpop.f32.mrf.mxu0
        %v8975 = vadd.f32 %v8955, %v8974
        %8976 = vdwg.mxu0
        %8977 = vmatpush.xpose.msra.mxu0 0.0
        %8978 = vmatpush.xpose.msra.mxu0 0.0
        %8979 = vmatpush.xpose.msra.mxu0 0.0
        %8980 = vmatpush.xpose.msra.mxu0 0.0
        %8981 = vmatpush.xpose.msra.mxu0 0.0
        %8982 = vmatpush.xpose.msra.mxu0 0.0
        %8983 = vmatpush.xpose.msra.mxu0 0.0
        %8984 = vmatpush.xpose.msra.mxu0 0.0
        %8985 = vmatpush.xpose.msra.mxu0 0.0
        %8986 = vmatpush.xpose.msra.mxu0 0.0
        %8987 = vmatpush.xpose.msra.mxu0 0.0
        %8988 = vmatpush.xpose.msra.mxu0 0.0
        %8989 = vmatpush.xpose.msra.mxu0 0.0
        %8990 = vmatpush.xpose.msra.mxu0 0.0
        %8991 = vmatpush.xpose.msra.mxu0 0.0
        %8992 = vmatpush.xpose.msra.mxu0 %v8739
        %8993 = vmatmul.f32.gmra.mxu0 %v8927
        %v8994 = vpop.f32.mrf.mxu0
        %v8995 = vadd.f32 %v8975, %v8994
        %8996 = vdwg.mxu0
        %8997 = vmatpush.xpose.msra.mxu0 0.0
        %8998 = vmatpush.xpose.msra.mxu0 0.0
        %8999 = vmatpush.xpose.msra.mxu0 0.0
        %9000 = vmatpush.xpose.msra.mxu0 0.0
        %9001 = vmatpush.xpose.msra.mxu0 0.0
        %9002 = vmatpush.xpose.msra.mxu0 0.0
        %9003 = vmatpush.xpose.msra.mxu0 0.0
        %9004 = vmatpush.xpose.msra.mxu0 0.0
        %9005 = vmatpush.xpose.msra.mxu0 0.0
        %9006 = vmatpush.xpose.msra.mxu0 0.0
        %9007 = vmatpush.xpose.msra.mxu0 0.0
        %9008 = vmatpush.xpose.msra.mxu0 0.0
        %9009 = vmatpush.xpose.msra.mxu0 0.0
        %9010 = vmatpush.xpose.msra.mxu0 0.0
        %9011 = vmatpush.xpose.msra.mxu0 0.0
        %9012 = vmatpush.xpose.msra.mxu0 %v8740
        %9013 = vmatmul.f32.gmra.mxu0 %v8928
        %v9014 = vpop.f32.mrf.mxu0
        %v9015 = vadd.f32 %v8995, %v9014
        %9016 = vdwg.mxu0
        %9017 = vmatpush.xpose.msra.mxu0 0.0
        %9018 = vmatpush.xpose.msra.mxu0 0.0
        %9019 = vmatpush.xpose.msra.mxu0 0.0
        %9020 = vmatpush.xpose.msra.mxu0 0.0
        %9021 = vmatpush.xpose.msra.mxu0 0.0
        %9022 = vmatpush.xpose.msra.mxu0 0.0
        %9023 = vmatpush.xpose.msra.mxu0 0.0
        %9024 = vmatpush.xpose.msra.mxu0 0.0
        %9025 = vmatpush.xpose.msra.mxu0 0.0
        %9026 = vmatpush.xpose.msra.mxu0 0.0
        %9027 = vmatpush.xpose.msra.mxu0 0.0
        %9028 = vmatpush.xpose.msra.mxu0 0.0
        %9029 = vmatpush.xpose.msra.mxu0 0.0
        %9030 = vmatpush.xpose.msra.mxu0 0.0
        %9031 = vmatpush.xpose.msra.mxu0 0.0
        %9032 = vmatpush.xpose.msra.mxu0 %v8741
        %9033 = vmatmul.f32.gmra.mxu0 %v8929
        %v9034 = vpop.f32.mrf.mxu0
        %v9035 = vadd.f32 %v9015, %v9034
        %9036 = vdwg.mxu0
        %9037 = vmatpush.xpose.msra.mxu0 0.0
        %9038 = vmatpush.xpose.msra.mxu0 0.0
        %9039 = vmatpush.xpose.msra.mxu0 0.0
        %9040 = vmatpush.xpose.msra.mxu0 0.0
        %9041 = vmatpush.xpose.msra.mxu0 0.0
        %9042 = vmatpush.xpose.msra.mxu0 0.0
        %9043 = vmatpush.xpose.msra.mxu0 0.0
        %9044 = vmatpush.xpose.msra.mxu0 0.0
        %9045 = vmatpush.xpose.msra.mxu0 0.0
        %9046 = vmatpush.xpose.msra.mxu0 0.0
        %9047 = vmatpush.xpose.msra.mxu0 0.0
        %9048 = vmatpush.xpose.msra.mxu0 0.0
        %9049 = vmatpush.xpose.msra.mxu0 0.0
        %9050 = vmatpush.xpose.msra.mxu0 0.0
        %9051 = vmatpush.xpose.msra.mxu0 0.0
        %9052 = vmatpush.xpose.msra.mxu0 %v8742
        %9053 = vmatmul.f32.gmra.mxu0 %v8930
        %v9054 = vpop.f32.mrf.mxu0
        %v9055 = vadd.f32 %v9035, %v9054
        %9056 = vdwg.mxu0
        %v9057 = vmul.f32 %v8923, 0.03608439
        %v9058 = vmul.f32 %v9055, 0.03608439
        %vm9059 = vcmp.eq.f32.partialorder %v549, 0.0
        %v9062 = vrot.slane %v9058, 7
        %v9063 = vsel %vm8782, %v9062, %v9057
        %v9065 = vsel %vm9059, -1e+10, %v9063
        %vm9066 = vcmask 58368
        %v9067 = vsel %vm9066, %v9065, -inf
        %9068 = vmax.xlane.f32.xlu0 %v9067
        %v9069 = vpop.xlane.xlu0 %9068
        %v9070 = vsub.f32 %v9065, %v9069
        %v9071 = vmul.f32 %v9070, 1.442695
        %v9072 = vpow.pop %v9071
        %v9073 = vsel %vm9066, %v9072, 0.0
        %9074 = vadd.xlane.f32.xlu0 %v9073
        %v9075 = vpop.xlane.xlu0 %9074
        %v9076 = vrcp.pop %v9075
        %v9077 = vmul.f32 %v9072, %v9076
        %v9079 = vrot.slane %v9077, 1
        %vm9080 = vcmask 64512
        %v9081 = vsel %vm9080, %v9077, 0
        %9083 = vmatpush.msra.mxu0 0.0
        %9084 = vmatpush.msra.mxu0 0.0
        %9085 = vmatpush.msra.mxu0 0.0
        %9086 = vmatpush.msra.mxu0 0.0
        %9087 = vmatpush.msra.mxu0 0.0
        %9088 = vmatpush.msra.mxu0 0.0
        %9089 = vmatpush.msra.mxu0 0.0
        %9090 = vmatpush.msra.mxu0 0.0
        %9091 = vmatpush.msra.mxu0 0.0
        %9092 = vmatpush.msra.mxu0 0.0
        %9093 = vmatpush.msra.mxu0 0.0
        %9094 = vmatpush.msra.mxu0 0.0
        %9095 = vmatpush.msra.mxu0 0.0
        %9096 = vmatpush.msra.mxu0 0.0
        %9097 = vmatpush.msra.mxu0 0.0
        %9098 = vmatpush.msra.mxu0 %v8749
        %9099 = vmatmul.f32.gmra.mxu0 %v9081
        %v9100 = vpop.f32.mrf.mxu0
        %v9101 = vadd.f32 0.0, %v9100
        %9102 = vdwg.mxu0
        %9103 = vmatpush.msra.mxu0 0.0
        %9104 = vmatpush.msra.mxu0 0.0
        %9105 = vmatpush.msra.mxu0 0.0
        %9106 = vmatpush.msra.mxu0 0.0
        %9107 = vmatpush.msra.mxu0 0.0
        %9108 = vmatpush.msra.mxu0 0.0
        %9109 = vmatpush.msra.mxu0 0.0
        %9110 = vmatpush.msra.mxu0 0.0
        %9111 = vmatpush.msra.mxu0 0.0
        %9112 = vmatpush.msra.mxu0 0.0
        %9113 = vmatpush.msra.mxu0 0.0
        %9114 = vmatpush.msra.mxu0 0.0
        %9115 = vmatpush.msra.mxu0 0.0
        %9116 = vmatpush.msra.mxu0 0.0
        %9117 = vmatpush.msra.mxu0 0.0
        %9118 = vmatpush.msra.mxu0 %v8750
        %9119 = vmatmul.f32.gmra.mxu0 %v9081
        %v9120 = vpop.f32.mrf.mxu0
        %v9121 = vadd.f32 0.0, %v9120
        %9122 = vdwg.mxu0
        %9123 = vmatpush.msra.mxu0 0.0
        %9124 = vmatpush.msra.mxu0 0.0
        %9125 = vmatpush.msra.mxu0 0.0
        %9126 = vmatpush.msra.mxu0 0.0
        %9127 = vmatpush.msra.mxu0 0.0
        %9128 = vmatpush.msra.mxu0 0.0
        %9129 = vmatpush.msra.mxu0 0.0
        %9130 = vmatpush.msra.mxu0 0.0
        %9131 = vmatpush.msra.mxu0 0.0
        %9132 = vmatpush.msra.mxu0 0.0
        %9133 = vmatpush.msra.mxu0 0.0
        %9134 = vmatpush.msra.mxu0 0.0
        %9135 = vmatpush.msra.mxu0 0.0
        %9136 = vmatpush.msra.mxu0 0.0
        %9137 = vmatpush.msra.mxu0 0.0
        %9138 = vmatpush.msra.mxu0 %v8751
        %9139 = vmatmul.f32.gmra.mxu0 %v9081
        %v9140 = vpop.f32.mrf.mxu0
        %v9141 = vadd.f32 0.0, %v9140
        %9142 = vdwg.mxu0
        %9143 = vmatpush.msra.mxu0 0.0
        %9144 = vmatpush.msra.mxu0 0.0
        %9145 = vmatpush.msra.mxu0 0.0
        %9146 = vmatpush.msra.mxu0 0.0
        %9147 = vmatpush.msra.mxu0 0.0
        %9148 = vmatpush.msra.mxu0 0.0
        %9149 = vmatpush.msra.mxu0 0.0
        %9150 = vmatpush.msra.mxu0 0.0
        %9151 = vmatpush.msra.mxu0 0.0
        %9152 = vmatpush.msra.mxu0 0.0
        %9153 = vmatpush.msra.mxu0 0.0
        %9154 = vmatpush.msra.mxu0 0.0
        %9155 = vmatpush.msra.mxu0 0.0
        %9156 = vmatpush.msra.mxu0 0.0
        %9157 = vmatpush.msra.mxu0 0.0
        %9158 = vmatpush.msra.mxu0 %v8752
        %9159 = vmatmul.f32.gmra.mxu0 %v9081
        %v9160 = vpop.f32.mrf.mxu0
        %v9161 = vadd.f32 0.0, %v9160
        %9162 = vdwg.mxu0
        %9163 = vmatpush.msra.mxu0 0.0
        %9164 = vmatpush.msra.mxu0 0.0
        %9165 = vmatpush.msra.mxu0 0.0
        %9166 = vmatpush.msra.mxu0 0.0
        %9167 = vmatpush.msra.mxu0 0.0
        %9168 = vmatpush.msra.mxu0 0.0
        %9169 = vmatpush.msra.mxu0 0.0
        %9170 = vmatpush.msra.mxu0 0.0
        %9171 = vmatpush.msra.mxu0 0.0
        %9172 = vmatpush.msra.mxu0 0.0
        %9173 = vmatpush.msra.mxu0 0.0
        %9174 = vmatpush.msra.mxu0 0.0
        %9175 = vmatpush.msra.mxu0 0.0
        %9176 = vmatpush.msra.mxu0 0.0
        %9177 = vmatpush.msra.mxu0 0.0
        %9178 = vmatpush.msra.mxu0 %v8753
        %9179 = vmatmul.f32.gmra.mxu0 %v9081
        %v9180 = vpop.f32.mrf.mxu0
        %v9181 = vadd.f32 0.0, %v9180
        %9182 = vdwg.mxu0
        %9183 = vmatpush.msra.mxu0 0.0
        %9184 = vmatpush.msra.mxu0 0.0
        %9185 = vmatpush.msra.mxu0 0.0
        %9186 = vmatpush.msra.mxu0 0.0
        %9187 = vmatpush.msra.mxu0 0.0
        %9188 = vmatpush.msra.mxu0 0.0
        %9189 = vmatpush.msra.mxu0 0.0
        %9190 = vmatpush.msra.mxu0 0.0
        %9191 = vmatpush.msra.mxu0 0.0
        %9192 = vmatpush.msra.mxu0 0.0
        %9193 = vmatpush.msra.mxu0 0.0
        %9194 = vmatpush.msra.mxu0 0.0
        %9195 = vmatpush.msra.mxu0 0.0
        %9196 = vmatpush.msra.mxu0 0.0
        %9197 = vmatpush.msra.mxu0 0.0
        %9198 = vmatpush.msra.mxu0 %v8754
        %9199 = vmatmul.f32.gmra.mxu0 %v9081
        %v9200 = vpop.f32.mrf.mxu0
        %v9201 = vadd.f32 0.0, %v9200
        %9202 = vdwg.mxu0
        %v9203 = vsel %vm9080, %v9079, 0
        %9205 = vmatpush.msra.mxu0 0.0
        %9206 = vmatpush.msra.mxu0 0.0
        %9207 = vmatpush.msra.mxu0 0.0
        %9208 = vmatpush.msra.mxu0 0.0
        %9209 = vmatpush.msra.mxu0 0.0
        %9210 = vmatpush.msra.mxu0 0.0
        %9211 = vmatpush.msra.mxu0 0.0
        %9212 = vmatpush.msra.mxu0 0.0
        %9213 = vmatpush.msra.mxu0 0.0
        %9214 = vmatpush.msra.mxu0 0.0
        %9215 = vmatpush.msra.mxu0 0.0
        %9216 = vmatpush.msra.mxu0 0.0
        %9217 = vmatpush.msra.mxu0 0.0
        %9218 = vmatpush.msra.mxu0 0.0
        %9219 = vmatpush.msra.mxu0 0.0
        %9220 = vmatpush.msra.mxu0 %v8755
        %9221 = vmatmul.f32.gmra.mxu0 %v9203
        %v9222 = vpop.f32.mrf.mxu0
        %v9223 = vadd.f32 0.0, %v9222
        %9224 = vdwg.mxu0
        %9225 = vmatpush.msra.mxu0 0.0
        %9226 = vmatpush.msra.mxu0 0.0
        %9227 = vmatpush.msra.mxu0 0.0
        %9228 = vmatpush.msra.mxu0 0.0
        %9229 = vmatpush.msra.mxu0 0.0
        %9230 = vmatpush.msra.mxu0 0.0
        %9231 = vmatpush.msra.mxu0 0.0
        %9232 = vmatpush.msra.mxu0 0.0
        %9233 = vmatpush.msra.mxu0 0.0
        %9234 = vmatpush.msra.mxu0 0.0
        %9235 = vmatpush.msra.mxu0 0.0
        %9236 = vmatpush.msra.mxu0 0.0
        %9237 = vmatpush.msra.mxu0 0.0
        %9238 = vmatpush.msra.mxu0 0.0
        %9239 = vmatpush.msra.mxu0 0.0
        %9240 = vmatpush.msra.mxu0 %v8756
        %9241 = vmatmul.f32.gmra.mxu0 %v9203
        %v9242 = vpop.f32.mrf.mxu0
        %v9243 = vadd.f32 0.0, %v9242
        %9244 = vdwg.mxu0
        %9245 = vmatpush.msra.mxu0 0.0
        %9246 = vmatpush.msra.mxu0 0.0
        %9247 = vmatpush.msra.mxu0 0.0
        %9248 = vmatpush.msra.mxu0 0.0
        %9249 = vmatpush.msra.mxu0 0.0
        %9250 = vmatpush.msra.mxu0 0.0
        %9251 = vmatpush.msra.mxu0 0.0
        %9252 = vmatpush.msra.mxu0 0.0
        %9253 = vmatpush.msra.mxu0 0.0
        %9254 = vmatpush.msra.mxu0 0.0
        %9255 = vmatpush.msra.mxu0 0.0
        %9256 = vmatpush.msra.mxu0 0.0
        %9257 = vmatpush.msra.mxu0 0.0
        %9258 = vmatpush.msra.mxu0 0.0
        %9259 = vmatpush.msra.mxu0 0.0
        %9260 = vmatpush.msra.mxu0 %v8757
        %9261 = vmatmul.f32.gmra.mxu0 %v9203
        %v9262 = vpop.f32.mrf.mxu0
        %v9263 = vadd.f32 0.0, %v9262
        %9264 = vdwg.mxu0
        %9265 = vmatpush.msra.mxu0 0.0
        %9266 = vmatpush.msra.mxu0 0.0
        %9267 = vmatpush.msra.mxu0 0.0
        %9268 = vmatpush.msra.mxu0 0.0
        %9269 = vmatpush.msra.mxu0 0.0
        %9270 = vmatpush.msra.mxu0 0.0
        %9271 = vmatpush.msra.mxu0 0.0
        %9272 = vmatpush.msra.mxu0 0.0
        %9273 = vmatpush.msra.mxu0 0.0
        %9274 = vmatpush.msra.mxu0 0.0
        %9275 = vmatpush.msra.mxu0 0.0
        %9276 = vmatpush.msra.mxu0 0.0
        %9277 = vmatpush.msra.mxu0 0.0
        %9278 = vmatpush.msra.mxu0 0.0
        %9279 = vmatpush.msra.mxu0 0.0
        %9280 = vmatpush.msra.mxu0 %v8758
        %9281 = vmatmul.f32.gmra.mxu0 %v9203
        %v9282 = vpop.f32.mrf.mxu0
        %v9283 = vadd.f32 0.0, %v9282
        %9284 = vdwg.mxu0
        %9285 = vmatpush.msra.mxu0 0.0
        %9286 = vmatpush.msra.mxu0 0.0
        %9287 = vmatpush.msra.mxu0 0.0
        %9288 = vmatpush.msra.mxu0 0.0
        %9289 = vmatpush.msra.mxu0 0.0
        %9290 = vmatpush.msra.mxu0 0.0
        %9291 = vmatpush.msra.mxu0 0.0
        %9292 = vmatpush.msra.mxu0 0.0
        %9293 = vmatpush.msra.mxu0 0.0
        %9294 = vmatpush.msra.mxu0 0.0
        %9295 = vmatpush.msra.mxu0 0.0
        %9296 = vmatpush.msra.mxu0 0.0
        %9297 = vmatpush.msra.mxu0 0.0
        %9298 = vmatpush.msra.mxu0 0.0
        %9299 = vmatpush.msra.mxu0 0.0
        %9300 = vmatpush.msra.mxu0 %v8759
        %9301 = vmatmul.f32.gmra.mxu0 %v9203
        %v9302 = vpop.f32.mrf.mxu0
        %v9303 = vadd.f32 0.0, %v9302
        %9304 = vdwg.mxu0
        %9305 = vmatpush.msra.mxu0 0.0
        %9306 = vmatpush.msra.mxu0 0.0
        %9307 = vmatpush.msra.mxu0 0.0
        %9308 = vmatpush.msra.mxu0 0.0
        %9309 = vmatpush.msra.mxu0 0.0
        %9310 = vmatpush.msra.mxu0 0.0
        %9311 = vmatpush.msra.mxu0 0.0
        %9312 = vmatpush.msra.mxu0 0.0
        %9313 = vmatpush.msra.mxu0 0.0
        %9314 = vmatpush.msra.mxu0 0.0
        %9315 = vmatpush.msra.mxu0 0.0
        %9316 = vmatpush.msra.mxu0 0.0
        %9317 = vmatpush.msra.mxu0 0.0
        %9318 = vmatpush.msra.mxu0 0.0
        %9319 = vmatpush.msra.mxu0 0.0
        %9320 = vmatpush.msra.mxu0 %v8760
        %9321 = vmatmul.f32.gmra.mxu0 %v9203
        %v9322 = vpop.f32.mrf.mxu0
        %v9323 = vadd.f32 0.0, %v9322
        %9324 = vdwg.mxu0
        %v9325 = vld [vmem:[%s473] sm:$0xff]
        %v9326 = vld [vmem:[%s473 + $0x8] sm:$0xff]
        %v9327 = vld [vmem:[%s473 + $0x10] sm:$0xff]
        %v9328 = vld [vmem:[%s473 + $0x18] sm:$0xff]
        %v9329 = vld [vmem:[%s473 + $0x20] sm:$0xff]
        %v9330 = vld [vmem:[%s473 + $0x28] sm:$0xff]
        %v9331 = vld [vmem:[%s473 + $0x30] sm:$0xff]
        %v9332 = vld [vmem:[%s473 + $0x38] sm:$0xff]
        %v9333 = vld [vmem:[%s473 + $0x40] sm:$0xff]
        %v9334 = vld [vmem:[%s473 + $0x48] sm:$0xff]
        %v9335 = vld [vmem:[%s473 + $0x50] sm:$0xff]
        %v9336 = vld [vmem:[%s473 + $0x58] sm:$0xff]
        %v9337 = vld [vmem:[%s473 + $0x60] sm:$0xff]
        %v9338 = vld [vmem:[%s473 + $0x68] sm:$0xff]
        %v9339 = vld [vmem:[%s473 + $0x70] sm:$0xff]
        %v9340 = vld [vmem:[%s473 + $0x78] sm:$0xff]
        %v9341 = vld [vmem:[%s473 + $0x80] sm:$0xff]
        %v9342 = vld [vmem:[%s473 + $0x88] sm:$0xff]
        %v9343 = vld [vmem:[%s473 + $0x90] sm:$0xff]
        %v9344 = vld [vmem:[%s473 + $0x98] sm:$0xff]
        %v9345 = vld [vmem:[%s473 + $0xa0] sm:$0xff]
        %v9346 = vld [vmem:[%s473 + $0xa8] sm:$0xff]
        %v9347 = vld [vmem:[%s473 + $0xb0] sm:$0xff]
        %v9348 = vld [vmem:[%s473 + $0xb8] sm:$0xff]
        %v9349 = vld [vmem:[%s473 + $0xc0] sm:$0xff]
        %v9350 = vld [vmem:[%s473 + $0xc8] sm:$0xff]
        %v9351 = vld [vmem:[%s473 + $0xd0] sm:$0xff]
        %v9352 = vld [vmem:[%s473 + $0xd8] sm:$0xff]
        %v9353 = vld [vmem:[%s473 + $0xe0] sm:$0xff]
        %v9354 = vld [vmem:[%s473 + $0xe8] sm:$0xff]
        %v9355 = vld [vmem:[%s473 + $0xf0] sm:$0xff]
        %v9356 = vld [vmem:[%s473 + $0xf8] sm:$0xff]
        %v9357 = vld [vmem:[%s473 + $0x100] sm:$0xff]
        %v9358 = vld [vmem:[%s473 + $0x108] sm:$0xff]
        %v9359 = vld [vmem:[%s473 + $0x110] sm:$0xff]
        %v9360 = vld [vmem:[%s473 + $0x118] sm:$0xff]
        %v9361 = vld [vmem:[%s473 + $0x120] sm:$0xff]
        %v9362 = vld [vmem:[%s473 + $0x128] sm:$0xff]
        %v9363 = vld [vmem:[%s473 + $0x130] sm:$0xff]
        %v9364 = vld [vmem:[%s473 + $0x138] sm:$0xff]
        %v9365 = vld [vmem:[%s473 + $0x140] sm:$0xff]
        %v9366 = vld [vmem:[%s473 + $0x148] sm:$0xff]
        %v9367 = vld [vmem:[%s473 + $0x150] sm:$0xff]
        %v9368 = vld [vmem:[%s473 + $0x158] sm:$0xff]
        %v9369 = vld [vmem:[%s473 + $0x160] sm:$0xff]
        %v9370 = vld [vmem:[%s473 + $0x168] sm:$0xff]
        %v9371 = vld [vmem:[%s473 + $0x170] sm:$0xff]
        %v9372 = vld [vmem:[%s473 + $0x178] sm:$0xff]
        %v9373 = vld [vmem:[%s473 + $0x180] sm:$0xff]
        %v9374 = vld [vmem:[%s473 + $0x188] sm:$0xff]
        %v9375 = vld [vmem:[%s473 + $0x190] sm:$0xff]
        %v9376 = vld [vmem:[%s473 + $0x198] sm:$0xff]
        %v9377 = vld [vmem:[%s473 + $0x1a0] sm:$0xff]
        %v9378 = vld [vmem:[%s473 + $0x1a8] sm:$0xff]
        %v9379 = vld [vmem:[%s473 + $0x1b0] sm:$0xff]
        %v9380 = vld [vmem:[%s473 + $0x1b8] sm:$0xff]
        %v9381 = vld [vmem:[%s473 + $0x1c0] sm:$0xff]
        %v9382 = vld [vmem:[%s473 + $0x1c8] sm:$0xff]
        %v9383 = vld [vmem:[%s473 + $0x1d0] sm:$0xff]
        %v9384 = vld [vmem:[%s473 + $0x1d8] sm:$0xff]
        %v9385 = vld [vmem:[%s473 + $0x1e0] sm:$0xff]
        %v9386 = vld [vmem:[%s473 + $0x1e8] sm:$0xff]
        %v9387 = vld [vmem:[%s473 + $0x1f0] sm:$0xff]
        %v9388 = vld [vmem:[%s473 + $0x1f8] sm:$0xff]
        %v9389 = vld [vmem:[%s473 + $0x200] sm:$0xff]
        %v9390 = vld [vmem:[%s473 + $0x208] sm:$0xff]
        %v9391 = vld [vmem:[%s473 + $0x210] sm:$0xff]
        %v9392 = vld [vmem:[%s473 + $0x218] sm:$0xff]
        %v9393 = vld [vmem:[%s473 + $0x220] sm:$0xff]
        %v9394 = vld [vmem:[%s473 + $0x228] sm:$0xff]
        %v9395 = vld [vmem:[%s473 + $0x230] sm:$0xff]
        %v9396 = vld [vmem:[%s473 + $0x238] sm:$0xff]
        %v9397 = vld [vmem:[%s473 + $0x240] sm:$0xff]
        %v9398 = vld [vmem:[%s473 + $0x248] sm:$0xff]
        %v9399 = vld [vmem:[%s473 + $0x250] sm:$0xff]
        %v9400 = vld [vmem:[%s473 + $0x258] sm:$0xff]
        %v9401 = vld [vmem:[%s473 + $0x260] sm:$0xff]
        %v9402 = vld [vmem:[%s473 + $0x268] sm:$0xff]
        %v9403 = vld [vmem:[%s473 + $0x270] sm:$0xff]
        %v9404 = vld [vmem:[%s473 + $0x278] sm:$0xff]
        %v9405 = vld [vmem:[%s473 + $0x280] sm:$0xff]
        %v9406 = vld [vmem:[%s473 + $0x288] sm:$0xff]
        %v9407 = vld [vmem:[%s473 + $0x290] sm:$0xff]
        %v9408 = vld [vmem:[%s473 + $0x298] sm:$0xff]
        %v9409 = vld [vmem:[%s473 + $0x2a0] sm:$0xff]
        %v9410 = vld [vmem:[%s473 + $0x2a8] sm:$0xff]
        %v9411 = vld [vmem:[%s473 + $0x2b0] sm:$0xff]
        %v9412 = vld [vmem:[%s473 + $0x2b8] sm:$0xff]
        %v9413 = vld [vmem:[%s473 + $0x2c0] sm:$0xff]
        %v9414 = vld [vmem:[%s473 + $0x2c8] sm:$0xff]
        %v9415 = vld [vmem:[%s473 + $0x2d0] sm:$0xff]
        %v9416 = vld [vmem:[%s473 + $0x2d8] sm:$0xff]
        %v9417 = vld [vmem:[%s473 + $0x2e0] sm:$0xff]
        %v9418 = vld [vmem:[%s473 + $0x2e8] sm:$0xff]
        %v9419 = vld [vmem:[%s473 + $0x2f0] sm:$0xff]
        %v9420 = vld [vmem:[%s473 + $0x2f8] sm:$0xff]
        %v9421 = vld [vmem:[%s473 + $0x300] sm:$0xff]
        %v9422 = vld [vmem:[%s473 + $0x308] sm:$0xff]
        %v9423 = vld [vmem:[%s473 + $0x310] sm:$0xff]
        %v9424 = vld [vmem:[%s473 + $0x318] sm:$0xff]
        %v9425 = vld [vmem:[%s473 + $0x320] sm:$0xff]
        %v9426 = vld [vmem:[%s473 + $0x328] sm:$0xff]
        %v9427 = vld [vmem:[%s473 + $0x330] sm:$0xff]
        %v9428 = vld [vmem:[%s473 + $0x338] sm:$0xff]
        %v9429 = vld [vmem:[%s473 + $0x340] sm:$0xff]
        %v9430 = vld [vmem:[%s473 + $0x348] sm:$0xff]
        %v9431 = vld [vmem:[%s473 + $0x350] sm:$0xff]
        %v9432 = vld [vmem:[%s473 + $0x358] sm:$0xff]
        %v9433 = vld [vmem:[%s473 + $0x360] sm:$0xff]
        %v9434 = vld [vmem:[%s473 + $0x368] sm:$0xff]
        %v9435 = vld [vmem:[%s473 + $0x370] sm:$0xff]
        %v9436 = vld [vmem:[%s473 + $0x378] sm:$0xff]
        %v9437 = vld [vmem:[%s473 + $0x380] sm:$0xff]
        %v9438 = vld [vmem:[%s473 + $0x388] sm:$0xff]
        %v9439 = vld [vmem:[%s473 + $0x390] sm:$0xff]
        %v9440 = vld [vmem:[%s473 + $0x398] sm:$0xff]
        %v9441 = vld [vmem:[%s473 + $0x3a0] sm:$0xff]
        %v9442 = vld [vmem:[%s473 + $0x3a8] sm:$0xff]
        %v9443 = vld [vmem:[%s473 + $0x3b0] sm:$0xff]
        %v9444 = vld [vmem:[%s473 + $0x3b8] sm:$0xff]
        %v9445 = vld [vmem:[%s473 + $0x3c0] sm:$0xff]
        %v9446 = vld [vmem:[%s473 + $0x3c8] sm:$0xff]
        %v9447 = vld [vmem:[%s473 + $0x3d0] sm:$0xff]
        %v9448 = vld [vmem:[%s473 + $0x3d8] sm:$0xff]
        %v9449 = vld [vmem:[%s473 + $0x3e0] sm:$0xff]
        %v9450 = vld [vmem:[%s473 + $0x3e8] sm:$0xff]
        %v9451 = vld [vmem:[%s473 + $0x3f0] sm:$0xff]
        %v9452 = vld [vmem:[%s473 + $0x3f8] sm:$0xff]
        %v9453 = vld [vmem:[%s473 + $0x400] sm:$0xff]
        %v9454 = vld [vmem:[%s473 + $0x408] sm:$0xff]
        %v9455 = vld [vmem:[%s473 + $0x410] sm:$0xff]
        %v9456 = vld [vmem:[%s473 + $0x418] sm:$0xff]
        %v9457 = vld [vmem:[%s473 + $0x420] sm:$0xff]
        %v9458 = vld [vmem:[%s473 + $0x428] sm:$0xff]
        %v9459 = vld [vmem:[%s473 + $0x430] sm:$0xff]
        %v9460 = vld [vmem:[%s473 + $0x438] sm:$0xff]
        %v9461 = vld [vmem:[%s473 + $0x440] sm:$0xff]
        %v9462 = vld [vmem:[%s473 + $0x448] sm:$0xff]
        %v9463 = vld [vmem:[%s473 + $0x450] sm:$0xff]
        %v9464 = vld [vmem:[%s473 + $0x458] sm:$0xff]
        %v9465 = vld [vmem:[%s473 + $0x460] sm:$0xff]
        %v9466 = vld [vmem:[%s473 + $0x468] sm:$0xff]
        %v9467 = vld [vmem:[%s473 + $0x470] sm:$0xff]
        %v9468 = vld [vmem:[%s473 + $0x478] sm:$0xff]
        %v9469 = vld [vmem:[%s473 + $0x480] sm:$0xff]
        %v9470 = vld [vmem:[%s473 + $0x488] sm:$0xff]
        %v9471 = vld [vmem:[%s473 + $0x490] sm:$0xff]
        %v9472 = vld [vmem:[%s473 + $0x498] sm:$0xff]
        %v9473 = vld [vmem:[%s473 + $0x4a0] sm:$0xff]
        %v9474 = vld [vmem:[%s473 + $0x4a8] sm:$0xff]
        %v9475 = vld [vmem:[%s473 + $0x4b0] sm:$0xff]
        %v9476 = vld [vmem:[%s473 + $0x4b8] sm:$0xff]
        %v9477 = vld [vmem:[%s473 + $0x4c0] sm:$0xff]
        %v9478 = vld [vmem:[%s473 + $0x4c8] sm:$0xff]
        %v9479 = vld [vmem:[%s473 + $0x4d0] sm:$0xff]
        %v9480 = vld [vmem:[%s473 + $0x4d8] sm:$0xff]
        %v9481 = vld [vmem:[%s473 + $0x4e0] sm:$0xff]
        %v9482 = vld [vmem:[%s473 + $0x4e8] sm:$0xff]
        %v9483 = vld [vmem:[%s473 + $0x4f0] sm:$0xff]
        %v9484 = vld [vmem:[%s473 + $0x4f8] sm:$0xff]
        %v9485 = vld [vmem:[%s473 + $0x500] sm:$0xff]
        %v9486 = vld [vmem:[%s473 + $0x508] sm:$0xff]
        %v9487 = vld [vmem:[%s473 + $0x510] sm:$0xff]
        %v9488 = vld [vmem:[%s473 + $0x518] sm:$0xff]
        %v9489 = vld [vmem:[%s473 + $0x520] sm:$0xff]
        %v9490 = vld [vmem:[%s473 + $0x528] sm:$0xff]
        %v9491 = vld [vmem:[%s473 + $0x530] sm:$0xff]
        %v9492 = vld [vmem:[%s473 + $0x538] sm:$0xff]
        %v9493 = vld [vmem:[%s473 + $0x540] sm:$0xff]
        %v9494 = vld [vmem:[%s473 + $0x548] sm:$0xff]
        %v9495 = vld [vmem:[%s473 + $0x550] sm:$0xff]
        %v9496 = vld [vmem:[%s473 + $0x558] sm:$0xff]
        %v9497 = vld [vmem:[%s473 + $0x560] sm:$0xff]
        %v9498 = vld [vmem:[%s473 + $0x568] sm:$0xff]
        %v9499 = vld [vmem:[%s473 + $0x570] sm:$0xff]
        %v9500 = vld [vmem:[%s473 + $0x578] sm:$0xff]
        %v9501 = vld [vmem:[%s473 + $0x580] sm:$0xff]
        %v9502 = vld [vmem:[%s473 + $0x588] sm:$0xff]
        %v9503 = vld [vmem:[%s473 + $0x590] sm:$0xff]
        %v9504 = vld [vmem:[%s473 + $0x598] sm:$0xff]
        %v9505 = vld [vmem:[%s473 + $0x5a0] sm:$0xff]
        %v9506 = vld [vmem:[%s473 + $0x5a8] sm:$0xff]
        %v9507 = vld [vmem:[%s473 + $0x5b0] sm:$0xff]
        %v9508 = vld [vmem:[%s473 + $0x5b8] sm:$0xff]
        %v9509 = vld [vmem:[%s473 + $0x5c0] sm:$0xff]
        %v9510 = vld [vmem:[%s473 + $0x5c8] sm:$0xff]
        %v9511 = vld [vmem:[%s473 + $0x5d0] sm:$0xff]
        %v9512 = vld [vmem:[%s473 + $0x5d8] sm:$0xff]
        %v9513 = vld [vmem:[%s473 + $0x5e0] sm:$0xff]
        %v9514 = vld [vmem:[%s473 + $0x5e8] sm:$0xff]
        %v9515 = vld [vmem:[%s473 + $0x5f0] sm:$0xff]
        %v9516 = vld [vmem:[%s473 + $0x5f8] sm:$0xff]
        %v9517 = vld [vmem:[%s473 + $0x600] sm:$0xff]
        %v9518 = vld [vmem:[%s473 + $0x608] sm:$0xff]
        %v9519 = vld [vmem:[%s473 + $0x610] sm:$0xff]
        %v9520 = vld [vmem:[%s473 + $0x618] sm:$0xff]
        %v9521 = vld [vmem:[%s473 + $0x620] sm:$0xff]
        %v9522 = vld [vmem:[%s473 + $0x628] sm:$0xff]
        %v9523 = vld [vmem:[%s473 + $0x630] sm:$0xff]
        %v9524 = vld [vmem:[%s473 + $0x638] sm:$0xff]
        %v9525 = vld [vmem:[%s473 + $0x640] sm:$0xff]
        %v9526 = vld [vmem:[%s473 + $0x648] sm:$0xff]
        %v9527 = vld [vmem:[%s473 + $0x650] sm:$0xff]
        %v9528 = vld [vmem:[%s473 + $0x658] sm:$0xff]
        %v9529 = vld [vmem:[%s473 + $0x660] sm:$0xff]
        %v9530 = vld [vmem:[%s473 + $0x668] sm:$0xff]
        %v9531 = vld [vmem:[%s473 + $0x670] sm:$0xff]
        %v9532 = vld [vmem:[%s473 + $0x678] sm:$0xff]
        %v9533 = vld [vmem:[%s473 + $0x680] sm:$0xff]
        %v9534 = vld [vmem:[%s473 + $0x688] sm:$0xff]
        %v9535 = vld [vmem:[%s473 + $0x690] sm:$0xff]
        %v9536 = vld [vmem:[%s473 + $0x698] sm:$0xff]
        %v9537 = vld [vmem:[%s473 + $0x6a0] sm:$0xff]
        %v9538 = vld [vmem:[%s473 + $0x6a8] sm:$0xff]
        %v9539 = vld [vmem:[%s473 + $0x6b0] sm:$0xff]
        %v9540 = vld [vmem:[%s473 + $0x6b8] sm:$0xff]
        %v9541 = vld [vmem:[%s473 + $0x6c0] sm:$0xff]
        %v9542 = vld [vmem:[%s473 + $0x6c8] sm:$0xff]
        %v9543 = vld [vmem:[%s473 + $0x6d0] sm:$0xff]
        %v9544 = vld [vmem:[%s473 + $0x6d8] sm:$0xff]
        %v9545 = vld [vmem:[%s473 + $0x6e0] sm:$0xff]
        %v9546 = vld [vmem:[%s473 + $0x6e8] sm:$0xff]
        %v9547 = vld [vmem:[%s473 + $0x6f0] sm:$0xff]
        %v9548 = vld [vmem:[%s473 + $0x6f8] sm:$0xff]
        %v9549 = vld [vmem:[%s473 + $0x700] sm:$0xff]
        %v9550 = vld [vmem:[%s473 + $0x708] sm:$0xff]
        %v9551 = vld [vmem:[%s473 + $0x710] sm:$0xff]
        %v9552 = vld [vmem:[%s473 + $0x718] sm:$0xff]
        %v9553 = vld [vmem:[%s473 + $0x720] sm:$0xff]
        %v9554 = vld [vmem:[%s473 + $0x728] sm:$0xff]
        %v9555 = vld [vmem:[%s473 + $0x730] sm:$0xff]
        %v9556 = vld [vmem:[%s473 + $0x738] sm:$0xff]
        %v9557 = vld [vmem:[%s473 + $0x740] sm:$0xff]
        %v9558 = vld [vmem:[%s473 + $0x748] sm:$0xff]
        %v9559 = vld [vmem:[%s473 + $0x750] sm:$0xff]
        %v9560 = vld [vmem:[%s473 + $0x758] sm:$0xff]
        %v9561 = vld [vmem:[%s473 + $0x760] sm:$0xff]
        %v9562 = vld [vmem:[%s473 + $0x768] sm:$0xff]
        %v9563 = vld [vmem:[%s473 + $0x770] sm:$0xff]
        %v9564 = vld [vmem:[%s473 + $0x778] sm:$0xff]
        %v9565 = vld [vmem:[%s473 + $0x780] sm:$0xff]
        %v9566 = vld [vmem:[%s473 + $0x788] sm:$0xff]
        %v9567 = vld [vmem:[%s473 + $0x790] sm:$0xff]
        %v9568 = vld [vmem:[%s473 + $0x798] sm:$0xff]
        %v9569 = vld [vmem:[%s473 + $0x7a0] sm:$0xff]
        %v9570 = vld [vmem:[%s473 + $0x7a8] sm:$0xff]
        %v9571 = vld [vmem:[%s473 + $0x7b0] sm:$0xff]
        %v9572 = vld [vmem:[%s473 + $0x7b8] sm:$0xff]
        %v9573 = vld [vmem:[%s473 + $0x7c0] sm:$0xff]
        %v9574 = vld [vmem:[%s473 + $0x7c8] sm:$0xff]
        %v9575 = vld [vmem:[%s473 + $0x7d0] sm:$0xff]
        %v9576 = vld [vmem:[%s473 + $0x7d8] sm:$0xff]
        %v9577 = vld [vmem:[%s473 + $0x7e0] sm:$0xff]
        %v9578 = vld [vmem:[%s473 + $0x7e8] sm:$0xff]
        %v9579 = vld [vmem:[%s473 + $0x7f0] sm:$0xff]
        %v9580 = vld [vmem:[%s473 + $0x7f8] sm:$0xff]
        %v9581 = vld [vmem:[%s473 + $0x800] sm:$0xff]
        %v9582 = vld [vmem:[%s473 + $0x808] sm:$0xff]
        %v9583 = vld [vmem:[%s473 + $0x810] sm:$0xff]
        %v9584 = vld [vmem:[%s473 + $0x818] sm:$0xff]
        %v9585 = vld [vmem:[%s473 + $0x820] sm:$0xff]
        %v9586 = vld [vmem:[%s473 + $0x828] sm:$0xff]
        %v9587 = vld [vmem:[%s473 + $0x830] sm:$0xff]
        %v9588 = vld [vmem:[%s473 + $0x838] sm:$0xff]
        %v9589 = vld [vmem:[%s473 + $0x840] sm:$0xff]
        %v9590 = vld [vmem:[%s473 + $0x848] sm:$0xff]
        %v9591 = vld [vmem:[%s473 + $0x850] sm:$0xff]
        %v9592 = vld [vmem:[%s473 + $0x858] sm:$0xff]
        %v9593 = vld [vmem:[%s473 + $0x860] sm:$0xff]
        %v9594 = vld [vmem:[%s473 + $0x868] sm:$0xff]
        %v9595 = vld [vmem:[%s473 + $0x870] sm:$0xff]
        %v9596 = vld [vmem:[%s473 + $0x878] sm:$0xff]
        %v9597 = vld [vmem:[%s473 + $0x880] sm:$0xff]
        %v9598 = vld [vmem:[%s473 + $0x888] sm:$0xff]
        %v9599 = vld [vmem:[%s473 + $0x890] sm:$0xff]
        %v9600 = vld [vmem:[%s473 + $0x898] sm:$0xff]
        %v9601 = vld [vmem:[%s473 + $0x8a0] sm:$0xff]
        %v9602 = vld [vmem:[%s473 + $0x8a8] sm:$0xff]
        %v9603 = vld [vmem:[%s473 + $0x8b0] sm:$0xff]
        %v9604 = vld [vmem:[%s473 + $0x8b8] sm:$0xff]
        %v9605 = vld [vmem:[%s473 + $0x8c0] sm:$0xff]
        %v9606 = vld [vmem:[%s473 + $0x8c8] sm:$0xff]
        %v9607 = vld [vmem:[%s473 + $0x8d0] sm:$0xff]
        %v9608 = vld [vmem:[%s473 + $0x8d8] sm:$0xff]
        %v9609 = vld [vmem:[%s473 + $0x8e0] sm:$0xff]
        %v9610 = vld [vmem:[%s473 + $0x8e8] sm:$0xff]
        %v9611 = vld [vmem:[%s473 + $0x8f0] sm:$0xff]
        %v9612 = vld [vmem:[%s473 + $0x8f8] sm:$0xff]
        %v9613 = vpack.c.bf16 %v9101, %v9101
        %v9614 = vpack.c.bf16 %v9121, %v9121
        %v9615 = vpack.c.bf16 %v9141, %v9141
        %v9616 = vpack.c.bf16 %v9161, %v9161
        %v9617 = vpack.c.bf16 %v9181, %v9181
        %v9618 = vpack.c.bf16 %v9201, %v9201
        %v9619 = vpack.c.bf16 %v9223, %v9223
        %v9620 = vpack.c.bf16 %v9243, %v9243
        %v9621 = vpack.c.bf16 %v9263, %v9263
        %v9622 = vpack.c.bf16 %v9283, %v9283
        %v9623 = vpack.c.bf16 %v9303, %v9303
        %v9624 = vpack.c.bf16 %v9323, %v9323
        %v9625 = vperm.slane %v551, 4
        %v9626 = vperm.slane %v552, 4
        %v9627 = vperm.slane %v553, 4
        %v9628 = vperm.slane %v554, 4
        %v9629 = vperm.slane %v555, 4
        %v9630 = vperm.slane %v556, 4
        %v9643 = vunpack.c.l.b16 %v9613
        %v9644 = vunpack.c.l.b16 %v9614
        %v9645 = vunpack.c.l.b16 %v9615
        %v9646 = vunpack.c.l.b16 %v9616
        %v9647 = vunpack.c.l.b16 %v9617
        %v9648 = vunpack.c.l.b16 %v9618
        %v9649 = vunpack.c.l.b16 %v9619
        %v9650 = vunpack.c.l.b16 %v9620
        %v9651 = vunpack.c.l.b16 %v9621
        %v9652 = vunpack.c.l.b16 %v9622
        %v9653 = vunpack.c.l.b16 %v9623
        %v9654 = vunpack.c.l.b16 %v9624
        %v9655 = vrot.slane %v9649, 7
        %v9656 = vsel %vm8782, %v9655, %v9643
        %v9657 = vrot.slane %v9650, 7
        %v9658 = vsel %vm8782, %v9657, %v9644
        %v9659 = vrot.slane %v9651, 7
        %v9660 = vsel %vm8782, %v9659, %v9645
        %v9661 = vrot.slane %v9652, 7
        %v9662 = vsel %vm8782, %v9661, %v9646
        %v9663 = vrot.slane %v9653, 7
        %v9664 = vsel %vm8782, %v9663, %v9647
        %v9665 = vrot.slane %v9654, 7
        %v9666 = vsel %vm8782, %v9665, %v9648
        %v9667 = vpack.c.b16 %v9656, %v9656
        %v9668 = vpack.c.b16 %v9658, %v9658
        %v9669 = vpack.c.b16 %v9660, %v9660
        %v9670 = vpack.c.b16 %v9662, %v9662
        %v9671 = vpack.c.b16 %v9664, %v9664
        %v9672 = vpack.c.b16 %v9666, %v9666
        %v9967 = vunpack.c.l.b16 %v9325
        %v9968 = vunpack.c.h.b16 %v9325
        %v9969 = vunpack.c.l.b16 %v9326
        %v9970 = vunpack.c.h.b16 %v9326
        %v9971 = vunpack.c.l.b16 %v9327
        %v9972 = vunpack.c.h.b16 %v9327
        %v9973 = vunpack.c.l.b16 %v9328
        %v9974 = vunpack.c.h.b16 %v9328
        %v9975 = vunpack.c.l.b16 %v9329
        %v9976 = vunpack.c.h.b16 %v9329
        %v9977 = vunpack.c.l.b16 %v9330
        %v9978 = vunpack.c.h.b16 %v9330
        %v9979 = vunpack.c.l.b16 %v9331
        %v9980 = vunpack.c.h.b16 %v9331
        %v9981 = vunpack.c.l.b16 %v9332
        %v9982 = vunpack.c.h.b16 %v9332
        %v9983 = vunpack.c.l.b16 %v9333
        %v9984 = vunpack.c.h.b16 %v9333
        %v9985 = vunpack.c.l.b16 %v9334
        %v9986 = vunpack.c.h.b16 %v9334
        %v9987 = vunpack.c.l.b16 %v9335
        %v9988 = vunpack.c.h.b16 %v9335
        %v9989 = vunpack.c.l.b16 %v9336
        %v9990 = vunpack.c.h.b16 %v9336
        %v9991 = vunpack.c.l.b16 %v9337
        %v9992 = vunpack.c.h.b16 %v9337
        %v9993 = vunpack.c.l.b16 %v9338
        %v9994 = vunpack.c.h.b16 %v9338
        %v9995 = vunpack.c.l.b16 %v9339
        %v9996 = vunpack.c.h.b16 %v9339
        %v9997 = vunpack.c.l.b16 %v9340
        %v9998 = vunpack.c.h.b16 %v9340
        %v9999 = vunpack.c.l.b16 %v9341
        %v10000 = vunpack.c.h.b16 %v9341
        %v10001 = vunpack.c.l.b16 %v9342
        %v10002 = vunpack.c.h.b16 %v9342
        %v10003 = vunpack.c.l.b16 %v9343
        %v10004 = vunpack.c.h.b16 %v9343
        %v10005 = vunpack.c.l.b16 %v9344
        %v10006 = vunpack.c.h.b16 %v9344
        %v10007 = vunpack.c.l.b16 %v9345
        %v10008 = vunpack.c.h.b16 %v9345
        %v10009 = vunpack.c.l.b16 %v9346
        %v10010 = vunpack.c.h.b16 %v9346
        %v10011 = vunpack.c.l.b16 %v9347
        %v10012 = vunpack.c.h.b16 %v9347
        %v10013 = vunpack.c.l.b16 %v9348
        %v10014 = vunpack.c.h.b16 %v9348
        %v10015 = vunpack.c.l.b16 %v9349
        %v10016 = vunpack.c.h.b16 %v9349
        %v10017 = vunpack.c.l.b16 %v9350
        %v10018 = vunpack.c.h.b16 %v9350
        %v10019 = vunpack.c.l.b16 %v9351
        %v10020 = vunpack.c.h.b16 %v9351
        %v10021 = vunpack.c.l.b16 %v9352
        %v10022 = vunpack.c.h.b16 %v9352
        %v10023 = vunpack.c.l.b16 %v9353
        %v10024 = vunpack.c.h.b16 %v9353
        %v10025 = vunpack.c.l.b16 %v9354
        %v10026 = vunpack.c.h.b16 %v9354
        %v10027 = vunpack.c.l.b16 %v9355
        %v10028 = vunpack.c.h.b16 %v9355
        %v10029 = vunpack.c.l.b16 %v9356
        %v10030 = vunpack.c.h.b16 %v9356
        %v10031 = vunpack.c.l.b16 %v9357
        %v10032 = vunpack.c.h.b16 %v9357
        %v10033 = vunpack.c.l.b16 %v9358
        %v10034 = vunpack.c.h.b16 %v9358
        %v10035 = vunpack.c.l.b16 %v9359
        %v10036 = vunpack.c.h.b16 %v9359
        %v10037 = vunpack.c.l.b16 %v9360
        %v10038 = vunpack.c.h.b16 %v9360
        %v10039 = vunpack.c.l.b16 %v9361
        %v10040 = vunpack.c.h.b16 %v9361
        %v10041 = vunpack.c.l.b16 %v9362
        %v10042 = vunpack.c.h.b16 %v9362
        %v10043 = vunpack.c.l.b16 %v9363
        %v10044 = vunpack.c.h.b16 %v9363
        %v10045 = vunpack.c.l.b16 %v9364
        %v10046 = vunpack.c.h.b16 %v9364
        %v10047 = vunpack.c.l.b16 %v9365
        %v10048 = vunpack.c.h.b16 %v9365
        %v10049 = vunpack.c.l.b16 %v9366
        %v10050 = vunpack.c.h.b16 %v9366
        %v10051 = vunpack.c.l.b16 %v9367
        %v10052 = vunpack.c.h.b16 %v9367
        %v10053 = vunpack.c.l.b16 %v9368
        %v10054 = vunpack.c.h.b16 %v9368
        %v10055 = vunpack.c.l.b16 %v9369
        %v10056 = vunpack.c.h.b16 %v9369
        %v10057 = vunpack.c.l.b16 %v9370
        %v10058 = vunpack.c.h.b16 %v9370
        %v10059 = vunpack.c.l.b16 %v9371
        %v10060 = vunpack.c.h.b16 %v9371
        %v10061 = vunpack.c.l.b16 %v9372
        %v10062 = vunpack.c.h.b16 %v9372
        %v10063 = vunpack.c.l.b16 %v9373
        %v10064 = vunpack.c.h.b16 %v9373
        %v10065 = vunpack.c.l.b16 %v9374
        %v10066 = vunpack.c.h.b16 %v9374
        %v10067 = vunpack.c.l.b16 %v9375
        %v10068 = vunpack.c.h.b16 %v9375
        %v10069 = vunpack.c.l.b16 %v9376
        %v10070 = vunpack.c.h.b16 %v9376
        %v10071 = vunpack.c.l.b16 %v9377
        %v10072 = vunpack.c.h.b16 %v9377
        %v10073 = vunpack.c.l.b16 %v9378
        %v10074 = vunpack.c.h.b16 %v9378
        %v10075 = vunpack.c.l.b16 %v9379
        %v10076 = vunpack.c.h.b16 %v9379
        %v10077 = vunpack.c.l.b16 %v9380
        %v10078 = vunpack.c.h.b16 %v9380
        %v10079 = vunpack.c.l.b16 %v9381
        %v10080 = vunpack.c.h.b16 %v9381
        %v10081 = vunpack.c.l.b16 %v9382
        %v10082 = vunpack.c.h.b16 %v9382
        %v10083 = vunpack.c.l.b16 %v9383
        %v10084 = vunpack.c.h.b16 %v9383
        %v10085 = vunpack.c.l.b16 %v9384
        %v10086 = vunpack.c.h.b16 %v9384
        %v10087 = vunpack.c.l.b16 %v9385
        %v10088 = vunpack.c.h.b16 %v9385
        %v10089 = vunpack.c.l.b16 %v9386
        %v10090 = vunpack.c.h.b16 %v9386
        %v10091 = vunpack.c.l.b16 %v9387
        %v10092 = vunpack.c.h.b16 %v9387
        %v10093 = vunpack.c.l.b16 %v9388
        %v10094 = vunpack.c.h.b16 %v9388
        %v10095 = vunpack.c.l.b16 %v9389
        %v10096 = vunpack.c.h.b16 %v9389
        %v10097 = vunpack.c.l.b16 %v9390
        %v10098 = vunpack.c.h.b16 %v9390
        %v10099 = vunpack.c.l.b16 %v9391
        %v10100 = vunpack.c.h.b16 %v9391
        %v10101 = vunpack.c.l.b16 %v9392
        %v10102 = vunpack.c.h.b16 %v9392
        %v10103 = vunpack.c.l.b16 %v9393
        %v10104 = vunpack.c.h.b16 %v9393
        %v10105 = vunpack.c.l.b16 %v9394
        %v10106 = vunpack.c.h.b16 %v9394
        %v10107 = vunpack.c.l.b16 %v9395
        %v10108 = vunpack.c.h.b16 %v9395
        %v10109 = vunpack.c.l.b16 %v9396
        %v10110 = vunpack.c.h.b16 %v9396
        %v10111 = vunpack.c.l.b16 %v9397
        %v10112 = vunpack.c.h.b16 %v9397
        %v10113 = vunpack.c.l.b16 %v9398
        %v10114 = vunpack.c.h.b16 %v9398
        %v10115 = vunpack.c.l.b16 %v9399
        %v10116 = vunpack.c.h.b16 %v9399
        %v10117 = vunpack.c.l.b16 %v9400
        %v10118 = vunpack.c.h.b16 %v9400
        %v10119 = vunpack.c.l.b16 %v9401
        %v10120 = vunpack.c.h.b16 %v9401
        %v10121 = vunpack.c.l.b16 %v9402
        %v10122 = vunpack.c.h.b16 %v9402
        %v10123 = vunpack.c.l.b16 %v9403
        %v10124 = vunpack.c.h.b16 %v9403
        %v10125 = vunpack.c.l.b16 %v9404
        %v10126 = vunpack.c.h.b16 %v9404
        %v10127 = vunpack.c.l.b16 %v9405
        %v10128 = vunpack.c.h.b16 %v9405
        %v10129 = vunpack.c.l.b16 %v9406
        %v10130 = vunpack.c.h.b16 %v9406
        %v10131 = vunpack.c.l.b16 %v9407
        %v10132 = vunpack.c.h.b16 %v9407
        %v10133 = vunpack.c.l.b16 %v9408
        %v10134 = vunpack.c.h.b16 %v9408
        %v10135 = vunpack.c.l.b16 %v9409
        %v10136 = vunpack.c.h.b16 %v9409
        %v10137 = vunpack.c.l.b16 %v9410
        %v10138 = vunpack.c.h.b16 %v9410
        %v10139 = vunpack.c.l.b16 %v9411
        %v10140 = vunpack.c.h.b16 %v9411
        %v10141 = vunpack.c.l.b16 %v9412
        %v10142 = vunpack.c.h.b16 %v9412
        %v10143 = vunpack.c.l.b16 %v9413
        %v10144 = vunpack.c.h.b16 %v9413
        %v10145 = vunpack.c.l.b16 %v9414
        %v10146 = vunpack.c.h.b16 %v9414
        %v10147 = vunpack.c.l.b16 %v9415
        %v10148 = vunpack.c.h.b16 %v9415
        %v10149 = vunpack.c.l.b16 %v9416
        %v10150 = vunpack.c.h.b16 %v9416
        %v10151 = vunpack.c.l.b16 %v9417
        %v10152 = vunpack.c.h.b16 %v9417
        %v10153 = vunpack.c.l.b16 %v9418
        %v10154 = vunpack.c.h.b16 %v9418
        %v10155 = vunpack.c.l.b16 %v9419
        %v10156 = vunpack.c.h.b16 %v9419
        %v10157 = vunpack.c.l.b16 %v9420
        %v10158 = vunpack.c.h.b16 %v9420
        %v10159 = vunpack.c.l.b16 %v9421
        %v10160 = vunpack.c.h.b16 %v9421
        %v10161 = vunpack.c.l.b16 %v9422
        %v10162 = vunpack.c.h.b16 %v9422
        %v10163 = vunpack.c.l.b16 %v9423
        %v10164 = vunpack.c.h.b16 %v9423
        %v10165 = vunpack.c.l.b16 %v9424
        %v10166 = vunpack.c.h.b16 %v9424
        %v10167 = vunpack.c.l.b16 %v9425
        %v10168 = vunpack.c.h.b16 %v9425
        %v10169 = vunpack.c.l.b16 %v9426
        %v10170 = vunpack.c.h.b16 %v9426
        %v10171 = vunpack.c.l.b16 %v9427
        %v10172 = vunpack.c.h.b16 %v9427
        %v10173 = vunpack.c.l.b16 %v9428
        %v10174 = vunpack.c.h.b16 %v9428
        %v10175 = vunpack.c.l.b16 %v9429
        %v10176 = vunpack.c.h.b16 %v9429
        %v10177 = vunpack.c.l.b16 %v9430
        %v10178 = vunpack.c.h.b16 %v9430
        %v10179 = vunpack.c.l.b16 %v9431
        %v10180 = vunpack.c.h.b16 %v9431
        %v10181 = vunpack.c.l.b16 %v9432
        %v10182 = vunpack.c.h.b16 %v9432
        %v10183 = vunpack.c.l.b16 %v9433
        %v10184 = vunpack.c.h.b16 %v9433
        %v10185 = vunpack.c.l.b16 %v9434
        %v10186 = vunpack.c.h.b16 %v9434
        %v10187 = vunpack.c.l.b16 %v9435
        %v10188 = vunpack.c.h.b16 %v9435
        %v10189 = vunpack.c.l.b16 %v9436
        %v10190 = vunpack.c.h.b16 %v9436
        %v10191 = vunpack.c.l.b16 %v9437
        %v10192 = vunpack.c.h.b16 %v9437
        %v10193 = vunpack.c.l.b16 %v9438
        %v10194 = vunpack.c.h.b16 %v9438
        %v10195 = vunpack.c.l.b16 %v9439
        %v10196 = vunpack.c.h.b16 %v9439
        %v10197 = vunpack.c.l.b16 %v9440
        %v10198 = vunpack.c.h.b16 %v9440
        %v10199 = vunpack.c.l.b16 %v9441
        %v10200 = vunpack.c.h.b16 %v9441
        %v10201 = vunpack.c.l.b16 %v9442
        %v10202 = vunpack.c.h.b16 %v9442
        %v10203 = vunpack.c.l.b16 %v9443
        %v10204 = vunpack.c.h.b16 %v9443
        %v10205 = vunpack.c.l.b16 %v9444
        %v10206 = vunpack.c.h.b16 %v9444
        %v10207 = vunpack.c.l.b16 %v9445
        %v10208 = vunpack.c.h.b16 %v9445
        %v10209 = vunpack.c.l.b16 %v9446
        %v10210 = vunpack.c.h.b16 %v9446
        %v10211 = vunpack.c.l.b16 %v9447
        %v10212 = vunpack.c.h.b16 %v9447
        %v10213 = vunpack.c.l.b16 %v9448
        %v10214 = vunpack.c.h.b16 %v9448
        %v10215 = vunpack.c.l.b16 %v9449
        %v10216 = vunpack.c.h.b16 %v9449
        %v10217 = vunpack.c.l.b16 %v9450
        %v10218 = vunpack.c.h.b16 %v9450
        %v10219 = vunpack.c.l.b16 %v9451
        %v10220 = vunpack.c.h.b16 %v9451
        %v10221 = vunpack.c.l.b16 %v9452
        %v10222 = vunpack.c.h.b16 %v9452
        %v10223 = vunpack.c.l.b16 %v9453
        %v10224 = vunpack.c.h.b16 %v9453
        %v10225 = vunpack.c.l.b16 %v9454
        %v10226 = vunpack.c.h.b16 %v9454
        %v10227 = vunpack.c.l.b16 %v9455
        %v10228 = vunpack.c.h.b16 %v9455
        %v10229 = vunpack.c.l.b16 %v9456
        %v10230 = vunpack.c.h.b16 %v9456
        %v10231 = vunpack.c.l.b16 %v9457
        %v10232 = vunpack.c.h.b16 %v9457
        %v10233 = vunpack.c.l.b16 %v9458
        %v10234 = vunpack.c.h.b16 %v9458
        %v10235 = vunpack.c.l.b16 %v9459
        %v10236 = vunpack.c.h.b16 %v9459
        %v10237 = vunpack.c.l.b16 %v9460
        %v10238 = vunpack.c.h.b16 %v9460
        %v10239 = vunpack.c.l.b16 %v9461
        %v10240 = vunpack.c.h.b16 %v9461
        %v10241 = vunpack.c.l.b16 %v9462
        %v10242 = vunpack.c.h.b16 %v9462
        %v10243 = vunpack.c.l.b16 %v9463
        %v10244 = vunpack.c.h.b16 %v9463
        %v10245 = vunpack.c.l.b16 %v9464
        %v10246 = vunpack.c.h.b16 %v9464
        %v10247 = vunpack.c.l.b16 %v9465
        %v10248 = vunpack.c.h.b16 %v9465
        %v10249 = vunpack.c.l.b16 %v9466
        %v10250 = vunpack.c.h.b16 %v9466
        %v10251 = vunpack.c.l.b16 %v9467
        %v10252 = vunpack.c.h.b16 %v9467
        %v10253 = vunpack.c.l.b16 %v9468
        %v10254 = vunpack.c.h.b16 %v9468
        %v10255 = vunpack.c.l.b16 %v9469
        %v10256 = vunpack.c.h.b16 %v9469
        %v10257 = vunpack.c.l.b16 %v9470
        %v10258 = vunpack.c.h.b16 %v9470
        %v10259 = vunpack.c.l.b16 %v9471
        %v10260 = vunpack.c.h.b16 %v9471
        %v10261 = vunpack.c.l.b16 %v9472
        %v10262 = vunpack.c.h.b16 %v9472
        %v10263 = vunpack.c.l.b16 %v9473
        %v10264 = vunpack.c.h.b16 %v9473
        %v10265 = vunpack.c.l.b16 %v9474
        %v10266 = vunpack.c.h.b16 %v9474
        %v10267 = vunpack.c.l.b16 %v9475
        %v10268 = vunpack.c.h.b16 %v9475
        %v10269 = vunpack.c.l.b16 %v9476
        %v10270 = vunpack.c.h.b16 %v9476
        %v10271 = vunpack.c.l.b16 %v9477
        %v10272 = vunpack.c.h.b16 %v9477
        %v10273 = vunpack.c.l.b16 %v9478
        %v10274 = vunpack.c.h.b16 %v9478
        %v10275 = vunpack.c.l.b16 %v9479
        %v10276 = vunpack.c.h.b16 %v9479
        %v10277 = vunpack.c.l.b16 %v9480
        %v10278 = vunpack.c.h.b16 %v9480
        %v10279 = vunpack.c.l.b16 %v9481
        %v10280 = vunpack.c.h.b16 %v9481
        %v10281 = vunpack.c.l.b16 %v9482
        %v10282 = vunpack.c.h.b16 %v9482
        %v10283 = vunpack.c.l.b16 %v9483
        %v10284 = vunpack.c.h.b16 %v9483
        %v10285 = vunpack.c.l.b16 %v9484
        %v10286 = vunpack.c.h.b16 %v9484
        %v10287 = vunpack.c.l.b16 %v9485
        %v10288 = vunpack.c.h.b16 %v9485
        %v10289 = vunpack.c.l.b16 %v9486
        %v10290 = vunpack.c.h.b16 %v9486
        %v10291 = vunpack.c.l.b16 %v9487
        %v10292 = vunpack.c.h.b16 %v9487
        %v10293 = vunpack.c.l.b16 %v9488
        %v10294 = vunpack.c.h.b16 %v9488
        %v10295 = vunpack.c.l.b16 %v9489
        %v10296 = vunpack.c.h.b16 %v9489
        %v10297 = vunpack.c.l.b16 %v9490
        %v10298 = vunpack.c.h.b16 %v9490
        %v10299 = vunpack.c.l.b16 %v9491
        %v10300 = vunpack.c.h.b16 %v9491
        %v10301 = vunpack.c.l.b16 %v9492
        %v10302 = vunpack.c.h.b16 %v9492
        %v10303 = vunpack.c.l.b16 %v9493
        %v10304 = vunpack.c.h.b16 %v9493
        %v10305 = vunpack.c.l.b16 %v9494
        %v10306 = vunpack.c.h.b16 %v9494
        %v10307 = vunpack.c.l.b16 %v9495
        %v10308 = vunpack.c.h.b16 %v9495
        %v10309 = vunpack.c.l.b16 %v9496
        %v10310 = vunpack.c.h.b16 %v9496
        %v10311 = vunpack.c.l.b16 %v9497
        %v10312 = vunpack.c.h.b16 %v9497
        %v10313 = vunpack.c.l.b16 %v9498
        %v10314 = vunpack.c.h.b16 %v9498
        %v10315 = vunpack.c.l.b16 %v9499
        %v10316 = vunpack.c.h.b16 %v9499
        %v10317 = vunpack.c.l.b16 %v9500
        %v10318 = vunpack.c.h.b16 %v9500
        %v10319 = vunpack.c.l.b16 %v9501
        %v10320 = vunpack.c.h.b16 %v9501
        %v10321 = vunpack.c.l.b16 %v9502
        %v10322 = vunpack.c.h.b16 %v9502
        %v10323 = vunpack.c.l.b16 %v9503
        %v10324 = vunpack.c.h.b16 %v9503
        %v10325 = vunpack.c.l.b16 %v9504
        %v10326 = vunpack.c.h.b16 %v9504
        %v10327 = vunpack.c.l.b16 %v9505
        %v10328 = vunpack.c.h.b16 %v9505
        %v10329 = vunpack.c.l.b16 %v9506
        %v10330 = vunpack.c.h.b16 %v9506
        %v10331 = vunpack.c.l.b16 %v9507
        %v10332 = vunpack.c.h.b16 %v9507
        %v10333 = vunpack.c.l.b16 %v9508
        %v10334 = vunpack.c.h.b16 %v9508
        %v10335 = vunpack.c.l.b16 %v9509
        %v10336 = vunpack.c.h.b16 %v9509
        %v10337 = vunpack.c.l.b16 %v9510
        %v10338 = vunpack.c.h.b16 %v9510
        %v10339 = vunpack.c.l.b16 %v9511
        %v10340 = vunpack.c.h.b16 %v9511
        %v10341 = vunpack.c.l.b16 %v9512
        %v10342 = vunpack.c.h.b16 %v9512
        %v10343 = vunpack.c.l.b16 %v9513
        %v10344 = vunpack.c.h.b16 %v9513
        %v10345 = vunpack.c.l.b16 %v9514
        %v10346 = vunpack.c.h.b16 %v9514
        %v10347 = vunpack.c.l.b16 %v9515
        %v10348 = vunpack.c.h.b16 %v9515
        %v10349 = vunpack.c.l.b16 %v9516
        %v10350 = vunpack.c.h.b16 %v9516
        %v10351 = vunpack.c.l.b16 %v9517
        %v10352 = vunpack.c.h.b16 %v9517
        %v10353 = vunpack.c.l.b16 %v9518
        %v10354 = vunpack.c.h.b16 %v9518
        %v10355 = vunpack.c.l.b16 %v9519
        %v10356 = vunpack.c.h.b16 %v9519
        %v10357 = vunpack.c.l.b16 %v9520
        %v10358 = vunpack.c.h.b16 %v9520
        %v10359 = vunpack.c.l.b16 %v9521
        %v10360 = vunpack.c.h.b16 %v9521
        %v10361 = vunpack.c.l.b16 %v9522
        %v10362 = vunpack.c.h.b16 %v9522
        %v10363 = vunpack.c.l.b16 %v9523
        %v10364 = vunpack.c.h.b16 %v9523
        %v10365 = vunpack.c.l.b16 %v9524
        %v10366 = vunpack.c.h.b16 %v9524
        %v10367 = vunpack.c.l.b16 %v9525
        %v10368 = vunpack.c.h.b16 %v9525
        %v10369 = vunpack.c.l.b16 %v9526
        %v10370 = vunpack.c.h.b16 %v9526
        %v10371 = vunpack.c.l.b16 %v9527
        %v10372 = vunpack.c.h.b16 %v9527
        %v10373 = vunpack.c.l.b16 %v9528
        %v10374 = vunpack.c.h.b16 %v9528
        %v10375 = vunpack.c.l.b16 %v9529
        %v10376 = vunpack.c.h.b16 %v9529
        %v10377 = vunpack.c.l.b16 %v9530
        %v10378 = vunpack.c.h.b16 %v9530
        %v10379 = vunpack.c.l.b16 %v9531
        %v10380 = vunpack.c.h.b16 %v9531
        %v10381 = vunpack.c.l.b16 %v9532
        %v10382 = vunpack.c.h.b16 %v9532
        %v10383 = vunpack.c.l.b16 %v9533
        %v10384 = vunpack.c.h.b16 %v9533
        %v10385 = vunpack.c.l.b16 %v9534
        %v10386 = vunpack.c.h.b16 %v9534
        %v10387 = vunpack.c.l.b16 %v9535
        %v10388 = vunpack.c.h.b16 %v9535
        %v10389 = vunpack.c.l.b16 %v9536
        %v10390 = vunpack.c.h.b16 %v9536
        %v10391 = vunpack.c.l.b16 %v9537
        %v10392 = vunpack.c.h.b16 %v9537
        %v10393 = vunpack.c.l.b16 %v9538
        %v10394 = vunpack.c.h.b16 %v9538
        %v10395 = vunpack.c.l.b16 %v9539
        %v10396 = vunpack.c.h.b16 %v9539
        %v10397 = vunpack.c.l.b16 %v9540
        %v10398 = vunpack.c.h.b16 %v9540
        %v10399 = vunpack.c.l.b16 %v9541
        %v10400 = vunpack.c.h.b16 %v9541
        %v10401 = vunpack.c.l.b16 %v9542
        %v10402 = vunpack.c.h.b16 %v9542
        %v10403 = vunpack.c.l.b16 %v9543
        %v10404 = vunpack.c.h.b16 %v9543
        %v10405 = vunpack.c.l.b16 %v9544
        %v10406 = vunpack.c.h.b16 %v9544
        %v10407 = vunpack.c.l.b16 %v9545
        %v10408 = vunpack.c.h.b16 %v9545
        %v10409 = vunpack.c.l.b16 %v9546
        %v10410 = vunpack.c.h.b16 %v9546
        %v10411 = vunpack.c.l.b16 %v9547
        %v10412 = vunpack.c.h.b16 %v9547
        %v10413 = vunpack.c.l.b16 %v9548
        %v10414 = vunpack.c.h.b16 %v9548
        %v10415 = vunpack.c.l.b16 %v9549
        %v10416 = vunpack.c.h.b16 %v9549
        %v10417 = vunpack.c.l.b16 %v9550
        %v10418 = vunpack.c.h.b16 %v9550
        %v10419 = vunpack.c.l.b16 %v9551
        %v10420 = vunpack.c.h.b16 %v9551
        %v10421 = vunpack.c.l.b16 %v9552
        %v10422 = vunpack.c.h.b16 %v9552
        %v10423 = vunpack.c.l.b16 %v9553
        %v10424 = vunpack.c.h.b16 %v9553
        %v10425 = vunpack.c.l.b16 %v9554
        %v10426 = vunpack.c.h.b16 %v9554
        %v10427 = vunpack.c.l.b16 %v9555
        %v10428 = vunpack.c.h.b16 %v9555
        %v10429 = vunpack.c.l.b16 %v9556
        %v10430 = vunpack.c.h.b16 %v9556
        %v10431 = vunpack.c.l.b16 %v9557
        %v10432 = vunpack.c.h.b16 %v9557
        %v10433 = vunpack.c.l.b16 %v9558
        %v10434 = vunpack.c.h.b16 %v9558
        %v10435 = vunpack.c.l.b16 %v9559
        %v10436 = vunpack.c.h.b16 %v9559
        %v10437 = vunpack.c.l.b16 %v9560
        %v10438 = vunpack.c.h.b16 %v9560
        %v10439 = vunpack.c.l.b16 %v9561
        %v10440 = vunpack.c.h.b16 %v9561
        %v10441 = vunpack.c.l.b16 %v9562
        %v10442 = vunpack.c.h.b16 %v9562
        %v10443 = vunpack.c.l.b16 %v9563
        %v10444 = vunpack.c.h.b16 %v9563
        %v10445 = vunpack.c.l.b16 %v9564
        %v10446 = vunpack.c.h.b16 %v9564
        %v10447 = vunpack.c.l.b16 %v9565
        %v10448 = vunpack.c.h.b16 %v9565
        %v10449 = vunpack.c.l.b16 %v9566
        %v10450 = vunpack.c.h.b16 %v9566
        %v10451 = vunpack.c.l.b16 %v9567
        %v10452 = vunpack.c.h.b16 %v9567
        %v10453 = vunpack.c.l.b16 %v9568
        %v10454 = vunpack.c.h.b16 %v9568
        %v10455 = vunpack.c.l.b16 %v9569
        %v10456 = vunpack.c.h.b16 %v9569
        %v10457 = vunpack.c.l.b16 %v9570
        %v10458 = vunpack.c.h.b16 %v9570
        %v10459 = vunpack.c.l.b16 %v9571
        %v10460 = vunpack.c.h.b16 %v9571
        %v10461 = vunpack.c.l.b16 %v9572
        %v10462 = vunpack.c.h.b16 %v9572
        %v10463 = vunpack.c.l.b16 %v9573
        %v10464 = vunpack.c.h.b16 %v9573
        %v10465 = vunpack.c.l.b16 %v9574
        %v10466 = vunpack.c.h.b16 %v9574
        %v10467 = vunpack.c.l.b16 %v9575
        %v10468 = vunpack.c.h.b16 %v9575
        %v10469 = vunpack.c.l.b16 %v9576
        %v10470 = vunpack.c.h.b16 %v9576
        %v10471 = vunpack.c.l.b16 %v9577
        %v10472 = vunpack.c.h.b16 %v9577
        %v10473 = vunpack.c.l.b16 %v9578
        %v10474 = vunpack.c.h.b16 %v9578
        %v10475 = vunpack.c.l.b16 %v9579
        %v10476 = vunpack.c.h.b16 %v9579
        %v10477 = vunpack.c.l.b16 %v9580
        %v10478 = vunpack.c.h.b16 %v9580
        %v10479 = vunpack.c.l.b16 %v9581
        %v10480 = vunpack.c.h.b16 %v9581
        %v10481 = vunpack.c.l.b16 %v9582
        %v10482 = vunpack.c.h.b16 %v9582
        %v10483 = vunpack.c.l.b16 %v9583
        %v10484 = vunpack.c.h.b16 %v9583
        %v10485 = vunpack.c.l.b16 %v9584
        %v10486 = vunpack.c.h.b16 %v9584
        %v10487 = vunpack.c.l.b16 %v9585
        %v10488 = vunpack.c.h.b16 %v9585
        %v10489 = vunpack.c.l.b16 %v9586
        %v10490 = vunpack.c.h.b16 %v9586
        %v10491 = vunpack.c.l.b16 %v9587
        %v10492 = vunpack.c.h.b16 %v9587
        %v10493 = vunpack.c.l.b16 %v9588
        %v10494 = vunpack.c.h.b16 %v9588
        %v10495 = vunpack.c.l.b16 %v9589
        %v10496 = vunpack.c.h.b16 %v9589
        %v10497 = vunpack.c.l.b16 %v9590
        %v10498 = vunpack.c.h.b16 %v9590
        %v10499 = vunpack.c.l.b16 %v9591
        %v10500 = vunpack.c.h.b16 %v9591
        %v10501 = vunpack.c.l.b16 %v9592
        %v10502 = vunpack.c.h.b16 %v9592
        %v10503 = vunpack.c.l.b16 %v9593
        %v10504 = vunpack.c.h.b16 %v9593
        %v10505 = vunpack.c.l.b16 %v9594
        %v10506 = vunpack.c.h.b16 %v9594
        %v10507 = vunpack.c.l.b16 %v9595
        %v10508 = vunpack.c.h.b16 %v9595
        %v10509 = vunpack.c.l.b16 %v9596
        %v10510 = vunpack.c.h.b16 %v9596
        %v10511 = vunpack.c.l.b16 %v9597
        %v10512 = vunpack.c.h.b16 %v9597
        %v10513 = vunpack.c.l.b16 %v9598
        %v10514 = vunpack.c.h.b16 %v9598
        %v10515 = vunpack.c.l.b16 %v9599
        %v10516 = vunpack.c.h.b16 %v9599
        %v10517 = vunpack.c.l.b16 %v9600
        %v10518 = vunpack.c.h.b16 %v9600
        %v10519 = vunpack.c.l.b16 %v9601
        %v10520 = vunpack.c.h.b16 %v9601
        %v10521 = vunpack.c.l.b16 %v9602
        %v10522 = vunpack.c.h.b16 %v9602
        %v10523 = vunpack.c.l.b16 %v9603
        %v10524 = vunpack.c.h.b16 %v9603
        %v10525 = vunpack.c.l.b16 %v9604
        %v10526 = vunpack.c.h.b16 %v9604
        %v10527 = vunpack.c.l.b16 %v9605
        %v10528 = vunpack.c.h.b16 %v9605
        %v10529 = vunpack.c.l.b16 %v9606
        %v10530 = vunpack.c.h.b16 %v9606
        %v10531 = vunpack.c.l.b16 %v9607
        %v10532 = vunpack.c.h.b16 %v9607
        %v10533 = vunpack.c.l.b16 %v9608
        %v10534 = vunpack.c.h.b16 %v9608
        %v10535 = vunpack.c.l.b16 %v9609
        %v10536 = vunpack.c.h.b16 %v9609
        %v10537 = vunpack.c.l.b16 %v9610
        %v10538 = vunpack.c.h.b16 %v9610
        %v10539 = vunpack.c.l.b16 %v9611
        %v10540 = vunpack.c.h.b16 %v9611
        %v10541 = vunpack.c.l.b16 %v9612
        %v10542 = vunpack.c.h.b16 %v9612
        %v10543 = vpack.c.b16 %v9973, %v9967
        %v10544 = vpack.c.b16 %v9974, %v9968
        %v10545 = vpack.c.b16 %v9975, %v9969
        %v10546 = vpack.c.b16 %v9976, %v9970
        %v10547 = vpack.c.b16 %v9977, %v9971
        %v10548 = vpack.c.b16 %v9978, %v9972
        %v10549 = vpack.c.b16 %v9985, %v9979
        %v10550 = vpack.c.b16 %v9986, %v9980
        %v10551 = vpack.c.b16 %v9987, %v9981
        %v10552 = vpack.c.b16 %v9988, %v9982
        %v10553 = vpack.c.b16 %v9989, %v9983
        %v10554 = vpack.c.b16 %v9990, %v9984
        %v10555 = vpack.c.b16 %v9997, %v9991
        %v10556 = vpack.c.b16 %v9998, %v9992
        %v10557 = vpack.c.b16 %v9999, %v9993
        %v10558 = vpack.c.b16 %v10000, %v9994
        %v10559 = vpack.c.b16 %v10001, %v9995
        %v10560 = vpack.c.b16 %v10002, %v9996
        %v10561 = vpack.c.b16 %v10009, %v10003
        %v10562 = vpack.c.b16 %v10010, %v10004
        %v10563 = vpack.c.b16 %v10011, %v10005
        %v10564 = vpack.c.b16 %v10012, %v10006
        %v10565 = vpack.c.b16 %v10013, %v10007
        %v10566 = vpack.c.b16 %v10014, %v10008
        %v10567 = vpack.c.b16 %v10021, %v10015
        %v10568 = vpack.c.b16 %v10022, %v10016
        %v10569 = vpack.c.b16 %v10023, %v10017
        %v10570 = vpack.c.b16 %v10024, %v10018
        %v10571 = vpack.c.b16 %v10025, %v10019
        %v10572 = vpack.c.b16 %v10026, %v10020
        %v10573 = vpack.c.b16 %v10033, %v10027
        %v10574 = vpack.c.b16 %v10034, %v10028
        %v10575 = vpack.c.b16 %v10035, %v10029
        %v10576 = vpack.c.b16 %v10036, %v10030
        %v10577 = vpack.c.b16 %v10037, %v10031
        %v10578 = vpack.c.b16 %v10038, %v10032
        %v10579 = vpack.c.b16 %v10045, %v10039
        %v10580 = vpack.c.b16 %v10046, %v10040
        %v10581 = vpack.c.b16 %v10047, %v10041
        %v10582 = vpack.c.b16 %v10048, %v10042
        %v10583 = vpack.c.b16 %v10049, %v10043
        %v10584 = vpack.c.b16 %v10050, %v10044
        %v10585 = vpack.c.b16 %v10057, %v10051
        %v10586 = vpack.c.b16 %v10058, %v10052
        %v10587 = vpack.c.b16 %v10059, %v10053
        %v10588 = vpack.c.b16 %v10060, %v10054
        %v10589 = vpack.c.b16 %v10061, %v10055
        %v10590 = vpack.c.b16 %v10062, %v10056
        %v10591 = vpack.c.b16 %v10069, %v10063
        %v10592 = vpack.c.b16 %v10070, %v10064
        %v10593 = vpack.c.b16 %v10071, %v10065
        %v10594 = vpack.c.b16 %v10072, %v10066
        %v10595 = vpack.c.b16 %v10073, %v10067
        %v10596 = vpack.c.b16 %v10074, %v10068
        %v10597 = vpack.c.b16 %v10081, %v10075
        %v10598 = vpack.c.b16 %v10082, %v10076
        %v10599 = vpack.c.b16 %v10083, %v10077
        %v10600 = vpack.c.b16 %v10084, %v10078
        %v10601 = vpack.c.b16 %v10085, %v10079
        %v10602 = vpack.c.b16 %v10086, %v10080
        %v10603 = vpack.c.b16 %v10093, %v10087
        %v10604 = vpack.c.b16 %v10094, %v10088
        %v10605 = vpack.c.b16 %v10095, %v10089
        %v10606 = vpack.c.b16 %v10096, %v10090
        %v10607 = vpack.c.b16 %v10097, %v10091
        %v10608 = vpack.c.b16 %v10098, %v10092
        %v10609 = vpack.c.b16 %v10105, %v10099
        %v10610 = vpack.c.b16 %v10106, %v10100
        %v10611 = vpack.c.b16 %v10107, %v10101
        %v10612 = vpack.c.b16 %v10108, %v10102
        %v10613 = vpack.c.b16 %v10109, %v10103
        %v10614 = vpack.c.b16 %v10110, %v10104
        %v10615 = vpack.c.b16 %v10117, %v10111
        %v10616 = vpack.c.b16 %v10118, %v10112
        %v10617 = vpack.c.b16 %v10119, %v10113
        %v10618 = vpack.c.b16 %v10120, %v10114
        %v10619 = vpack.c.b16 %v10121, %v10115
        %v10620 = vpack.c.b16 %v10122, %v10116
        %v10621 = vpack.c.b16 %v10129, %v10123
        %v10622 = vpack.c.b16 %v10130, %v10124
        %v10623 = vpack.c.b16 %v10131, %v10125
        %v10624 = vpack.c.b16 %v10132, %v10126
        %v10625 = vpack.c.b16 %v10133, %v10127
        %v10626 = vpack.c.b16 %v10134, %v10128
        %v10627 = vpack.c.b16 %v10141, %v10135
        %v10628 = vpack.c.b16 %v10142, %v10136
        %v10629 = vpack.c.b16 %v10143, %v10137
        %v10630 = vpack.c.b16 %v10144, %v10138
        %v10631 = vpack.c.b16 %v10145, %v10139
        %v10632 = vpack.c.b16 %v10146, %v10140
        %v10633 = vpack.c.b16 %v10153, %v10147
        %v10634 = vpack.c.b16 %v10154, %v10148
        %v10635 = vpack.c.b16 %v10155, %v10149
        %v10636 = vpack.c.b16 %v10156, %v10150
        %v10637 = vpack.c.b16 %v10157, %v10151
        %v10638 = vpack.c.b16 %v10158, %v10152
        %v10639 = vpack.c.b16 %v10165, %v10159
        %v10640 = vpack.c.b16 %v10166, %v10160
        %v10641 = vpack.c.b16 %v10167, %v10161
        %v10642 = vpack.c.b16 %v10168, %v10162
        %v10643 = vpack.c.b16 %v10169, %v10163
        %v10644 = vpack.c.b16 %v10170, %v10164
        %v10645 = vpack.c.b16 %v10177, %v10171
        %v10646 = vpack.c.b16 %v10178, %v10172
        %v10647 = vpack.c.b16 %v10179, %v10173
        %v10648 = vpack.c.b16 %v10180, %v10174
        %v10649 = vpack.c.b16 %v10181, %v10175
        %v10650 = vpack.c.b16 %v10182, %v10176
        %v10651 = vpack.c.b16 %v10189, %v10183
        %v10652 = vpack.c.b16 %v10190, %v10184
        %v10653 = vpack.c.b16 %v10191, %v10185
        %v10654 = vpack.c.b16 %v10192, %v10186
        %v10655 = vpack.c.b16 %v10193, %v10187
        %v10656 = vpack.c.b16 %v10194, %v10188
        %v10657 = vpack.c.b16 %v10201, %v10195
        %v10658 = vpack.c.b16 %v10202, %v10196
        %v10659 = vpack.c.b16 %v10203, %v10197
        %v10660 = vpack.c.b16 %v10204, %v10198
        %v10661 = vpack.c.b16 %v10205, %v10199
        %v10662 = vpack.c.b16 %v10206, %v10200
        %v10663 = vpack.c.b16 %v10213, %v10207
        %v10664 = vpack.c.b16 %v10214, %v10208
        %v10665 = vpack.c.b16 %v10215, %v10209
        %v10666 = vpack.c.b16 %v10216, %v10210
        %v10667 = vpack.c.b16 %v10217, %v10211
        %v10668 = vpack.c.b16 %v10218, %v10212
        %v10669 = vpack.c.b16 %v10225, %v10219
        %v10670 = vpack.c.b16 %v10226, %v10220
        %v10671 = vpack.c.b16 %v10227, %v10221
        %v10672 = vpack.c.b16 %v10228, %v10222
        %v10673 = vpack.c.b16 %v10229, %v10223
        %v10674 = vpack.c.b16 %v10230, %v10224
        %v10675 = vpack.c.b16 %v10237, %v10231
        %v10676 = vpack.c.b16 %v10238, %v10232
        %v10677 = vpack.c.b16 %v10239, %v10233
        %v10678 = vpack.c.b16 %v10240, %v10234
        %v10679 = vpack.c.b16 %v10241, %v10235
        %v10680 = vpack.c.b16 %v10242, %v10236
        %v10681 = vpack.c.b16 %v10249, %v10243
        %v10682 = vpack.c.b16 %v10250, %v10244
        %v10683 = vpack.c.b16 %v10251, %v10245
        %v10684 = vpack.c.b16 %v10252, %v10246
        %v10685 = vpack.c.b16 %v10253, %v10247
        %v10686 = vpack.c.b16 %v10254, %v10248
        %v10687 = vpack.c.b16 %v10261, %v10255
        %v10688 = vpack.c.b16 %v10262, %v10256
        %v10689 = vpack.c.b16 %v10263, %v10257
        %v10690 = vpack.c.b16 %v10264, %v10258
        %v10691 = vpack.c.b16 %v10265, %v10259
        %v10692 = vpack.c.b16 %v10266, %v10260
        %v10693 = vpack.c.b16 %v10273, %v10267
        %v10694 = vpack.c.b16 %v10274, %v10268
        %v10695 = vpack.c.b16 %v10275, %v10269
        %v10696 = vpack.c.b16 %v10276, %v10270
        %v10697 = vpack.c.b16 %v10277, %v10271
        %v10698 = vpack.c.b16 %v10278, %v10272
        %v10699 = vpack.c.b16 %v10285, %v10279
        %v10700 = vpack.c.b16 %v10286, %v10280
        %v10701 = vpack.c.b16 %v10287, %v10281
        %v10702 = vpack.c.b16 %v10288, %v10282
        %v10703 = vpack.c.b16 %v10289, %v10283
        %v10704 = vpack.c.b16 %v10290, %v10284
        %v10705 = vpack.c.b16 %v10297, %v10291
        %v10706 = vpack.c.b16 %v10298, %v10292
        %v10707 = vpack.c.b16 %v10299, %v10293
        %v10708 = vpack.c.b16 %v10300, %v10294
        %v10709 = vpack.c.b16 %v10301, %v10295
        %v10710 = vpack.c.b16 %v10302, %v10296
        %v10711 = vpack.c.b16 %v10309, %v10303
        %v10712 = vpack.c.b16 %v10310, %v10304
        %v10713 = vpack.c.b16 %v10311, %v10305
        %v10714 = vpack.c.b16 %v10312, %v10306
        %v10715 = vpack.c.b16 %v10313, %v10307
        %v10716 = vpack.c.b16 %v10314, %v10308
        %v10717 = vpack.c.b16 %v10321, %v10315
        %v10718 = vpack.c.b16 %v10322, %v10316
        %v10719 = vpack.c.b16 %v10323, %v10317
        %v10720 = vpack.c.b16 %v10324, %v10318
        %v10721 = vpack.c.b16 %v10325, %v10319
        %v10722 = vpack.c.b16 %v10326, %v10320
        %v10723 = vpack.c.b16 %v10333, %v10327
        %v10724 = vpack.c.b16 %v10334, %v10328
        %v10725 = vpack.c.b16 %v10335, %v10329
        %v10726 = vpack.c.b16 %v10336, %v10330
        %v10727 = vpack.c.b16 %v10337, %v10331
        %v10728 = vpack.c.b16 %v10338, %v10332
        %v10729 = vpack.c.b16 %v10345, %v10339
        %v10730 = vpack.c.b16 %v10346, %v10340
        %v10731 = vpack.c.b16 %v10347, %v10341
        %v10732 = vpack.c.b16 %v10348, %v10342
        %v10733 = vpack.c.b16 %v10349, %v10343
        %v10734 = vpack.c.b16 %v10350, %v10344
        %v10735 = vpack.c.b16 %v10357, %v10351
        %v10736 = vpack.c.b16 %v10358, %v10352
        %v10737 = vpack.c.b16 %v10359, %v10353
        %v10738 = vpack.c.b16 %v10360, %v10354
        %v10739 = vpack.c.b16 %v10361, %v10355
        %v10740 = vpack.c.b16 %v10362, %v10356
        %v10741 = vpack.c.b16 %v10369, %v10363
        %v10742 = vpack.c.b16 %v10370, %v10364
        %v10743 = vpack.c.b16 %v10371, %v10365
        %v10744 = vpack.c.b16 %v10372, %v10366
        %v10745 = vpack.c.b16 %v10373, %v10367
        %v10746 = vpack.c.b16 %v10374, %v10368
        %v10747 = vpack.c.b16 %v10381, %v10375
        %v10748 = vpack.c.b16 %v10382, %v10376
        %v10749 = vpack.c.b16 %v10383, %v10377
        %v10750 = vpack.c.b16 %v10384, %v10378
        %v10751 = vpack.c.b16 %v10385, %v10379
        %v10752 = vpack.c.b16 %v10386, %v10380
        %v10753 = vpack.c.b16 %v10393, %v10387
        %v10754 = vpack.c.b16 %v10394, %v10388
        %v10755 = vpack.c.b16 %v10395, %v10389
        %v10756 = vpack.c.b16 %v10396, %v10390
        %v10757 = vpack.c.b16 %v10397, %v10391
        %v10758 = vpack.c.b16 %v10398, %v10392
        %v10759 = vpack.c.b16 %v10405, %v10399
        %v10760 = vpack.c.b16 %v10406, %v10400
        %v10761 = vpack.c.b16 %v10407, %v10401
        %v10762 = vpack.c.b16 %v10408, %v10402
        %v10763 = vpack.c.b16 %v10409, %v10403
        %v10764 = vpack.c.b16 %v10410, %v10404
        %v10765 = vpack.c.b16 %v10417, %v10411
        %v10766 = vpack.c.b16 %v10418, %v10412
        %v10767 = vpack.c.b16 %v10419, %v10413
        %v10768 = vpack.c.b16 %v10420, %v10414
        %v10769 = vpack.c.b16 %v10421, %v10415
        %v10770 = vpack.c.b16 %v10422, %v10416
        %v10771 = vpack.c.b16 %v10429, %v10423
        %v10772 = vpack.c.b16 %v10430, %v10424
        %v10773 = vpack.c.b16 %v10431, %v10425
        %v10774 = vpack.c.b16 %v10432, %v10426
        %v10775 = vpack.c.b16 %v10433, %v10427
        %v10776 = vpack.c.b16 %v10434, %v10428
        %v10777 = vpack.c.b16 %v10441, %v10435
        %v10778 = vpack.c.b16 %v10442, %v10436
        %v10779 = vpack.c.b16 %v10443, %v10437
        %v10780 = vpack.c.b16 %v10444, %v10438
        %v10781 = vpack.c.b16 %v10445, %v10439
        %v10782 = vpack.c.b16 %v10446, %v10440
        %v10783 = vpack.c.b16 %v10453, %v10447
        %v10784 = vpack.c.b16 %v10454, %v10448
        %v10785 = vpack.c.b16 %v10455, %v10449
        %v10786 = vpack.c.b16 %v10456, %v10450
        %v10787 = vpack.c.b16 %v10457, %v10451
        %v10788 = vpack.c.b16 %v10458, %v10452
        %v10789 = vpack.c.b16 %v10465, %v10459
        %v10790 = vpack.c.b16 %v10466, %v10460
        %v10791 = vpack.c.b16 %v10467, %v10461
        %v10792 = vpack.c.b16 %v10468, %v10462
        %v10793 = vpack.c.b16 %v10469, %v10463
        %v10794 = vpack.c.b16 %v10470, %v10464
        %v10795 = vpack.c.b16 %v10477, %v10471
        %v10796 = vpack.c.b16 %v10478, %v10472
        %v10797 = vpack.c.b16 %v10479, %v10473
        %v10798 = vpack.c.b16 %v10480, %v10474
        %v10799 = vpack.c.b16 %v10481, %v10475
        %v10800 = vpack.c.b16 %v10482, %v10476
        %v10801 = vpack.c.b16 %v10489, %v10483
        %v10802 = vpack.c.b16 %v10490, %v10484
        %v10803 = vpack.c.b16 %v10491, %v10485
        %v10804 = vpack.c.b16 %v10492, %v10486
        %v10805 = vpack.c.b16 %v10493, %v10487
        %v10806 = vpack.c.b16 %v10494, %v10488
        %v10807 = vpack.c.b16 %v10501, %v10495
        %v10808 = vpack.c.b16 %v10502, %v10496
        %v10809 = vpack.c.b16 %v10503, %v10497
        %v10810 = vpack.c.b16 %v10504, %v10498
        %v10811 = vpack.c.b16 %v10505, %v10499
        %v10812 = vpack.c.b16 %v10506, %v10500
        %v10813 = vpack.c.b16 %v10513, %v10507
        %v10814 = vpack.c.b16 %v10514, %v10508
        %v10815 = vpack.c.b16 %v10515, %v10509
        %v10816 = vpack.c.b16 %v10516, %v10510
        %v10817 = vpack.c.b16 %v10517, %v10511
        %v10818 = vpack.c.b16 %v10518, %v10512
        %v10819 = vpack.c.b16 %v10525, %v10519
        %v10820 = vpack.c.b16 %v10526, %v10520
        %v10821 = vpack.c.b16 %v10527, %v10521
        %v10822 = vpack.c.b16 %v10528, %v10522
        %v10823 = vpack.c.b16 %v10529, %v10523
        %v10824 = vpack.c.b16 %v10530, %v10524
        %v10825 = vpack.c.b16 %v10537, %v10531
        %v10826 = vpack.c.b16 %v10538, %v10532
        %v10827 = vpack.c.b16 %v10539, %v10533
        %v10828 = vpack.c.b16 %v10540, %v10534
        %v10829 = vpack.c.b16 %v10541, %v10535
        %v10830 = vpack.c.b16 %v10542, %v10536
        %11119 = vmatpush.bf16.msra.mxu0 %v10585
        %11120 = vmatpush.bf16.msra.mxu0 %v10579
        %11121 = vmatpush.bf16.msra.mxu0 %v10573
        %11122 = vmatpush.bf16.msra.mxu0 %v10567
        %11123 = vmatpush.bf16.msra.mxu0 %v10561
        %11124 = vmatpush.bf16.msra.mxu0 %v10555
        %11125 = vmatpush.bf16.msra.mxu0 %v10549
        %11126 = vmatpush.bf16.msra.mxu0 %v10543
        %11127 = vmatmul.bf16.gmra.mxu0 %v9667
        %v11128 = vpop.f32.mrf.mxu0
        %v11129 = vadd.f32 %v9625, %v11128
        %v11130 = vpop.f32.mrf.mxu0
        %11131 = vdwg.mxu0
        %11132 = vmatpush.bf16.msra.mxu0 %v10633
        %11133 = vmatpush.bf16.msra.mxu0 %v10627
        %11134 = vmatpush.bf16.msra.mxu0 %v10621
        %11135 = vmatpush.bf16.msra.mxu0 %v10615
        %11136 = vmatpush.bf16.msra.mxu0 %v10609
        %11137 = vmatpush.bf16.msra.mxu0 %v10603
        %11138 = vmatpush.bf16.msra.mxu0 %v10597
        %11139 = vmatpush.bf16.msra.mxu0 %v10591
        %11140 = vmatmul.bf16.gmra.mxu0 %v9668
        %v11141 = vpop.f32.mrf.mxu0
        %v11142 = vadd.f32 %v11129, %v11141
        %v11143 = vpop.f32.mrf.mxu0
        %11144 = vdwg.mxu0
        %11145 = vmatpush.bf16.msra.mxu0 %v10681
        %11146 = vmatpush.bf16.msra.mxu0 %v10675
        %11147 = vmatpush.bf16.msra.mxu0 %v10669
        %11148 = vmatpush.bf16.msra.mxu0 %v10663
        %11149 = vmatpush.bf16.msra.mxu0 %v10657
        %11150 = vmatpush.bf16.msra.mxu0 %v10651
        %11151 = vmatpush.bf16.msra.mxu0 %v10645
        %11152 = vmatpush.bf16.msra.mxu0 %v10639
        %11153 = vmatmul.bf16.gmra.mxu0 %v9669
        %v11154 = vpop.f32.mrf.mxu0
        %v11155 = vadd.f32 %v11142, %v11154
        %v11156 = vpop.f32.mrf.mxu0
        %11157 = vdwg.mxu0
        %11158 = vmatpush.bf16.msra.mxu0 %v10729
        %11159 = vmatpush.bf16.msra.mxu0 %v10723
        %11160 = vmatpush.bf16.msra.mxu0 %v10717
        %11161 = vmatpush.bf16.msra.mxu0 %v10711
        %11162 = vmatpush.bf16.msra.mxu0 %v10705
        %11163 = vmatpush.bf16.msra.mxu0 %v10699
        %11164 = vmatpush.bf16.msra.mxu0 %v10693
        %11165 = vmatpush.bf16.msra.mxu0 %v10687
        %11166 = vmatmul.bf16.gmra.mxu0 %v9670
        %v11167 = vpop.f32.mrf.mxu0
        %v11168 = vadd.f32 %v11155, %v11167
        %v11169 = vpop.f32.mrf.mxu0
        %11170 = vdwg.mxu0
        %11171 = vmatpush.bf16.msra.mxu0 %v10777
        %11172 = vmatpush.bf16.msra.mxu0 %v10771
        %11173 = vmatpush.bf16.msra.mxu0 %v10765
        %11174 = vmatpush.bf16.msra.mxu0 %v10759
        %11175 = vmatpush.bf16.msra.mxu0 %v10753
        %11176 = vmatpush.bf16.msra.mxu0 %v10747
        %11177 = vmatpush.bf16.msra.mxu0 %v10741
        %11178 = vmatpush.bf16.msra.mxu0 %v10735
        %11179 = vmatmul.bf16.gmra.mxu0 %v9671
        %v11180 = vpop.f32.mrf.mxu0
        %v11181 = vadd.f32 %v11168, %v11180
        %v11182 = vpop.f32.mrf.mxu0
        %11183 = vdwg.mxu0
        %11184 = vmatpush.bf16.msra.mxu0 %v10825
        %11185 = vmatpush.bf16.msra.mxu0 %v10819
        %11186 = vmatpush.bf16.msra.mxu0 %v10813
        %11187 = vmatpush.bf16.msra.mxu0 %v10807
        %11188 = vmatpush.bf16.msra.mxu0 %v10801
        %11189 = vmatpush.bf16.msra.mxu0 %v10795
        %11190 = vmatpush.bf16.msra.mxu0 %v10789
        %11191 = vmatpush.bf16.msra.mxu0 %v10783
        %11192 = vmatmul.bf16.gmra.mxu0 %v9672
        %v11193 = vpop.f32.mrf.mxu0
        %v11194 = vadd.f32 %v11181, %v11193
        %v11195 = vpop.f32.mrf.mxu0
        %11196 = vdwg.mxu0
        %11197 = vmatpush.bf16.msra.mxu0 %v10586
        %11198 = vmatpush.bf16.msra.mxu0 %v10580
        %11199 = vmatpush.bf16.msra.mxu0 %v10574
        %11200 = vmatpush.bf16.msra.mxu0 %v10568
        %11201 = vmatpush.bf16.msra.mxu0 %v10562
        %11202 = vmatpush.bf16.msra.mxu0 %v10556
        %11203 = vmatpush.bf16.msra.mxu0 %v10550
        %11204 = vmatpush.bf16.msra.mxu0 %v10544
        %11205 = vmatmul.bf16.gmra.mxu0 %v9667
        %v11206 = vpop.f32.mrf.mxu0
        %v11207 = vadd.f32 %v9626, %v11206
        %v11208 = vpop.f32.mrf.mxu0
        %11209 = vdwg.mxu0
        %11210 = vmatpush.bf16.msra.mxu0 %v10634
        %11211 = vmatpush.bf16.msra.mxu0 %v10628
        %11212 = vmatpush.bf16.msra.mxu0 %v10622
        %11213 = vmatpush.bf16.msra.mxu0 %v10616
        %11214 = vmatpush.bf16.msra.mxu0 %v10610
        %11215 = vmatpush.bf16.msra.mxu0 %v10604
        %11216 = vmatpush.bf16.msra.mxu0 %v10598
        %11217 = vmatpush.bf16.msra.mxu0 %v10592
        %11218 = vmatmul.bf16.gmra.mxu0 %v9668
        %v11219 = vpop.f32.mrf.mxu0
        %v11220 = vadd.f32 %v11207, %v11219
        %v11221 = vpop.f32.mrf.mxu0
        %11222 = vdwg.mxu0
        %11223 = vmatpush.bf16.msra.mxu0 %v10682
        %11224 = vmatpush.bf16.msra.mxu0 %v10676
        %11225 = vmatpush.bf16.msra.mxu0 %v10670
        %11226 = vmatpush.bf16.msra.mxu0 %v10664
        %11227 = vmatpush.bf16.msra.mxu0 %v10658
        %11228 = vmatpush.bf16.msra.mxu0 %v10652
        %11229 = vmatpush.bf16.msra.mxu0 %v10646
        %11230 = vmatpush.bf16.msra.mxu0 %v10640
        %11231 = vmatmul.bf16.gmra.mxu0 %v9669
        %v11232 = vpop.f32.mrf.mxu0
        %v11233 = vadd.f32 %v11220, %v11232
        %v11234 = vpop.f32.mrf.mxu0
        %11235 = vdwg.mxu0
        %11236 = vmatpush.bf16.msra.mxu0 %v10730
        %11237 = vmatpush.bf16.msra.mxu0 %v10724
        %11238 = vmatpush.bf16.msra.mxu0 %v10718
        %11239 = vmatpush.bf16.msra.mxu0 %v10712
        %11240 = vmatpush.bf16.msra.mxu0 %v10706
        %11241 = vmatpush.bf16.msra.mxu0 %v10700
        %11242 = vmatpush.bf16.msra.mxu0 %v10694
        %11243 = vmatpush.bf16.msra.mxu0 %v10688
        %11244 = vmatmul.bf16.gmra.mxu0 %v9670
        %v11245 = vpop.f32.mrf.mxu0
        %v11246 = vadd.f32 %v11233, %v11245
        %v11247 = vpop.f32.mrf.mxu0
        %11248 = vdwg.mxu0
        %11249 = vmatpush.bf16.msra.mxu0 %v10778
        %11250 = vmatpush.bf16.msra.mxu0 %v10772
        %11251 = vmatpush.bf16.msra.mxu0 %v10766
        %11252 = vmatpush.bf16.msra.mxu0 %v10760
        %11253 = vmatpush.bf16.msra.mxu0 %v10754
        %11254 = vmatpush.bf16.msra.mxu0 %v10748
        %11255 = vmatpush.bf16.msra.mxu0 %v10742
        %11256 = vmatpush.bf16.msra.mxu0 %v10736
        %11257 = vmatmul.bf16.gmra.mxu0 %v9671
        %v11258 = vpop.f32.mrf.mxu0
        %v11259 = vadd.f32 %v11246, %v11258
        %v11260 = vpop.f32.mrf.mxu0
        %11261 = vdwg.mxu0
        %11262 = vmatpush.bf16.msra.mxu0 %v10826
        %11263 = vmatpush.bf16.msra.mxu0 %v10820
        %11264 = vmatpush.bf16.msra.mxu0 %v10814
        %11265 = vmatpush.bf16.msra.mxu0 %v10808
        %11266 = vmatpush.bf16.msra.mxu0 %v10802
        %11267 = vmatpush.bf16.msra.mxu0 %v10796
        %11268 = vmatpush.bf16.msra.mxu0 %v10790
        %11269 = vmatpush.bf16.msra.mxu0 %v10784
        %11270 = vmatmul.bf16.gmra.mxu0 %v9672
        %v11271 = vpop.f32.mrf.mxu0
        %v11272 = vadd.f32 %v11259, %v11271
        %v11273 = vpop.f32.mrf.mxu0
        %11274 = vdwg.mxu0
        %11275 = vmatpush.bf16.msra.mxu0 %v10587
        %11276 = vmatpush.bf16.msra.mxu0 %v10581
        %11277 = vmatpush.bf16.msra.mxu0 %v10575
        %11278 = vmatpush.bf16.msra.mxu0 %v10569
        %11279 = vmatpush.bf16.msra.mxu0 %v10563
        %11280 = vmatpush.bf16.msra.mxu0 %v10557
        %11281 = vmatpush.bf16.msra.mxu0 %v10551
        %11282 = vmatpush.bf16.msra.mxu0 %v10545
        %11283 = vmatmul.bf16.gmra.mxu0 %v9667
        %v11284 = vpop.f32.mrf.mxu0
        %v11285 = vadd.f32 %v9627, %v11284
        %v11286 = vpop.f32.mrf.mxu0
        %11287 = vdwg.mxu0
        %11288 = vmatpush.bf16.msra.mxu0 %v10635
        %11289 = vmatpush.bf16.msra.mxu0 %v10629
        %11290 = vmatpush.bf16.msra.mxu0 %v10623
        %11291 = vmatpush.bf16.msra.mxu0 %v10617
        %11292 = vmatpush.bf16.msra.mxu0 %v10611
        %11293 = vmatpush.bf16.msra.mxu0 %v10605
        %11294 = vmatpush.bf16.msra.mxu0 %v10599
        %11295 = vmatpush.bf16.msra.mxu0 %v10593
        %11296 = vmatmul.bf16.gmra.mxu0 %v9668
        %v11297 = vpop.f32.mrf.mxu0
        %v11298 = vadd.f32 %v11285, %v11297
        %v11299 = vpop.f32.mrf.mxu0
        %11300 = vdwg.mxu0
        %11301 = vmatpush.bf16.msra.mxu0 %v10683
        %11302 = vmatpush.bf16.msra.mxu0 %v10677
        %11303 = vmatpush.bf16.msra.mxu0 %v10671
        %11304 = vmatpush.bf16.msra.mxu0 %v10665
        %11305 = vmatpush.bf16.msra.mxu0 %v10659
        %11306 = vmatpush.bf16.msra.mxu0 %v10653
        %11307 = vmatpush.bf16.msra.mxu0 %v10647
        %11308 = vmatpush.bf16.msra.mxu0 %v10641
        %11309 = vmatmul.bf16.gmra.mxu0 %v9669
        %v11310 = vpop.f32.mrf.mxu0
        %v11311 = vadd.f32 %v11298, %v11310
        %v11312 = vpop.f32.mrf.mxu0
        %11313 = vdwg.mxu0
        %11314 = vmatpush.bf16.msra.mxu0 %v10731
        %11315 = vmatpush.bf16.msra.mxu0 %v10725
        %11316 = vmatpush.bf16.msra.mxu0 %v10719
        %11317 = vmatpush.bf16.msra.mxu0 %v10713
        %11318 = vmatpush.bf16.msra.mxu0 %v10707
        %11319 = vmatpush.bf16.msra.mxu0 %v10701
        %11320 = vmatpush.bf16.msra.mxu0 %v10695
        %11321 = vmatpush.bf16.msra.mxu0 %v10689
        %11322 = vmatmul.bf16.gmra.mxu0 %v9670
        %v11323 = vpop.f32.mrf.mxu0
        %v11324 = vadd.f32 %v11311, %v11323
        %v11325 = vpop.f32.mrf.mxu0
        %11326 = vdwg.mxu0
        %11327 = vmatpush.bf16.msra.mxu0 %v10779
        %11328 = vmatpush.bf16.msra.mxu0 %v10773
        %11329 = vmatpush.bf16.msra.mxu0 %v10767
        %11330 = vmatpush.bf16.msra.mxu0 %v10761
        %11331 = vmatpush.bf16.msra.mxu0 %v10755
        %11332 = vmatpush.bf16.msra.mxu0 %v10749
        %11333 = vmatpush.bf16.msra.mxu0 %v10743
        %11334 = vmatpush.bf16.msra.mxu0 %v10737
        %11335 = vmatmul.bf16.gmra.mxu0 %v9671
        %v11336 = vpop.f32.mrf.mxu0
        %v11337 = vadd.f32 %v11324, %v11336
        %v11338 = vpop.f32.mrf.mxu0
        %11339 = vdwg.mxu0
        %11340 = vmatpush.bf16.msra.mxu0 %v10827
        %11341 = vmatpush.bf16.msra.mxu0 %v10821
        %11342 = vmatpush.bf16.msra.mxu0 %v10815
        %11343 = vmatpush.bf16.msra.mxu0 %v10809
        %11344 = vmatpush.bf16.msra.mxu0 %v10803
        %11345 = vmatpush.bf16.msra.mxu0 %v10797
        %11346 = vmatpush.bf16.msra.mxu0 %v10791
        %11347 = vmatpush.bf16.msra.mxu0 %v10785
        %11348 = vmatmul.bf16.gmra.mxu0 %v9672
        %v11349 = vpop.f32.mrf.mxu0
        %v11350 = vadd.f32 %v11337, %v11349
        %v11351 = vpop.f32.mrf.mxu0
        %11352 = vdwg.mxu0
        %11353 = vmatpush.bf16.msra.mxu0 %v10588
        %11354 = vmatpush.bf16.msra.mxu0 %v10582
        %11355 = vmatpush.bf16.msra.mxu0 %v10576
        %11356 = vmatpush.bf16.msra.mxu0 %v10570
        %11357 = vmatpush.bf16.msra.mxu0 %v10564
        %11358 = vmatpush.bf16.msra.mxu0 %v10558
        %11359 = vmatpush.bf16.msra.mxu0 %v10552
        %11360 = vmatpush.bf16.msra.mxu0 %v10546
        %11361 = vmatmul.bf16.gmra.mxu0 %v9667
        %v11362 = vpop.f32.mrf.mxu0
        %v11363 = vadd.f32 %v9628, %v11362
        %v11364 = vpop.f32.mrf.mxu0
        %11365 = vdwg.mxu0
        %11366 = vmatpush.bf16.msra.mxu0 %v10636
        %11367 = vmatpush.bf16.msra.mxu0 %v10630
        %11368 = vmatpush.bf16.msra.mxu0 %v10624
        %11369 = vmatpush.bf16.msra.mxu0 %v10618
        %11370 = vmatpush.bf16.msra.mxu0 %v10612
        %11371 = vmatpush.bf16.msra.mxu0 %v10606
        %11372 = vmatpush.bf16.msra.mxu0 %v10600
        %11373 = vmatpush.bf16.msra.mxu0 %v10594
        %11374 = vmatmul.bf16.gmra.mxu0 %v9668
        %v11375 = vpop.f32.mrf.mxu0
        %v11376 = vadd.f32 %v11363, %v11375
        %v11377 = vpop.f32.mrf.mxu0
        %11378 = vdwg.mxu0
        %11379 = vmatpush.bf16.msra.mxu0 %v10684
        %11380 = vmatpush.bf16.msra.mxu0 %v10678
        %11381 = vmatpush.bf16.msra.mxu0 %v10672
        %11382 = vmatpush.bf16.msra.mxu0 %v10666
        %11383 = vmatpush.bf16.msra.mxu0 %v10660
        %11384 = vmatpush.bf16.msra.mxu0 %v10654
        %11385 = vmatpush.bf16.msra.mxu0 %v10648
        %11386 = vmatpush.bf16.msra.mxu0 %v10642
        %11387 = vmatmul.bf16.gmra.mxu0 %v9669
        %v11388 = vpop.f32.mrf.mxu0
        %v11389 = vadd.f32 %v11376, %v11388
        %v11390 = vpop.f32.mrf.mxu0
        %11391 = vdwg.mxu0
        %11392 = vmatpush.bf16.msra.mxu0 %v10732
        %11393 = vmatpush.bf16.msra.mxu0 %v10726
        %11394 = vmatpush.bf16.msra.mxu0 %v10720
        %11395 = vmatpush.bf16.msra.mxu0 %v10714
        %11396 = vmatpush.bf16.msra.mxu0 %v10708
        %11397 = vmatpush.bf16.msra.mxu0 %v10702
        %11398 = vmatpush.bf16.msra.mxu0 %v10696
        %11399 = vmatpush.bf16.msra.mxu0 %v10690
        %11400 = vmatmul.bf16.gmra.mxu0 %v9670
        %v11401 = vpop.f32.mrf.mxu0
        %v11402 = vadd.f32 %v11389, %v11401
        %v11403 = vpop.f32.mrf.mxu0
        %11404 = vdwg.mxu0
        %11405 = vmatpush.bf16.msra.mxu0 %v10780
        %11406 = vmatpush.bf16.msra.mxu0 %v10774
        %11407 = vmatpush.bf16.msra.mxu0 %v10768
        %11408 = vmatpush.bf16.msra.mxu0 %v10762
        %11409 = vmatpush.bf16.msra.mxu0 %v10756
        %11410 = vmatpush.bf16.msra.mxu0 %v10750
        %11411 = vmatpush.bf16.msra.mxu0 %v10744
        %11412 = vmatpush.bf16.msra.mxu0 %v10738
        %11413 = vmatmul.bf16.gmra.mxu0 %v9671
        %v11414 = vpop.f32.mrf.mxu0
        %v11415 = vadd.f32 %v11402, %v11414
        %v11416 = vpop.f32.mrf.mxu0
        %11417 = vdwg.mxu0
        %11418 = vmatpush.bf16.msra.mxu0 %v10828
        %11419 = vmatpush.bf16.msra.mxu0 %v10822
        %11420 = vmatpush.bf16.msra.mxu0 %v10816
        %11421 = vmatpush.bf16.msra.mxu0 %v10810
        %11422 = vmatpush.bf16.msra.mxu0 %v10804
        %11423 = vmatpush.bf16.msra.mxu0 %v10798
        %11424 = vmatpush.bf16.msra.mxu0 %v10792
        %11425 = vmatpush.bf16.msra.mxu0 %v10786
        %11426 = vmatmul.bf16.gmra.mxu0 %v9672
        %v11427 = vpop.f32.mrf.mxu0
        %v11428 = vadd.f32 %v11415, %v11427
        %v11429 = vpop.f32.mrf.mxu0
        %11430 = vdwg.mxu0
        %11431 = vmatpush.bf16.msra.mxu0 %v10589
        %11432 = vmatpush.bf16.msra.mxu0 %v10583
        %11433 = vmatpush.bf16.msra.mxu0 %v10577
        %11434 = vmatpush.bf16.msra.mxu0 %v10571
        %11435 = vmatpush.bf16.msra.mxu0 %v10565
        %11436 = vmatpush.bf16.msra.mxu0 %v10559
        %11437 = vmatpush.bf16.msra.mxu0 %v10553
        %11438 = vmatpush.bf16.msra.mxu0 %v10547
        %11439 = vmatmul.bf16.gmra.mxu0 %v9667
        %v11440 = vpop.f32.mrf.mxu0
        %v11441 = vadd.f32 %v9629, %v11440
        %v11442 = vpop.f32.mrf.mxu0
        %11443 = vdwg.mxu0
        %11444 = vmatpush.bf16.msra.mxu0 %v10637
        %11445 = vmatpush.bf16.msra.mxu0 %v10631
        %11446 = vmatpush.bf16.msra.mxu0 %v10625
        %11447 = vmatpush.bf16.msra.mxu0 %v10619
        %11448 = vmatpush.bf16.msra.mxu0 %v10613
        %11449 = vmatpush.bf16.msra.mxu0 %v10607
        %11450 = vmatpush.bf16.msra.mxu0 %v10601
        %11451 = vmatpush.bf16.msra.mxu0 %v10595
        %11452 = vmatmul.bf16.gmra.mxu0 %v9668
        %v11453 = vpop.f32.mrf.mxu0
        %v11454 = vadd.f32 %v11441, %v11453
        %v11455 = vpop.f32.mrf.mxu0
        %11456 = vdwg.mxu0
        %11457 = vmatpush.bf16.msra.mxu0 %v10685
        %11458 = vmatpush.bf16.msra.mxu0 %v10679
        %11459 = vmatpush.bf16.msra.mxu0 %v10673
        %11460 = vmatpush.bf16.msra.mxu0 %v10667
        %11461 = vmatpush.bf16.msra.mxu0 %v10661
        %11462 = vmatpush.bf16.msra.mxu0 %v10655
        %11463 = vmatpush.bf16.msra.mxu0 %v10649
        %11464 = vmatpush.bf16.msra.mxu0 %v10643
        %11465 = vmatmul.bf16.gmra.mxu0 %v9669
        %v11466 = vpop.f32.mrf.mxu0
        %v11467 = vadd.f32 %v11454, %v11466
        %v11468 = vpop.f32.mrf.mxu0
        %11469 = vdwg.mxu0
        %11470 = vmatpush.bf16.msra.mxu0 %v10733
        %11471 = vmatpush.bf16.msra.mxu0 %v10727
        %11472 = vmatpush.bf16.msra.mxu0 %v10721
        %11473 = vmatpush.bf16.msra.mxu0 %v10715
        %11474 = vmatpush.bf16.msra.mxu0 %v10709
        %11475 = vmatpush.bf16.msra.mxu0 %v10703
        %11476 = vmatpush.bf16.msra.mxu0 %v10697
        %11477 = vmatpush.bf16.msra.mxu0 %v10691
        %11478 = vmatmul.bf16.gmra.mxu0 %v9670
        %v11479 = vpop.f32.mrf.mxu0
        %v11480 = vadd.f32 %v11467, %v11479
        %v11481 = vpop.f32.mrf.mxu0
        %11482 = vdwg.mxu0
        %11483 = vmatpush.bf16.msra.mxu0 %v10781
        %11484 = vmatpush.bf16.msra.mxu0 %v10775
        %11485 = vmatpush.bf16.msra.mxu0 %v10769
        %11486 = vmatpush.bf16.msra.mxu0 %v10763
        %11487 = vmatpush.bf16.msra.mxu0 %v10757
        %11488 = vmatpush.bf16.msra.mxu0 %v10751
        %11489 = vmatpush.bf16.msra.mxu0 %v10745
        %11490 = vmatpush.bf16.msra.mxu0 %v10739
        %11491 = vmatmul.bf16.gmra.mxu0 %v9671
        %v11492 = vpop.f32.mrf.mxu0
        %v11493 = vadd.f32 %v11480, %v11492
        %v11494 = vpop.f32.mrf.mxu0
        %11495 = vdwg.mxu0
        %11496 = vmatpush.bf16.msra.mxu0 %v10829
        %11497 = vmatpush.bf16.msra.mxu0 %v10823
        %11498 = vmatpush.bf16.msra.mxu0 %v10817
        %11499 = vmatpush.bf16.msra.mxu0 %v10811
        %11500 = vmatpush.bf16.msra.mxu0 %v10805
        %11501 = vmatpush.bf16.msra.mxu0 %v10799
        %11502 = vmatpush.bf16.msra.mxu0 %v10793
        %11503 = vmatpush.bf16.msra.mxu0 %v10787
        %11504 = vmatmul.bf16.gmra.mxu0 %v9672
        %v11505 = vpop.f32.mrf.mxu0
        %v11506 = vadd.f32 %v11493, %v11505
        %v11507 = vpop.f32.mrf.mxu0
        %11508 = vdwg.mxu0
        %11509 = vmatpush.bf16.msra.mxu0 %v10590
        %11510 = vmatpush.bf16.msra.mxu0 %v10584
        %11511 = vmatpush.bf16.msra.mxu0 %v10578
        %11512 = vmatpush.bf16.msra.mxu0 %v10572
        %11513 = vmatpush.bf16.msra.mxu0 %v10566
        %11514 = vmatpush.bf16.msra.mxu0 %v10560
        %11515 = vmatpush.bf16.msra.mxu0 %v10554
        %11516 = vmatpush.bf16.msra.mxu0 %v10548
        %11517 = vmatmul.bf16.gmra.mxu0 %v9667
        %v11518 = vpop.f32.mrf.mxu0
        %v11519 = vadd.f32 %v9630, %v11518
        %v11520 = vpop.f32.mrf.mxu0
        %11521 = vdwg.mxu0
        %11522 = vmatpush.bf16.msra.mxu0 %v10638
        %11523 = vmatpush.bf16.msra.mxu0 %v10632
        %11524 = vmatpush.bf16.msra.mxu0 %v10626
        %11525 = vmatpush.bf16.msra.mxu0 %v10620
        %11526 = vmatpush.bf16.msra.mxu0 %v10614
        %11527 = vmatpush.bf16.msra.mxu0 %v10608
        %11528 = vmatpush.bf16.msra.mxu0 %v10602
        %11529 = vmatpush.bf16.msra.mxu0 %v10596
        %11530 = vmatmul.bf16.gmra.mxu0 %v9668
        %v11531 = vpop.f32.mrf.mxu0
        %v11532 = vadd.f32 %v11519, %v11531
        %v11533 = vpop.f32.mrf.mxu0
        %11534 = vdwg.mxu0
        %11535 = vmatpush.bf16.msra.mxu0 %v10686
        %11536 = vmatpush.bf16.msra.mxu0 %v10680
        %11537 = vmatpush.bf16.msra.mxu0 %v10674
        %11538 = vmatpush.bf16.msra.mxu0 %v10668
        %11539 = vmatpush.bf16.msra.mxu0 %v10662
        %11540 = vmatpush.bf16.msra.mxu0 %v10656
        %11541 = vmatpush.bf16.msra.mxu0 %v10650
        %11542 = vmatpush.bf16.msra.mxu0 %v10644
        %11543 = vmatmul.bf16.gmra.mxu0 %v9669
        %v11544 = vpop.f32.mrf.mxu0
        %v11545 = vadd.f32 %v11532, %v11544
        %v11546 = vpop.f32.mrf.mxu0
        %11547 = vdwg.mxu0
        %11548 = vmatpush.bf16.msra.mxu0 %v10734
        %11549 = vmatpush.bf16.msra.mxu0 %v10728
        %11550 = vmatpush.bf16.msra.mxu0 %v10722
        %11551 = vmatpush.bf16.msra.mxu0 %v10716
        %11552 = vmatpush.bf16.msra.mxu0 %v10710
        %11553 = vmatpush.bf16.msra.mxu0 %v10704
        %11554 = vmatpush.bf16.msra.mxu0 %v10698
        %11555 = vmatpush.bf16.msra.mxu0 %v10692
        %11556 = vmatmul.bf16.gmra.mxu0 %v9670
        %v11557 = vpop.f32.mrf.mxu0
        %v11558 = vadd.f32 %v11545, %v11557
        %v11559 = vpop.f32.mrf.mxu0
        %11560 = vdwg.mxu0
        %11561 = vmatpush.bf16.msra.mxu0 %v10782
        %11562 = vmatpush.bf16.msra.mxu0 %v10776
        %11563 = vmatpush.bf16.msra.mxu0 %v10770
        %11564 = vmatpush.bf16.msra.mxu0 %v10764
        %11565 = vmatpush.bf16.msra.mxu0 %v10758
        %11566 = vmatpush.bf16.msra.mxu0 %v10752
        %11567 = vmatpush.bf16.msra.mxu0 %v10746
        %11568 = vmatpush.bf16.msra.mxu0 %v10740
        %11569 = vmatmul.bf16.gmra.mxu0 %v9671
        %v11570 = vpop.f32.mrf.mxu0
        %v11571 = vadd.f32 %v11558, %v11570
        %v11572 = vpop.f32.mrf.mxu0
        %11573 = vdwg.mxu0
        %11574 = vmatpush.bf16.msra.mxu0 %v10830
        %11575 = vmatpush.bf16.msra.mxu0 %v10824
        %11576 = vmatpush.bf16.msra.mxu0 %v10818
        %11577 = vmatpush.bf16.msra.mxu0 %v10812
        %11578 = vmatpush.bf16.msra.mxu0 %v10806
        %11579 = vmatpush.bf16.msra.mxu0 %v10800
        %11580 = vmatpush.bf16.msra.mxu0 %v10794
        %11581 = vmatpush.bf16.msra.mxu0 %v10788
        %11582 = vmatmul.bf16.gmra.mxu0 %v9672
        %v11583 = vpop.f32.mrf.mxu0
        %v11584 = vadd.f32 %v11571, %v11583
        %v11585 = vpop.f32.mrf.mxu0
        %11586 = vdwg.mxu0
        %v11593 = vrot.slane %v11272, 6
        %v11594 = vrot.slane %v11350, 4
        %v11595 = vrot.slane %v11428, 2
        %v11596 = vrot.slane %v11584, 6
        %v11597 = vsel %vm8774, %v11194, %v11593
        %v11598 = vsel %vm8788, %v11594, %v11595
        %vm11599 = vcmask 1043456
        %v11600 = vsel %vm11599, %v11597, %v11598
        %v11601 = vsel %vm8774, %v11506, %v11596
        %11604 = vst [vmem:[%s531] sm:$0xff] %v11600
        %11605 = vst [vmem:[%s531 + $0x8] sm:$0xf] %v11601
        %s11606 = sand.u32 %s238, 1
        %s11607 = scalar_lea.sflag [#allocation4], %s11606
        %s11608 = sand.u32 %s238, 1
        %s11609 = smul.addr %s11608, 12
        %s11610 = scalar_lea.vmem [#allocation14], %s11609
        // Predicated region
        $region81: #{tpu_custom_call.1} parent=51 // pred_check
          %p11611 = pneg %p248
        $region82: #{tpu_custom_call.1} parent=51 // pred_check_branch
          %11613 = sbr.rel (%p11611) target = $region84
        $region83: #{tpu_custom_call.1} parent=51 // pred_region
          %11615 = vsyncadd %s11607, 0
          %s11616 = smul.addr %s32, 6
          %s11617 = smul.addr %s11616, 2
          %s11618 = scalar_lea.hbm %s8, %s11617
          %s11620 = sshll.u32 %s11610, 4
          %s11621 = int_to_ptr.vmem [resolvable:$true] %s11620
          %s11622 = sshll.u32 %s11618, 4
          %s11623 = int_to_ptr.hbm [resolvable:$true] %s11622
          %11625 = dma.vmem_to_hbm [thread:$0]  %s11621, 192, %s11623, %s11607
        $region84: #{tpu_custom_call.1} parent=51 // pred_fallthru
          _
      $region52: #{tpu_custom_call.1} parent=5 // pred_fallthru
        _
      %p11626 = scmp.le.s32.totalorder 2, %s27
      // Predicated region
      $region85: #{tpu_custom_call.1} parent=5 // pred_check
        %p11627 = pneg %p11626
      $region86: #{tpu_custom_call.1} parent=5 // pred_check_branch
        %11629 = sbr.rel (%p11627) target = $region88
      $region87: #{tpu_custom_call.1} parent=5 // pred_region
        %s11630 = ssub.s32 %s27, 2
        // Predicated region
        $region89: #{tpu_custom_call.1} parent=87 // pred_check
          %p11631 = pneg %p254
        $region90: #{tpu_custom_call.1} parent=87 // pred_check_branch
          %11633 = sbr.rel (%p11631) target = $region92
        $region91: #{tpu_custom_call.1} parent=87 // pred_region
          %s11634 = sand.u32 %s239, 1
          %s11635 = scalar_lea.sflag [#allocation4], %s11634
          %s11636 = sand.u32 %s239, 1
          %s11637 = smul.addr %s11636, 12
          %s11638 = scalar_lea.vmem [#allocation14], %s11637
          %11640 = dma.done %s11635, 192
        $region92: #{tpu_custom_call.1} parent=87 // pred_fallthru
          _
      $region88: #{tpu_custom_call.1} parent=5 // pred_fallthru
        _
    $region6: #{tpu_custom_call.1} parent=1 // loop_footer
      %s31 = sadd.s32 1, %s27
    $region7: #{tpu_custom_call.1} parent=1 // loop_footer_branch
      %26 = sbr.rel target = $region3
    $region8: #{tpu_custom_call.1} parent=1 // loop_exit
      _
    %11641 = vsyncpa [#allocation3], 1
    %s11642 = scalar_lea.sflag [#allocation3], 1
    %11643 = vsyncpa %s11642, 1
    %11644 = vsyncpa [#allocation6], 1
    %11645 = vsyncpa [#allocation9], 1
    %s11646 = scalar_lea.sflag [#allocation9], 1
    %11647 = vsyncpa %s11646, 1
    %11648 = vsyncpa [#allocation12], 1
    %s11649 = scalar_lea.sflag [#allocation12], 1
    %11650 = vsyncpa %s11649, 1
    %11651 = vsyncpa [#allocation4], 1
    %s11652 = scalar_lea.sflag [#allocation4], 1
    %11653 = vsyncpa %s11652, 1

</llo_original>
